<compile_context>
chip_gen: v7x
topology: tpu7x:2x2x1
jax: 0.10.0
libtpu: 0.0.40
codegen_flags: <defaults>
</compile_context>

<pallas_src>
import functools
import math

import numpy as np
import jax
import jax.numpy as jnp
from jax.experimental import pallas as pl
from jax.experimental.pallas import tpu as pltpu

# ----------------------------------------------------------------------------
# Small synthetic configuration (real RAMplus defaults are much larger).
# ----------------------------------------------------------------------------
BATCH = 2
IMAGE_SIZE = 32
PATCH_SIZE = 4
WINDOW_SIZE = 4            # n = 16 tokens/window -> sublane-aligned reshapes
ENCODER_WIDTH = 32
ENCODER_DEPTHS = (2, 2)
ENCODER_NUM_HEADS = (2, 4)
HIDDEN_CHANNELS = 32
NUM_CATEGORIES = 16
NUM_DESCRIPTIONS = 8
DECODER_DEPTH = 2
DECODER_NUM_HEADS = 4
DECODER_HIDDEN = 128       # keeps the (B, K*HD) RAM-head output 128-lane tiled
DECODER_INTERMEDIATE = 4 * DECODER_HIDDEN

LN_EPS_SWIN = 1e-5         # torchvision Swin LayerNorm eps
LN_EPS_BERT = 1e-12        # BertLayerNorm eps

_GELU_C = math.sqrt(2.0 / math.pi)


# ------------------------------ spec helpers --------------------------------

def _vmem_spec():
    return pl.BlockSpec(memory_space=pltpu.MemorySpace.VMEM)


def _bcast_spec(shape):
    """Full-array block, same block for every grid step (weights / biases)."""
    shape = tuple(shape)
    nd = len(shape)
    return pl.BlockSpec(shape, lambda *args: (0,) * nd)


def _parallel(n_axes=1):
    return pltpu.CompilerParams(dimension_semantics=("parallel",) * n_axes)


def _largest_divisor_leq(n, cap):
    for c in range(min(n, cap), 0, -1):
        if n % c == 0:
            return c
    return n


def _row_tile(rows, cap=1024):
    """Largest sublane-aligned row tile <= cap that divides `rows`."""
    if rows <= cap:
        return rows
    for c in range(cap, 7, -1):
        if rows % c == 0 and c % 8 == 0:
            return c
    return rows


# ---------------------------- in-kernel helpers ------------------------------

def _mm(a, b):
    """MXU matmul: bf16 operands, f32 accumulation."""
    return jnp.dot(a.astype(jnp.bfloat16), b.astype(jnp.bfloat16),
                   preferred_element_type=jnp.float32)


def _dot_nt(a, b):
    # a:(m,d), b:(n,d) -> (m,n); contraction on the last dims (MXU).
    return jax.lax.dot_general(a.astype(jnp.bfloat16), b.astype(jnp.bfloat16),
                               (((1,), (1,)), ((), ())),
                               preferred_element_type=jnp.float32)


def _bdot_qk(q, k):
    # (w,q,d) x (w,k,d) -> (w,q,k), batched over windows.
    return jax.lax.dot_general(q.astype(jnp.bfloat16), k.astype(jnp.bfloat16),
                               (((2,), (2,)), ((0,), (0,))),
                               preferred_element_type=jnp.float32)


def _bdot_pv(p, v):
    # (w,q,k) x (w,k,d) -> (w,q,d), batched over windows.
    return jax.lax.dot_general(p.astype(jnp.bfloat16), v.astype(jnp.bfloat16),
                               (((2,), (1,)), ((0,), (0,))),
                               preferred_element_type=jnp.float32)


def _ln_f32(x, g, b, eps):
    mean = jnp.mean(x, axis=-1, keepdims=True)
    var = jnp.mean(jnp.square(x - mean), axis=-1, keepdims=True)
    return (x - mean) * jax.lax.rsqrt(var + eps) * g + b


def _gelu(x):
    # tanh-approximate GELU; runs on the EUP inside the kernel.
    return 0.5 * x * (1.0 + jnp.tanh(_GELU_C * (x + 0.044715 * x * x * x)))


def _softmax_rows(s):
    s = s - jnp.max(s, axis=-1, keepdims=True)
    p = jnp.exp(s)
    return p * pl.reciprocal(jnp.sum(p, axis=-1, keepdims=True), approx=True)


# ------------------------------ Pallas kernels ------------------------------

def _patch_embed_kernel(x_ref, w_ref, b_ref, g_ref, beta_ref, o_ref, *, eps):
    y = _mm(x_ref[...], w_ref[...]) + b_ref[...]
    o_ref[...] = _ln_f32(y, g_ref[...], beta_ref[...], eps).astype(o_ref.dtype)


def _ln_linear_kernel(x_ref, g_ref, b_ref, w_ref, o_ref, *, eps):
    h = _ln_f32(x_ref[...].astype(jnp.float32), g_ref[...], b_ref[...], eps)
    o_ref[...] = _mm(h, w_ref[...]).astype(o_ref.dtype)


def _swin_block_kernel(x_ref, bias_ref, n1g_ref, n1b_ref, qkvw_ref, qkvb_ref,
                       pw_ref, pb_ref, n2g_ref, n2b_ref, f1w_ref, f1b_ref,
                       f2w_ref, f2b_ref, o_ref, *, num_heads, win_tile, win_n,
                       eps, scale):
    # x_ref block: (1, win_tile * n, C) -- a window-tile of one image, tokens
    # kept flat so every linear layer is a single dense MXU matmul.
    c = x_ref.shape[-1]
    t = win_tile * win_n
    d = c // num_heads

    x = x_ref[0].astype(jnp.float32)                        # (t, C)
    h = _ln_f32(x, n1g_ref[...], n1b_ref[...], eps)
    qkv = _mm(h, qkvw_ref[...]) + qkvb_ref[...]             # (t, 3C) fused QKV

    q = (qkv[:, :c] * scale).reshape(win_tile, win_n, c)    # scale folded into q
    k = qkv[:, c:2 * c].reshape(win_tile, win_n, c)
    v = qkv[:, 2 * c:].reshape(win_tile, win_n, c)
    bias = bias_ref[...].astype(jnp.float32)                # (H, wt, n, n)

    ctx_heads = []
    for hd in range(num_heads):                             # short head loop only
        sl = slice(hd * d, (hd + 1) * d)
        s = _bdot_qk(q[:, :, sl], k[:, :, sl]) + bias[hd]   # (wt, n, n)
        p = _softmax_rows(s)
        ctx_heads.append(_bdot_pv(p, v[:, :, sl]))          # (wt, n, d)
    ctx = jnp.concatenate(ctx_heads, axis=-1).reshape(t, c)

    x = x + _mm(ctx, pw_ref[...]) + pb_ref[...]             # single proj + res1
    y = _ln_f32(x, n2g_ref[...], n2b_ref[...], eps)
    y = _gelu(_mm(y, f1w_ref[...]) + f1b_ref[...])
    y = _mm(y, f2w_ref[...]) + f2b_ref[...]
    o_ref[0] = (x + y).astype(o_ref.dtype)                  # one dense store


def _encoder_final_kernel(x_ref, g_ref, b_ref, hw_ref, hb_ref,
                          cls_ref, tok_ref, *, eps):
    x = x_ref[0].astype(jnp.float32)                        # (hw, dim)
    xn = _ln_f32(x, g_ref[...], b_ref[...], eps)
    tok = _mm(xn, hw_ref[...]) + hb_ref[...]                # (hw, hidden)
    # head is linear -> head(mean(xn)) == mean(head(xn)); saves a matmul.
    cls_ = jnp.mean(tok, axis=0, keepdims=True)
    cls_ref[0] = cls_.astype(cls_ref.dtype)
    tok_ref[0] = tok.astype(tok_ref.dtype)


def _ram_head_kernel(cls_ref, ce_ref, inw_ref, inb_ref, o_ref, *, temp_inv):
    # grid over categories: ce_ref block is this category's (1, N, C) slice.
    cls_ = cls_ref[...].astype(jnp.float32)                 # (B, C)
    nrm = jnp.sqrt(jnp.sum(cls_ * cls_, axis=-1, keepdims=True))
    cls_n = cls_ / jnp.maximum(nrm, 1e-12)                  # F.normalize
    cek = ce_ref[0].astype(jnp.float32)                     # (N, C)
    wts = _dot_nt(cls_n, cek) * temp_inv                    # (B, N)  MXU
    p = _softmax_rows(wts)                                  # softmax over n
    emb = _mm(p, cek)                                       # (B, C)  MXU
    # fused decoder in_linear + ReLU, lane-dense (B, HD) column-block store.
    o_ref[...] = jnp.maximum(_mm(emb, inw_ref[...]) + inb_ref[...],
                             0.0).astype(o_ref.dtype)


def _decoder_layer_kernel(h_ref, x_ref, qw_ref, qb_ref, kw_ref, kb_ref,
                          vw_ref, vb_ref, aow_ref, aob_ref, aog_ref, aob2_ref,
                          iw_ref, ib_ref, ow_ref, ob_ref, og_ref, ob2_ref,
                          o_ref, *, num_heads, eps, scale):
    hdim = h_ref.shape[-1]
    d = hdim // num_heads
    h = h_ref[0].astype(jnp.float32)                        # (K, HD)
    xe = x_ref[0].astype(jnp.float32)                       # (L, HC)
    q = _mm(h, qw_ref[...]) + qb_ref[...]
    k = _mm(xe, kw_ref[...]) + kb_ref[...]
    v = _mm(xe, vw_ref[...]) + vb_ref[...]
    ctx_heads = []
    for i in range(num_heads):                              # 4 heads only
        sl = slice(i * d, (i + 1) * d)
        p = _softmax_rows(_dot_nt(q[:, sl] * scale, k[:, sl]))
        ctx_heads.append(_mm(p, v[:, sl]))
    ctx = jnp.concatenate(ctx_heads, axis=-1)               # (K, HD)
    ao = _mm(ctx, aow_ref[...]) + aob_ref[...]              # single output proj
    x1 = _ln_f32(ao + h, aog_ref[...], aob2_ref[...], eps)
    inter = _gelu(_mm(x1, iw_ref[...]) + ib_ref[...])
    out = _mm(inter, ow_ref[...]) + ob_ref[...]
    o_ref[0] = _ln_f32(out + x1, og_ref[...], ob2_ref[...], eps).astype(o_ref.dtype)


def _logits_kernel(h_ref, w_ref, b_ref, o_ref):
    h = h_ref[...].astype(jnp.float32)                      # (B, K, HD)
    w = w_ref[...].astype(jnp.float32)                      # (1, 1, HD)
    o_ref[...] = (jnp.sum(h * w, axis=-1) + b_ref[...]).astype(o_ref.dtype)


# ------------------------- static bias construction --------------------------

def _relative_position_index(ws):
    coords = np.stack(np.meshgrid(np.arange(ws), np.arange(ws), indexing="ij"))
    cf = coords.reshape(2, -1)
    rel = (cf[:, :, None] - cf[:, None, :]).transpose(1, 2, 0)   # (N, N, 2)
    rel[:, :, 0] += ws - 1
    rel[:, :, 1] += ws - 1
    rel[:, :, 0] *= 2 * ws - 1
    return rel.sum(-1)                                           # (N, N)


def _shifted_window_mask(pad_h, pad_w, ws, sh):
    mask = np.zeros((pad_h, pad_w), np.float32)
    h_slices = ((0, -ws), (-ws, -sh[0]), (-sh[0], None))
    w_slices = ((0, -ws), (-ws, -sh[1]), (-sh[1], None))
    count = 0
    for hs in h_slices:
        for ws_ in w_slices:
            mask[hs[0]:hs[1], ws_[0]:ws_[1]] = count
            count += 1
    nh, nw = pad_h // ws, pad_w // ws
    mask = mask.reshape(nh, ws, nw, ws).transpose(0, 2, 1, 3).reshape(nh * nw, ws * ws)
    diff = mask[:, None, :] - mask[:, :, None]
    return np.where(diff != 0, -100.0, 0.0).astype(np.float32)   # (nW, N, N)


def _make_attn_bias(rpb_table, num_heads, h, w, ws, shift):
    """Precompute the full (H, nW, n, n) attention bias (bf16) for one block."""
    pad_r = (ws - w % ws) % ws
    pad_b = (ws - h % ws) % ws
    ph, pw = h + pad_b, w + pad_r
    sh = [shift, shift]
    if ws >= ph:
        sh[0] = 0
    if ws >= pw:
        sh[1] = 0
    n = ws * ws
    nwin = (ph // ws) * (pw // ws)
    idx = _relative_position_index(ws).reshape(-1)
    rpb = np.asarray(rpb_table)[idx].reshape(n, n, num_heads).transpose(2, 0, 1)
    bias = np.broadcast_to(rpb[:, None], (num_heads, nwin, n, n)).copy()
    if sum(sh) > 0:
        amask = _shifted_window_mask(ph, pw, ws, sh)             # (nW, n, n)
        bias = bias + amask[None, :, :, :]
    return jnp.asarray(bias, jnp.bfloat16)


# ---------------------------- encoder forward --------------------------------

def patch_embed(patches, w, b, g, beta):
    rows, kin = patches.shape
    n = w.shape[-1]
    tile = _row_tile(rows)
    return pl.pallas_call(
        functools.partial(_patch_embed_kernel, eps=LN_EPS_SWIN),
        out_shape=jax.ShapeDtypeStruct((rows, n), patches.dtype),
        grid=(rows // tile,),
        in_specs=[pl.BlockSpec((tile, kin), lambda i: (i, 0)),
                  _bcast_spec((kin, n)), _bcast_spec((1, n)),
                  _bcast_spec((1, n)), _bcast_spec((1, n))],
        out_specs=pl.BlockSpec((tile, n), lambda i: (i, 0)),
        compiler_params=_parallel(),
    )(patches, w, b.reshape(1, n), g.reshape(1, n), beta.reshape(1, n))


def swin_block_apply(x, blk, num_heads, ws, shift):
    b, h, w, c = x.shape
    pad_r = (ws - w % ws) % ws
    pad_b_ = (ws - h % ws) % ws
    if pad_r or pad_b_:
        x = jnp.pad(x, ((0, 0), (0, pad_b_), (0, pad_r), (0, 0)))
    ph, pw_ = h + pad_b_, w + pad_r
    sh = [shift, shift]
    if ws >= ph:
        sh[0] = 0
    if ws >= pw_:
        sh[1] = 0
    shifted = sum(sh) > 0
    if shifted:
        x = jnp.roll(x, shift=(-sh[0], -sh[1]), axis=(1, 2))

    nh, nw = ph // ws, pw_ // ws
    num_windows = nh * nw
    n = ws * ws
    # window partition, then flatten tokens window-major: (B, nW*n, C)
    xw = (x.reshape(b, nh, ws, nw, ws, c)
           .transpose(0, 1, 3, 2, 4, 5)
           .reshape(b, num_windows * n, c))

    bias = blk["attn_bias"]                                  # (H, nW, n, n) bf16
    # window-tile grid axis bounds the per-step VMEM block (v7x) and gives the
    # pipeline more than one step per image.
    win_tile = _largest_divisor_leq(num_windows, 16)
    n_wt = num_windows // win_tile
    t_blk = win_tile * n

    kernel = functools.partial(_swin_block_kernel, num_heads=num_heads,
                               win_tile=win_tile, win_n=n, eps=LN_EPS_SWIN,
                               scale=float((c // num_heads) ** -0.5))
    out = pl.pallas_call(
        kernel,
        out_shape=jax.ShapeDtypeStruct((b, num_windows * n, c), x.dtype),
        grid=(b, n_wt),
        in_specs=[pl.BlockSpec((1, t_blk, c), lambda i, j: (i, j, 0)),
                  pl.BlockSpec((num_heads, win_tile, n, n),
                               lambda i, j: (0, j, 0, 0)),
                  _bcast_spec((1, c)), _bcast_spec((1, c)),
                  _bcast_spec((c, 3 * c)), _bcast_spec((1, 3 * c)),
                  _bcast_spec((c, c)), _bcast_spec((1, c)),
                  _bcast_spec((1, c)), _bcast_spec((1, c)),
                  _bcast_spec((c, 4 * c)), _bcast_spec((1, 4 * c)),
                  _bcast_spec((4 * c, c)), _bcast_spec((1, c))],
        out_specs=pl.BlockSpec((1, t_blk, c), lambda i, j: (i, j, 0)),
        compiler_params=_parallel(2),
    )(xw, bias,
      blk["norm1_g"].reshape(1, c), blk["norm1_b"].reshape(1, c),
      blk["qkv_w"], blk["qkv_b"].reshape(1, 3 * c),
      blk["proj_w"], blk["proj_b"].reshape(1, c),
      blk["norm2_g"].reshape(1, c), blk["norm2_b"].reshape(1, c),
      blk["fc1_w"], blk["fc1_b"].reshape(1, 4 * c),
      blk["fc2_w"], blk["fc2_b"].reshape(1, c))

    out = (out.reshape(b, nh, nw, ws, ws, c)
              .transpose(0, 1, 3, 2, 4, 5)
              .reshape(b, ph, pw_, c))
    if shifted:
        out = jnp.roll(out, shift=(sh[0], sh[1]), axis=(1, 2))
    return out[:, :h, :w, :]


def patch_merging(x, ds):
    b, h, w, c = x.shape
    if h % 2 or w % 2:
        x = jnp.pad(x, ((0, 0), (0, h % 2), (0, w % 2), (0, 0)))
    x0 = x[:, 0::2, 0::2, :]
    x1 = x[:, 1::2, 0::2, :]
    x2 = x[:, 0::2, 1::2, :]
    x3 = x[:, 1::2, 1::2, :]
    xc = jnp.concatenate([x0, x1, x2, x3], axis=-1)           # (b, h/2, w/2, 4c)
    b2, h2, w2, c4 = xc.shape
    flat = xc.reshape(b2 * h2 * w2, c4)
    rows = flat.shape[0]
    tile = _row_tile(rows)
    out = pl.pallas_call(
        functools.partial(_ln_linear_kernel, eps=LN_EPS_SWIN),
        out_shape=jax.ShapeDtypeStruct((rows, c4 // 2), x.dtype),
        grid=(rows // tile,),
        in_specs=[pl.BlockSpec((tile, c4), lambda i: (i, 0)),
                  _bcast_spec((1, c4)), _bcast_spec((1, c4)),
                  _bcast_spec((c4, c4 // 2))],
        out_specs=pl.BlockSpec((tile, c4 // 2), lambda i: (i, 0)),
        compiler_params=_parallel(),
    )(flat, ds["norm_g"].reshape(1, c4), ds["norm_b"].reshape(1, c4), ds["red_w"])
    return out.reshape(b2, h2, w2, c4 // 2)


def encoder_forward(params, image):
    # Patch embedding: Conv2d(kernel=stride=PATCH_SIZE) expressed as matmul + LN.
    bsz, cin, hh, ww = image.shape
    gh, gw = hh // PATCH_SIZE, ww // PATCH_SIZE
    patches = (image.reshape(bsz, cin, gh, PATCH_SIZE, gw, PATCH_SIZE)
                    .transpose(0, 2, 4, 1, 3, 5)
                    .reshape(bsz * gh * gw, cin * PATCH_SIZE * PATCH_SIZE))
    x = patch_embed(patches, params["patch_w"], params["patch_b"],
                    params["patch_ln_g"], params["patch_ln_b"])
    x = x.reshape(bsz, gh, gw, ENCODER_WIDTH)

    for si, (depth, heads) in enumerate(zip(ENCODER_DEPTHS, ENCODER_NUM_HEADS)):
        stage = params["stages"][si]
        for bi in range(depth):
            shift = 0 if bi % 2 == 0 else WINDOW_SIZE // 2
            x = swin_block_apply(x, stage["blocks"][bi], heads, WINDOW_SIZE, shift)
        if si < len(ENCODER_DEPTHS) - 1:
            x = patch_merging(x, stage["downsample"])

    b, h, w, c = x.shape
    tokens = x.reshape(b, h * w, c)                           # 'b h w c -> b (h w) c'
    cls_out, tok_out = pl.pallas_call(
        functools.partial(_encoder_final_kernel, eps=LN_EPS_SWIN),
        out_shape=(jax.ShapeDtypeStruct((b, 1, HIDDEN_CHANNELS), x.dtype),
                   jax.ShapeDtypeStruct((b, h * w, HIDDEN_CHANNELS), x.dtype)),
        grid=(b,),
        in_specs=[pl.BlockSpec((1, h * w, c), lambda i: (i, 0, 0)),
                  _bcast_spec((1, c)), _bcast_spec((1, c)),
                  _bcast_spec((c, HIDDEN_CHANNELS)),
                  _bcast_spec((1, HIDDEN_CHANNELS))],
        out_specs=(pl.BlockSpec((1, 1, HIDDEN_CHANNELS), lambda i: (i, 0, 0)),
                   pl.BlockSpec((1, h * w, HIDDEN_CHANNELS), lambda i: (i, 0, 0))),
        compiler_params=_parallel(),
    )(tokens, params["norm_g"].reshape(1, c), params["norm_b"].reshape(1, c),
      params["head_w"], params["head_b"].reshape(1, HIDDEN_CHANNELS))
    return jnp.concatenate([cls_out, tok_out], axis=1)        # (b, 1+hw, hidden)


# ----------------------- RAM head + decoder forward --------------------------

def ram_head_project(cls_, category_embedding, in_w, in_b):
    b, c = cls_.shape
    k, n, _ = category_embedding.shape
    hd = in_w.shape[1]
    out = pl.pallas_call(
        functools.partial(_ram_head_kernel, temp_inv=1.0 / 0.07),
        out_shape=jax.ShapeDtypeStruct((b, k * hd), cls_.dtype),
        grid=(k,),
        in_specs=[_bcast_spec((b, c)),
                  pl.BlockSpec((1, n, c), lambda i: (i, 0, 0)),
                  _bcast_spec((c, hd)), _bcast_spec((1, hd))],
        out_specs=pl.BlockSpec((b, hd), lambda i: (0, i)),
        compiler_params=_parallel(),
    )(cls_, category_embedding, in_w, in_b.reshape(1, hd))
    return out.reshape(b, k, hd)                              # free reshape


def decoder_forward(dec, x_enc, h):
    b, kq, hdim = h.shape
    l, hc = x_enc.shape[1], x_enc.shape[2]
    heads = DECODER_NUM_HEADS
    d = hdim // heads
    # layer.attention is an identity in RAMplus' Decoder, so each BertLayer
    # reduces to cross-attention + FFN (fused into one kernel per layer).
    for lp in dec["layers"]:
        kernel = functools.partial(_decoder_layer_kernel, num_heads=heads,
                                   eps=LN_EPS_BERT, scale=1.0 / math.sqrt(d))
        h = pl.pallas_call(
            kernel,
            out_shape=jax.ShapeDtypeStruct((b, kq, hdim), h.dtype),
            grid=(b,),
            in_specs=[pl.BlockSpec((1, kq, hdim), lambda i: (i, 0, 0)),
                      pl.BlockSpec((1, l, hc), lambda i: (i, 0, 0)),
                      _bcast_spec((hdim, hdim)), _bcast_spec((1, hdim)),
                      _bcast_spec((hc, hdim)), _bcast_spec((1, hdim)),
                      _bcast_spec((hc, hdim)), _bcast_spec((1, hdim)),
                      _bcast_spec((hdim, hdim)), _bcast_spec((1, hdim)),
                      _bcast_spec((1, hdim)), _bcast_spec((1, hdim)),
                      _bcast_spec((hdim, DECODER_INTERMEDIATE)),
                      _bcast_spec((1, DECODER_INTERMEDIATE)),
                      _bcast_spec((DECODER_INTERMEDIATE, hdim)),
                      _bcast_spec((1, hdim)),
                      _bcast_spec((1, hdim)), _bcast_spec((1, hdim))],
            out_specs=pl.BlockSpec((1, kq, hdim), lambda i: (i, 0, 0)),
            compiler_params=_parallel(),
        )(h, x_enc,
          lp["q_w"], lp["q_b"].reshape(1, hdim),
          lp["k_w"], lp["k_b"].reshape(1, hdim),
          lp["v_w"], lp["v_b"].reshape(1, hdim),
          lp["ao_w"], lp["ao_b"].reshape(1, hdim),
          lp["ao_ln_g"].reshape(1, hdim), lp["ao_ln_b"].reshape(1, hdim),
          lp["inter_w"], lp["inter_b"].reshape(1, DECODER_INTERMEDIATE),
          lp["out_w"], lp["out_b"].reshape(1, hdim),
          lp["out_ln_g"].reshape(1, hdim), lp["out_ln_b"].reshape(1, hdim))

    # Final projection: lane-dense (B, K) output (no trailing dim of 1).
    logits = pl.pallas_call(
        _logits_kernel,
        out_shape=jax.ShapeDtypeStruct((b, kq), h.dtype),
        in_specs=[_vmem_spec()] * 3,
        out_specs=_vmem_spec(),
    )(h, dec["out_w"].reshape(1, 1, hdim), dec["out_b"].reshape(1, 1))
    return logits


def ramplus_forward(params, image):
    x = encoder_forward(params, image)                        # (B, 1+hw, hidden)
    cls_ = x[:, 0]
    dec = params["decoder"]
    h0 = ram_head_project(cls_, params["category_embedding"],
                          dec["in_w"], dec["in_b"])           # (B, K, HD)
    return decoder_forward(dec, x, h0)


# ---------------------------- parameter creation -----------------------------

def init_params(key):
    keys = iter(jax.random.split(key, 512))

    def nk():
        return next(keys)

    def dense(fan_in, fan_out, bias=True):
        # matmul weights live in bf16 (MXU operands); biases stay f32.
        w = (0.02 * jax.random.normal(nk(), (fan_in, fan_out),
                                      jnp.float32)).astype(jnp.bfloat16)
        b = (0.02 * jax.random.normal(nk(), (fan_out,), jnp.float32)
             if bias else jnp.zeros((fan_out,), jnp.float32))
        return w, b

    def ln(c):
        return jnp.ones((c,), jnp.float32), jnp.zeros((c,), jnp.float32)

    p = {}
    p["patch_w"], p["patch_b"] = dense(3 * PATCH_SIZE * PATCH_SIZE, ENCODER_WIDTH)
    p["patch_ln_g"], p["patch_ln_b"] = ln(ENCODER_WIDTH)

    stages = []
    dim = ENCODER_WIDTH
    spatial_h = spatial_w = IMAGE_SIZE // PATCH_SIZE
    for si, (depth, heads) in enumerate(zip(ENCODER_DEPTHS, ENCODER_NUM_HEADS)):
        blocks = []
        for bi in range(depth):
            blk = {}
            blk["norm1_g"], blk["norm1_b"] = ln(dim)
            blk["qkv_w"], blk["qkv_b"] = dense(dim, 3 * dim)
            blk["proj_w"], blk["proj_b"] = dense(dim, dim)
            rpb_table = 0.02 * jax.random.normal(
                nk(), ((2 * WINDOW_SIZE - 1) ** 2, heads), jnp.float32)
            shift = 0 if bi % 2 == 0 else WINDOW_SIZE // 2
            # Precompute the (H, nW, n, n) bias (rpb gather + shift mask) once
            # at init, stored bf16: removes per-forward gather traffic.
            blk["attn_bias"] = _make_attn_bias(rpb_table, heads, spatial_h,
                                               spatial_w, WINDOW_SIZE, shift)
            blk["norm2_g"], blk["norm2_b"] = ln(dim)
            blk["fc1_w"], blk["fc1_b"] = dense(dim, 4 * dim)
            blk["fc2_w"], blk["fc2_b"] = dense(4 * dim, dim)
            blocks.append(blk)
        stage = {"blocks": blocks}
        if si < len(ENCODER_DEPTHS) - 1:
            ds = {}
            ds["norm_g"], ds["norm_b"] = ln(4 * dim)
            ds["red_w"], _ = dense(4 * dim, 2 * dim, bias=False)
            stage["downsample"] = ds
            dim *= 2
            spatial_h = (spatial_h + 1) // 2
            spatial_w = (spatial_w + 1) // 2
        stages.append(stage)
    p["stages"] = stages
    p["norm_g"], p["norm_b"] = ln(dim)
    p["head_w"], p["head_b"] = dense(dim, HIDDEN_CHANNELS)

    p["category_embedding"] = (0.1 * jax.random.normal(
        nk(), (NUM_CATEGORIES, NUM_DESCRIPTIONS, HIDDEN_CHANNELS),
        jnp.float32)).astype(jnp.bfloat16)

    dec = {"layers": []}
    dec["in_w"], dec["in_b"] = dense(HIDDEN_CHANNELS, DECODER_HIDDEN)
    for _ in range(DECODER_DEPTH):
        lp = {}
        lp["q_w"], lp["q_b"] = dense(DECODER_HIDDEN, DECODER_HIDDEN)
        lp["k_w"], lp["k_b"] = dense(HIDDEN_CHANNELS, DECODER_HIDDEN)
        lp["v_w"], lp["v_b"] = dense(HIDDEN_CHANNELS, DECODER_HIDDEN)
        lp["ao_w"], lp["ao_b"] = dense(DECODER_HIDDEN, DECODER_HIDDEN)
        lp["ao_ln_g"], lp["ao_ln_b"] = ln(DECODER_HIDDEN)
        lp["inter_w"], lp["inter_b"] = dense(DECODER_HIDDEN, DECODER_INTERMEDIATE)
        lp["out_w"], lp["out_b"] = dense(DECODER_INTERMEDIATE, DECODER_HIDDEN)
        lp["out_ln_g"], lp["out_ln_b"] = ln(DECODER_HIDDEN)
        dec["layers"].append(lp)
    dec["out_w"], dec["out_b"] = dense(DECODER_HIDDEN, 1)
    p["decoder"] = dec
    return p


if __name__ == "__main__":
    key = jax.random.PRNGKey(0)
    pkey, ikey = jax.random.split(key)
    params = init_params(pkey)
    image = jax.random.normal(ikey, (BATCH, 3, IMAGE_SIZE, IMAGE_SIZE), jnp.float32)

    logits = jax.jit(ramplus_forward)(params, image)
    logits = jax.block_until_ready(logits)

    assert logits.shape == (BATCH, NUM_CATEGORIES), logits.shape
    assert bool(jnp.all(jnp.isfinite(logits)))
    print("KERNEL_OK")
</pallas_src>

<mosaic_0001>
module attributes {stable_mosaic.version = 11 : i64} {
  func.func @_patch_embed_kernel(%arg0: i32, %arg1: memref<128x48xf32, #tpu.memory_space<vmem>>, %arg2: memref<48x32xbf16, #tpu.memory_space<vmem>>, %arg3: memref<1x32xf32, #tpu.memory_space<vmem>>, %arg4: memref<1x32xf32, #tpu.memory_space<vmem>>, %arg5: memref<1x32xf32, #tpu.memory_space<vmem>>, %arg6: memref<128x32xf32, #tpu.memory_space<vmem>>) attributes {dimension_semantics = [#tpu.dimension_semantics<parallel>], iteration_bounds = array<i64: 1>, scalar_prefetch = 0 : i64, scratch_operands = 0 : i64, tpu.core_type = #tpu.core_type<tc>, window_params = [{transform_indices = @transform_0, window_bounds = array<i64: 128, 48>}, {pipeline_mode = #tpu.pipeline_mode<synchronous>, transform_indices = @transform_1, window_bounds = array<i64: 48, 32>}, {pipeline_mode = #tpu.pipeline_mode<synchronous>, transform_indices = @transform_2, window_bounds = array<i64: 1, 32>}, {pipeline_mode = #tpu.pipeline_mode<synchronous>, transform_indices = @transform_3, window_bounds = array<i64: 1, 32>}, {pipeline_mode = #tpu.pipeline_mode<synchronous>, transform_indices = @transform_4, window_bounds = array<i64: 1, 32>}, {transform_indices = @transform_5, window_bounds = array<i64: 128, 32>}]} {
    %c0 = arith.constant 0 : index
    %c0_0 = arith.constant 0 : index
    %0 = vector.load %arg1[%c0, %c0_0] : memref<128x48xf32, #tpu.memory_space<vmem>>, vector<128x48xf32>
    %c0_1 = arith.constant 0 : index
    %c0_2 = arith.constant 0 : index
    %1 = vector.load %arg2[%c0_1, %c0_2] : memref<48x32xbf16, #tpu.memory_space<vmem>>, vector<48x32xbf16>
    %2 = arith.truncf %0 : vector<128x48xf32> to vector<128x48xbf16>
    %cst = arith.constant dense<0.000000e+00> : vector<128x32xf32>
    %3 = tpu.matmul %2, %1, %cst {dimension_numbers = #tpu.dot_dimension_numbers<[1], [0], [0], [1], [0, 0, 1, 1], [], []>} : vector<128x48xbf16>, vector<48x32xbf16>, vector<128x32xf32> -> vector<128x32xf32>
    %c0_3 = arith.constant 0 : index
    %c0_4 = arith.constant 0 : index
    %4 = vector.load %arg3[%c0_3, %c0_4] : memref<1x32xf32, #tpu.memory_space<vmem>>, vector<1x32xf32>
    %5 = vector.broadcast %4 : vector<1x32xf32> to vector<128x32xf32>
    %6 = arith.addf %3, %5 : vector<128x32xf32>
    %c0_5 = arith.constant 0 : index
    %c0_6 = arith.constant 0 : index
    %7 = vector.load %arg4[%c0_5, %c0_6] : memref<1x32xf32, #tpu.memory_space<vmem>>, vector<1x32xf32>
    %c0_7 = arith.constant 0 : index
    %c0_8 = arith.constant 0 : index
    %8 = vector.load %arg5[%c0_7, %c0_8] : memref<1x32xf32, #tpu.memory_space<vmem>>, vector<1x32xf32>
    %cst_9 = arith.constant dense<0.000000e+00> : vector<128xf32>
    %9 = vector.multi_reduction <add>, %6, %cst_9 [1] : vector<128x32xf32> to vector<128xf32>
    %10 = vector.shape_cast %9 : vector<128xf32> to vector<128x1xf32>
    %cst_10 = arith.constant 3.200000e+01 : f32
    %11 = vector.broadcast %cst_10 : f32 to vector<128x1xf32>
    %12 = arith.divf %10, %11 : vector<128x1xf32>
    %13 = vector.broadcast %12 : vector<128x1xf32> to vector<128x32xf32>
    %14 = arith.subf %6, %13 : vector<128x32xf32>
    %15 = arith.mulf %14, %14 : vector<128x32xf32>
    %cst_11 = arith.constant dense<0.000000e+00> : vector<128xf32>
    %16 = vector.multi_reduction <add>, %15, %cst_11 [1] : vector<128x32xf32> to vector<128xf32>
    %17 = vector.shape_cast %16 : vector<128xf32> to vector<128x1xf32>
    %cst_12 = arith.constant 3.200000e+01 : f32
    %18 = vector.broadcast %cst_12 : f32 to vector<128x1xf32>
    %19 = arith.divf %17, %18 : vector<128x1xf32>
    %20 = vector.broadcast %12 : vector<128x1xf32> to vector<128x32xf32>
    %21 = arith.subf %6, %20 : vector<128x32xf32>
    %cst_13 = arith.constant 9.99999974E-6 : f32
    %22 = vector.broadcast %cst_13 : f32 to vector<128x1xf32>
    %23 = arith.addf %19, %22 : vector<128x1xf32>
    %24 = math.rsqrt %23 : vector<128x1xf32>
    %25 = vector.broadcast %24 : vector<128x1xf32> to vector<128x32xf32>
    %26 = arith.mulf %21, %25 : vector<128x32xf32>
    %27 = vector.broadcast %7 : vector<1x32xf32> to vector<128x32xf32>
    %28 = arith.mulf %26, %27 : vector<128x32xf32>
    %29 = vector.broadcast %8 : vector<1x32xf32> to vector<128x32xf32>
    %30 = arith.addf %28, %29 : vector<128x32xf32>
    %c0_14 = arith.constant 0 : index
    %c0_15 = arith.constant 0 : index
    %31 = vector.load %arg6[%c0_14, %c0_15] : memref<128x32xf32, #tpu.memory_space<vmem>>, vector<128x32xf32>
    tpu.vector_store %arg6[%c0_14, %c0_15], %30 {strides = array<i32>} : memref<128x32xf32, #tpu.memory_space<vmem>>, vector<128x32xf32>,
    return
  }
  func.func @transform_0(%arg0: i32) -> (i32, i32) {
    %c0_i32 = arith.constant 0 : i32
    %c0_i32_0 = arith.constant 0 : i32
    return %arg0, %c0_i32 : i32, i32
  }
  func.func @transform_1(%arg0: i32) -> (i32, i32) {
    %c0_i32 = arith.constant 0 : i32
    %c0_i32_0 = arith.constant 0 : i32
    %c0_i32_1 = arith.constant 0 : i32
    return %c0_i32, %c0_i32_0 : i32, i32
  }
  func.func @transform_2(%arg0: i32) -> (i32, i32) {
    %c0_i32 = arith.constant 0 : i32
    %c0_i32_0 = arith.constant 0 : i32
    %c0_i32_1 = arith.constant 0 : i32
    return %c0_i32, %c0_i32_0 : i32, i32
  }
  func.func @transform_3(%arg0: i32) -> (i32, i32) {
    %c0_i32 = arith.constant 0 : i32
    %c0_i32_0 = arith.constant 0 : i32
    %c0_i32_1 = arith.constant 0 : i32
    return %c0_i32, %c0_i32_0 : i32, i32
  }
  func.func @transform_4(%arg0: i32) -> (i32, i32) {
    %c0_i32 = arith.constant 0 : i32
    %c0_i32_0 = arith.constant 0 : i32
    %c0_i32_1 = arith.constant 0 : i32
    return %c0_i32, %c0_i32_0 : i32, i32
  }
  func.func @transform_5(%arg0: i32) -> (i32, i32) {
    %c0_i32 = arith.constant 0 : i32
    %c0_i32_0 = arith.constant 0 : i32
    return %arg0, %c0_i32 : i32, i32
  }
}

module attributes {stable_mosaic.version = 11 : i64} {
  func.func @_swin_block_kernel(%arg0: i32, %arg1: i32, %arg2: memref<1x64x32xf32, #tpu.memory_space<vmem>>, %arg3: memref<2x4x16x16xbf16, #tpu.memory_space<vmem>>, %arg4: memref<1x32xf32, #tpu.memory_space<vmem>>, %arg5: memref<1x32xf32, #tpu.memory_space<vmem>>, %arg6: memref<32x96xbf16, #tpu.memory_space<vmem>>, %arg7: memref<1x96xf32, #tpu.memory_space<vmem>>, %arg8: memref<32x32xbf16, #tpu.memory_space<vmem>>, %arg9: memref<1x32xf32, #tpu.memory_space<vmem>>, %arg10: memref<1x32xf32, #tpu.memory_space<vmem>>, %arg11: memref<1x32xf32, #tpu.memory_space<vmem>>, %arg12: memref<32x128xbf16, #tpu.memory_space<vmem>>, %arg13: memref<1x128xf32, #tpu.memory_space<vmem>>, %arg14: memref<128x32xbf16, #tpu.memory_space<vmem>>, %arg15: memref<1x32xf32, #tpu.memory_space<vmem>>, %arg16: memref<1x64x32xf32, #tpu.memory_space<vmem>>) attributes {dimension_semantics = [#tpu.dimension_semantics<parallel>, #tpu.dimension_semantics<parallel>], iteration_bounds = array<i64: 2, 1>, scalar_prefetch = 0 : i64, scratch_operands = 0 : i64, tpu.core_type = #tpu.core_type<tc>, window_params = [{transform_indices = @transform_0, window_bounds = array<i64: 1, 64, 32>}, {transform_indices = @transform_1, window_bounds = array<i64: 2, 4, 16, 16>}, {pipeline_mode = #tpu.pipeline_mode<synchronous>, transform_indices = @transform_2, window_bounds = array<i64: 1, 32>}, {pipeline_mode = #tpu.pipeline_mode<synchronous>, transform_indices = @transform_3, window_bounds = array<i64: 1, 32>}, {pipeline_mode = #tpu.pipeline_mode<synchronous>, transform_indices = @transform_4, window_bounds = array<i64: 32, 96>}, {pipeline_mode = #tpu.pipeline_mode<synchronous>, transform_indices = @transform_5, window_bounds = array<i64: 1, 96>}, {pipeline_mode = #tpu.pipeline_mode<synchronous>, transform_indices = @transform_6, window_bounds = array<i64: 32, 32>}, {pipeline_mode = #tpu.pipeline_mode<synchronous>, transform_indices = @transform_7, window_bounds = array<i64: 1, 32>}, {pipeline_mode = #tpu.pipeline_mode<synchronous>, transform_indices = @transform_8, window_bounds = array<i64: 1, 32>}, {pipeline_mode = #tpu.pipeline_mode<synchronous>, transform_indices = @transform_9, window_bounds = array<i64: 1, 32>}, {pipeline_mode = #tpu.pipeline_mode<synchronous>, transform_indices = @transform_10, window_bounds = array<i64: 32, 128>}, {pipeline_mode = #tpu.pipeline_mode<synchronous>, transform_indices = @transform_11, window_bounds = array<i64: 1, 128>}, {pipeline_mode = #tpu.pipeline_mode<synchronous>, transform_indices = @transform_12, window_bounds = array<i64: 128, 32>}, {pipeline_mode = #tpu.pipeline_mode<synchronous>, transform_indices = @transform_13, window_bounds = array<i64: 1, 32>}, {transform_indices = @transform_14, window_bounds = array<i64: 1, 64, 32>}]} {
    %c0 = arith.constant 0 : index
    %c0_0 = arith.constant 0 : index
    %c0_1 = arith.constant 0 : index
    %0 = vector.load %arg2[%c0, %c0_0, %c0_1] : memref<1x64x32xf32, #tpu.memory_space<vmem>>, vector<1x64x32xf32>
    %1 = vector.shape_cast %0 : vector<1x64x32xf32> to vector<64x32xf32>
    %c0_2 = arith.constant 0 : index
    %c0_3 = arith.constant 0 : index
    %2 = vector.load %arg4[%c0_2, %c0_3] : memref<1x32xf32, #tpu.memory_space<vmem>>, vector<1x32xf32>
    %c0_4 = arith.constant 0 : index
    %c0_5 = arith.constant 0 : index
    %3 = vector.load %arg5[%c0_4, %c0_5] : memref<1x32xf32, #tpu.memory_space<vmem>>, vector<1x32xf32>
    %cst = arith.constant dense<0.000000e+00> : vector<64xf32>
    %4 = vector.multi_reduction <add>, %1, %cst [1] : vector<64x32xf32> to vector<64xf32>
    %5 = vector.shape_cast %4 : vector<64xf32> to vector<64x1xf32>
    %cst_6 = arith.constant 3.200000e+01 : f32
    %6 = vector.broadcast %cst_6 : f32 to vector<64x1xf32>
    %7 = arith.divf %5, %6 : vector<64x1xf32>
    %8 = vector.broadcast %7 : vector<64x1xf32> to vector<64x32xf32>
    %9 = arith.subf %1, %8 : vector<64x32xf32>
    %10 = arith.mulf %9, %9 : vector<64x32xf32>
    %cst_7 = arith.constant dense<0.000000e+00> : vector<64xf32>
    %11 = vector.multi_reduction <add>, %10, %cst_7 [1] : vector<64x32xf32> to vector<64xf32>
    %12 = vector.shape_cast %11 : vector<64xf32> to vector<64x1xf32>
    %cst_8 = arith.constant 3.200000e+01 : f32
    %13 = vector.broadcast %cst_8 : f32 to vector<64x1xf32>
    %14 = arith.divf %12, %13 : vector<64x1xf32>
    %15 = vector.broadcast %7 : vector<64x1xf32> to vector<64x32xf32>
    %16 = arith.subf %1, %15 : vector<64x32xf32>
    %cst_9 = arith.constant 9.99999974E-6 : f32
    %17 = vector.broadcast %cst_9 : f32 to vector<64x1xf32>
    %18 = arith.addf %14, %17 : vector<64x1xf32>
    %19 = math.rsqrt %18 : vector<64x1xf32>
    %20 = vector.broadcast %19 : vector<64x1xf32> to vector<64x32xf32>
    %21 = arith.mulf %16, %20 : vector<64x32xf32>
    %22 = vector.broadcast %2 : vector<1x32xf32> to vector<64x32xf32>
    %23 = arith.mulf %21, %22 : vector<64x32xf32>
    %24 = vector.broadcast %3 : vector<1x32xf32> to vector<64x32xf32>
    %25 = arith.addf %23, %24 : vector<64x32xf32>
    %c0_10 = arith.constant 0 : index
    %c0_11 = arith.constant 0 : index
    %26 = vector.load %arg6[%c0_10, %c0_11] : memref<32x96xbf16, #tpu.memory_space<vmem>>, vector<32x96xbf16>
    %27 = arith.truncf %25 : vector<64x32xf32> to vector<64x32xbf16>
    %cst_12 = arith.constant dense<0.000000e+00> : vector<64x96xf32>
    %28 = tpu.matmul %27, %26, %cst_12 {dimension_numbers = #tpu.dot_dimension_numbers<[1], [0], [0], [1], [0, 0, 1, 1], [], []>} : vector<64x32xbf16>, vector<32x96xbf16>, vector<64x96xf32> -> vector<64x96xf32>
    %c0_13 = arith.constant 0 : index
    %c0_14 = arith.constant 0 : index
    %29 = vector.load %arg7[%c0_13, %c0_14] : memref<1x96xf32, #tpu.memory_space<vmem>>, vector<1x96xf32>
    %30 = vector.broadcast %29 : vector<1x96xf32> to vector<64x96xf32>
    %31 = arith.addf %28, %30 : vector<64x96xf32>
    %32 = vector.extract_strided_slice %31 {offsets = [0, 0], sizes = [64, 32], strides = [1, 1]} : vector<64x96xf32> to vector<64x32xf32>
    %cst_15 = arith.constant 2.500000e-01 : f32
    %33 = vector.broadcast %cst_15 : f32 to vector<64x32xf32>
    %34 = arith.mulf %32, %33 : vector<64x32xf32>
    %35 = vector.shape_cast %34 : vector<64x32xf32> to vector<4x16x32xf32>
    %36 = vector.extract_strided_slice %31 {offsets = [0, 32], sizes = [64, 32], strides = [1, 1]} : vector<64x96xf32> to vector<64x32xf32>
    %37 = vector.shape_cast %36 : vector<64x32xf32> to vector<4x16x32xf32>
    %38 = vector.extract_strided_slice %31 {offsets = [0, 64], sizes = [64, 32], strides = [1, 1]} : vector<64x96xf32> to vector<64x32xf32>
    %39 = vector.shape_cast %38 : vector<64x32xf32> to vector<4x16x32xf32>
    %c0_16 = arith.constant 0 : index
    %c0_17 = arith.constant 0 : index
    %c0_18 = arith.constant 0 : index
    %c0_19 = arith.constant 0 : index
    %40 = vector.load %arg3[%c0_16, %c0_17, %c0_18, %c0_19] : memref<2x4x16x16xbf16, #tpu.memory_space<vmem>>, vector<2x4x16x16xbf16>
    %41 = arith.extf %40 : vector<2x4x16x16xbf16> to vector<2x4x16x16xf32>
    %42 = vector.extract_strided_slice %35 {offsets = [0, 0, 0], sizes = [4, 16, 16], strides = [1, 1, 1]} : vector<4x16x32xf32> to vector<4x16x16xf32>
    %43 = vector.extract_strided_slice %37 {offsets = [0, 0, 0], sizes = [4, 16, 16], strides = [1, 1, 1]} : vector<4x16x32xf32> to vector<4x16x16xf32>
    %44 = arith.truncf %42 : vector<4x16x16xf32> to vector<4x16x16xbf16>
    %45 = arith.truncf %43 : vector<4x16x16xf32> to vector<4x16x16xbf16>
    %cst_20 = arith.constant dense<0.000000e+00> : vector<4x16x16xf32>
    %46 = tpu.matmul %44, %45, %cst_20 {dimension_numbers = #tpu.dot_dimension_numbers<[2], [2], [1], [1], [0, 0, 0, 1, 1, 1], [0], [0]>} : vector<4x16x16xbf16>, vector<4x16x16xbf16>, vector<4x16x16xf32> -> vector<4x16x16xf32>
    %47 = vector.extract_strided_slice %41 {offsets = [0, 0, 0, 0], sizes = [1, 4, 16, 16], strides = [1, 1, 1, 1]} : vector<2x4x16x16xf32> to vector<1x4x16x16xf32>
    %48 = vector.shape_cast %47 : vector<1x4x16x16xf32> to vector<4x16x16xf32>
    %49 = arith.addf %46, %48 : vector<4x16x16xf32>
    %cst_21 = arith.constant dense<0xFF800000> : vector<4x16xf32>
    %50 = vector.multi_reduction <maximumf>, %49, %cst_21 [2] : vector<4x16x16xf32> to vector<4x16xf32>
    %51 = vector.shape_cast %50 : vector<4x16xf32> to vector<4x16x1xf32>
    %52 = vector.broadcast %51 : vector<4x16x1xf32> to vector<4x16x16xf32>
    %53 = arith.subf %49, %52 : vector<4x16x16xf32>
    %54 = math.exp %53 : vector<4x16x16xf32>
    %cst_22 = arith.constant dense<0.000000e+00> : vector<4x16xf32>
    %55 = vector.multi_reduction <add>, %54, %cst_22 [2] : vector<4x16x16xf32> to vector<4x16xf32>
    %56 = vector.shape_cast %55 : vector<4x16xf32> to vector<4x16x1xf32>
    %57 = tpu.reciprocal %56 {approx = true} : vector<4x16x1xf32> -> vector<4x16x1xf32>
    %58 = vector.broadcast %57 : vector<4x16x1xf32> to vector<4x16x16xf32>
    %59 = arith.mulf %54, %58 : vector<4x16x16xf32>
    %60 = vector.extract_strided_slice %39 {offsets = [0, 0, 0], sizes = [4, 16, 16], strides = [1, 1, 1]} : vector<4x16x32xf32> to vector<4x16x16xf32>
    %61 = arith.truncf %59 : vector<4x16x16xf32> to vector<4x16x16xbf16>
    %62 = arith.truncf %60 : vector<4x16x16xf32> to vector<4x16x16xbf16>
    %cst_23 = arith.constant dense<0.000000e+00> : vector<4x16x16xf32>
    %63 = tpu.matmul %61, %62, %cst_23 {dimension_numbers = #tpu.dot_dimension_numbers<[2], [1], [1], [2], [0, 0, 0, 1, 1, 2], [0], [0]>} : vector<4x16x16xbf16>, vector<4x16x16xbf16>, vector<4x16x16xf32> -> vector<4x16x16xf32>
    %64 = vector.extract_strided_slice %35 {offsets = [0, 0, 16], sizes = [4, 16, 16], strides = [1, 1, 1]} : vector<4x16x32xf32> to vector<4x16x16xf32>
    %65 = vector.extract_strided_slice %37 {offsets = [0, 0, 16], sizes = [4, 16, 16], strides = [1, 1, 1]} : vector<4x16x32xf32> to vector<4x16x16xf32>
    %66 = arith.truncf %64 : vector<4x16x16xf32> to vector<4x16x16xbf16>
    %67 = arith.truncf %65 : vector<4x16x16xf32> to vector<4x16x16xbf16>
    %cst_24 = arith.constant dense<0.000000e+00> : vector<4x16x16xf32>
    %68 = tpu.matmul %66, %67, %cst_24 {dimension_numbers = #tpu.dot_dimension_numbers<[2], [2], [1], [1], [0, 0, 0, 1, 1, 1], [0], [0]>} : vector<4x16x16xbf16>, vector<4x16x16xbf16>, vector<4x16x16xf32> -> vector<4x16x16xf32>
    %69 = vector.extract_strided_slice %41 {offsets = [1, 0, 0, 0], sizes = [1, 4, 16, 16], strides = [1, 1, 1, 1]} : vector<2x4x16x16xf32> to vector<1x4x16x16xf32>
    %70 = vector.shape_cast %69 : vector<1x4x16x16xf32> to vector<4x16x16xf32>
    %71 = arith.addf %68, %70 : vector<4x16x16xf32>
    %cst_25 = arith.constant dense<0xFF800000> : vector<4x16xf32>
    %72 = vector.multi_reduction <maximumf>, %71, %cst_25 [2] : vector<4x16x16xf32> to vector<4x16xf32>
    %73 = vector.shape_cast %72 : vector<4x16xf32> to vector<4x16x1xf32>
    %74 = vector.broadcast %73 : vector<4x16x1xf32> to vector<4x16x16xf32>
    %75 = arith.subf %71, %74 : vector<4x16x16xf32>
    %76 = math.exp %75 : vector<4x16x16xf32>
    %cst_26 = arith.constant dense<0.000000e+00> : vector<4x16xf32>
    %77 = vector.multi_reduction <add>, %76, %cst_26 [2] : vector<4x16x16xf32> to vector<4x16xf32>
    %78 = vector.shape_cast %77 : vector<4x16xf32> to vector<4x16x1xf32>
    %79 = tpu.reciprocal %78 {approx = true} : vector<4x16x1xf32> -> vector<4x16x1xf32>
    %80 = vector.broadcast %79 : vector<4x16x1xf32> to vector<4x16x16xf32>
    %81 = arith.mulf %76, %80 : vector<4x16x16xf32>
    %82 = vector.extract_strided_slice %39 {offsets = [0, 0, 16], sizes = [4, 16, 16], strides = [1, 1, 1]} : vector<4x16x32xf32> to vector<4x16x16xf32>
    %83 = arith.truncf %81 : vector<4x16x16xf32> to vector<4x16x16xbf16>
    %84 = arith.truncf %82 : vector<4x16x16xf32> to vector<4x16x16xbf16>
    %cst_27 = arith.constant dense<0.000000e+00> : vector<4x16x16xf32>
    %85 = tpu.matmul %83, %84, %cst_27 {dimension_numbers = #tpu.dot_dimension_numbers<[2], [1], [1], [2], [0, 0, 0, 1, 1, 2], [0], [0]>} : vector<4x16x16xbf16>, vector<4x16x16xbf16>, vector<4x16x16xf32> -> vector<4x16x16xf32>
    %86 = tpu.concatenate %63, %85 in 2 : vector<4x16x16xf32>, vector<4x16x16xf32> -> vector<4x16x32xf32>
    %87 = vector.shape_cast %86 : vector<4x16x32xf32> to vector<64x32xf32>
    %c0_28 = arith.constant 0 : index
    %c0_29 = arith.constant 0 : index
    %88 = vector.load %arg8[%c0_28, %c0_29] : memref<32x32xbf16, #tpu.memory_space<vmem>>, vector<32x32xbf16>
    %89 = arith.truncf %87 : vector<64x32xf32> to vector<64x32xbf16>
    %cst_30 = arith.constant dense<0.000000e+00> : vector<64x32xf32>
    %90 = tpu.matmul %89, %88, %cst_30 {dimension_numbers = #tpu.dot_dimension_numbers<[1], [0], [0], [1], [0, 0, 1, 1], [], []>} : vector<64x32xbf16>, vector<32x32xbf16>, vector<64x32xf32> -> vector<64x32xf32>
    %91 = arith.addf %1, %90 : vector<64x32xf32>
    %c0_31 = arith.constant 0 : index
    %c0_32 = arith.constant 0 : index
    %92 = vector.load %arg9[%c0_31, %c0_32] : memref<1x32xf32, #tpu.memory_space<vmem>>, vector<1x32xf32>
    %93 = vector.broadcast %92 : vector<1x32xf32> to vector<64x32xf32>
    %94 = arith.addf %91, %93 : vector<64x32xf32>
    %c0_33 = arith.constant 0 : index
    %c0_34 = arith.constant 0 : index
    %95 = vector.load %arg10[%c0_33, %c0_34] : memref<1x32xf32, #tpu.memory_space<vmem>>, vector<1x32xf32>
    %c0_35 = arith.constant 0 : index
    %c0_36 = arith.constant 0 : index
    %96 = vector.load %arg11[%c0_35, %c0_36] : memref<1x32xf32, #tpu.memory_space<vmem>>, vector<1x32xf32>
    %cst_37 = arith.constant dense<0.000000e+00> : vector<64xf32>
    %97 = vector.multi_reduction <add>, %94, %cst_37 [1] : vector<64x32xf32> to vector<64xf32>
    %98 = vector.shape_cast %97 : vector<64xf32> to vector<64x1xf32>
    %cst_38 = arith.constant 3.200000e+01 : f32
    %99 = vector.broadcast %cst_38 : f32 to vector<64x1xf32>
    %100 = arith.divf %98, %99 : vector<64x1xf32>
    %101 = vector.broadcast %100 : vector<64x1xf32> to vector<64x32xf32>
    %102 = arith.subf %94, %101 : vector<64x32xf32>
    %103 = arith.mulf %102, %102 : vector<64x32xf32>
    %cst_39 = arith.constant dense<0.000000e+00> : vector<64xf32>
    %104 = vector.multi_reduction <add>, %103, %cst_39 [1] : vector<64x32xf32> to vector<64xf32>
    %105 = vector.shape_cast %104 : vector<64xf32> to vector<64x1xf32>
    %cst_40 = arith.constant 3.200000e+01 : f32
    %106 = vector.broadcast %cst_40 : f32 to vector<64x1xf32>
    %107 = arith.divf %105, %106 : vector<64x1xf32>
    %108 = vector.broadcast %100 : vector<64x1xf32> to vector<64x32xf32>
    %109 = arith.subf %94, %108 : vector<64x32xf32>
    %cst_41 = arith.constant 9.99999974E-6 : f32
    %110 = vector.broadcast %cst_41 : f32 to vector<64x1xf32>
    %111 = arith.addf %107, %110 : vector<64x1xf32>
    %112 = math.rsqrt %111 : vector<64x1xf32>
    %113 = vector.broadcast %112 : vector<64x1xf32> to vector<64x32xf32>
    %114 = arith.mulf %109, %113 : vector<64x32xf32>
    %115 = vector.broadcast %95 : vector<1x32xf32> to vector<64x32xf32>
    %116 = arith.mulf %114, %115 : vector<64x32xf32>
    %117 = vector.broadcast %96 : vector<1x32xf32> to vector<64x32xf32>
    %118 = arith.addf %116, %117 : vector<64x32xf32>
    %c0_42 = arith.constant 0 : index
    %c0_43 = arith.constant 0 : index
    %119 = vector.load %arg12[%c0_42, %c0_43] : memref<32x128xbf16, #tpu.memory_space<vmem>>, vector<32x128xbf16>
    %120 = arith.truncf %118 : vector<64x32xf32> to vector<64x32xbf16>
    %cst_44 = arith.constant dense<0.000000e+00> : vector<64x128xf32>
    %121 = tpu.matmul %120, %119, %cst_44 {dimension_numbers = #tpu.dot_dimension_numbers<[1], [0], [0], [1], [0, 0, 1, 1], [], []>} : vector<64x32xbf16>, vector<32x128xbf16>, vector<64x128xf32> -> vector<64x128xf32>
    %c0_45 = arith.constant 0 : index
    %c0_46 = arith.constant 0 : index
    %122 = vector.load %arg13[%c0_45, %c0_46] : memref<1x128xf32, #tpu.memory_space<vmem>>, vector<1x128xf32>
    %123 = vector.broadcast %122 : vector<1x128xf32> to vector<64x128xf32>
    %124 = arith.addf %121, %123 : vector<64x128xf32>
    %cst_47 = arith.constant 5.000000e-01 : f32
    %125 = vector.broadcast %cst_47 : f32 to vector<64x128xf32>
    %126 = arith.mulf %125, %124 : vector<64x128xf32>
    %cst_48 = arith.constant 4.471500e-02 : f32
    %127 = vector.broadcast %cst_48 : f32 to vector<64x128xf32>
    %128 = arith.mulf %127, %124 : vector<64x128xf32>
    %129 = arith.mulf %128, %124 : vector<64x128xf32>
    %130 = arith.mulf %129, %124 : vector<64x128xf32>
    %131 = arith.addf %124, %130 : vector<64x128xf32>
    %cst_49 = arith.constant 0.797884583 : f32
    %132 = vector.broadcast %cst_49 : f32 to vector<64x128xf32>
    %133 = arith.mulf %132, %131 : vector<64x128xf32>
    %134 = math.tanh %133 : vector<64x128xf32>
    %cst_50 = arith.constant 1.000000e+00 : f32
    %135 = vector.broadcast %cst_50 : f32 to vector<64x128xf32>
    %136 = arith.addf %135, %134 : vector<64x128xf32>
    %137 = arith.mulf %126, %136 : vector<64x128xf32>
    %c0_51 = arith.constant 0 : index
    %c0_52 = arith.constant 0 : index
    %138 = vector.load %arg14[%c0_51, %c0_52] : memref<128x32xbf16, #tpu.memory_space<vmem>>, vector<128x32xbf16>
    %139 = arith.truncf %137 : vector<64x128xf32> to vector<64x128xbf16>
    %cst_53 = arith.constant dense<0.000000e+00> : vector<64x32xf32>
    %140 = tpu.matmul %139, %138, %cst_53 {dimension_numbers = #tpu.dot_dimension_numbers<[1], [0], [0], [1], [0, 0, 1, 1], [], []>} : vector<64x128xbf16>, vector<128x32xbf16>, vector<64x32xf32> -> vector<64x32xf32>
    %c0_54 = arith.constant 0 : index
    %c0_55 = arith.constant 0 : index
    %141 = vector.load %arg15[%c0_54, %c0_55] : memref<1x32xf32, #tpu.memory_space<vmem>>, vector<1x32xf32>
    %142 = vector.broadcast %141 : vector<1x32xf32> to vector<64x32xf32>
    %143 = arith.addf %140, %142 : vector<64x32xf32>
    %144 = arith.addf %94, %143 : vector<64x32xf32>
    %c0_56 = arith.constant 0 : index
    %c0_57 = arith.constant 0 : index
    %c0_58 = arith.constant 0 : index
    %145 = vector.load %arg16[%c0_56, %c0_57, %c0_58] : memref<1x64x32xf32, #tpu.memory_space<vmem>>, vector<1x64x32xf32>
    %146 = vector.shape_cast %145 : vector<1x64x32xf32> to vector<64x32xf32>
    %147 = vector.shape_cast %144 : vector<64x32xf32> to vector<1x64x32xf32>
    tpu.vector_store %arg16[%c0_56, %c0_57, %c0_58], %147 {strides = array<i32>} : memref<1x64x32xf32, #tpu.memory_space<vmem>>, vector<1x64x32xf32>,
    return
  }
  func.func @transform_0(%arg0: i32, %arg1: i32) -> (i32, i32, i32) {
    %c0_i32 = arith.constant 0 : i32
    %c0_i32_0 = arith.constant 0 : i32
    return %arg0, %arg1, %c0_i32 : i32, i32, i32
  }
  func.func @transform_1(%arg0: i32, %arg1: i32) -> (i32, i32, i32, i32) {
    %c0_i32 = arith.constant 0 : i32
    %c0_i32_0 = arith.constant 0 : i32
    %c0_i32_1 = arith.constant 0 : i32
    %c0_i32_2 = arith.constant 0 : i32
    return %c0_i32, %arg1, %c0_i32_0, %c0_i32_1 : i32, i32, i32, i32
  }
  func.func @transform_2(%arg0: i32, %arg1: i32) -> (i32, i32) {
    %c0_i32 = arith.constant 0 : i32
    %c0_i32_0 = arith.constant 0 : i32
    %c0_i32_1 = arith.constant 0 : i32
    return %c0_i32, %c0_i32_0 : i32, i32
  }
  func.func @transform_3(%arg0: i32, %arg1: i32) -> (i32, i32) {
    %c0_i32 = arith.constant 0 : i32
    %c0_i32_0 = arith.constant 0 : i32
    %c0_i32_1 = arith.constant 0 : i32
    return %c0_i32, %c0_i32_0 : i32, i32
  }
  func.func @transform_4(%arg0: i32, %arg1: i32) -> (i32, i32) {
    %c0_i32 = arith.constant 0 : i32
    %c0_i32_0 = arith.constant 0 : i32
    %c0_i32_1 = arith.constant 0 : i32
    return %c0_i32, %c0_i32_0 : i32, i32
  }
  func.func @transform_5(%arg0: i32, %arg1: i32) -> (i32, i32) {
    %c0_i32 = arith.constant 0 : i32
    %c0_i32_0 = arith.constant 0 : i32
    %c0_i32_1 = arith.constant 0 : i32
    return %c0_i32, %c0_i32_0 : i32, i32
  }
  func.func @transform_6(%arg0: i32, %arg1: i32) -> (i32, i32) {
    %c0_i32 = arith.constant 0 : i32
    %c0_i32_0 = arith.constant 0 : i32
    %c0_i32_1 = arith.constant 0 : i32
    return %c0_i32, %c0_i32_0 : i32, i32
  }
  func.func @transform_7(%arg0: i32, %arg1: i32) -> (i32, i32) {
    %c0_i32 = arith.constant 0 : i32
    %c0_i32_0 = arith.constant 0 : i32
    %c0_i32_1 = arith.constant 0 : i32
    return %c0_i32, %c0_i32_0 : i32, i32
  }
  func.func @transform_8(%arg0: i32, %arg1: i32) -> (i32, i32) {
    %c0_i32 = arith.constant 0 : i32
    %c0_i32_0 = arith.constant 0 : i32
    %c0_i32_1 = arith.constant 0 : i32
    return %c0_i32, %c0_i32_0 : i32, i32
  }
  func.func @transform_9(%arg0: i32, %arg1: i32) -> (i32, i32) {
    %c0_i32 = arith.constant 0 : i32
    %c0_i32_0 = arith.constant 0 : i32
    %c0_i32_1 = arith.constant 0 : i32
    return %c0_i32, %c0_i32_0 : i32, i32
  }
  func.func @transform_10(%arg0: i32, %arg1: i32) -> (i32, i32) {
    %c0_i32 = arith.constant 0 : i32
    %c0_i32_0 = arith.constant 0 : i32
    %c0_i32_1 = arith.constant 0 : i32
    return %c0_i32, %c0_i32_0 : i32, i32
  }
  func.func @transform_11(%arg0: i32, %arg1: i32) -> (i32, i32) {
    %c0_i32 = arith.constant 0 : i32
    %c0_i32_0 = arith.constant 0 : i32
    %c0_i32_1 = arith.constant 0 : i32
    return %c0_i32, %c0_i32_0 : i32, i32
  }
  func.func @transform_12(%arg0: i32, %arg1: i32) -> (i32, i32) {
    %c0_i32 = arith.constant 0 : i32
    %c0_i32_0 = arith.constant 0 : i32
    %c0_i32_1 = arith.constant 0 : i32
    return %c0_i32, %c0_i32_0 : i32, i32
  }
  func.func @transform_13(%arg0: i32, %arg1: i32) -> (i32, i32) {
    %c0_i32 = arith.constant 0 : i32
    %c0_i32_0 = arith.constant 0 : i32
    %c0_i32_1 = arith.constant 0 : i32
    return %c0_i32, %c0_i32_0 : i32, i32
  }
  func.func @transform_14(%arg0: i32, %arg1: i32) -> (i32, i32, i32) {
    %c0_i32 = arith.constant 0 : i32
    %c0_i32_0 = arith.constant 0 : i32
    return %arg0, %arg1, %c0_i32 : i32, i32, i32
  }
}

module attributes {stable_mosaic.version = 11 : i64} {
  func.func @_ln_linear_kernel(%arg0: i32, %arg1: memref<32x128xf32, #tpu.memory_space<vmem>>, %arg2: memref<1x128xf32, #tpu.memory_space<vmem>>, %arg3: memref<1x128xf32, #tpu.memory_space<vmem>>, %arg4: memref<128x64xbf16, #tpu.memory_space<vmem>>, %arg5: memref<32x64xf32, #tpu.memory_space<vmem>>) attributes {dimension_semantics = [#tpu.dimension_semantics<parallel>], iteration_bounds = array<i64: 1>, scalar_prefetch = 0 : i64, scratch_operands = 0 : i64, tpu.core_type = #tpu.core_type<tc>, window_params = [{transform_indices = @transform_0, window_bounds = array<i64: 32, 128>}, {pipeline_mode = #tpu.pipeline_mode<synchronous>, transform_indices = @transform_1, window_bounds = array<i64: 1, 128>}, {pipeline_mode = #tpu.pipeline_mode<synchronous>, transform_indices = @transform_2, window_bounds = array<i64: 1, 128>}, {pipeline_mode = #tpu.pipeline_mode<synchronous>, transform_indices = @transform_3, window_bounds = array<i64: 128, 64>}, {transform_indices = @transform_4, window_bounds = array<i64: 32, 64>}]} {
    %c0 = arith.constant 0 : index
    %c0_0 = arith.constant 0 : index
    %0 = vector.load %arg1[%c0, %c0_0] : memref<32x128xf32, #tpu.memory_space<vmem>>, vector<32x128xf32>
    %c0_1 = arith.constant 0 : index
    %c0_2 = arith.constant 0 : index
    %1 = vector.load %arg2[%c0_1, %c0_2] : memref<1x128xf32, #tpu.memory_space<vmem>>, vector<1x128xf32>
    %c0_3 = arith.constant 0 : index
    %c0_4 = arith.constant 0 : index
    %2 = vector.load %arg3[%c0_3, %c0_4] : memref<1x128xf32, #tpu.memory_space<vmem>>, vector<1x128xf32>
    %cst = arith.constant dense<0.000000e+00> : vector<32xf32>
    %3 = vector.multi_reduction <add>, %0, %cst [1] : vector<32x128xf32> to vector<32xf32>
    %4 = vector.shape_cast %3 : vector<32xf32> to vector<32x1xf32>
    %cst_5 = arith.constant 1.280000e+02 : f32
    %5 = vector.broadcast %cst_5 : f32 to vector<32x1xf32>
    %6 = arith.divf %4, %5 : vector<32x1xf32>
    %7 = vector.broadcast %6 : vector<32x1xf32> to vector<32x128xf32>
    %8 = arith.subf %0, %7 : vector<32x128xf32>
    %9 = arith.mulf %8, %8 : vector<32x128xf32>
    %cst_6 = arith.constant dense<0.000000e+00> : vector<32xf32>
    %10 = vector.multi_reduction <add>, %9, %cst_6 [1] : vector<32x128xf32> to vector<32xf32>
    %11 = vector.shape_cast %10 : vector<32xf32> to vector<32x1xf32>
    %cst_7 = arith.constant 1.280000e+02 : f32
    %12 = vector.broadcast %cst_7 : f32 to vector<32x1xf32>
    %13 = arith.divf %11, %12 : vector<32x1xf32>
    %14 = vector.broadcast %6 : vector<32x1xf32> to vector<32x128xf32>
    %15 = arith.subf %0, %14 : vector<32x128xf32>
    %cst_8 = arith.constant 9.99999974E-6 : f32
    %16 = vector.broadcast %cst_8 : f32 to vector<32x1xf32>
    %17 = arith.addf %13, %16 : vector<32x1xf32>
    %18 = math.rsqrt %17 : vector<32x1xf32>
    %19 = vector.broadcast %18 : vector<32x1xf32> to vector<32x128xf32>
    %20 = arith.mulf %15, %19 : vector<32x128xf32>
    %21 = vector.broadcast %1 : vector<1x128xf32> to vector<32x128xf32>
    %22 = arith.mulf %20, %21 : vector<32x128xf32>
    %23 = vector.broadcast %2 : vector<1x128xf32> to vector<32x128xf32>
    %24 = arith.addf %22, %23 : vector<32x128xf32>
    %c0_9 = arith.constant 0 : index
    %c0_10 = arith.constant 0 : index
    %25 = vector.load %arg4[%c0_9, %c0_10] : memref<128x64xbf16, #tpu.memory_space<vmem>>, vector<128x64xbf16>
    %26 = arith.truncf %24 : vector<32x128xf32> to vector<32x128xbf16>
    %cst_11 = arith.constant dense<0.000000e+00> : vector<32x64xf32>
    %27 = tpu.matmul %26, %25, %cst_11 {dimension_numbers = #tpu.dot_dimension_numbers<[1], [0], [0], [1], [0, 0, 1, 1], [], []>} : vector<32x128xbf16>, vector<128x64xbf16>, vector<32x64xf32> -> vector<32x64xf32>
    %c0_12 = arith.constant 0 : index
    %c0_13 = arith.constant 0 : index
    %28 = vector.load %arg5[%c0_12, %c0_13] : memref<32x64xf32, #tpu.memory_space<vmem>>, vector<32x64xf32>
    tpu.vector_store %arg5[%c0_12, %c0_13], %27 {strides = array<i32>} : memref<32x64xf32, #tpu.memory_space<vmem>>, vector<32x64xf32>,
    return
  }
  func.func @transform_0(%arg0: i32) -> (i32, i32) {
    %c0_i32 = arith.constant 0 : i32
    %c0_i32_0 = arith.constant 0 : i32
    return %arg0, %c0_i32 : i32, i32
  }
  func.func @transform_1(%arg0: i32) -> (i32, i32) {
    %c0_i32 = arith.constant 0 : i32
    %c0_i32_0 = arith.constant 0 : i32
    %c0_i32_1 = arith.constant 0 : i32
    return %c0_i32, %c0_i32_0 : i32, i32
  }
  func.func @transform_2(%arg0: i32) -> (i32, i32) {
    %c0_i32 = arith.constant 0 : i32
    %c0_i32_0 = arith.constant 0 : i32
    %c0_i32_1 = arith.constant 0 : i32
    return %c0_i32, %c0_i32_0 : i32, i32
  }
  func.func @transform_3(%arg0: i32) -> (i32, i32) {
    %c0_i32 = arith.constant 0 : i32
    %c0_i32_0 = arith.constant 0 : i32
    %c0_i32_1 = arith.constant 0 : i32
    return %c0_i32, %c0_i32_0 : i32, i32
  }
  func.func @transform_4(%arg0: i32) -> (i32, i32) {
    %c0_i32 = arith.constant 0 : i32
    %c0_i32_0 = arith.constant 0 : i32
    return %arg0, %c0_i32 : i32, i32
  }
}

module attributes {stable_mosaic.version = 11 : i64} {
  func.func @_swin_block_kernel(%arg0: i32, %arg1: i32, %arg2: memref<1x16x64xf32, #tpu.memory_space<vmem>>, %arg3: memref<4x1x16x16xbf16, #tpu.memory_space<vmem>>, %arg4: memref<1x64xf32, #tpu.memory_space<vmem>>, %arg5: memref<1x64xf32, #tpu.memory_space<vmem>>, %arg6: memref<64x192xbf16, #tpu.memory_space<vmem>>, %arg7: memref<1x192xf32, #tpu.memory_space<vmem>>, %arg8: memref<64x64xbf16, #tpu.memory_space<vmem>>, %arg9: memref<1x64xf32, #tpu.memory_space<vmem>>, %arg10: memref<1x64xf32, #tpu.memory_space<vmem>>, %arg11: memref<1x64xf32, #tpu.memory_space<vmem>>, %arg12: memref<64x256xbf16, #tpu.memory_space<vmem>>, %arg13: memref<1x256xf32, #tpu.memory_space<vmem>>, %arg14: memref<256x64xbf16, #tpu.memory_space<vmem>>, %arg15: memref<1x64xf32, #tpu.memory_space<vmem>>, %arg16: memref<1x16x64xf32, #tpu.memory_space<vmem>>) attributes {dimension_semantics = [#tpu.dimension_semantics<parallel>, #tpu.dimension_semantics<parallel>], iteration_bounds = array<i64: 2, 1>, scalar_prefetch = 0 : i64, scratch_operands = 0 : i64, tpu.core_type = #tpu.core_type<tc>, window_params = [{transform_indices = @transform_0, window_bounds = array<i64: 1, 16, 64>}, {transform_indices = @transform_1, window_bounds = array<i64: 4, 1, 16, 16>}, {pipeline_mode = #tpu.pipeline_mode<synchronous>, transform_indices = @transform_2, window_bounds = array<i64: 1, 64>}, {pipeline_mode = #tpu.pipeline_mode<synchronous>, transform_indices = @transform_3, window_bounds = array<i64: 1, 64>}, {pipeline_mode = #tpu.pipeline_mode<synchronous>, transform_indices = @transform_4, window_bounds = array<i64: 64, 192>}, {pipeline_mode = #tpu.pipeline_mode<synchronous>, transform_indices = @transform_5, window_bounds = array<i64: 1, 192>}, {pipeline_mode = #tpu.pipeline_mode<synchronous>, transform_indices = @transform_6, window_bounds = array<i64: 64, 64>}, {pipeline_mode = #tpu.pipeline_mode<synchronous>, transform_indices = @transform_7, window_bounds = array<i64: 1, 64>}, {pipeline_mode = #tpu.pipeline_mode<synchronous>, transform_indices = @transform_8, window_bounds = array<i64: 1, 64>}, {pipeline_mode = #tpu.pipeline_mode<synchronous>, transform_indices = @transform_9, window_bounds = array<i64: 1, 64>}, {pipeline_mode = #tpu.pipeline_mode<synchronous>, transform_indices = @transform_10, window_bounds = array<i64: 64, 256>}, {pipeline_mode = #tpu.pipeline_mode<synchronous>, transform_indices = @transform_11, window_bounds = array<i64: 1, 256>}, {pipeline_mode = #tpu.pipeline_mode<synchronous>, transform_indices = @transform_12, window_bounds = array<i64: 256, 64>}, {pipeline_mode = #tpu.pipeline_mode<synchronous>, transform_indices = @transform_13, window_bounds = array<i64: 1, 64>}, {transform_indices = @transform_14, window_bounds = array<i64: 1, 16, 64>}]} {
    %c0 = arith.constant 0 : index
    %c0_0 = arith.constant 0 : index
    %c0_1 = arith.constant 0 : index
    %0 = vector.load %arg2[%c0, %c0_0, %c0_1] : memref<1x16x64xf32, #tpu.memory_space<vmem>>, vector<1x16x64xf32>
    %1 = vector.shape_cast %0 : vector<1x16x64xf32> to vector<16x64xf32>
    %c0_2 = arith.constant 0 : index
    %c0_3 = arith.constant 0 : index
    %2 = vector.load %arg4[%c0_2, %c0_3] : memref<1x64xf32, #tpu.memory_space<vmem>>, vector<1x64xf32>
    %c0_4 = arith.constant 0 : index
    %c0_5 = arith.constant 0 : index
    %3 = vector.load %arg5[%c0_4, %c0_5] : memref<1x64xf32, #tpu.memory_space<vmem>>, vector<1x64xf32>
    %cst = arith.constant dense<0.000000e+00> : vector<16xf32>
    %4 = vector.multi_reduction <add>, %1, %cst [1] : vector<16x64xf32> to vector<16xf32>
    %5 = vector.shape_cast %4 : vector<16xf32> to vector<16x1xf32>
    %cst_6 = arith.constant 6.400000e+01 : f32
    %6 = vector.broadcast %cst_6 : f32 to vector<16x1xf32>
    %7 = arith.divf %5, %6 : vector<16x1xf32>
    %8 = vector.broadcast %7 : vector<16x1xf32> to vector<16x64xf32>
    %9 = arith.subf %1, %8 : vector<16x64xf32>
    %10 = arith.mulf %9, %9 : vector<16x64xf32>
    %cst_7 = arith.constant dense<0.000000e+00> : vector<16xf32>
    %11 = vector.multi_reduction <add>, %10, %cst_7 [1] : vector<16x64xf32> to vector<16xf32>
    %12 = vector.shape_cast %11 : vector<16xf32> to vector<16x1xf32>
    %cst_8 = arith.constant 6.400000e+01 : f32
    %13 = vector.broadcast %cst_8 : f32 to vector<16x1xf32>
    %14 = arith.divf %12, %13 : vector<16x1xf32>
    %15 = vector.broadcast %7 : vector<16x1xf32> to vector<16x64xf32>
    %16 = arith.subf %1, %15 : vector<16x64xf32>
    %cst_9 = arith.constant 9.99999974E-6 : f32
    %17 = vector.broadcast %cst_9 : f32 to vector<16x1xf32>
    %18 = arith.addf %14, %17 : vector<16x1xf32>
    %19 = math.rsqrt %18 : vector<16x1xf32>
    %20 = vector.broadcast %19 : vector<16x1xf32> to vector<16x64xf32>
    %21 = arith.mulf %16, %20 : vector<16x64xf32>
    %22 = vector.broadcast %2 : vector<1x64xf32> to vector<16x64xf32>
    %23 = arith.mulf %21, %22 : vector<16x64xf32>
    %24 = vector.broadcast %3 : vector<1x64xf32> to vector<16x64xf32>
    %25 = arith.addf %23, %24 : vector<16x64xf32>
    %c0_10 = arith.constant 0 : index
    %c0_11 = arith.constant 0 : index
    %26 = vector.load %arg6[%c0_10, %c0_11] : memref<64x192xbf16, #tpu.memory_space<vmem>>, vector<64x192xbf16>
    %27 = arith.truncf %25 : vector<16x64xf32> to vector<16x64xbf16>
    %cst_12 = arith.constant dense<0.000000e+00> : vector<16x192xf32>
    %28 = tpu.matmul %27, %26, %cst_12 {dimension_numbers = #tpu.dot_dimension_numbers<[1], [0], [0], [1], [0, 0, 1, 1], [], []>} : vector<16x64xbf16>, vector<64x192xbf16>, vector<16x192xf32> -> vector<16x192xf32>
    %c0_13 = arith.constant 0 : index
    %c0_14 = arith.constant 0 : index
    %29 = vector.load %arg7[%c0_13, %c0_14] : memref<1x192xf32, #tpu.memory_space<vmem>>, vector<1x192xf32>
    %30 = vector.broadcast %29 : vector<1x192xf32> to vector<16x192xf32>
    %31 = arith.addf %28, %30 : vector<16x192xf32>
    %32 = vector.extract_strided_slice %31 {offsets = [0, 0], sizes = [16, 64], strides = [1, 1]} : vector<16x192xf32> to vector<16x64xf32>
    %cst_15 = arith.constant 2.500000e-01 : f32
    %33 = vector.broadcast %cst_15 : f32 to vector<16x64xf32>
    %34 = arith.mulf %32, %33 : vector<16x64xf32>
    %35 = vector.shape_cast %34 : vector<16x64xf32> to vector<1x16x64xf32>
    %36 = vector.extract_strided_slice %31 {offsets = [0, 64], sizes = [16, 64], strides = [1, 1]} : vector<16x192xf32> to vector<16x64xf32>
    %37 = vector.shape_cast %36 : vector<16x64xf32> to vector<1x16x64xf32>
    %38 = vector.extract_strided_slice %31 {offsets = [0, 128], sizes = [16, 64], strides = [1, 1]} : vector<16x192xf32> to vector<16x64xf32>
    %39 = vector.shape_cast %38 : vector<16x64xf32> to vector<1x16x64xf32>
    %c0_16 = arith.constant 0 : index
    %c0_17 = arith.constant 0 : index
    %c0_18 = arith.constant 0 : index
    %c0_19 = arith.constant 0 : index
    %40 = vector.load %arg3[%c0_16, %c0_17, %c0_18, %c0_19] : memref<4x1x16x16xbf16, #tpu.memory_space<vmem>>, vector<4x1x16x16xbf16>
    %41 = arith.extf %40 : vector<4x1x16x16xbf16> to vector<4x1x16x16xf32>
    %42 = vector.extract_strided_slice %35 {offsets = [0, 0, 0], sizes = [1, 16, 16], strides = [1, 1, 1]} : vector<1x16x64xf32> to vector<1x16x16xf32>
    %43 = vector.extract_strided_slice %37 {offsets = [0, 0, 0], sizes = [1, 16, 16], strides = [1, 1, 1]} : vector<1x16x64xf32> to vector<1x16x16xf32>
    %44 = arith.truncf %42 : vector<1x16x16xf32> to vector<1x16x16xbf16>
    %45 = arith.truncf %43 : vector<1x16x16xf32> to vector<1x16x16xbf16>
    %cst_20 = arith.constant dense<0.000000e+00> : vector<1x16x16xf32>
    %46 = tpu.matmul %44, %45, %cst_20 {dimension_numbers = #tpu.dot_dimension_numbers<[2], [2], [1], [1], [0, 0, 0, 1, 1, 1], [0], [0]>} : vector<1x16x16xbf16>, vector<1x16x16xbf16>, vector<1x16x16xf32> -> vector<1x16x16xf32>
    %47 = vector.extract_strided_slice %41 {offsets = [0, 0, 0, 0], sizes = [1, 1, 16, 16], strides = [1, 1, 1, 1]} : vector<4x1x16x16xf32> to vector<1x1x16x16xf32>
    %48 = vector.shape_cast %47 : vector<1x1x16x16xf32> to vector<1x16x16xf32>
    %49 = arith.addf %46, %48 : vector<1x16x16xf32>
    %cst_21 = arith.constant dense<0xFF800000> : vector<1x16xf32>
    %50 = vector.multi_reduction <maximumf>, %49, %cst_21 [2] : vector<1x16x16xf32> to vector<1x16xf32>
    %51 = vector.shape_cast %50 : vector<1x16xf32> to vector<1x16x1xf32>
    %52 = vector.broadcast %51 : vector<1x16x1xf32> to vector<1x16x16xf32>
    %53 = arith.subf %49, %52 : vector<1x16x16xf32>
    %54 = math.exp %53 : vector<1x16x16xf32>
    %cst_22 = arith.constant dense<0.000000e+00> : vector<1x16xf32>
    %55 = vector.multi_reduction <add>, %54, %cst_22 [2] : vector<1x16x16xf32> to vector<1x16xf32>
    %56 = vector.shape_cast %55 : vector<1x16xf32> to vector<1x16x1xf32>
    %57 = tpu.reciprocal %56 {approx = true} : vector<1x16x1xf32> -> vector<1x16x1xf32>
    %58 = vector.broadcast %57 : vector<1x16x1xf32> to vector<1x16x16xf32>
    %59 = arith.mulf %54, %58 : vector<1x16x16xf32>
    %60 = vector.extract_strided_slice %39 {offsets = [0, 0, 0], sizes = [1, 16, 16], strides = [1, 1, 1]} : vector<1x16x64xf32> to vector<1x16x16xf32>
    %61 = arith.truncf %59 : vector<1x16x16xf32> to vector<1x16x16xbf16>
    %62 = arith.truncf %60 : vector<1x16x16xf32> to vector<1x16x16xbf16>
    %cst_23 = arith.constant dense<0.000000e+00> : vector<1x16x16xf32>
    %63 = tpu.matmul %61, %62, %cst_23 {dimension_numbers = #tpu.dot_dimension_numbers<[2], [1], [1], [2], [0, 0, 0, 1, 1, 2], [0], [0]>} : vector<1x16x16xbf16>, vector<1x16x16xbf16>, vector<1x16x16xf32> -> vector<1x16x16xf32>
    %64 = vector.extract_strided_slice %35 {offsets = [0, 0, 16], sizes = [1, 16, 16], strides = [1, 1, 1]} : vector<1x16x64xf32> to vector<1x16x16xf32>
    %65 = vector.extract_strided_slice %37 {offsets = [0, 0, 16], sizes = [1, 16, 16], strides = [1, 1, 1]} : vector<1x16x64xf32> to vector<1x16x16xf32>
    %66 = arith.truncf %64 : vector<1x16x16xf32> to vector<1x16x16xbf16>
    %67 = arith.truncf %65 : vector<1x16x16xf32> to vector<1x16x16xbf16>
    %cst_24 = arith.constant dense<0.000000e+00> : vector<1x16x16xf32>
    %68 = tpu.matmul %66, %67, %cst_24 {dimension_numbers = #tpu.dot_dimension_numbers<[2], [2], [1], [1], [0, 0, 0, 1, 1, 1], [0], [0]>} : vector<1x16x16xbf16>, vector<1x16x16xbf16>, vector<1x16x16xf32> -> vector<1x16x16xf32>
    %69 = vector.extract_strided_slice %41 {offsets = [1, 0, 0, 0], sizes = [1, 1, 16, 16], strides = [1, 1, 1, 1]} : vector<4x1x16x16xf32> to vector<1x1x16x16xf32>
    %70 = vector.shape_cast %69 : vector<1x1x16x16xf32> to vector<1x16x16xf32>
    %71 = arith.addf %68, %70 : vector<1x16x16xf32>
    %cst_25 = arith.constant dense<0xFF800000> : vector<1x16xf32>
    %72 = vector.multi_reduction <maximumf>, %71, %cst_25 [2] : vector<1x16x16xf32> to vector<1x16xf32>
    %73 = vector.shape_cast %72 : vector<1x16xf32> to vector<1x16x1xf32>
    %74 = vector.broadcast %73 : vector<1x16x1xf32> to vector<1x16x16xf32>
    %75 = arith.subf %71, %74 : vector<1x16x16xf32>
    %76 = math.exp %75 : vector<1x16x16xf32>
    %cst_26 = arith.constant dense<0.000000e+00> : vector<1x16xf32>
    %77 = vector.multi_reduction <add>, %76, %cst_26 [2] : vector<1x16x16xf32> to vector<1x16xf32>
    %78 = vector.shape_cast %77 : vector<1x16xf32> to vector<1x16x1xf32>
    %79 = tpu.reciprocal %78 {approx = true} : vector<1x16x1xf32> -> vector<1x16x1xf32>
    %80 = vector.broadcast %79 : vector<1x16x1xf32> to vector<1x16x16xf32>
    %81 = arith.mulf %76, %80 : vector<1x16x16xf32>
    %82 = vector.extract_strided_slice %39 {offsets = [0, 0, 16], sizes = [1, 16, 16], strides = [1, 1, 1]} : vector<1x16x64xf32> to vector<1x16x16xf32>
    %83 = arith.truncf %81 : vector<1x16x16xf32> to vector<1x16x16xbf16>
    %84 = arith.truncf %82 : vector<1x16x16xf32> to vector<1x16x16xbf16>
    %cst_27 = arith.constant dense<0.000000e+00> : vector<1x16x16xf32>
    %85 = tpu.matmul %83, %84, %cst_27 {dimension_numbers = #tpu.dot_dimension_numbers<[2], [1], [1], [2], [0, 0, 0, 1, 1, 2], [0], [0]>} : vector<1x16x16xbf16>, vector<1x16x16xbf16>, vector<1x16x16xf32> -> vector<1x16x16xf32>
    %86 = vector.extract_strided_slice %35 {offsets = [0, 0, 32], sizes = [1, 16, 16], strides = [1, 1, 1]} : vector<1x16x64xf32> to vector<1x16x16xf32>
    %87 = vector.extract_strided_slice %37 {offsets = [0, 0, 32], sizes = [1, 16, 16], strides = [1, 1, 1]} : vector<1x16x64xf32> to vector<1x16x16xf32>
    %88 = arith.truncf %86 : vector<1x16x16xf32> to vector<1x16x16xbf16>
    %89 = arith.truncf %87 : vector<1x16x16xf32> to vector<1x16x16xbf16>
    %cst_28 = arith.constant dense<0.000000e+00> : vector<1x16x16xf32>
    %90 = tpu.matmul %88, %89, %cst_28 {dimension_numbers = #tpu.dot_dimension_numbers<[2], [2], [1], [1], [0, 0, 0, 1, 1, 1], [0], [0]>} : vector<1x16x16xbf16>, vector<1x16x16xbf16>, vector<1x16x16xf32> -> vector<1x16x16xf32>
    %91 = vector.extract_strided_slice %41 {offsets = [2, 0, 0, 0], sizes = [1, 1, 16, 16], strides = [1, 1, 1, 1]} : vector<4x1x16x16xf32> to vector<1x1x16x16xf32>
    %92 = vector.shape_cast %91 : vector<1x1x16x16xf32> to vector<1x16x16xf32>
    %93 = arith.addf %90, %92 : vector<1x16x16xf32>
    %cst_29 = arith.constant dense<0xFF800000> : vector<1x16xf32>
    %94 = vector.multi_reduction <maximumf>, %93, %cst_29 [2] : vector<1x16x16xf32> to vector<1x16xf32>
    %95 = vector.shape_cast %94 : vector<1x16xf32> to vector<1x16x1xf32>
    %96 = vector.broadcast %95 : vector<1x16x1xf32> to vector<1x16x16xf32>
    %97 = arith.subf %93, %96 : vector<1x16x16xf32>
    %98 = math.exp %97 : vector<1x16x16xf32>
    %cst_30 = arith.constant dense<0.000000e+00> : vector<1x16xf32>
    %99 = vector.multi_reduction <add>, %98, %cst_30 [2] : vector<1x16x16xf32> to vector<1x16xf32>
    %100 = vector.shape_cast %99 : vector<1x16xf32> to vector<1x16x1xf32>
    %101 = tpu.reciprocal %100 {approx = true} : vector<1x16x1xf32> -> vector<1x16x1xf32>
    %102 = vector.broadcast %101 : vector<1x16x1xf32> to vector<1x16x16xf32>
    %103 = arith.mulf %98, %102 : vector<1x16x16xf32>
    %104 = vector.extract_strided_slice %39 {offsets = [0, 0, 32], sizes = [1, 16, 16], strides = [1, 1, 1]} : vector<1x16x64xf32> to vector<1x16x16xf32>
    %105 = arith.truncf %103 : vector<1x16x16xf32> to vector<1x16x16xbf16>
    %106 = arith.truncf %104 : vector<1x16x16xf32> to vector<1x16x16xbf16>
    %cst_31 = arith.constant dense<0.000000e+00> : vector<1x16x16xf32>
    %107 = tpu.matmul %105, %106, %cst_31 {dimension_numbers = #tpu.dot_dimension_numbers<[2], [1], [1], [2], [0, 0, 0, 1, 1, 2], [0], [0]>} : vector<1x16x16xbf16>, vector<1x16x16xbf16>, vector<1x16x16xf32> -> vector<1x16x16xf32>
    %108 = vector.extract_strided_slice %35 {offsets = [0, 0, 48], sizes = [1, 16, 16], strides = [1, 1, 1]} : vector<1x16x64xf32> to vector<1x16x16xf32>
    %109 = vector.extract_strided_slice %37 {offsets = [0, 0, 48], sizes = [1, 16, 16], strides = [1, 1, 1]} : vector<1x16x64xf32> to vector<1x16x16xf32>
    %110 = arith.truncf %108 : vector<1x16x16xf32> to vector<1x16x16xbf16>
    %111 = arith.truncf %109 : vector<1x16x16xf32> to vector<1x16x16xbf16>
    %cst_32 = arith.constant dense<0.000000e+00> : vector<1x16x16xf32>
    %112 = tpu.matmul %110, %111, %cst_32 {dimension_numbers = #tpu.dot_dimension_numbers<[2], [2], [1], [1], [0, 0, 0, 1, 1, 1], [0], [0]>} : vector<1x16x16xbf16>, vector<1x16x16xbf16>, vector<1x16x16xf32> -> vector<1x16x16xf32>
    %113 = vector.extract_strided_slice %41 {offsets = [3, 0, 0, 0], sizes = [1, 1, 16, 16], strides = [1, 1, 1, 1]} : vector<4x1x16x16xf32> to vector<1x1x16x16xf32>
    %114 = vector.shape_cast %113 : vector<1x1x16x16xf32> to vector<1x16x16xf32>
    %115 = arith.addf %112, %114 : vector<1x16x16xf32>
    %cst_33 = arith.constant dense<0xFF800000> : vector<1x16xf32>
    %116 = vector.multi_reduction <maximumf>, %115, %cst_33 [2] : vector<1x16x16xf32> to vector<1x16xf32>
    %117 = vector.shape_cast %116 : vector<1x16xf32> to vector<1x16x1xf32>
    %118 = vector.broadcast %117 : vector<1x16x1xf32> to vector<1x16x16xf32>
    %119 = arith.subf %115, %118 : vector<1x16x16xf32>
    %120 = math.exp %119 : vector<1x16x16xf32>
    %cst_34 = arith.constant dense<0.000000e+00> : vector<1x16xf32>
    %121 = vector.multi_reduction <add>, %120, %cst_34 [2] : vector<1x16x16xf32> to vector<1x16xf32>
    %122 = vector.shape_cast %121 : vector<1x16xf32> to vector<1x16x1xf32>
    %123 = tpu.reciprocal %122 {approx = true} : vector<1x16x1xf32> -> vector<1x16x1xf32>
    %124 = vector.broadcast %123 : vector<1x16x1xf32> to vector<1x16x16xf32>
    %125 = arith.mulf %120, %124 : vector<1x16x16xf32>
    %126 = vector.extract_strided_slice %39 {offsets = [0, 0, 48], sizes = [1, 16, 16], strides = [1, 1, 1]} : vector<1x16x64xf32> to vector<1x16x16xf32>
    %127 = arith.truncf %125 : vector<1x16x16xf32> to vector<1x16x16xbf16>
    %128 = arith.truncf %126 : vector<1x16x16xf32> to vector<1x16x16xbf16>
    %cst_35 = arith.constant dense<0.000000e+00> : vector<1x16x16xf32>
    %129 = tpu.matmul %127, %128, %cst_35 {dimension_numbers = #tpu.dot_dimension_numbers<[2], [1], [1], [2], [0, 0, 0, 1, 1, 2], [0], [0]>} : vector<1x16x16xbf16>, vector<1x16x16xbf16>, vector<1x16x16xf32> -> vector<1x16x16xf32>
    %130 = tpu.concatenate %63, %85, %107, %129 in 2 : vector<1x16x16xf32>, vector<1x16x16xf32>, vector<1x16x16xf32>, vector<1x16x16xf32> -> vector<1x16x64xf32>
    %131 = vector.shape_cast %130 : vector<1x16x64xf32> to vector<16x64xf32>
    %c0_36 = arith.constant 0 : index
    %c0_37 = arith.constant 0 : index
    %132 = vector.load %arg8[%c0_36, %c0_37] : memref<64x64xbf16, #tpu.memory_space<vmem>>, vector<64x64xbf16>
    %133 = arith.truncf %131 : vector<16x64xf32> to vector<16x64xbf16>
    %cst_38 = arith.constant dense<0.000000e+00> : vector<16x64xf32>
    %134 = tpu.matmul %133, %132, %cst_38 {dimension_numbers = #tpu.dot_dimension_numbers<[1], [0], [0], [1], [0, 0, 1, 1], [], []>} : vector<16x64xbf16>, vector<64x64xbf16>, vector<16x64xf32> -> vector<16x64xf32>
    %135 = arith.addf %1, %134 : vector<16x64xf32>
    %c0_39 = arith.constant 0 : index
    %c0_40 = arith.constant 0 : index
    %136 = vector.load %arg9[%c0_39, %c0_40] : memref<1x64xf32, #tpu.memory_space<vmem>>, vector<1x64xf32>
    %137 = vector.broadcast %136 : vector<1x64xf32> to vector<16x64xf32>
    %138 = arith.addf %135, %137 : vector<16x64xf32>
    %c0_41 = arith.constant 0 : index
    %c0_42 = arith.constant 0 : index
    %139 = vector.load %arg10[%c0_41, %c0_42] : memref<1x64xf32, #tpu.memory_space<vmem>>, vector<1x64xf32>
    %c0_43 = arith.constant 0 : index
    %c0_44 = arith.constant 0 : index
    %140 = vector.load %arg11[%c0_43, %c0_44] : memref<1x64xf32, #tpu.memory_space<vmem>>, vector<1x64xf32>
    %cst_45 = arith.constant dense<0.000000e+00> : vector<16xf32>
    %141 = vector.multi_reduction <add>, %138, %cst_45 [1] : vector<16x64xf32> to vector<16xf32>
    %142 = vector.shape_cast %141 : vector<16xf32> to vector<16x1xf32>
    %cst_46 = arith.constant 6.400000e+01 : f32
    %143 = vector.broadcast %cst_46 : f32 to vector<16x1xf32>
    %144 = arith.divf %142, %143 : vector<16x1xf32>
    %145 = vector.broadcast %144 : vector<16x1xf32> to vector<16x64xf32>
    %146 = arith.subf %138, %145 : vector<16x64xf32>
    %147 = arith.mulf %146, %146 : vector<16x64xf32>
    %cst_47 = arith.constant dense<0.000000e+00> : vector<16xf32>
    %148 = vector.multi_reduction <add>, %147, %cst_47 [1] : vector<16x64xf32> to vector<16xf32>
    %149 = vector.shape_cast %148 : vector<16xf32> to vector<16x1xf32>
    %cst_48 = arith.constant 6.400000e+01 : f32
    %150 = vector.broadcast %cst_48 : f32 to vector<16x1xf32>
    %151 = arith.divf %149, %150 : vector<16x1xf32>
    %152 = vector.broadcast %144 : vector<16x1xf32> to vector<16x64xf32>
    %153 = arith.subf %138, %152 : vector<16x64xf32>
    %cst_49 = arith.constant 9.99999974E-6 : f32
    %154 = vector.broadcast %cst_49 : f32 to vector<16x1xf32>
    %155 = arith.addf %151, %154 : vector<16x1xf32>
    %156 = math.rsqrt %155 : vector<16x1xf32>
    %157 = vector.broadcast %156 : vector<16x1xf32> to vector<16x64xf32>
    %158 = arith.mulf %153, %157 : vector<16x64xf32>
    %159 = vector.broadcast %139 : vector<1x64xf32> to vector<16x64xf32>
    %160 = arith.mulf %158, %159 : vector<16x64xf32>
    %161 = vector.broadcast %140 : vector<1x64xf32> to vector<16x64xf32>
    %162 = arith.addf %160, %161 : vector<16x64xf32>
    %c0_50 = arith.constant 0 : index
    %c0_51 = arith.constant 0 : index
    %163 = vector.load %arg12[%c0_50, %c0_51] : memref<64x256xbf16, #tpu.memory_space<vmem>>, vector<64x256xbf16>
    %164 = arith.truncf %162 : vector<16x64xf32> to vector<16x64xbf16>
    %cst_52 = arith.constant dense<0.000000e+00> : vector<16x256xf32>
    %165 = tpu.matmul %164, %163, %cst_52 {dimension_numbers = #tpu.dot_dimension_numbers<[1], [0], [0], [1], [0, 0, 1, 1], [], []>} : vector<16x64xbf16>, vector<64x256xbf16>, vector<16x256xf32> -> vector<16x256xf32>
    %c0_53 = arith.constant 0 : index
    %c0_54 = arith.constant 0 : index
    %166 = vector.load %arg13[%c0_53, %c0_54] : memref<1x256xf32, #tpu.memory_space<vmem>>, vector<1x256xf32>
    %167 = vector.broadcast %166 : vector<1x256xf32> to vector<16x256xf32>
    %168 = arith.addf %165, %167 : vector<16x256xf32>
    %cst_55 = arith.constant 5.000000e-01 : f32
    %169 = vector.broadcast %cst_55 : f32 to vector<16x256xf32>
    %170 = arith.mulf %169, %168 : vector<16x256xf32>
    %cst_56 = arith.constant 4.471500e-02 : f32
    %171 = vector.broadcast %cst_56 : f32 to vector<16x256xf32>
    %172 = arith.mulf %171, %168 : vector<16x256xf32>
    %173 = arith.mulf %172, %168 : vector<16x256xf32>
    %174 = arith.mulf %173, %168 : vector<16x256xf32>
    %175 = arith.addf %168, %174 : vector<16x256xf32>
    %cst_57 = arith.constant 0.797884583 : f32
    %176 = vector.broadcast %cst_57 : f32 to vector<16x256xf32>
    %177 = arith.mulf %176, %175 : vector<16x256xf32>
    %178 = math.tanh %177 : vector<16x256xf32>
    %cst_58 = arith.constant 1.000000e+00 : f32
    %179 = vector.broadcast %cst_58 : f32 to vector<16x256xf32>
    %180 = arith.addf %179, %178 : vector<16x256xf32>
    %181 = arith.mulf %170, %180 : vector<16x256xf32>
    %c0_59 = arith.constant 0 : index
    %c0_60 = arith.constant 0 : index
    %182 = vector.load %arg14[%c0_59, %c0_60] : memref<256x64xbf16, #tpu.memory_space<vmem>>, vector<256x64xbf16>
    %183 = arith.truncf %181 : vector<16x256xf32> to vector<16x256xbf16>
    %cst_61 = arith.constant dense<0.000000e+00> : vector<16x64xf32>
    %184 = tpu.matmul %183, %182, %cst_61 {dimension_numbers = #tpu.dot_dimension_numbers<[1], [0], [0], [1], [0, 0, 1, 1], [], []>} : vector<16x256xbf16>, vector<256x64xbf16>, vector<16x64xf32> -> vector<16x64xf32>
    %c0_62 = arith.constant 0 : index
    %c0_63 = arith.constant 0 : index
    %185 = vector.load %arg15[%c0_62, %c0_63] : memref<1x64xf32, #tpu.memory_space<vmem>>, vector<1x64xf32>
    %186 = vector.broadcast %185 : vector<1x64xf32> to vector<16x64xf32>
    %187 = arith.addf %184, %186 : vector<16x64xf32>
    %188 = arith.addf %138, %187 : vector<16x64xf32>
    %c0_64 = arith.constant 0 : index
    %c0_65 = arith.constant 0 : index
    %c0_66 = arith.constant 0 : index
    %189 = vector.load %arg16[%c0_64, %c0_65, %c0_66] : memref<1x16x64xf32, #tpu.memory_space<vmem>>, vector<1x16x64xf32>
    %190 = vector.shape_cast %189 : vector<1x16x64xf32> to vector<16x64xf32>
    %191 = vector.shape_cast %188 : vector<16x64xf32> to vector<1x16x64xf32>
    tpu.vector_store %arg16[%c0_64, %c0_65, %c0_66], %191 {strides = array<i32>} : memref<1x16x64xf32, #tpu.memory_space<vmem>>, vector<1x16x64xf32>,
    return
  }
  func.func @transform_0(%arg0: i32, %arg1: i32) -> (i32, i32, i32) {
    %c0_i32 = arith.constant 0 : i32
    %c0_i32_0 = arith.constant 0 : i32
    return %arg0, %arg1, %c0_i32 : i32, i32, i32
  }
  func.func @transform_1(%arg0: i32, %arg1: i32) -> (i32, i32, i32, i32) {
    %c0_i32 = arith.constant 0 : i32
    %c0_i32_0 = arith.constant 0 : i32
    %c0_i32_1 = arith.constant 0 : i32
    %c0_i32_2 = arith.constant 0 : i32
    return %c0_i32, %arg1, %c0_i32_0, %c0_i32_1 : i32, i32, i32, i32
  }
  func.func @transform_2(%arg0: i32, %arg1: i32) -> (i32, i32) {
    %c0_i32 = arith.constant 0 : i32
    %c0_i32_0 = arith.constant 0 : i32
    %c0_i32_1 = arith.constant 0 : i32
    return %c0_i32, %c0_i32_0 : i32, i32
  }
  func.func @transform_3(%arg0: i32, %arg1: i32) -> (i32, i32) {
    %c0_i32 = arith.constant 0 : i32
    %c0_i32_0 = arith.constant 0 : i32
    %c0_i32_1 = arith.constant 0 : i32
    return %c0_i32, %c0_i32_0 : i32, i32
  }
  func.func @transform_4(%arg0: i32, %arg1: i32) -> (i32, i32) {
    %c0_i32 = arith.constant 0 : i32
    %c0_i32_0 = arith.constant 0 : i32
    %c0_i32_1 = arith.constant 0 : i32
    return %c0_i32, %c0_i32_0 : i32, i32
  }
  func.func @transform_5(%arg0: i32, %arg1: i32) -> (i32, i32) {
    %c0_i32 = arith.constant 0 : i32
    %c0_i32_0 = arith.constant 0 : i32
    %c0_i32_1 = arith.constant 0 : i32
    return %c0_i32, %c0_i32_0 : i32, i32
  }
  func.func @transform_6(%arg0: i32, %arg1: i32) -> (i32, i32) {
    %c0_i32 = arith.constant 0 : i32
    %c0_i32_0 = arith.constant 0 : i32
    %c0_i32_1 = arith.constant 0 : i32
    return %c0_i32, %c0_i32_0 : i32, i32
  }
  func.func @transform_7(%arg0: i32, %arg1: i32) -> (i32, i32) {
    %c0_i32 = arith.constant 0 : i32
    %c0_i32_0 = arith.constant 0 : i32
    %c0_i32_1 = arith.constant 0 : i32
    return %c0_i32, %c0_i32_0 : i32, i32
  }
  func.func @transform_8(%arg0: i32, %arg1: i32) -> (i32, i32) {
    %c0_i32 = arith.constant 0 : i32
    %c0_i32_0 = arith.constant 0 : i32
    %c0_i32_1 = arith.constant 0 : i32
    return %c0_i32, %c0_i32_0 : i32, i32
  }
  func.func @transform_9(%arg0: i32, %arg1: i32) -> (i32, i32) {
    %c0_i32 = arith.constant 0 : i32
    %c0_i32_0 = arith.constant 0 : i32
    %c0_i32_1 = arith.constant 0 : i32
    return %c0_i32, %c0_i32_0 : i32, i32
  }
  func.func @transform_10(%arg0: i32, %arg1: i32) -> (i32, i32) {
    %c0_i32 = arith.constant 0 : i32
    %c0_i32_0 = arith.constant 0 : i32
    %c0_i32_1 = arith.constant 0 : i32
    return %c0_i32, %c0_i32_0 : i32, i32
  }
  func.func @transform_11(%arg0: i32, %arg1: i32) -> (i32, i32) {
    %c0_i32 = arith.constant 0 : i32
    %c0_i32_0 = arith.constant 0 : i32
    %c0_i32_1 = arith.constant 0 : i32
    return %c0_i32, %c0_i32_0 : i32, i32
  }
  func.func @transform_12(%arg0: i32, %arg1: i32) -> (i32, i32) {
    %c0_i32 = arith.constant 0 : i32
    %c0_i32_0 = arith.constant 0 : i32
    %c0_i32_1 = arith.constant 0 : i32
    return %c0_i32, %c0_i32_0 : i32, i32
  }
  func.func @transform_13(%arg0: i32, %arg1: i32) -> (i32, i32) {
    %c0_i32 = arith.constant 0 : i32
    %c0_i32_0 = arith.constant 0 : i32
    %c0_i32_1 = arith.constant 0 : i32
    return %c0_i32, %c0_i32_0 : i32, i32
  }
  func.func @transform_14(%arg0: i32, %arg1: i32) -> (i32, i32, i32) {
    %c0_i32 = arith.constant 0 : i32
    %c0_i32_0 = arith.constant 0 : i32
    return %arg0, %arg1, %c0_i32 : i32, i32, i32
  }
}

module attributes {stable_mosaic.version = 11 : i64} {
  func.func @_encoder_final_kernel(%arg0: i32, %arg1: memref<1x16x64xf32, #tpu.memory_space<vmem>>, %arg2: memref<1x64xf32, #tpu.memory_space<vmem>>, %arg3: memref<1x64xf32, #tpu.memory_space<vmem>>, %arg4: memref<64x32xbf16, #tpu.memory_space<vmem>>, %arg5: memref<1x32xf32, #tpu.memory_space<vmem>>, %arg6: memref<1x1x32xf32, #tpu.memory_space<vmem>>, %arg7: memref<1x16x32xf32, #tpu.memory_space<vmem>>) attributes {dimension_semantics = [#tpu.dimension_semantics<parallel>], iteration_bounds = array<i64: 2>, scalar_prefetch = 0 : i64, scratch_operands = 0 : i64, tpu.core_type = #tpu.core_type<tc>, window_params = [{transform_indices = @transform_0, window_bounds = array<i64: 1, 16, 64>}, {pipeline_mode = #tpu.pipeline_mode<synchronous>, transform_indices = @transform_1, window_bounds = array<i64: 1, 64>}, {pipeline_mode = #tpu.pipeline_mode<synchronous>, transform_indices = @transform_2, window_bounds = array<i64: 1, 64>}, {pipeline_mode = #tpu.pipeline_mode<synchronous>, transform_indices = @transform_3, window_bounds = array<i64: 64, 32>}, {pipeline_mode = #tpu.pipeline_mode<synchronous>, transform_indices = @transform_4, window_bounds = array<i64: 1, 32>}, {transform_indices = @transform_5, window_bounds = array<i64: 1, 1, 32>}, {transform_indices = @transform_6, window_bounds = array<i64: 1, 16, 32>}]} {
    %c0 = arith.constant 0 : index
    %c0_0 = arith.constant 0 : index
    %c0_1 = arith.constant 0 : index
    %0 = vector.load %arg1[%c0, %c0_0, %c0_1] : memref<1x16x64xf32, #tpu.memory_space<vmem>>, vector<1x16x64xf32>
    %1 = vector.shape_cast %0 : vector<1x16x64xf32> to vector<16x64xf32>
    %c0_2 = arith.constant 0 : index
    %c0_3 = arith.constant 0 : index
    %2 = vector.load %arg2[%c0_2, %c0_3] : memref<1x64xf32, #tpu.memory_space<vmem>>, vector<1x64xf32>
    %c0_4 = arith.constant 0 : index
    %c0_5 = arith.constant 0 : index
    %3 = vector.load %arg3[%c0_4, %c0_5] : memref<1x64xf32, #tpu.memory_space<vmem>>, vector<1x64xf32>
    %cst = arith.constant dense<0.000000e+00> : vector<16xf32>
    %4 = vector.multi_reduction <add>, %1, %cst [1] : vector<16x64xf32> to vector<16xf32>
    %5 = vector.shape_cast %4 : vector<16xf32> to vector<16x1xf32>
    %cst_6 = arith.constant 6.400000e+01 : f32
    %6 = vector.broadcast %cst_6 : f32 to vector<16x1xf32>
    %7 = arith.divf %5, %6 : vector<16x1xf32>
    %8 = vector.broadcast %7 : vector<16x1xf32> to vector<16x64xf32>
    %9 = arith.subf %1, %8 : vector<16x64xf32>
    %10 = arith.mulf %9, %9 : vector<16x64xf32>
    %cst_7 = arith.constant dense<0.000000e+00> : vector<16xf32>
    %11 = vector.multi_reduction <add>, %10, %cst_7 [1] : vector<16x64xf32> to vector<16xf32>
    %12 = vector.shape_cast %11 : vector<16xf32> to vector<16x1xf32>
    %cst_8 = arith.constant 6.400000e+01 : f32
    %13 = vector.broadcast %cst_8 : f32 to vector<16x1xf32>
    %14 = arith.divf %12, %13 : vector<16x1xf32>
    %15 = vector.broadcast %7 : vector<16x1xf32> to vector<16x64xf32>
    %16 = arith.subf %1, %15 : vector<16x64xf32>
    %cst_9 = arith.constant 9.99999974E-6 : f32
    %17 = vector.broadcast %cst_9 : f32 to vector<16x1xf32>
    %18 = arith.addf %14, %17 : vector<16x1xf32>
    %19 = math.rsqrt %18 : vector<16x1xf32>
    %20 = vector.broadcast %19 : vector<16x1xf32> to vector<16x64xf32>
    %21 = arith.mulf %16, %20 : vector<16x64xf32>
    %22 = vector.broadcast %2 : vector<1x64xf32> to vector<16x64xf32>
    %23 = arith.mulf %21, %22 : vector<16x64xf32>
    %24 = vector.broadcast %3 : vector<1x64xf32> to vector<16x64xf32>
    %25 = arith.addf %23, %24 : vector<16x64xf32>
    %c0_10 = arith.constant 0 : index
    %c0_11 = arith.constant 0 : index
    %26 = vector.load %arg4[%c0_10, %c0_11] : memref<64x32xbf16, #tpu.memory_space<vmem>>, vector<64x32xbf16>
    %27 = arith.truncf %25 : vector<16x64xf32> to vector<16x64xbf16>
    %cst_12 = arith.constant dense<0.000000e+00> : vector<16x32xf32>
    %28 = tpu.matmul %27, %26, %cst_12 {dimension_numbers = #tpu.dot_dimension_numbers<[1], [0], [0], [1], [0, 0, 1, 1], [], []>} : vector<16x64xbf16>, vector<64x32xbf16>, vector<16x32xf32> -> vector<16x32xf32>
    %c0_13 = arith.constant 0 : index
    %c0_14 = arith.constant 0 : index
    %29 = vector.load %arg5[%c0_13, %c0_14] : memref<1x32xf32, #tpu.memory_space<vmem>>, vector<1x32xf32>
    %30 = vector.broadcast %29 : vector<1x32xf32> to vector<16x32xf32>
    %31 = arith.addf %28, %30 : vector<16x32xf32>
    %cst_15 = arith.constant dense<0.000000e+00> : vector<32xf32>
    %32 = vector.multi_reduction <add>, %31, %cst_15 [0] : vector<16x32xf32> to vector<32xf32>
    %33 = vector.shape_cast %32 : vector<32xf32> to vector<1x32xf32>
    %cst_16 = arith.constant 1.600000e+01 : f32
    %34 = vector.broadcast %cst_16 : f32 to vector<1x32xf32>
    %35 = arith.divf %33, %34 : vector<1x32xf32>
    %c0_17 = arith.constant 0 : index
    %c0_18 = arith.constant 0 : index
    %c0_19 = arith.constant 0 : index
    %36 = vector.load %arg6[%c0_17, %c0_18, %c0_19] : memref<1x1x32xf32, #tpu.memory_space<vmem>>, vector<1x1x32xf32>
    %37 = vector.shape_cast %36 : vector<1x1x32xf32> to vector<1x32xf32>
    %38 = vector.shape_cast %35 : vector<1x32xf32> to vector<1x1x32xf32>
    tpu.vector_store %arg6[%c0_17, %c0_18, %c0_19], %38 {strides = array<i32>} : memref<1x1x32xf32, #tpu.memory_space<vmem>>, vector<1x1x32xf32>,
    %c0_20 = arith.constant 0 : index
    %c0_21 = arith.constant 0 : index
    %c0_22 = arith.constant 0 : index
    %39 = vector.load %arg7[%c0_20, %c0_21, %c0_22] : memref<1x16x32xf32, #tpu.memory_space<vmem>>, vector<1x16x32xf32>
    %40 = vector.shape_cast %39 : vector<1x16x32xf32> to vector<16x32xf32>
    %41 = vector.shape_cast %31 : vector<16x32xf32> to vector<1x16x32xf32>
    tpu.vector_store %arg7[%c0_20, %c0_21, %c0_22], %41 {strides = array<i32>} : memref<1x16x32xf32, #tpu.memory_space<vmem>>, vector<1x16x32xf32>,
    return
  }
  func.func @transform_0(%arg0: i32) -> (i32, i32, i32) {
    %c0_i32 = arith.constant 0 : i32
    %c0_i32_0 = arith.constant 0 : i32
    %c0_i32_1 = arith.constant 0 : i32
    return %arg0, %c0_i32, %c0_i32_0 : i32, i32, i32
  }
  func.func @transform_1(%arg0: i32) -> (i32, i32) {
    %c0_i32 = arith.constant 0 : i32
    %c0_i32_0 = arith.constant 0 : i32
    %c0_i32_1 = arith.constant 0 : i32
    return %c0_i32, %c0_i32_0 : i32, i32
  }
  func.func @transform_2(%arg0: i32) -> (i32, i32) {
    %c0_i32 = arith.constant 0 : i32
    %c0_i32_0 = arith.constant 0 : i32
    %c0_i32_1 = arith.constant 0 : i32
    return %c0_i32, %c0_i32_0 : i32, i32
  }
  func.func @transform_3(%arg0: i32) -> (i32, i32) {
    %c0_i32 = arith.constant 0 : i32
    %c0_i32_0 = arith.constant 0 : i32
    %c0_i32_1 = arith.constant 0 : i32
    return %c0_i32, %c0_i32_0 : i32, i32
  }
  func.func @transform_4(%arg0: i32) -> (i32, i32) {
    %c0_i32 = arith.constant 0 : i32
    %c0_i32_0 = arith.constant 0 : i32
    %c0_i32_1 = arith.constant 0 : i32
    return %c0_i32, %c0_i32_0 : i32, i32
  }
  func.func @transform_5(%arg0: i32) -> (i32, i32, i32) {
    %c0_i32 = arith.constant 0 : i32
    %c0_i32_0 = arith.constant 0 : i32
    %c0_i32_1 = arith.constant 0 : i32
    return %arg0, %c0_i32, %c0_i32_0 : i32, i32, i32
  }
  func.func @transform_6(%arg0: i32) -> (i32, i32, i32) {
    %c0_i32 = arith.constant 0 : i32
    %c0_i32_0 = arith.constant 0 : i32
    %c0_i32_1 = arith.constant 0 : i32
    return %arg0, %c0_i32, %c0_i32_0 : i32, i32, i32
  }
}

module attributes {stable_mosaic.version = 11 : i64} {
  func.func @_ram_head_kernel(%arg0: i32, %arg1: memref<2x32xf32, #tpu.memory_space<vmem>>, %arg2: memref<1x8x32xbf16, #tpu.memory_space<vmem>>, %arg3: memref<32x128xbf16, #tpu.memory_space<vmem>>, %arg4: memref<1x128xf32, #tpu.memory_space<vmem>>, %arg5: memref<2x128xf32, #tpu.memory_space<vmem>>) attributes {dimension_semantics = [#tpu.dimension_semantics<parallel>], iteration_bounds = array<i64: 16>, scalar_prefetch = 0 : i64, scratch_operands = 0 : i64, tpu.core_type = #tpu.core_type<tc>, window_params = [{pipeline_mode = #tpu.pipeline_mode<synchronous>, transform_indices = @transform_0, window_bounds = array<i64: 2, 32>}, {transform_indices = @transform_1, window_bounds = array<i64: 1, 8, 32>}, {pipeline_mode = #tpu.pipeline_mode<synchronous>, transform_indices = @transform_2, window_bounds = array<i64: 32, 128>}, {pipeline_mode = #tpu.pipeline_mode<synchronous>, transform_indices = @transform_3, window_bounds = array<i64: 1, 128>}, {transform_indices = @transform_4, window_bounds = array<i64: 2, 128>}]} {
    %c0 = arith.constant 0 : index
    %c0_0 = arith.constant 0 : index
    %0 = vector.load %arg1[%c0, %c0_0] : memref<2x32xf32, #tpu.memory_space<vmem>>, vector<2x32xf32>
    %1 = arith.mulf %0, %0 : vector<2x32xf32>
    %cst = arith.constant dense<0.000000e+00> : vector<2xf32>
    %2 = vector.multi_reduction <add>, %1, %cst [1] : vector<2x32xf32> to vector<2xf32>
    %3 = vector.shape_cast %2 : vector<2xf32> to vector<2x1xf32>
    %4 = math.sqrt %3 : vector<2x1xf32>
    %cst_1 = arith.constant 9.99999996E-13 : f32
    %5 = vector.broadcast %cst_1 : f32 to vector<2x1xf32>
    %6 = arith.maximumf %4, %5 : vector<2x1xf32>
    %7 = vector.broadcast %6 : vector<2x1xf32> to vector<2x32xf32>
    %8 = arith.divf %0, %7 : vector<2x32xf32>
    %c0_2 = arith.constant 0 : index
    %c0_3 = arith.constant 0 : index
    %c0_4 = arith.constant 0 : index
    %9 = vector.load %arg2[%c0_2, %c0_3, %c0_4] : memref<1x8x32xbf16, #tpu.memory_space<vmem>>, vector<1x8x32xbf16>
    %10 = vector.shape_cast %9 : vector<1x8x32xbf16> to vector<8x32xbf16>
    %11 = arith.extf %10 : vector<8x32xbf16> to vector<8x32xf32>
    %12 = arith.truncf %8 : vector<2x32xf32> to vector<2x32xbf16>
    %13 = arith.truncf %11 : vector<8x32xf32> to vector<8x32xbf16>
    %cst_5 = arith.constant dense<0.000000e+00> : vector<2x8xf32>
    %14 = tpu.matmul %12, %13, %cst_5 {dimension_numbers = #tpu.dot_dimension_numbers<[1], [1], [0], [0], [0, 0, 1, 0], [], []>} : vector<2x32xbf16>, vector<8x32xbf16>, vector<2x8xf32> -> vector<2x8xf32>
    %cst_6 = arith.constant 14.2857141 : f32
    %15 = vector.broadcast %cst_6 : f32 to vector<2x8xf32>
    %16 = arith.mulf %14, %15 : vector<2x8xf32>
    %cst_7 = arith.constant dense<0xFF800000> : vector<2xf32>
    %17 = vector.multi_reduction <maximumf>, %16, %cst_7 [1] : vector<2x8xf32> to vector<2xf32>
    %18 = vector.shape_cast %17 : vector<2xf32> to vector<2x1xf32>
    %19 = vector.broadcast %18 : vector<2x1xf32> to vector<2x8xf32>
    %20 = arith.subf %16, %19 : vector<2x8xf32>
    %21 = math.exp %20 : vector<2x8xf32>
    %cst_8 = arith.constant dense<0.000000e+00> : vector<2xf32>
    %22 = vector.multi_reduction <add>, %21, %cst_8 [1] : vector<2x8xf32> to vector<2xf32>
    %23 = vector.shape_cast %22 : vector<2xf32> to vector<2x1xf32>
    %24 = tpu.reciprocal %23 {approx = true} : vector<2x1xf32> -> vector<2x1xf32>
    %25 = vector.broadcast %24 : vector<2x1xf32> to vector<2x8xf32>
    %26 = arith.mulf %21, %25 : vector<2x8xf32>
    %27 = arith.truncf %26 : vector<2x8xf32> to vector<2x8xbf16>
    %28 = arith.truncf %11 : vector<8x32xf32> to vector<8x32xbf16>
    %cst_9 = arith.constant dense<0.000000e+00> : vector<2x32xf32>
    %29 = tpu.matmul %27, %28, %cst_9 {dimension_numbers = #tpu.dot_dimension_numbers<[1], [0], [0], [1], [0, 0, 1, 1], [], []>} : vector<2x8xbf16>, vector<8x32xbf16>, vector<2x32xf32> -> vector<2x32xf32>
    %c0_10 = arith.constant 0 : index
    %c0_11 = arith.constant 0 : index
    %30 = vector.load %arg3[%c0_10, %c0_11] : memref<32x128xbf16, #tpu.memory_space<vmem>>, vector<32x128xbf16>
    %31 = arith.truncf %29 : vector<2x32xf32> to vector<2x32xbf16>
    %cst_12 = arith.constant dense<0.000000e+00> : vector<2x128xf32>
    %32 = tpu.matmul %31, %30, %cst_12 {dimension_numbers = #tpu.dot_dimension_numbers<[1], [0], [0], [1], [0, 0, 1, 1], [], []>} : vector<2x32xbf16>, vector<32x128xbf16>, vector<2x128xf32> -> vector<2x128xf32>
    %c0_13 = arith.constant 0 : index
    %c0_14 = arith.constant 0 : index
    %33 = vector.load %arg4[%c0_13, %c0_14] : memref<1x128xf32, #tpu.memory_space<vmem>>, vector<1x128xf32>
    %34 = vector.broadcast %33 : vector<1x128xf32> to vector<2x128xf32>
    %35 = arith.addf %32, %34 : vector<2x128xf32>
    %cst_15 = arith.constant 0.000000e+00 : f32
    %36 = vector.broadcast %cst_15 : f32 to vector<2x128xf32>
    %37 = arith.maximumf %35, %36 : vector<2x128xf32>
    %c0_16 = arith.constant 0 : index
    %c0_17 = arith.constant 0 : index
    %38 = vector.load %arg5[%c0_16, %c0_17] : memref<2x128xf32, #tpu.memory_space<vmem>>, vector<2x128xf32>
    tpu.vector_store %arg5[%c0_16, %c0_17], %37 {strides = array<i32>} : memref<2x128xf32, #tpu.memory_space<vmem>>, vector<2x128xf32>,
    return
  }
  func.func @transform_0(%arg0: i32) -> (i32, i32) {
    %c0_i32 = arith.constant 0 : i32
    %c0_i32_0 = arith.constant 0 : i32
    %c0_i32_1 = arith.constant 0 : i32
    return %c0_i32, %c0_i32_0 : i32, i32
  }
  func.func @transform_1(%arg0: i32) -> (i32, i32, i32) {
    %c0_i32 = arith.constant 0 : i32
    %c0_i32_0 = arith.constant 0 : i32
    %c0_i32_1 = arith.constant 0 : i32
    return %arg0, %c0_i32, %c0_i32_0 : i32, i32, i32
  }
  func.func @transform_2(%arg0: i32) -> (i32, i32) {
    %c0_i32 = arith.constant 0 : i32
    %c0_i32_0 = arith.constant 0 : i32
    %c0_i32_1 = arith.constant 0 : i32
    return %c0_i32, %c0_i32_0 : i32, i32
  }
  func.func @transform_3(%arg0: i32) -> (i32, i32) {
    %c0_i32 = arith.constant 0 : i32
    %c0_i32_0 = arith.constant 0 : i32
    %c0_i32_1 = arith.constant 0 : i32
    return %c0_i32, %c0_i32_0 : i32, i32
  }
  func.func @transform_4(%arg0: i32) -> (i32, i32) {
    %c0_i32 = arith.constant 0 : i32
    %c0_i32_0 = arith.constant 0 : i32
    return %c0_i32, %arg0 : i32, i32
  }
}

module attributes {stable_mosaic.version = 11 : i64} {
  func.func @_decoder_layer_kernel(%arg0: i32, %arg1: memref<1x16x128xf32, #tpu.memory_space<vmem>>, %arg2: memref<1x17x32xf32, #tpu.memory_space<vmem>>, %arg3: memref<128x128xbf16, #tpu.memory_space<vmem>>, %arg4: memref<1x128xf32, #tpu.memory_space<vmem>>, %arg5: memref<32x128xbf16, #tpu.memory_space<vmem>>, %arg6: memref<1x128xf32, #tpu.memory_space<vmem>>, %arg7: memref<32x128xbf16, #tpu.memory_space<vmem>>, %arg8: memref<1x128xf32, #tpu.memory_space<vmem>>, %arg9: memref<128x128xbf16, #tpu.memory_space<vmem>>, %arg10: memref<1x128xf32, #tpu.memory_space<vmem>>, %arg11: memref<1x128xf32, #tpu.memory_space<vmem>>, %arg12: memref<1x128xf32, #tpu.memory_space<vmem>>, %arg13: memref<128x512xbf16, #tpu.memory_space<vmem>>, %arg14: memref<1x512xf32, #tpu.memory_space<vmem>>, %arg15: memref<512x128xbf16, #tpu.memory_space<vmem>>, %arg16: memref<1x128xf32, #tpu.memory_space<vmem>>, %arg17: memref<1x128xf32, #tpu.memory_space<vmem>>, %arg18: memref<1x128xf32, #tpu.memory_space<vmem>>, %arg19: memref<1x16x128xf32, #tpu.memory_space<vmem>>) attributes {dimension_semantics = [#tpu.dimension_semantics<parallel>], iteration_bounds = array<i64: 2>, scalar_prefetch = 0 : i64, scratch_operands = 0 : i64, tpu.core_type = #tpu.core_type<tc>, window_params = [{transform_indices = @transform_0, window_bounds = array<i64: 1, 16, 128>}, {transform_indices = @transform_1, window_bounds = array<i64: 1, 17, 32>}, {pipeline_mode = #tpu.pipeline_mode<synchronous>, transform_indices = @transform_2, window_bounds = array<i64: 128, 128>}, {pipeline_mode = #tpu.pipeline_mode<synchronous>, transform_indices = @transform_3, window_bounds = array<i64: 1, 128>}, {pipeline_mode = #tpu.pipeline_mode<synchronous>, transform_indices = @transform_4, window_bounds = array<i64: 32, 128>}, {pipeline_mode = #tpu.pipeline_mode<synchronous>, transform_indices = @transform_5, window_bounds = array<i64: 1, 128>}, {pipeline_mode = #tpu.pipeline_mode<synchronous>, transform_indices = @transform_6, window_bounds = array<i64: 32, 128>}, {pipeline_mode = #tpu.pipeline_mode<synchronous>, transform_indices = @transform_7, window_bounds = array<i64: 1, 128>}, {pipeline_mode = #tpu.pipeline_mode<synchronous>, transform_indices = @transform_8, window_bounds = array<i64: 128, 128>}, {pipeline_mode = #tpu.pipeline_mode<synchronous>, transform_indices = @transform_9, window_bounds = array<i64: 1, 128>}, {pipeline_mode = #tpu.pipeline_mode<synchronous>, transform_indices = @transform_10, window_bounds = array<i64: 1, 128>}, {pipeline_mode = #tpu.pipeline_mode<synchronous>, transform_indices = @transform_11, window_bounds = array<i64: 1, 128>}, {pipeline_mode = #tpu.pipeline_mode<synchronous>, transform_indices = @transform_12, window_bounds = array<i64: 128, 512>}, {pipeline_mode = #tpu.pipeline_mode<synchronous>, transform_indices = @transform_13, window_bounds = array<i64: 1, 512>}, {pipeline_mode = #tpu.pipeline_mode<synchronous>, transform_indices = @transform_14, window_bounds = array<i64: 512, 128>}, {pipeline_mode = #tpu.pipeline_mode<synchronous>, transform_indices = @transform_15, window_bounds = array<i64: 1, 128>}, {pipeline_mode = #tpu.pipeline_mode<synchronous>, transform_indices = @transform_16, window_bounds = array<i64: 1, 128>}, {pipeline_mode = #tpu.pipeline_mode<synchronous>, transform_indices = @transform_17, window_bounds = array<i64: 1, 128>}, {transform_indices = @transform_18, window_bounds = array<i64: 1, 16, 128>}]} {
    %c0 = arith.constant 0 : index
    %c0_0 = arith.constant 0 : index
    %c0_1 = arith.constant 0 : index
    %0 = vector.load %arg1[%c0, %c0_0, %c0_1] : memref<1x16x128xf32, #tpu.memory_space<vmem>>, vector<1x16x128xf32>
    %1 = vector.shape_cast %0 : vector<1x16x128xf32> to vector<16x128xf32>
    %c0_2 = arith.constant 0 : index
    %c0_3 = arith.constant 0 : index
    %c0_4 = arith.constant 0 : index
    %2 = vector.load %arg2[%c0_2, %c0_3, %c0_4] : memref<1x17x32xf32, #tpu.memory_space<vmem>>, vector<1x17x32xf32>
    %3 = vector.shape_cast %2 : vector<1x17x32xf32> to vector<17x32xf32>
    %c0_5 = arith.constant 0 : index
    %c0_6 = arith.constant 0 : index
    %4 = vector.load %arg3[%c0_5, %c0_6] : memref<128x128xbf16, #tpu.memory_space<vmem>>, vector<128x128xbf16>
    %5 = arith.truncf %1 : vector<16x128xf32> to vector<16x128xbf16>
    %cst = arith.constant dense<0.000000e+00> : vector<16x128xf32>
    %6 = tpu.matmul %5, %4, %cst {dimension_numbers = #tpu.dot_dimension_numbers<[1], [0], [0], [1], [0, 0, 1, 1], [], []>} : vector<16x128xbf16>, vector<128x128xbf16>, vector<16x128xf32> -> vector<16x128xf32>
    %c0_7 = arith.constant 0 : index
    %c0_8 = arith.constant 0 : index
    %7 = vector.load %arg4[%c0_7, %c0_8] : memref<1x128xf32, #tpu.memory_space<vmem>>, vector<1x128xf32>
    %8 = vector.broadcast %7 : vector<1x128xf32> to vector<16x128xf32>
    %9 = arith.addf %6, %8 : vector<16x128xf32>
    %c0_9 = arith.constant 0 : index
    %c0_10 = arith.constant 0 : index
    %10 = vector.load %arg5[%c0_9, %c0_10] : memref<32x128xbf16, #tpu.memory_space<vmem>>, vector<32x128xbf16>
    %11 = arith.truncf %3 : vector<17x32xf32> to vector<17x32xbf16>
    %cst_11 = arith.constant dense<0.000000e+00> : vector<17x128xf32>
    %12 = tpu.matmul %11, %10, %cst_11 {dimension_numbers = #tpu.dot_dimension_numbers<[1], [0], [0], [1], [0, 0, 1, 1], [], []>} : vector<17x32xbf16>, vector<32x128xbf16>, vector<17x128xf32> -> vector<17x128xf32>
    %c0_12 = arith.constant 0 : index
    %c0_13 = arith.constant 0 : index
    %13 = vector.load %arg6[%c0_12, %c0_13] : memref<1x128xf32, #tpu.memory_space<vmem>>, vector<1x128xf32>
    %14 = vector.broadcast %13 : vector<1x128xf32> to vector<17x128xf32>
    %15 = arith.addf %12, %14 : vector<17x128xf32>
    %c0_14 = arith.constant 0 : index
    %c0_15 = arith.constant 0 : index
    %16 = vector.load %arg7[%c0_14, %c0_15] : memref<32x128xbf16, #tpu.memory_space<vmem>>, vector<32x128xbf16>
    %17 = arith.truncf %3 : vector<17x32xf32> to vector<17x32xbf16>
    %cst_16 = arith.constant dense<0.000000e+00> : vector<17x128xf32>
    %18 = tpu.matmul %17, %16, %cst_16 {dimension_numbers = #tpu.dot_dimension_numbers<[1], [0], [0], [1], [0, 0, 1, 1], [], []>} : vector<17x32xbf16>, vector<32x128xbf16>, vector<17x128xf32> -> vector<17x128xf32>
    %c0_17 = arith.constant 0 : index
    %c0_18 = arith.constant 0 : index
    %19 = vector.load %arg8[%c0_17, %c0_18] : memref<1x128xf32, #tpu.memory_space<vmem>>, vector<1x128xf32>
    %20 = vector.broadcast %19 : vector<1x128xf32> to vector<17x128xf32>
    %21 = arith.addf %18, %20 : vector<17x128xf32>
    %22 = vector.extract_strided_slice %9 {offsets = [0, 0], sizes = [16, 32], strides = [1, 1]} : vector<16x128xf32> to vector<16x32xf32>
    %cst_19 = arith.constant 0.176776692 : f32
    %23 = vector.broadcast %cst_19 : f32 to vector<16x32xf32>
    %24 = arith.mulf %22, %23 : vector<16x32xf32>
    %25 = vector.extract_strided_slice %15 {offsets = [0, 0], sizes = [17, 32], strides = [1, 1]} : vector<17x128xf32> to vector<17x32xf32>
    %26 = arith.truncf %24 : vector<16x32xf32> to vector<16x32xbf16>
    %27 = arith.truncf %25 : vector<17x32xf32> to vector<17x32xbf16>
    %cst_20 = arith.constant dense<0.000000e+00> : vector<16x17xf32>
    %28 = tpu.matmul %26, %27, %cst_20 {dimension_numbers = #tpu.dot_dimension_numbers<[1], [1], [0], [0], [0, 0, 1, 0], [], []>} : vector<16x32xbf16>, vector<17x32xbf16>, vector<16x17xf32> -> vector<16x17xf32>
    %cst_21 = arith.constant dense<0xFF800000> : vector<16xf32>
    %29 = vector.multi_reduction <maximumf>, %28, %cst_21 [1] : vector<16x17xf32> to vector<16xf32>
    %30 = vector.shape_cast %29 : vector<16xf32> to vector<16x1xf32>
    %31 = vector.broadcast %30 : vector<16x1xf32> to vector<16x17xf32>
    %32 = arith.subf %28, %31 : vector<16x17xf32>
    %33 = math.exp %32 : vector<16x17xf32>
    %cst_22 = arith.constant dense<0.000000e+00> : vector<16xf32>
    %34 = vector.multi_reduction <add>, %33, %cst_22 [1] : vector<16x17xf32> to vector<16xf32>
    %35 = vector.shape_cast %34 : vector<16xf32> to vector<16x1xf32>
    %36 = tpu.reciprocal %35 {approx = true} : vector<16x1xf32> -> vector<16x1xf32>
    %37 = vector.broadcast %36 : vector<16x1xf32> to vector<16x17xf32>
    %38 = arith.mulf %33, %37 : vector<16x17xf32>
    %39 = vector.extract_strided_slice %21 {offsets = [0, 0], sizes = [17, 32], strides = [1, 1]} : vector<17x128xf32> to vector<17x32xf32>
    %40 = arith.truncf %38 : vector<16x17xf32> to vector<16x17xbf16>
    %41 = arith.truncf %39 : vector<17x32xf32> to vector<17x32xbf16>
    %cst_23 = arith.constant dense<0.000000e+00> : vector<16x32xf32>
    %42 = tpu.matmul %40, %41, %cst_23 {dimension_numbers = #tpu.dot_dimension_numbers<[1], [0], [0], [1], [0, 0, 1, 1], [], []>} : vector<16x17xbf16>, vector<17x32xbf16>, vector<16x32xf32> -> vector<16x32xf32>
    %43 = vector.extract_strided_slice %9 {offsets = [0, 32], sizes = [16, 32], strides = [1, 1]} : vector<16x128xf32> to vector<16x32xf32>
    %cst_24 = arith.constant 0.176776692 : f32
    %44 = vector.broadcast %cst_24 : f32 to vector<16x32xf32>
    %45 = arith.mulf %43, %44 : vector<16x32xf32>
    %46 = vector.extract_strided_slice %15 {offsets = [0, 32], sizes = [17, 32], strides = [1, 1]} : vector<17x128xf32> to vector<17x32xf32>
    %47 = arith.truncf %45 : vector<16x32xf32> to vector<16x32xbf16>
    %48 = arith.truncf %46 : vector<17x32xf32> to vector<17x32xbf16>
    %cst_25 = arith.constant dense<0.000000e+00> : vector<16x17xf32>
    %49 = tpu.matmul %47, %48, %cst_25 {dimension_numbers = #tpu.dot_dimension_numbers<[1], [1], [0], [0], [0, 0, 1, 0], [], []>} : vector<16x32xbf16>, vector<17x32xbf16>, vector<16x17xf32> -> vector<16x17xf32>
    %cst_26 = arith.constant dense<0xFF800000> : vector<16xf32>
    %50 = vector.multi_reduction <maximumf>, %49, %cst_26 [1] : vector<16x17xf32> to vector<16xf32>
    %51 = vector.shape_cast %50 : vector<16xf32> to vector<16x1xf32>
    %52 = vector.broadcast %51 : vector<16x1xf32> to vector<16x17xf32>
    %53 = arith.subf %49, %52 : vector<16x17xf32>
    %54 = math.exp %53 : vector<16x17xf32>
    %cst_27 = arith.constant dense<0.000000e+00> : vector<16xf32>
    %55 = vector.multi_reduction <add>, %54, %cst_27 [1] : vector<16x17xf32> to vector<16xf32>
    %56 = vector.shape_cast %55 : vector<16xf32> to vector<16x1xf32>
    %57 = tpu.reciprocal %56 {approx = true} : vector<16x1xf32> -> vector<16x1xf32>
    %58 = vector.broadcast %57 : vector<16x1xf32> to vector<16x17xf32>
    %59 = arith.mulf %54, %58 : vector<16x17xf32>
    %60 = vector.extract_strided_slice %21 {offsets = [0, 32], sizes = [17, 32], strides = [1, 1]} : vector<17x128xf32> to vector<17x32xf32>
    %61 = arith.truncf %59 : vector<16x17xf32> to vector<16x17xbf16>
    %62 = arith.truncf %60 : vector<17x32xf32> to vector<17x32xbf16>
    %cst_28 = arith.constant dense<0.000000e+00> : vector<16x32xf32>
    %63 = tpu.matmul %61, %62, %cst_28 {dimension_numbers = #tpu.dot_dimension_numbers<[1], [0], [0], [1], [0, 0, 1, 1], [], []>} : vector<16x17xbf16>, vector<17x32xbf16>, vector<16x32xf32> -> vector<16x32xf32>
    %64 = vector.extract_strided_slice %9 {offsets = [0, 64], sizes = [16, 32], strides = [1, 1]} : vector<16x128xf32> to vector<16x32xf32>
    %cst_29 = arith.constant 0.176776692 : f32
    %65 = vector.broadcast %cst_29 : f32 to vector<16x32xf32>
    %66 = arith.mulf %64, %65 : vector<16x32xf32>
    %67 = vector.extract_strided_slice %15 {offsets = [0, 64], sizes = [17, 32], strides = [1, 1]} : vector<17x128xf32> to vector<17x32xf32>
    %68 = arith.truncf %66 : vector<16x32xf32> to vector<16x32xbf16>
    %69 = arith.truncf %67 : vector<17x32xf32> to vector<17x32xbf16>
    %cst_30 = arith.constant dense<0.000000e+00> : vector<16x17xf32>
    %70 = tpu.matmul %68, %69, %cst_30 {dimension_numbers = #tpu.dot_dimension_numbers<[1], [1], [0], [0], [0, 0, 1, 0], [], []>} : vector<16x32xbf16>, vector<17x32xbf16>, vector<16x17xf32> -> vector<16x17xf32>
    %cst_31 = arith.constant dense<0xFF800000> : vector<16xf32>
    %71 = vector.multi_reduction <maximumf>, %70, %cst_31 [1] : vector<16x17xf32> to vector<16xf32>
    %72 = vector.shape_cast %71 : vector<16xf32> to vector<16x1xf32>
    %73 = vector.broadcast %72 : vector<16x1xf32> to vector<16x17xf32>
    %74 = arith.subf %70, %73 : vector<16x17xf32>
    %75 = math.exp %74 : vector<16x17xf32>
    %cst_32 = arith.constant dense<0.000000e+00> : vector<16xf32>
    %76 = vector.multi_reduction <add>, %75, %cst_32 [1] : vector<16x17xf32> to vector<16xf32>
    %77 = vector.shape_cast %76 : vector<16xf32> to vector<16x1xf32>
    %78 = tpu.reciprocal %77 {approx = true} : vector<16x1xf32> -> vector<16x1xf32>
    %79 = vector.broadcast %78 : vector<16x1xf32> to vector<16x17xf32>
    %80 = arith.mulf %75, %79 : vector<16x17xf32>
    %81 = vector.extract_strided_slice %21 {offsets = [0, 64], sizes = [17, 32], strides = [1, 1]} : vector<17x128xf32> to vector<17x32xf32>
    %82 = arith.truncf %80 : vector<16x17xf32> to vector<16x17xbf16>
    %83 = arith.truncf %81 : vector<17x32xf32> to vector<17x32xbf16>
    %cst_33 = arith.constant dense<0.000000e+00> : vector<16x32xf32>
    %84 = tpu.matmul %82, %83, %cst_33 {dimension_numbers = #tpu.dot_dimension_numbers<[1], [0], [0], [1], [0, 0, 1, 1], [], []>} : vector<16x17xbf16>, vector<17x32xbf16>, vector<16x32xf32> -> vector<16x32xf32>
    %85 = vector.extract_strided_slice %9 {offsets = [0, 96], sizes = [16, 32], strides = [1, 1]} : vector<16x128xf32> to vector<16x32xf32>
    %cst_34 = arith.constant 0.176776692 : f32
    %86 = vector.broadcast %cst_34 : f32 to vector<16x32xf32>
    %87 = arith.mulf %85, %86 : vector<16x32xf32>
    %88 = vector.extract_strided_slice %15 {offsets = [0, 96], sizes = [17, 32], strides = [1, 1]} : vector<17x128xf32> to vector<17x32xf32>
    %89 = arith.truncf %87 : vector<16x32xf32> to vector<16x32xbf16>
    %90 = arith.truncf %88 : vector<17x32xf32> to vector<17x32xbf16>
    %cst_35 = arith.constant dense<0.000000e+00> : vector<16x17xf32>
    %91 = tpu.matmul %89, %90, %cst_35 {dimension_numbers = #tpu.dot_dimension_numbers<[1], [1], [0], [0], [0, 0, 1, 0], [], []>} : vector<16x32xbf16>, vector<17x32xbf16>, vector<16x17xf32> -> vector<16x17xf32>
    %cst_36 = arith.constant dense<0xFF800000> : vector<16xf32>
    %92 = vector.multi_reduction <maximumf>, %91, %cst_36 [1] : vector<16x17xf32> to vector<16xf32>
    %93 = vector.shape_cast %92 : vector<16xf32> to vector<16x1xf32>
    %94 = vector.broadcast %93 : vector<16x1xf32> to vector<16x17xf32>
    %95 = arith.subf %91, %94 : vector<16x17xf32>
    %96 = math.exp %95 : vector<16x17xf32>
    %cst_37 = arith.constant dense<0.000000e+00> : vector<16xf32>
    %97 = vector.multi_reduction <add>, %96, %cst_37 [1] : vector<16x17xf32> to vector<16xf32>
    %98 = vector.shape_cast %97 : vector<16xf32> to vector<16x1xf32>
    %99 = tpu.reciprocal %98 {approx = true} : vector<16x1xf32> -> vector<16x1xf32>
    %100 = vector.broadcast %99 : vector<16x1xf32> to vector<16x17xf32>
    %101 = arith.mulf %96, %100 : vector<16x17xf32>
    %102 = vector.extract_strided_slice %21 {offsets = [0, 96], sizes = [17, 32], strides = [1, 1]} : vector<17x128xf32> to vector<17x32xf32>
    %103 = arith.truncf %101 : vector<16x17xf32> to vector<16x17xbf16>
    %104 = arith.truncf %102 : vector<17x32xf32> to vector<17x32xbf16>
    %cst_38 = arith.constant dense<0.000000e+00> : vector<16x32xf32>
    %105 = tpu.matmul %103, %104, %cst_38 {dimension_numbers = #tpu.dot_dimension_numbers<[1], [0], [0], [1], [0, 0, 1, 1], [], []>} : vector<16x17xbf16>, vector<17x32xbf16>, vector<16x32xf32> -> vector<16x32xf32>
    %106 = tpu.concatenate %42, %63, %84, %105 in 1 : vector<16x32xf32>, vector<16x32xf32>, vector<16x32xf32>, vector<16x32xf32> -> vector<16x128xf32>
    %c0_39 = arith.constant 0 : index
    %c0_40 = arith.constant 0 : index
    %107 = vector.load %arg9[%c0_39, %c0_40] : memref<128x128xbf16, #tpu.memory_space<vmem>>, vector<128x128xbf16>
    %108 = arith.truncf %106 : vector<16x128xf32> to vector<16x128xbf16>
    %cst_41 = arith.constant dense<0.000000e+00> : vector<16x128xf32>
    %109 = tpu.matmul %108, %107, %cst_41 {dimension_numbers = #tpu.dot_dimension_numbers<[1], [0], [0], [1], [0, 0, 1, 1], [], []>} : vector<16x128xbf16>, vector<128x128xbf16>, vector<16x128xf32> -> vector<16x128xf32>
    %c0_42 = arith.constant 0 : index
    %c0_43 = arith.constant 0 : index
    %110 = vector.load %arg10[%c0_42, %c0_43] : memref<1x128xf32, #tpu.memory_space<vmem>>, vector<1x128xf32>
    %111 = vector.broadcast %110 : vector<1x128xf32> to vector<16x128xf32>
    %112 = arith.addf %109, %111 : vector<16x128xf32>
    %113 = arith.addf %112, %1 : vector<16x128xf32>
    %c0_44 = arith.constant 0 : index
    %c0_45 = arith.constant 0 : index
    %114 = vector.load %arg11[%c0_44, %c0_45] : memref<1x128xf32, #tpu.memory_space<vmem>>, vector<1x128xf32>
    %c0_46 = arith.constant 0 : index
    %c0_47 = arith.constant 0 : index
    %115 = vector.load %arg12[%c0_46, %c0_47] : memref<1x128xf32, #tpu.memory_space<vmem>>, vector<1x128xf32>
    %cst_48 = arith.constant dense<0.000000e+00> : vector<16xf32>
    %116 = vector.multi_reduction <add>, %113, %cst_48 [1] : vector<16x128xf32> to vector<16xf32>
    %117 = vector.shape_cast %116 : vector<16xf32> to vector<16x1xf32>
    %cst_49 = arith.constant 1.280000e+02 : f32
    %118 = vector.broadcast %cst_49 : f32 to vector<16x1xf32>
    %119 = arith.divf %117, %118 : vector<16x1xf32>
    %120 = vector.broadcast %119 : vector<16x1xf32> to vector<16x128xf32>
    %121 = arith.subf %113, %120 : vector<16x128xf32>
    %122 = arith.mulf %121, %121 : vector<16x128xf32>
    %cst_50 = arith.constant dense<0.000000e+00> : vector<16xf32>
    %123 = vector.multi_reduction <add>, %122, %cst_50 [1] : vector<16x128xf32> to vector<16xf32>
    %124 = vector.shape_cast %123 : vector<16xf32> to vector<16x1xf32>
    %cst_51 = arith.constant 1.280000e+02 : f32
    %125 = vector.broadcast %cst_51 : f32 to vector<16x1xf32>
    %126 = arith.divf %124, %125 : vector<16x1xf32>
    %127 = vector.broadcast %119 : vector<16x1xf32> to vector<16x128xf32>
    %128 = arith.subf %113, %127 : vector<16x128xf32>
    %cst_52 = arith.constant 9.99999996E-13 : f32
    %129 = vector.broadcast %cst_52 : f32 to vector<16x1xf32>
    %130 = arith.addf %126, %129 : vector<16x1xf32>
    %131 = math.rsqrt %130 : vector<16x1xf32>
    %132 = vector.broadcast %131 : vector<16x1xf32> to vector<16x128xf32>
    %133 = arith.mulf %128, %132 : vector<16x128xf32>
    %134 = vector.broadcast %114 : vector<1x128xf32> to vector<16x128xf32>
    %135 = arith.mulf %133, %134 : vector<16x128xf32>
    %136 = vector.broadcast %115 : vector<1x128xf32> to vector<16x128xf32>
    %137 = arith.addf %135, %136 : vector<16x128xf32>
    %c0_53 = arith.constant 0 : index
    %c0_54 = arith.constant 0 : index
    %138 = vector.load %arg13[%c0_53, %c0_54] : memref<128x512xbf16, #tpu.memory_space<vmem>>, vector<128x512xbf16>
    %139 = arith.truncf %137 : vector<16x128xf32> to vector<16x128xbf16>
    %cst_55 = arith.constant dense<0.000000e+00> : vector<16x512xf32>
    %140 = tpu.matmul %139, %138, %cst_55 {dimension_numbers = #tpu.dot_dimension_numbers<[1], [0], [0], [1], [0, 0, 1, 1], [], []>} : vector<16x128xbf16>, vector<128x512xbf16>, vector<16x512xf32> -> vector<16x512xf32>
    %c0_56 = arith.constant 0 : index
    %c0_57 = arith.constant 0 : index
    %141 = vector.load %arg14[%c0_56, %c0_57] : memref<1x512xf32, #tpu.memory_space<vmem>>, vector<1x512xf32>
    %142 = vector.broadcast %141 : vector<1x512xf32> to vector<16x512xf32>
    %143 = arith.addf %140, %142 : vector<16x512xf32>
    %cst_58 = arith.constant 5.000000e-01 : f32
    %144 = vector.broadcast %cst_58 : f32 to vector<16x512xf32>
    %145 = arith.mulf %144, %143 : vector<16x512xf32>
    %cst_59 = arith.constant 4.471500e-02 : f32
    %146 = vector.broadcast %cst_59 : f32 to vector<16x512xf32>
    %147 = arith.mulf %146, %143 : vector<16x512xf32>
    %148 = arith.mulf %147, %143 : vector<16x512xf32>
    %149 = arith.mulf %148, %143 : vector<16x512xf32>
    %150 = arith.addf %143, %149 : vector<16x512xf32>
    %cst_60 = arith.constant 0.797884583 : f32
    %151 = vector.broadcast %cst_60 : f32 to vector<16x512xf32>
    %152 = arith.mulf %151, %150 : vector<16x512xf32>
    %153 = math.tanh %152 : vector<16x512xf32>
    %cst_61 = arith.constant 1.000000e+00 : f32
    %154 = vector.broadcast %cst_61 : f32 to vector<16x512xf32>
    %155 = arith.addf %154, %153 : vector<16x512xf32>
    %156 = arith.mulf %145, %155 : vector<16x512xf32>
    %c0_62 = arith.constant 0 : index
    %c0_63 = arith.constant 0 : index
    %157 = vector.load %arg15[%c0_62, %c0_63] : memref<512x128xbf16, #tpu.memory_space<vmem>>, vector<512x128xbf16>
    %158 = arith.truncf %156 : vector<16x512xf32> to vector<16x512xbf16>
    %cst_64 = arith.constant dense<0.000000e+00> : vector<16x128xf32>
    %159 = tpu.matmul %158, %157, %cst_64 {dimension_numbers = #tpu.dot_dimension_numbers<[1], [0], [0], [1], [0, 0, 1, 1], [], []>} : vector<16x512xbf16>, vector<512x128xbf16>, vector<16x128xf32> -> vector<16x128xf32>
    %c0_65 = arith.constant 0 : index
    %c0_66 = arith.constant 0 : index
    %160 = vector.load %arg16[%c0_65, %c0_66] : memref<1x128xf32, #tpu.memory_space<vmem>>, vector<1x128xf32>
    %161 = vector.broadcast %160 : vector<1x128xf32> to vector<16x128xf32>
    %162 = arith.addf %159, %161 : vector<16x128xf32>
    %163 = arith.addf %162, %137 : vector<16x128xf32>
    %c0_67 = arith.constant 0 : index
    %c0_68 = arith.constant 0 : index
    %164 = vector.load %arg17[%c0_67, %c0_68] : memref<1x128xf32, #tpu.memory_space<vmem>>, vector<1x128xf32>
    %c0_69 = arith.constant 0 : index
    %c0_70 = arith.constant 0 : index
    %165 = vector.load %arg18[%c0_69, %c0_70] : memref<1x128xf32, #tpu.memory_space<vmem>>, vector<1x128xf32>
    %cst_71 = arith.constant dense<0.000000e+00> : vector<16xf32>
    %166 = vector.multi_reduction <add>, %163, %cst_71 [1] : vector<16x128xf32> to vector<16xf32>
    %167 = vector.shape_cast %166 : vector<16xf32> to vector<16x1xf32>
    %cst_72 = arith.constant 1.280000e+02 : f32
    %168 = vector.broadcast %cst_72 : f32 to vector<16x1xf32>
    %169 = arith.divf %167, %168 : vector<16x1xf32>
    %170 = vector.broadcast %169 : vector<16x1xf32> to vector<16x128xf32>
    %171 = arith.subf %163, %170 : vector<16x128xf32>
    %172 = arith.mulf %171, %171 : vector<16x128xf32>
    %cst_73 = arith.constant dense<0.000000e+00> : vector<16xf32>
    %173 = vector.multi_reduction <add>, %172, %cst_73 [1] : vector<16x128xf32> to vector<16xf32>
    %174 = vector.shape_cast %173 : vector<16xf32> to vector<16x1xf32>
    %cst_74 = arith.constant 1.280000e+02 : f32
    %175 = vector.broadcast %cst_74 : f32 to vector<16x1xf32>
    %176 = arith.divf %174, %175 : vector<16x1xf32>
    %177 = vector.broadcast %169 : vector<16x1xf32> to vector<16x128xf32>
    %178 = arith.subf %163, %177 : vector<16x128xf32>
    %cst_75 = arith.constant 9.99999996E-13 : f32
    %179 = vector.broadcast %cst_75 : f32 to vector<16x1xf32>
    %180 = arith.addf %176, %179 : vector<16x1xf32>
    %181 = math.rsqrt %180 : vector<16x1xf32>
    %182 = vector.broadcast %181 : vector<16x1xf32> to vector<16x128xf32>
    %183 = arith.mulf %178, %182 : vector<16x128xf32>
    %184 = vector.broadcast %164 : vector<1x128xf32> to vector<16x128xf32>
    %185 = arith.mulf %183, %184 : vector<16x128xf32>
    %186 = vector.broadcast %165 : vector<1x128xf32> to vector<16x128xf32>
    %187 = arith.addf %185, %186 : vector<16x128xf32>
    %c0_76 = arith.constant 0 : index
    %c0_77 = arith.constant 0 : index
    %c0_78 = arith.constant 0 : index
    %188 = vector.load %arg19[%c0_76, %c0_77, %c0_78] : memref<1x16x128xf32, #tpu.memory_space<vmem>>, vector<1x16x128xf32>
    %189 = vector.shape_cast %188 : vector<1x16x128xf32> to vector<16x128xf32>
    %190 = vector.shape_cast %187 : vector<16x128xf32> to vector<1x16x128xf32>
    tpu.vector_store %arg19[%c0_76, %c0_77, %c0_78], %190 {strides = array<i32>} : memref<1x16x128xf32, #tpu.memory_space<vmem>>, vector<1x16x128xf32>,
    return
  }
  func.func @transform_0(%arg0: i32) -> (i32, i32, i32) {
    %c0_i32 = arith.constant 0 : i32
    %c0_i32_0 = arith.constant 0 : i32
    %c0_i32_1 = arith.constant 0 : i32
    return %arg0, %c0_i32, %c0_i32_0 : i32, i32, i32
  }
  func.func @transform_1(%arg0: i32) -> (i32, i32, i32) {
    %c0_i32 = arith.constant 0 : i32
    %c0_i32_0 = arith.constant 0 : i32
    %c0_i32_1 = arith.constant 0 : i32
    return %arg0, %c0_i32, %c0_i32_0 : i32, i32, i32
  }
  func.func @transform_2(%arg0: i32) -> (i32, i32) {
    %c0_i32 = arith.constant 0 : i32
    %c0_i32_0 = arith.constant 0 : i32
    %c0_i32_1 = arith.constant 0 : i32
    return %c0_i32, %c0_i32_0 : i32, i32
  }
  func.func @transform_3(%arg0: i32) -> (i32, i32) {
    %c0_i32 = arith.constant 0 : i32
    %c0_i32_0 = arith.constant 0 : i32
    %c0_i32_1 = arith.constant 0 : i32
    return %c0_i32, %c0_i32_0 : i32, i32
  }
  func.func @transform_4(%arg0: i32) -> (i32, i32) {
    %c0_i32 = arith.constant 0 : i32
    %c0_i32_0 = arith.constant 0 : i32
    %c0_i32_1 = arith.constant 0 : i32
    return %c0_i32, %c0_i32_0 : i32, i32
  }
  func.func @transform_5(%arg0: i32) -> (i32, i32) {
    %c0_i32 = arith.constant 0 : i32
    %c0_i32_0 = arith.constant 0 : i32
    %c0_i32_1 = arith.constant 0 : i32
    return %c0_i32, %c0_i32_0 : i32, i32
  }
  func.func @transform_6(%arg0: i32) -> (i32, i32) {
    %c0_i32 = arith.constant 0 : i32
    %c0_i32_0 = arith.constant 0 : i32
    %c0_i32_1 = arith.constant 0 : i32
    return %c0_i32, %c0_i32_0 : i32, i32
  }
  func.func @transform_7(%arg0: i32) -> (i32, i32) {
    %c0_i32 = arith.constant 0 : i32
    %c0_i32_0 = arith.constant 0 : i32
    %c0_i32_1 = arith.constant 0 : i32
    return %c0_i32, %c0_i32_0 : i32, i32
  }
  func.func @transform_8(%arg0: i32) -> (i32, i32) {
    %c0_i32 = arith.constant 0 : i32
    %c0_i32_0 = arith.constant 0 : i32
    %c0_i32_1 = arith.constant 0 : i32
    return %c0_i32, %c0_i32_0 : i32, i32
  }
  func.func @transform_9(%arg0: i32) -> (i32, i32) {
    %c0_i32 = arith.constant 0 : i32
    %c0_i32_0 = arith.constant 0 : i32
    %c0_i32_1 = arith.constant 0 : i32
    return %c0_i32, %c0_i32_0 : i32, i32
  }
  func.func @transform_10(%arg0: i32) -> (i32, i32) {
    %c0_i32 = arith.constant 0 : i32
    %c0_i32_0 = arith.constant 0 : i32
    %c0_i32_1 = arith.constant 0 : i32
    return %c0_i32, %c0_i32_0 : i32, i32
  }
  func.func @transform_11(%arg0: i32) -> (i32, i32) {
    %c0_i32 = arith.constant 0 : i32
    %c0_i32_0 = arith.constant 0 : i32
    %c0_i32_1 = arith.constant 0 : i32
    return %c0_i32, %c0_i32_0 : i32, i32
  }
  func.func @transform_12(%arg0: i32) -> (i32, i32) {
    %c0_i32 = arith.constant 0 : i32
    %c0_i32_0 = arith.constant 0 : i32
    %c0_i32_1 = arith.constant 0 : i32
    return %c0_i32, %c0_i32_0 : i32, i32
  }
  func.func @transform_13(%arg0: i32) -> (i32, i32) {
    %c0_i32 = arith.constant 0 : i32
    %c0_i32_0 = arith.constant 0 : i32
    %c0_i32_1 = arith.constant 0 : i32
    return %c0_i32, %c0_i32_0 : i32, i32
  }
  func.func @transform_14(%arg0: i32) -> (i32, i32) {
    %c0_i32 = arith.constant 0 : i32
    %c0_i32_0 = arith.constant 0 : i32
    %c0_i32_1 = arith.constant 0 : i32
    return %c0_i32, %c0_i32_0 : i32, i32
  }
  func.func @transform_15(%arg0: i32) -> (i32, i32) {
    %c0_i32 = arith.constant 0 : i32
    %c0_i32_0 = arith.constant 0 : i32
    %c0_i32_1 = arith.constant 0 : i32
    return %c0_i32, %c0_i32_0 : i32, i32
  }
  func.func @transform_16(%arg0: i32) -> (i32, i32) {
    %c0_i32 = arith.constant 0 : i32
    %c0_i32_0 = arith.constant 0 : i32
    %c0_i32_1 = arith.constant 0 : i32
    return %c0_i32, %c0_i32_0 : i32, i32
  }
  func.func @transform_17(%arg0: i32) -> (i32, i32) {
    %c0_i32 = arith.constant 0 : i32
    %c0_i32_0 = arith.constant 0 : i32
    %c0_i32_1 = arith.constant 0 : i32
    return %c0_i32, %c0_i32_0 : i32, i32
  }
  func.func @transform_18(%arg0: i32) -> (i32, i32, i32) {
    %c0_i32 = arith.constant 0 : i32
    %c0_i32_0 = arith.constant 0 : i32
    %c0_i32_1 = arith.constant 0 : i32
    return %arg0, %c0_i32, %c0_i32_0 : i32, i32, i32
  }
}

module attributes {stable_mosaic.version = 11 : i64} {
  func.func @_logits_kernel(%arg0: memref<2x16x128xf32, #tpu.memory_space<vmem>>, %arg1: memref<1x1x128xbf16, #tpu.memory_space<vmem>>, %arg2: memref<1x1xf32, #tpu.memory_space<vmem>>, %arg3: memref<2x16xf32, #tpu.memory_space<vmem>>) attributes {dimension_semantics = [], scalar_prefetch = 0 : i64, scratch_operands = 0 : i64, tpu.core_type = #tpu.core_type<tc>} {
    %c0 = arith.constant 0 : index
    %c0_0 = arith.constant 0 : index
    %c0_1 = arith.constant 0 : index
    %0 = vector.load %arg0[%c0, %c0_0, %c0_1] : memref<2x16x128xf32, #tpu.memory_space<vmem>>, vector<2x16x128xf32>
    %c0_2 = arith.constant 0 : index
    %c0_3 = arith.constant 0 : index
    %c0_4 = arith.constant 0 : index
    %1 = vector.load %arg1[%c0_2, %c0_3, %c0_4] : memref<1x1x128xbf16, #tpu.memory_space<vmem>>, vector<1x1x128xbf16>
    %2 = arith.extf %1 : vector<1x1x128xbf16> to vector<1x1x128xf32>
    %3 = vector.broadcast %2 : vector<1x1x128xf32> to vector<2x16x128xf32>
    %4 = arith.mulf %0, %3 : vector<2x16x128xf32>
    %cst = arith.constant dense<0.000000e+00> : vector<2x16xf32>
    %5 = vector.multi_reduction <add>, %4, %cst [2] : vector<2x16x128xf32> to vector<2x16xf32>
    %c0_5 = arith.constant 0 : index
    %c0_6 = arith.constant 0 : index
    %6 = vector.load %arg2[%c0_5, %c0_6] : memref<1x1xf32, #tpu.memory_space<vmem>>, vector<1x1xf32>
    %7 = vector.broadcast %6 : vector<1x1xf32> to vector<2x16xf32>
    %8 = arith.addf %5, %7 : vector<2x16xf32>
    %c0_7 = arith.constant 0 : index
    %c0_8 = arith.constant 0 : index
    %9 = vector.load %arg3[%c0_7, %c0_8] : memref<2x16xf32, #tpu.memory_space<vmem>>, vector<2x16xf32>
    tpu.vector_store %arg3[%c0_7, %c0_8], %8 {strides = array<i32>} : memref<2x16xf32, #tpu.memory_space<vmem>>, vector<2x16xf32>,
    return
  }
}

</mosaic_0001>

<llo_original>
// kernel: ramplus_forward.11
$region0: #{ramplus_forward.11}
  #allocation0 [shape = 'u32[]', space=smem, size = 0x4, offset = 0x4, fixed_abs, tag = 'smem constant byte address 0x4 - core index']
  #allocation1 [shape = 'u32[144,128]{1,0:T(1,128)}', space=vmem, size = 0x12000, scoped, tag = 'internal scratch']
  %s0 = inlined_call_operand.vmem [shape: f32[128,48], index: 0, kind: input, shape index: {}]
  %s1 = inlined_call_operand.vmem [shape: bf16[48,32], index: 1, kind: input, shape index: {}]
  %s2 = inlined_call_operand.vmem [shape: f32[1,32], index: 2, kind: input, shape index: {}]
  %s3 = inlined_call_operand.vmem [shape: f32[1,32], index: 3, kind: input, shape index: {}]
  %s4 = inlined_call_operand.vmem [shape: f32[1,32], index: 4, kind: input, shape index: {}]
  %s5 = inlined_call_operand.vmem [shape: f32[128,32], index: 5, kind: output, shape index: {}]
  %s6 = sld [smem:[#allocation0]]
  $region30: #{ramplus_forward.11} parent=0
    _
  %s8 = ssub.s32 1, %s6
  %s9 = scalar_select 0, %s8, %s6
  // Predicated region
  $region2: #{ramplus_forward.11} parent=0 // pred_check
    _
  $region3: #{ramplus_forward.11} parent=0 // pred_check_branch
    %11 = sbr.rel (0) target = $region5
  $region4: #{ramplus_forward.11} parent=0 // pred_region
    _
  $region5: #{ramplus_forward.11} parent=0 // pred_fallthru
    _
  // Predicated region
  $region6: #{ramplus_forward.11} parent=0 // pred_check
    _
  $region7: #{ramplus_forward.11} parent=0 // pred_check_branch
    %13 = sbr.rel (0) target = $region9
  $region8: #{ramplus_forward.11} parent=0 // pred_region
    _
  $region9: #{ramplus_forward.11} parent=0 // pred_fallthru
    _
  // Predicated region
  $region10: #{ramplus_forward.11} parent=0 // pred_check
    _
  $region11: #{ramplus_forward.11} parent=0 // pred_check_branch
    %15 = sbr.rel (0) target = $region13
  $region12: #{ramplus_forward.11} parent=0 // pred_region
    _
  $region13: #{ramplus_forward.11} parent=0 // pred_fallthru
    _
  // Predicated region
  $region14: #{ramplus_forward.11} parent=0 // pred_check
    _
  $region15: #{ramplus_forward.11} parent=0 // pred_check_branch
    %17 = sbr.rel (0) target = $region17
  $region16: #{ramplus_forward.11} parent=0 // pred_region
    _
  $region17: #{ramplus_forward.11} parent=0 // pred_fallthru
    _
  // Predicated region
  $region18: #{ramplus_forward.11} parent=0 // pred_check
    _
  $region19: #{ramplus_forward.11} parent=0 // pred_check_branch
    %19 = sbr.rel (0) target = $region21
  $region20: #{ramplus_forward.11} parent=0 // pred_region
    _
  $region21: #{ramplus_forward.11} parent=0 // pred_fallthru
    _
  %v21 = vld [vmem:[%s0] sm:$0xff]
  %v22 = vld [vmem:[%s0 + $0x8] sm:$0xff]
  %v23 = vld [vmem:[%s0 + $0x10] sm:$0xff]
  %v24 = vld [vmem:[%s0 + $0x18] sm:$0xff]
  %v25 = vld [vmem:[%s0 + $0x20] sm:$0xff]
  %v26 = vld [vmem:[%s0 + $0x28] sm:$0xff]
  %v27 = vld [vmem:[%s0 + $0x30] sm:$0xff]
  %v28 = vld [vmem:[%s0 + $0x38] sm:$0xff]
  %v29 = vld [vmem:[%s0 + $0x40] sm:$0xff]
  %v30 = vld [vmem:[%s0 + $0x48] sm:$0xff]
  %v31 = vld [vmem:[%s0 + $0x50] sm:$0xff]
  %v32 = vld [vmem:[%s0 + $0x58] sm:$0xff]
  %v33 = vld [vmem:[%s0 + $0x60] sm:$0xff]
  %v34 = vld [vmem:[%s0 + $0x68] sm:$0xff]
  %v35 = vld [vmem:[%s0 + $0x70] sm:$0xff]
  %v36 = vld [vmem:[%s0 + $0x78] sm:$0xff]
  %v37 = vld [vmem:[%s1] sm:$0xf]
  %v38 = vld [vmem:[%s1 + $0x4] sm:$0xf]
  %v39 = vld [vmem:[%s1 + $0x8] sm:$0xf]
  %v40 = vld [vmem:[%s1 + $0xc] sm:$0xf]
  %v41 = vld [vmem:[%s1 + $0x10] sm:$0xf]
  %v42 = vld [vmem:[%s1 + $0x14] sm:$0xf]
  %v43 = vpack.c.bf16 %v22, %v21
  %v44 = vpack.c.bf16 %v24, %v23
  %v45 = vpack.c.bf16 %v26, %v25
  %v46 = vpack.c.bf16 %v28, %v27
  %v47 = vpack.c.bf16 %v30, %v29
  %v48 = vpack.c.bf16 %v32, %v31
  %v49 = vpack.c.bf16 %v34, %v33
  %v50 = vpack.c.bf16 %v36, %v35
  %v51 = vld [vmem:[%s2] sm:$0x1]
  %v53 = vlaneseq
  %v54 = vshrl.u32 %v53, 7
  %v55 = vsub.s32 0, %v54
  %v56 = vrot.slane %v51, %v55
  %v64 = vunpack.c.l.b16 %v37
  %v65 = vunpack.c.l.b16 %v38
  %v66 = vunpack.c.l.b16 %v39
  %v67 = vunpack.c.l.b16 %v40
  %v68 = vunpack.c.l.b16 %v41
  %v69 = vunpack.c.l.b16 %v42
  %v70 = vpack.c.b16 %v65, %v64
  %v71 = vpack.c.b16 %v67, %v66
  %v72 = vpack.c.b16 %v69, %v68
  %vm76 = vcmask 392192
  %v78 = vsel %vm76, %v43, 0
  %v81 = vsel %vm76, %v44, 0
  %v84 = vsel %vm76, %v45, 0
  %v87 = vsel %vm76, %v46, 0
  %v90 = vsel %vm76, %v47, 0
  %v93 = vsel %vm76, %v48, 0
  %v96 = vsel %vm76, %v49, 0
  %v99 = vsel %vm76, %v50, 0
  %101 = vmatprep.subr.bf16.mxu0 0
  %102 = vmatpush1.bf16.msra.mxu0 %v70
  %103 = vmatprep.subr.bf16.mxu0 0
  %104 = vmatpush1.bf16.msra.mxu0 %v71
  %105 = vmatprep.subr.bf16.mxu0 0
  %106 = vmatpush1.bf16.msra.mxu0 %v72
  %107 = vmatprep.subr.bf16.mxu0 0
  %108 = vmatpush1.bf16.msra.mxu0 0
  %109 = vmatprep.subr.bf16.mxu0 0
  %110 = vmatpush1.bf16.msra.mxu0 0
  %111 = vmatprep.subr.bf16.mxu0 0
  %112 = vmatpush1.bf16.msra.mxu0 0
  %113 = vmatprep.subr.bf16.mxu0 0
  %114 = vmatpush1.bf16.msra.mxu0 0
  %115 = vmatprep.subr.bf16.mxu0 0
  %116 = vmatpush1.bf16.msra.mxu0 0
  %117 = vmatprep.subr.bf16.mxu0 0
  %118 = vmatpush1.bf16.msra.mxu0 0
  %119 = vmatprep.subr.bf16.mxu0 0
  %120 = vmatpush1.bf16.msra.mxu0 0
  %121 = vmatprep.subr.bf16.mxu0 0
  %122 = vmatpush1.bf16.msra.mxu0 0
  %123 = vmatprep.subr.bf16.mxu0 0
  %124 = vmatpush1.bf16.msra.mxu0 0
  %125 = vmatprep.subr.bf16.mxu0 0
  %126 = vmatpush1.bf16.msra.mxu0 0
  %127 = vmatprep.subr.bf16.mxu0 0
  %128 = vmatpush1.bf16.msra.mxu0 0
  %129 = vmatprep.subr.bf16.mxu0 0
  %130 = vmatpush1.bf16.msra.mxu0 0
  %131 = vmatprep.subr.bf16.mxu0 0
  %132 = vmatpush1.bf16.msra.mxu0 0
  %133 = vmatprep.mubr.bf16.mxu0 0
  %134 = vmatmul.mubr.bf16.gmra.mrb[0].mxu0 %v78
  %v135 = vpop.f32.mrb[0].mxu0
  %v136 = vadd.f32 %v56, %v135
  %v137 = vpop.f32.mrb[0].mxu0
  %v138 = vpop.f32.mrb[0].mxu0
  %v139 = vadd.f32 %v56, %v138
  %v140 = vpop.f32.mrb[0].mxu0
  %141 = vmatprep.mubr.bf16.mxu0 0
  %142 = vmatmul.mubr.bf16.gmra.mrb[0].mxu0 %v81
  %v143 = vpop.f32.mrb[0].mxu0
  %v144 = vadd.f32 %v56, %v143
  %v145 = vpop.f32.mrb[0].mxu0
  %v146 = vpop.f32.mrb[0].mxu0
  %v147 = vadd.f32 %v56, %v146
  %v148 = vpop.f32.mrb[0].mxu0
  %149 = vmatprep.mubr.bf16.mxu0 0
  %150 = vmatmul.mubr.bf16.gmra.mrb[0].mxu0 %v84
  %v151 = vpop.f32.mrb[0].mxu0
  %v152 = vadd.f32 %v56, %v151
  %v153 = vpop.f32.mrb[0].mxu0
  %v154 = vpop.f32.mrb[0].mxu0
  %v155 = vadd.f32 %v56, %v154
  %v156 = vpop.f32.mrb[0].mxu0
  %157 = vmatprep.mubr.bf16.mxu0 0
  %158 = vmatmul.mubr.bf16.gmra.mrb[0].mxu0 %v87
  %v159 = vpop.f32.mrb[0].mxu0
  %v160 = vadd.f32 %v56, %v159
  %v161 = vpop.f32.mrb[0].mxu0
  %v162 = vpop.f32.mrb[0].mxu0
  %v163 = vadd.f32 %v56, %v162
  %v164 = vpop.f32.mrb[0].mxu0
  %165 = vmatprep.mubr.bf16.mxu0 0
  %166 = vmatmul.mubr.bf16.gmra.mrb[0].mxu0 %v90
  %v167 = vpop.f32.mrb[0].mxu0
  %v168 = vadd.f32 %v56, %v167
  %v169 = vpop.f32.mrb[0].mxu0
  %v170 = vpop.f32.mrb[0].mxu0
  %v171 = vadd.f32 %v56, %v170
  %v172 = vpop.f32.mrb[0].mxu0
  %173 = vmatprep.mubr.bf16.mxu0 0
  %174 = vmatmul.mubr.bf16.gmra.mrb[0].mxu0 %v93
  %v175 = vpop.f32.mrb[0].mxu0
  %v176 = vadd.f32 %v56, %v175
  %v177 = vpop.f32.mrb[0].mxu0
  %v178 = vpop.f32.mrb[0].mxu0
  %v179 = vadd.f32 %v56, %v178
  %v180 = vpop.f32.mrb[0].mxu0
  %181 = vmatprep.mubr.bf16.mxu0 0
  %182 = vmatmul.mubr.bf16.gmra.mrb[0].mxu0 %v96
  %v183 = vpop.f32.mrb[0].mxu0
  %v184 = vadd.f32 %v56, %v183
  %v185 = vpop.f32.mrb[0].mxu0
  %v186 = vpop.f32.mrb[0].mxu0
  %v187 = vadd.f32 %v56, %v186
  %v188 = vpop.f32.mrb[0].mxu0
  %189 = vmatprep.mubr.bf16.mxu0 0
  %190 = vmatmul.mubr.bf16.gmra.mrb[0].mxu0 %v99
  %v191 = vpop.f32.mrb[0].mxu0
  %v192 = vadd.f32 %v56, %v191
  %v193 = vpop.f32.mrb[0].mxu0
  %v194 = vpop.f32.mrb[0].mxu0
  %v195 = vadd.f32 %v56, %v194
  %v196 = vpop.f32.mrb[0].mxu0
  %197 = vdwg.mxu0
  %v198 = vld [vmem:[%s3] sm:$0x1]
  %v199 = vld [vmem:[%s4] sm:$0x1]
  %vm200 = vcmask 261120
  %v201 = vsel %vm200, %v136, 0.0
  %202 = vadd.xlane.f32.xlu0 %v201
  %v203 = vpop.xlane.xlu0 %202
  %v204 = vsel %vm200, %v139, 0.0
  %205 = vadd.xlane.f32.xlu0 %v204
  %v206 = vpop.xlane.xlu0 %205
  %v207 = vsel %vm200, %v144, 0.0
  %208 = vadd.xlane.f32.xlu0 %v207
  %v209 = vpop.xlane.xlu0 %208
  %v210 = vsel %vm200, %v147, 0.0
  %211 = vadd.xlane.f32.xlu0 %v210
  %v212 = vpop.xlane.xlu0 %211
  %v213 = vsel %vm200, %v152, 0.0
  %214 = vadd.xlane.f32.xlu0 %v213
  %v215 = vpop.xlane.xlu0 %214
  %v216 = vsel %vm200, %v155, 0.0
  %217 = vadd.xlane.f32.xlu0 %v216
  %v218 = vpop.xlane.xlu0 %217
  %v219 = vsel %vm200, %v160, 0.0
  %220 = vadd.xlane.f32.xlu0 %v219
  %v221 = vpop.xlane.xlu0 %220
  %v222 = vsel %vm200, %v163, 0.0
  %223 = vadd.xlane.f32.xlu0 %v222
  %v224 = vpop.xlane.xlu0 %223
  %v225 = vsel %vm200, %v168, 0.0
  %226 = vadd.xlane.f32.xlu0 %v225
  %v227 = vpop.xlane.xlu0 %226
  %v228 = vsel %vm200, %v171, 0.0
  %229 = vadd.xlane.f32.xlu0 %v228
  %v230 = vpop.xlane.xlu0 %229
  %v231 = vsel %vm200, %v176, 0.0
  %232 = vadd.xlane.f32.xlu0 %v231
  %v233 = vpop.xlane.xlu0 %232
  %v234 = vsel %vm200, %v179, 0.0
  %235 = vadd.xlane.f32.xlu0 %v234
  %v236 = vpop.xlane.xlu0 %235
  %v237 = vsel %vm200, %v184, 0.0
  %238 = vadd.xlane.f32.xlu0 %v237
  %v239 = vpop.xlane.xlu0 %238
  %v240 = vsel %vm200, %v187, 0.0
  %241 = vadd.xlane.f32.xlu0 %v240
  %v242 = vpop.xlane.xlu0 %241
  %v243 = vsel %vm200, %v192, 0.0
  %244 = vadd.xlane.f32.xlu0 %v243
  %v245 = vpop.xlane.xlu0 %244
  %v246 = vsel %vm200, %v195, 0.0
  %247 = vadd.xlane.f32.xlu0 %v246
  %v248 = vpop.xlane.xlu0 %247
  %v249 = vrcp.pop 32.0
  %v250 = vmul.f32 %v203, %v249
  %v251 = vmul.f32 %v206, %v249
  %v252 = vmul.f32 %v209, %v249
  %v253 = vmul.f32 %v212, %v249
  %v254 = vmul.f32 %v215, %v249
  %v255 = vmul.f32 %v218, %v249
  %v256 = vmul.f32 %v221, %v249
  %v257 = vmul.f32 %v224, %v249
  %v258 = vmul.f32 %v227, %v249
  %v259 = vmul.f32 %v230, %v249
  %v260 = vmul.f32 %v233, %v249
  %v261 = vmul.f32 %v236, %v249
  %v262 = vmul.f32 %v239, %v249
  %v263 = vmul.f32 %v242, %v249
  %v264 = vmul.f32 %v245, %v249
  %v265 = vmul.f32 %v248, %v249
  %v266 = vsub.f32 %v136, %v250
  %v267 = vsub.f32 %v139, %v251
  %v268 = vsub.f32 %v144, %v252
  %v269 = vsub.f32 %v147, %v253
  %v270 = vsub.f32 %v152, %v254
  %v271 = vsub.f32 %v155, %v255
  %v272 = vsub.f32 %v160, %v256
  %v273 = vsub.f32 %v163, %v257
  %v274 = vsub.f32 %v168, %v258
  %v275 = vsub.f32 %v171, %v259
  %v276 = vsub.f32 %v176, %v260
  %v277 = vsub.f32 %v179, %v261
  %v278 = vsub.f32 %v184, %v262
  %v279 = vsub.f32 %v187, %v263
  %v280 = vsub.f32 %v192, %v264
  %v281 = vsub.f32 %v195, %v265
  %v282 = vmul.f32 %v266, %v266
  %v283 = vmul.f32 %v267, %v267
  %v284 = vmul.f32 %v268, %v268
  %v285 = vmul.f32 %v269, %v269
  %v286 = vmul.f32 %v270, %v270
  %v287 = vmul.f32 %v271, %v271
  %v288 = vmul.f32 %v272, %v272
  %v289 = vmul.f32 %v273, %v273
  %v290 = vmul.f32 %v274, %v274
  %v291 = vmul.f32 %v275, %v275
  %v292 = vmul.f32 %v276, %v276
  %v293 = vmul.f32 %v277, %v277
  %v294 = vmul.f32 %v278, %v278
  %v295 = vmul.f32 %v279, %v279
  %v296 = vmul.f32 %v280, %v280
  %v297 = vmul.f32 %v281, %v281
  %v298 = vsel %vm200, %v282, 0.0
  %299 = vadd.xlane.f32.xlu0 %v298
  %v300 = vpop.xlane.xlu0 %299
  %v301 = vsel %vm200, %v283, 0.0
  %302 = vadd.xlane.f32.xlu0 %v301
  %v303 = vpop.xlane.xlu0 %302
  %v304 = vsel %vm200, %v284, 0.0
  %305 = vadd.xlane.f32.xlu0 %v304
  %v306 = vpop.xlane.xlu0 %305
  %v307 = vsel %vm200, %v285, 0.0
  %308 = vadd.xlane.f32.xlu0 %v307
  %v309 = vpop.xlane.xlu0 %308
  %v310 = vsel %vm200, %v286, 0.0
  %311 = vadd.xlane.f32.xlu0 %v310
  %v312 = vpop.xlane.xlu0 %311
  %v313 = vsel %vm200, %v287, 0.0
  %314 = vadd.xlane.f32.xlu0 %v313
  %v315 = vpop.xlane.xlu0 %314
  %v316 = vsel %vm200, %v288, 0.0
  %317 = vadd.xlane.f32.xlu0 %v316
  %v318 = vpop.xlane.xlu0 %317
  %v319 = vsel %vm200, %v289, 0.0
  %320 = vadd.xlane.f32.xlu0 %v319
  %v321 = vpop.xlane.xlu0 %320
  %v322 = vsel %vm200, %v290, 0.0
  %323 = vadd.xlane.f32.xlu0 %v322
  %v324 = vpop.xlane.xlu0 %323
  %v325 = vsel %vm200, %v291, 0.0
  %326 = vadd.xlane.f32.xlu0 %v325
  %v327 = vpop.xlane.xlu0 %326
  %v328 = vsel %vm200, %v292, 0.0
  %329 = vadd.xlane.f32.xlu0 %v328
  %v330 = vpop.xlane.xlu0 %329
  %v331 = vsel %vm200, %v293, 0.0
  %332 = vadd.xlane.f32.xlu0 %v331
  %v333 = vpop.xlane.xlu0 %332
  %v334 = vsel %vm200, %v294, 0.0
  %335 = vadd.xlane.f32.xlu0 %v334
  %v336 = vpop.xlane.xlu0 %335
  %v337 = vsel %vm200, %v295, 0.0
  %338 = vadd.xlane.f32.xlu0 %v337
  %v339 = vpop.xlane.xlu0 %338
  %v340 = vsel %vm200, %v296, 0.0
  %341 = vadd.xlane.f32.xlu0 %v340
  %v342 = vpop.xlane.xlu0 %341
  %v343 = vsel %vm200, %v297, 0.0
  %344 = vadd.xlane.f32.xlu0 %v343
  %v345 = vpop.xlane.xlu0 %344
  %v346 = vmul.f32 %v300, %v249
  %v347 = vmul.f32 %v303, %v249
  %v348 = vmul.f32 %v306, %v249
  %v349 = vmul.f32 %v309, %v249
  %v350 = vmul.f32 %v312, %v249
  %v351 = vmul.f32 %v315, %v249
  %v352 = vmul.f32 %v318, %v249
  %v353 = vmul.f32 %v321, %v249
  %v354 = vmul.f32 %v324, %v249
  %v355 = vmul.f32 %v327, %v249
  %v356 = vmul.f32 %v330, %v249
  %v357 = vmul.f32 %v333, %v249
  %v358 = vmul.f32 %v336, %v249
  %v359 = vmul.f32 %v339, %v249
  %v360 = vmul.f32 %v342, %v249
  %v361 = vmul.f32 %v345, %v249
  %v362 = vadd.f32 %v346, 1e-05
  %v363 = vadd.f32 %v347, 1e-05
  %v364 = vadd.f32 %v348, 1e-05
  %v365 = vadd.f32 %v349, 1e-05
  %v366 = vadd.f32 %v350, 1e-05
  %v367 = vadd.f32 %v351, 1e-05
  %v368 = vadd.f32 %v352, 1e-05
  %v369 = vadd.f32 %v353, 1e-05
  %v370 = vadd.f32 %v354, 1e-05
  %v371 = vadd.f32 %v355, 1e-05
  %v372 = vadd.f32 %v356, 1e-05
  %v373 = vadd.f32 %v357, 1e-05
  %v374 = vadd.f32 %v358, 1e-05
  %v375 = vadd.f32 %v359, 1e-05
  %v376 = vadd.f32 %v360, 1e-05
  %v377 = vadd.f32 %v361, 1e-05
  %v378 = vrsqrt.pop %v362
  %v379 = vrsqrt.pop %v363
  %v380 = vrsqrt.pop %v364
  %v381 = vrsqrt.pop %v365
  %v382 = vrsqrt.pop %v366
  %v383 = vrsqrt.pop %v367
  %v384 = vrsqrt.pop %v368
  %v385 = vrsqrt.pop %v369
  %v386 = vrsqrt.pop %v370
  %v387 = vrsqrt.pop %v371
  %v388 = vrsqrt.pop %v372
  %v389 = vrsqrt.pop %v373
  %v390 = vrsqrt.pop %v374
  %v391 = vrsqrt.pop %v375
  %v392 = vrsqrt.pop %v376
  %v393 = vrsqrt.pop %v377
  %v394 = vmul.f32 %v266, %v378
  %v395 = vmul.f32 %v267, %v379
  %v396 = vmul.f32 %v268, %v380
  %v397 = vmul.f32 %v269, %v381
  %v398 = vmul.f32 %v270, %v382
  %v399 = vmul.f32 %v271, %v383
  %v400 = vmul.f32 %v272, %v384
  %v401 = vmul.f32 %v273, %v385
  %v402 = vmul.f32 %v274, %v386
  %v403 = vmul.f32 %v275, %v387
  %v404 = vmul.f32 %v276, %v388
  %v405 = vmul.f32 %v277, %v389
  %v406 = vmul.f32 %v278, %v390
  %v407 = vmul.f32 %v279, %v391
  %v408 = vmul.f32 %v280, %v392
  %v409 = vmul.f32 %v281, %v393
  %v411 = vlaneseq
  %v412 = vshrl.u32 %v411, 7
  %v413 = vsub.s32 0, %v412
  %v414 = vrot.slane %v198, %v413
  %v416 = vmul.f32 %v394, %v414
  %v417 = vmul.f32 %v395, %v414
  %v418 = vmul.f32 %v396, %v414
  %v419 = vmul.f32 %v397, %v414
  %v420 = vmul.f32 %v398, %v414
  %v421 = vmul.f32 %v399, %v414
  %v422 = vmul.f32 %v400, %v414
  %v423 = vmul.f32 %v401, %v414
  %v424 = vmul.f32 %v402, %v414
  %v425 = vmul.f32 %v403, %v414
  %v426 = vmul.f32 %v404, %v414
  %v427 = vmul.f32 %v405, %v414
  %v428 = vmul.f32 %v406, %v414
  %v429 = vmul.f32 %v407, %v414
  %v430 = vmul.f32 %v408, %v414
  %v431 = vmul.f32 %v409, %v414
  %v433 = vlaneseq
  %v434 = vshrl.u32 %v433, 7
  %v435 = vsub.s32 0, %v434
  %v436 = vrot.slane %v199, %v435
  %v438 = vadd.f32 %v416, %v436
  %v439 = vadd.f32 %v417, %v436
  %v440 = vadd.f32 %v418, %v436
  %v441 = vadd.f32 %v419, %v436
  %v442 = vadd.f32 %v420, %v436
  %v443 = vadd.f32 %v421, %v436
  %v444 = vadd.f32 %v422, %v436
  %v445 = vadd.f32 %v423, %v436
  %v446 = vadd.f32 %v424, %v436
  %v447 = vadd.f32 %v425, %v436
  %v448 = vadd.f32 %v426, %v436
  %v449 = vadd.f32 %v427, %v436
  %v450 = vadd.f32 %v428, %v436
  %v451 = vadd.f32 %v429, %v436
  %v452 = vadd.f32 %v430, %v436
  %v453 = vadd.f32 %v431, %v436
  %454 = vst.msk [vmem:[%s5] sm:$0xff] %vm200, %v438
  %455 = vst.msk [vmem:[%s5 + $0x8] sm:$0xff] %vm200, %v439
  %456 = vst.msk [vmem:[%s5 + $0x10] sm:$0xff] %vm200, %v440
  %457 = vst.msk [vmem:[%s5 + $0x18] sm:$0xff] %vm200, %v441
  %458 = vst.msk [vmem:[%s5 + $0x20] sm:$0xff] %vm200, %v442
  %459 = vst.msk [vmem:[%s5 + $0x28] sm:$0xff] %vm200, %v443
  %460 = vst.msk [vmem:[%s5 + $0x30] sm:$0xff] %vm200, %v444
  %461 = vst.msk [vmem:[%s5 + $0x38] sm:$0xff] %vm200, %v445
  %462 = vst.msk [vmem:[%s5 + $0x40] sm:$0xff] %vm200, %v446
  %463 = vst.msk [vmem:[%s5 + $0x48] sm:$0xff] %vm200, %v447
  %464 = vst.msk [vmem:[%s5 + $0x50] sm:$0xff] %vm200, %v448
  %465 = vst.msk [vmem:[%s5 + $0x58] sm:$0xff] %vm200, %v449
  %466 = vst.msk [vmem:[%s5 + $0x60] sm:$0xff] %vm200, %v450
  %467 = vst.msk [vmem:[%s5 + $0x68] sm:$0xff] %vm200, %v451
  %468 = vst.msk [vmem:[%s5 + $0x70] sm:$0xff] %vm200, %v452
  %469 = vst.msk [vmem:[%s5 + $0x78] sm:$0xff] %vm200, %v453
  // Predicated region
  $region22: #{ramplus_forward.11} parent=0 // pred_check
    _
  $region23: #{ramplus_forward.11} parent=0 // pred_check_branch
    %471 = sbr.rel (0) target = $region25
  $region24: #{ramplus_forward.11} parent=0 // pred_region
    _
  $region25: #{ramplus_forward.11} parent=0 // pred_fallthru
    _
  // Predicated region
  $region26: #{ramplus_forward.11} parent=0 // pred_check
    _
  $region27: #{ramplus_forward.11} parent=0 // pred_check_branch
    %473 = sbr.rel (0) target = $region29
  $region28: #{ramplus_forward.11} parent=0 // pred_region
    _
  $region29: #{ramplus_forward.11} parent=0 // pred_fallthru
    _

// kernel: ramplus_forward.12
$region0: #{ramplus_forward.12}
  #allocation0 [shape = 'u32[]', space=smem, size = 0x4, offset = 0x4, fixed_abs, tag = 'smem constant byte address 0x4 - core index']
  #allocation1 [shape = 'u32[144,128]{1,0:T(1,128)}', space=vmem, size = 0x12000, scoped, tag = 'internal scratch']
  %s0 = inlined_call_operand.vmem [shape: f32[2,64,32], index: 0, kind: input, shape index: {}]
  %s1 = inlined_call_operand.vmem [shape: bf16[2,4,16,16], index: 1, kind: input, shape index: {}]
  %s2 = inlined_call_operand.vmem [shape: f32[1,32], index: 2, kind: input, shape index: {}]
  %s3 = inlined_call_operand.vmem [shape: f32[1,32], index: 3, kind: input, shape index: {}]
  %s4 = inlined_call_operand.vmem [shape: bf16[32,96], index: 4, kind: input, shape index: {}]
  %s5 = inlined_call_operand.vmem [shape: f32[1,96], index: 5, kind: input, shape index: {}]
  %s6 = inlined_call_operand.vmem [shape: bf16[32,32], index: 6, kind: input, shape index: {}]
  %s7 = inlined_call_operand.vmem [shape: f32[1,32], index: 7, kind: input, shape index: {}]
  %s8 = inlined_call_operand.vmem [shape: f32[1,32], index: 8, kind: input, shape index: {}]
  %s9 = inlined_call_operand.vmem [shape: f32[1,32], index: 9, kind: input, shape index: {}]
  %s10 = inlined_call_operand.vmem [shape: bf16[32,128], index: 10, kind: input, shape index: {}]
  %s11 = inlined_call_operand.vmem [shape: f32[1,128], index: 11, kind: input, shape index: {}]
  %s12 = inlined_call_operand.vmem [shape: bf16[128,32], index: 12, kind: input, shape index: {}]
  %s13 = inlined_call_operand.vmem [shape: f32[1,32], index: 13, kind: input, shape index: {}]
  %s14 = inlined_call_operand.vmem [shape: f32[2,64,32], index: 14, kind: output, shape index: {}]
  %s15 = sld [smem:[#allocation0]]
  $region89: #{ramplus_forward.12} parent=0
    _
  %s17 = ssub.s32 1, %s15
  %s18 = scalar_select 0, %s17, %s15
  loop: start=0, step=1, limit=4
  $region2: #{ramplus_forward.12} parent=0 // loop_pre_header
    _
  $region3: #{ramplus_forward.12} parent=0 // loop_header
    %s20 = sphi 0, %s24
    %p21 = scmp.ge.s32.totalorder %s20, 4
    %s27 = sphi 0, %s39
    %s28 = sphi 0, %s35
    %s29 = sphi 0, %s27
    %s30 = sphi 0, %s28
    %s31 = sphi 0, %s29
    %s32 = sphi 0, %s30
    %s44 = sphi 0, %s46
    %s47 = sphi 0, %s44
    %s48 = sphi 0, %s47
    %s64 = sphi 0, %s48
    %s70 = sphi 0, %s72
    %s73 = sphi 0, %s70
    %s74 = sphi 0, %s73
    %s90 = sphi 0, %s74
    %s94 = sphi 0, %s94
    %s96 = sphi 0, %s94
    %s97 = sphi 0, %s96
    %s111 = sphi 0, %s97
    %s115 = sphi 0, %s115
    %s117 = sphi 0, %s115
    %s118 = sphi 0, %s117
    %s132 = sphi 0, %s118
    %s136 = sphi 0, %s136
    %s138 = sphi 0, %s136
    %s139 = sphi 0, %s138
    %s153 = sphi 0, %s139
    %s157 = sphi 0, %s157
    %s159 = sphi 0, %s157
    %s160 = sphi 0, %s159
    %s174 = sphi 0, %s160
    %s178 = sphi 0, %s178
    %s180 = sphi 0, %s178
    %s181 = sphi 0, %s180
    %s195 = sphi 0, %s181
    %s199 = sphi 0, %s199
    %s201 = sphi 0, %s199
    %s202 = sphi 0, %s201
    %s216 = sphi 0, %s202
    %s220 = sphi 0, %s220
    %s222 = sphi 0, %s220
    %s223 = sphi 0, %s222
    %s237 = sphi 0, %s223
    %s241 = sphi 0, %s241
    %s243 = sphi 0, %s241
    %s244 = sphi 0, %s243
    %s258 = sphi 0, %s244
    %s262 = sphi 0, %s262
    %s264 = sphi 0, %s262
    %s265 = sphi 0, %s264
    %s279 = sphi 0, %s265
    %s283 = sphi 0, %s283
    %s285 = sphi 0, %s283
    %s286 = sphi 0, %s285
    %s300 = sphi 0, %s286
    %s304 = sphi 0, %s304
    %s306 = sphi 0, %s304
    %s307 = sphi 0, %s306
    %s321 = sphi 0, %s307
    %s325 = sphi 0, %s325
    %s327 = sphi 0, %s325
    %s328 = sphi 0, %s327
    %s342 = sphi 0, %s328
    %s350 = sphi 0, %s352
    %s353 = sphi 0, %s350
    %s354 = sphi 0, %s353
    %s370 = sphi 0, %s354
  $region4: #{ramplus_forward.12} parent=0 // loop_header_branch
    %23 = sbr.rel (%p21) target = $region8
  $region5: #{ramplus_forward.12} parent=0 // loop_body
    %s25 = ssub.s32 %s20, 1
    %s26 = ssub.s32 %s20, 2
    %s33 = sadd.s32 1, %s28
    %p34 = scmp.ge.s32.totalorder %s33, 1
    %s35 = scalar_select %p34, 0, %s33
    %s36 = sadd.s32 1, %s27
    %s37 = scalar_select %p34, %s36, %s27
    %p38 = scmp.ge.s32.totalorder %s37, 2
    %s39 = scalar_select %p38, 0, %s37
    %s40 = ssub.s32 %s27, %s39
    %s41 = ssub.s32 %s28, %s35
    %s42 = sor.u32 %s40, %s41
    %p43 = scmp.eq.s32.totalorder %s42, 0
    %s45 = sadd.s32 %s44, 1
    %s46 = scalar_select %p43, %s44, %s45
    %p49 = pneg %p43
    %p50 = scmp.eq.s32.totalorder %s20, 1
    %p51 = por %p49, %p50
    %p52 = scmp.ne.s32.totalorder %s44, %s47
    %p53 = scmp.eq.s32.totalorder %s20, 0
    %p54 = por %p52, %p53
    %p55 = scmp.ne.s32.totalorder %s44, %s47
    %p56 = scmp.eq.s32.totalorder %s25, 1
    %p57 = por %p55, %p56
    %p58 = scmp.ne.s32.totalorder %s47, %s48
    %p59 = scmp.eq.s32.totalorder %s25, 0
    %p60 = por %p58, %p59
    %p61 = scmp.ne.s32.totalorder %s47, %s48
    %p62 = scmp.eq.s32.totalorder %s26, 1
    %p63 = por %p61, %p62
    %p65 = scmp.ne.s32.totalorder %s48, %s64
    %p66 = scmp.eq.s32.totalorder %s26, 0
    %p67 = por %p65, %p66
    %s68 = ssub.s32 %s28, %s35
    %p69 = scmp.eq.s32.totalorder %s68, 0
    %s71 = sadd.s32 %s70, 1
    %s72 = scalar_select %p69, %s70, %s71
    %p75 = pneg %p69
    %p76 = scmp.eq.s32.totalorder %s20, 1
    %p77 = por %p75, %p76
    %p78 = scmp.ne.s32.totalorder %s70, %s73
    %p79 = scmp.eq.s32.totalorder %s20, 0
    %p80 = por %p78, %p79
    %p81 = scmp.ne.s32.totalorder %s70, %s73
    %p82 = scmp.eq.s32.totalorder %s25, 1
    %p83 = por %p81, %p82
    %p84 = scmp.ne.s32.totalorder %s73, %s74
    %p85 = scmp.eq.s32.totalorder %s25, 0
    %p86 = por %p84, %p85
    %p87 = scmp.ne.s32.totalorder %s73, %s74
    %p88 = scmp.eq.s32.totalorder %s26, 1
    %p89 = por %p87, %p88
    %p91 = scmp.ne.s32.totalorder %s74, %s90
    %p92 = scmp.eq.s32.totalorder %s26, 0
    %p93 = por %p91, %p92
    %s95 = sadd.s32 %s94, 1
    %p98 = scmp.eq.s32.totalorder %s20, 1
    %p99 = scmp.ne.s32.totalorder %s94, %s96
    %p100 = scmp.eq.s32.totalorder %s20, 0
    %p101 = por %p99, %p100
    %p102 = scmp.ne.s32.totalorder %s94, %s96
    %p103 = scmp.eq.s32.totalorder %s25, 1
    %p104 = por %p102, %p103
    %p105 = scmp.ne.s32.totalorder %s96, %s97
    %p106 = scmp.eq.s32.totalorder %s25, 0
    %p107 = por %p105, %p106
    %p108 = scmp.ne.s32.totalorder %s96, %s97
    %p109 = scmp.eq.s32.totalorder %s26, 1
    %p110 = por %p108, %p109
    %p112 = scmp.ne.s32.totalorder %s97, %s111
    %p113 = scmp.eq.s32.totalorder %s26, 0
    %p114 = por %p112, %p113
    %s116 = sadd.s32 %s115, 1
    %p119 = scmp.eq.s32.totalorder %s20, 1
    %p120 = scmp.ne.s32.totalorder %s115, %s117
    %p121 = scmp.eq.s32.totalorder %s20, 0
    %p122 = por %p120, %p121
    %p123 = scmp.ne.s32.totalorder %s115, %s117
    %p124 = scmp.eq.s32.totalorder %s25, 1
    %p125 = por %p123, %p124
    %p126 = scmp.ne.s32.totalorder %s117, %s118
    %p127 = scmp.eq.s32.totalorder %s25, 0
    %p128 = por %p126, %p127
    %p129 = scmp.ne.s32.totalorder %s117, %s118
    %p130 = scmp.eq.s32.totalorder %s26, 1
    %p131 = por %p129, %p130
    %p133 = scmp.ne.s32.totalorder %s118, %s132
    %p134 = scmp.eq.s32.totalorder %s26, 0
    %p135 = por %p133, %p134
    %s137 = sadd.s32 %s136, 1
    %p140 = scmp.eq.s32.totalorder %s20, 1
    %p141 = scmp.ne.s32.totalorder %s136, %s138
    %p142 = scmp.eq.s32.totalorder %s20, 0
    %p143 = por %p141, %p142
    %p144 = scmp.ne.s32.totalorder %s136, %s138
    %p145 = scmp.eq.s32.totalorder %s25, 1
    %p146 = por %p144, %p145
    %p147 = scmp.ne.s32.totalorder %s138, %s139
    %p148 = scmp.eq.s32.totalorder %s25, 0
    %p149 = por %p147, %p148
    %p150 = scmp.ne.s32.totalorder %s138, %s139
    %p151 = scmp.eq.s32.totalorder %s26, 1
    %p152 = por %p150, %p151
    %p154 = scmp.ne.s32.totalorder %s139, %s153
    %p155 = scmp.eq.s32.totalorder %s26, 0
    %p156 = por %p154, %p155
    %s158 = sadd.s32 %s157, 1
    %p161 = scmp.eq.s32.totalorder %s20, 1
    %p162 = scmp.ne.s32.totalorder %s157, %s159
    %p163 = scmp.eq.s32.totalorder %s20, 0
    %p164 = por %p162, %p163
    %p165 = scmp.ne.s32.totalorder %s157, %s159
    %p166 = scmp.eq.s32.totalorder %s25, 1
    %p167 = por %p165, %p166
    %p168 = scmp.ne.s32.totalorder %s159, %s160
    %p169 = scmp.eq.s32.totalorder %s25, 0
    %p170 = por %p168, %p169
    %p171 = scmp.ne.s32.totalorder %s159, %s160
    %p172 = scmp.eq.s32.totalorder %s26, 1
    %p173 = por %p171, %p172
    %p175 = scmp.ne.s32.totalorder %s160, %s174
    %p176 = scmp.eq.s32.totalorder %s26, 0
    %p177 = por %p175, %p176
    %s179 = sadd.s32 %s178, 1
    %p182 = scmp.eq.s32.totalorder %s20, 1
    %p183 = scmp.ne.s32.totalorder %s178, %s180
    %p184 = scmp.eq.s32.totalorder %s20, 0
    %p185 = por %p183, %p184
    %p186 = scmp.ne.s32.totalorder %s178, %s180
    %p187 = scmp.eq.s32.totalorder %s25, 1
    %p188 = por %p186, %p187
    %p189 = scmp.ne.s32.totalorder %s180, %s181
    %p190 = scmp.eq.s32.totalorder %s25, 0
    %p191 = por %p189, %p190
    %p192 = scmp.ne.s32.totalorder %s180, %s181
    %p193 = scmp.eq.s32.totalorder %s26, 1
    %p194 = por %p192, %p193
    %p196 = scmp.ne.s32.totalorder %s181, %s195
    %p197 = scmp.eq.s32.totalorder %s26, 0
    %p198 = por %p196, %p197
    %s200 = sadd.s32 %s199, 1
    %p203 = scmp.eq.s32.totalorder %s20, 1
    %p204 = scmp.ne.s32.totalorder %s199, %s201
    %p205 = scmp.eq.s32.totalorder %s20, 0
    %p206 = por %p204, %p205
    %p207 = scmp.ne.s32.totalorder %s199, %s201
    %p208 = scmp.eq.s32.totalorder %s25, 1
    %p209 = por %p207, %p208
    %p210 = scmp.ne.s32.totalorder %s201, %s202
    %p211 = scmp.eq.s32.totalorder %s25, 0
    %p212 = por %p210, %p211
    %p213 = scmp.ne.s32.totalorder %s201, %s202
    %p214 = scmp.eq.s32.totalorder %s26, 1
    %p215 = por %p213, %p214
    %p217 = scmp.ne.s32.totalorder %s202, %s216
    %p218 = scmp.eq.s32.totalorder %s26, 0
    %p219 = por %p217, %p218
    %s221 = sadd.s32 %s220, 1
    %p224 = scmp.eq.s32.totalorder %s20, 1
    %p225 = scmp.ne.s32.totalorder %s220, %s222
    %p226 = scmp.eq.s32.totalorder %s20, 0
    %p227 = por %p225, %p226
    %p228 = scmp.ne.s32.totalorder %s220, %s222
    %p229 = scmp.eq.s32.totalorder %s25, 1
    %p230 = por %p228, %p229
    %p231 = scmp.ne.s32.totalorder %s222, %s223
    %p232 = scmp.eq.s32.totalorder %s25, 0
    %p233 = por %p231, %p232
    %p234 = scmp.ne.s32.totalorder %s222, %s223
    %p235 = scmp.eq.s32.totalorder %s26, 1
    %p236 = por %p234, %p235
    %p238 = scmp.ne.s32.totalorder %s223, %s237
    %p239 = scmp.eq.s32.totalorder %s26, 0
    %p240 = por %p238, %p239
    %s242 = sadd.s32 %s241, 1
    %p245 = scmp.eq.s32.totalorder %s20, 1
    %p246 = scmp.ne.s32.totalorder %s241, %s243
    %p247 = scmp.eq.s32.totalorder %s20, 0
    %p248 = por %p246, %p247
    %p249 = scmp.ne.s32.totalorder %s241, %s243
    %p250 = scmp.eq.s32.totalorder %s25, 1
    %p251 = por %p249, %p250
    %p252 = scmp.ne.s32.totalorder %s243, %s244
    %p253 = scmp.eq.s32.totalorder %s25, 0
    %p254 = por %p252, %p253
    %p255 = scmp.ne.s32.totalorder %s243, %s244
    %p256 = scmp.eq.s32.totalorder %s26, 1
    %p257 = por %p255, %p256
    %p259 = scmp.ne.s32.totalorder %s244, %s258
    %p260 = scmp.eq.s32.totalorder %s26, 0
    %p261 = por %p259, %p260
    %s263 = sadd.s32 %s262, 1
    %p266 = scmp.eq.s32.totalorder %s20, 1
    %p267 = scmp.ne.s32.totalorder %s262, %s264
    %p268 = scmp.eq.s32.totalorder %s20, 0
    %p269 = por %p267, %p268
    %p270 = scmp.ne.s32.totalorder %s262, %s264
    %p271 = scmp.eq.s32.totalorder %s25, 1
    %p272 = por %p270, %p271
    %p273 = scmp.ne.s32.totalorder %s264, %s265
    %p274 = scmp.eq.s32.totalorder %s25, 0
    %p275 = por %p273, %p274
    %p276 = scmp.ne.s32.totalorder %s264, %s265
    %p277 = scmp.eq.s32.totalorder %s26, 1
    %p278 = por %p276, %p277
    %p280 = scmp.ne.s32.totalorder %s265, %s279
    %p281 = scmp.eq.s32.totalorder %s26, 0
    %p282 = por %p280, %p281
    %s284 = sadd.s32 %s283, 1
    %p287 = scmp.eq.s32.totalorder %s20, 1
    %p288 = scmp.ne.s32.totalorder %s283, %s285
    %p289 = scmp.eq.s32.totalorder %s20, 0
    %p290 = por %p288, %p289
    %p291 = scmp.ne.s32.totalorder %s283, %s285
    %p292 = scmp.eq.s32.totalorder %s25, 1
    %p293 = por %p291, %p292
    %p294 = scmp.ne.s32.totalorder %s285, %s286
    %p295 = scmp.eq.s32.totalorder %s25, 0
    %p296 = por %p294, %p295
    %p297 = scmp.ne.s32.totalorder %s285, %s286
    %p298 = scmp.eq.s32.totalorder %s26, 1
    %p299 = por %p297, %p298
    %p301 = scmp.ne.s32.totalorder %s286, %s300
    %p302 = scmp.eq.s32.totalorder %s26, 0
    %p303 = por %p301, %p302
    %s305 = sadd.s32 %s304, 1
    %p308 = scmp.eq.s32.totalorder %s20, 1
    %p309 = scmp.ne.s32.totalorder %s304, %s306
    %p310 = scmp.eq.s32.totalorder %s20, 0
    %p311 = por %p309, %p310
    %p312 = scmp.ne.s32.totalorder %s304, %s306
    %p313 = scmp.eq.s32.totalorder %s25, 1
    %p314 = por %p312, %p313
    %p315 = scmp.ne.s32.totalorder %s306, %s307
    %p316 = scmp.eq.s32.totalorder %s25, 0
    %p317 = por %p315, %p316
    %p318 = scmp.ne.s32.totalorder %s306, %s307
    %p319 = scmp.eq.s32.totalorder %s26, 1
    %p320 = por %p318, %p319
    %p322 = scmp.ne.s32.totalorder %s307, %s321
    %p323 = scmp.eq.s32.totalorder %s26, 0
    %p324 = por %p322, %p323
    %s326 = sadd.s32 %s325, 1
    %p329 = scmp.eq.s32.totalorder %s20, 1
    %p330 = scmp.ne.s32.totalorder %s325, %s327
    %p331 = scmp.eq.s32.totalorder %s20, 0
    %p332 = por %p330, %p331
    %p333 = scmp.ne.s32.totalorder %s325, %s327
    %p334 = scmp.eq.s32.totalorder %s25, 1
    %p335 = por %p333, %p334
    %p336 = scmp.ne.s32.totalorder %s327, %s328
    %p337 = scmp.eq.s32.totalorder %s25, 0
    %p338 = por %p336, %p337
    %p339 = scmp.ne.s32.totalorder %s327, %s328
    %p340 = scmp.eq.s32.totalorder %s26, 1
    %p341 = por %p339, %p340
    %p343 = scmp.ne.s32.totalorder %s328, %s342
    %p344 = scmp.eq.s32.totalorder %s26, 0
    %p345 = por %p343, %p344
    %s346 = ssub.s32 %s27, %s39
    %s347 = ssub.s32 %s28, %s35
    %s348 = sor.u32 %s346, %s347
    %p349 = scmp.eq.s32.totalorder %s348, 0
    %s351 = sadd.s32 %s350, 1
    %s352 = scalar_select %p349, %s350, %s351
    %p355 = pneg %p349
    %p356 = scmp.eq.s32.totalorder %s20, 1
    %p357 = por %p355, %p356
    %p358 = scmp.ne.s32.totalorder %s350, %s353
    %p359 = scmp.eq.s32.totalorder %s20, 0
    %p360 = por %p358, %p359
    %p361 = scmp.ne.s32.totalorder %s350, %s353
    %p362 = scmp.eq.s32.totalorder %s25, 1
    %p363 = por %p361, %p362
    %p364 = scmp.ne.s32.totalorder %s353, %s354
    %p365 = scmp.eq.s32.totalorder %s25, 0
    %p366 = por %p364, %p365
    %p367 = scmp.ne.s32.totalorder %s353, %s354
    %p368 = scmp.eq.s32.totalorder %s26, 1
    %p369 = por %p367, %p368
    %p371 = scmp.ne.s32.totalorder %s354, %s370
    %p372 = scmp.eq.s32.totalorder %s26, 0
    %p373 = por %p371, %p372
    %p374 = scmp.le.s32.totalorder 1, %s20
    %p375 = scmp.lt.s32.totalorder %s20, 3
    %p376 = pnand %p374, %p375
    %p377 = pneg %p376
    // Predicated region
    $region9: #{ramplus_forward.12} parent=5 // pred_check
      _
    $region10: #{ramplus_forward.12} parent=5 // pred_check_branch
      %379 = sbr.rel (%p376) target = $region12
    $region11: #{ramplus_forward.12} parent=5 // pred_region
      %s380 = ssub.s32 %s20, 1
      // Predicated region
      $region13: #{ramplus_forward.12} parent=11 // pred_check
        %p381 = pneg %p86
      $region14: #{ramplus_forward.12} parent=11 // pred_check_branch
        %383 = sbr.rel (%p381) target = $region16
      $region15: #{ramplus_forward.12} parent=11 // pred_region
        %s384 = smul.u32 4, %s30
        %p385 = scmp.lt.s32.totalorder %s384, 3
        %s386 = scalar_select %p385, %s384, 3
        %s387 = smul.addr %s386, 2
        %s388 = smul.addr %s387, 4
        %s389 = scalar_lea.vmem %s1, %s388
        %s390 = smul.u32 4, %s30
      $region16: #{ramplus_forward.12} parent=11 // pred_fallthru
        _
      // Predicated region
      $region17: #{ramplus_forward.12} parent=11 // pred_check
        %p391 = pneg %p107
      $region18: #{ramplus_forward.12} parent=11 // pred_check_branch
        %393 = sbr.rel (%p391) target = $region20
      $region19: #{ramplus_forward.12} parent=11 // pred_region
        _
      $region20: #{ramplus_forward.12} parent=11 // pred_fallthru
        _
      // Predicated region
      $region21: #{ramplus_forward.12} parent=11 // pred_check
        %p394 = pneg %p128
      $region22: #{ramplus_forward.12} parent=11 // pred_check_branch
        %396 = sbr.rel (%p394) target = $region24
      $region23: #{ramplus_forward.12} parent=11 // pred_region
        _
      $region24: #{ramplus_forward.12} parent=11 // pred_fallthru
        _
      // Predicated region
      $region25: #{ramplus_forward.12} parent=11 // pred_check
        %p397 = pneg %p149
      $region26: #{ramplus_forward.12} parent=11 // pred_check_branch
        %399 = sbr.rel (%p397) target = $region28
      $region27: #{ramplus_forward.12} parent=11 // pred_region
        _
      $region28: #{ramplus_forward.12} parent=11 // pred_fallthru
        _
      // Predicated region
      $region29: #{ramplus_forward.12} parent=11 // pred_check
        %p400 = pneg %p170
      $region30: #{ramplus_forward.12} parent=11 // pred_check_branch
        %402 = sbr.rel (%p400) target = $region32
      $region31: #{ramplus_forward.12} parent=11 // pred_region
        _
      $region32: #{ramplus_forward.12} parent=11 // pred_fallthru
        _
      // Predicated region
      $region33: #{ramplus_forward.12} parent=11 // pred_check
        %p403 = pneg %p191
      $region34: #{ramplus_forward.12} parent=11 // pred_check_branch
        %405 = sbr.rel (%p403) target = $region36
      $region35: #{ramplus_forward.12} parent=11 // pred_region
        _
      $region36: #{ramplus_forward.12} parent=11 // pred_fallthru
        _
      // Predicated region
      $region37: #{ramplus_forward.12} parent=11 // pred_check
        %p406 = pneg %p212
      $region38: #{ramplus_forward.12} parent=11 // pred_check_branch
        %408 = sbr.rel (%p406) target = $region40
      $region39: #{ramplus_forward.12} parent=11 // pred_region
        _
      $region40: #{ramplus_forward.12} parent=11 // pred_fallthru
        _
      // Predicated region
      $region41: #{ramplus_forward.12} parent=11 // pred_check
        %p409 = pneg %p233
      $region42: #{ramplus_forward.12} parent=11 // pred_check_branch
        %411 = sbr.rel (%p409) target = $region44
      $region43: #{ramplus_forward.12} parent=11 // pred_region
        _
      $region44: #{ramplus_forward.12} parent=11 // pred_fallthru
        _
      // Predicated region
      $region45: #{ramplus_forward.12} parent=11 // pred_check
        %p412 = pneg %p254
      $region46: #{ramplus_forward.12} parent=11 // pred_check_branch
        %414 = sbr.rel (%p412) target = $region48
      $region47: #{ramplus_forward.12} parent=11 // pred_region
        _
      $region48: #{ramplus_forward.12} parent=11 // pred_fallthru
        _
      // Predicated region
      $region49: #{ramplus_forward.12} parent=11 // pred_check
        %p415 = pneg %p275
      $region50: #{ramplus_forward.12} parent=11 // pred_check_branch
        %417 = sbr.rel (%p415) target = $region52
      $region51: #{ramplus_forward.12} parent=11 // pred_region
        _
      $region52: #{ramplus_forward.12} parent=11 // pred_fallthru
        _
      // Predicated region
      $region53: #{ramplus_forward.12} parent=11 // pred_check
        %p418 = pneg %p296
      $region54: #{ramplus_forward.12} parent=11 // pred_check_branch
        %420 = sbr.rel (%p418) target = $region56
      $region55: #{ramplus_forward.12} parent=11 // pred_region
        _
      $region56: #{ramplus_forward.12} parent=11 // pred_fallthru
        _
      // Predicated region
      $region57: #{ramplus_forward.12} parent=11 // pred_check
        %p421 = pneg %p317
      $region58: #{ramplus_forward.12} parent=11 // pred_check_branch
        %423 = sbr.rel (%p421) target = $region60
      $region59: #{ramplus_forward.12} parent=11 // pred_region
        _
      $region60: #{ramplus_forward.12} parent=11 // pred_fallthru
        _
      // Predicated region
      $region61: #{ramplus_forward.12} parent=11 // pred_check
        %p424 = pneg %p338
      $region62: #{ramplus_forward.12} parent=11 // pred_check_branch
        %426 = sbr.rel (%p424) target = $region64
      $region63: #{ramplus_forward.12} parent=11 // pred_region
        _
      $region64: #{ramplus_forward.12} parent=11 // pred_fallthru
        _
    $region12: #{ramplus_forward.12} parent=5 // pred_fallthru
      _
    %p427 = scmp.lt.s32.totalorder %s20, 2
    // Predicated region
    $region65: #{ramplus_forward.12} parent=5 // pred_check
      %p428 = pneg %p427
    $region66: #{ramplus_forward.12} parent=5 // pred_check_branch
      %430 = sbr.rel (%p428) target = $region68
    $region67: #{ramplus_forward.12} parent=5 // pred_region
      // Predicated region
      $region69: #{ramplus_forward.12} parent=67 // pred_check
        %p431 = pneg %p54
      $region70: #{ramplus_forward.12} parent=67 // pred_check_branch
        %433 = sbr.rel (%p431) target = $region72
      $region71: #{ramplus_forward.12} parent=67 // pred_region
        %s434 = smul.u32 8, %s28
        %p435 = scmp.lt.s32.totalorder %s27, 1
        %s436 = scalar_select %p435, %s27, 1
        %p437 = scmp.lt.s32.totalorder %s434, 7
        %s438 = scalar_select %p437, %s434, 7
        %s439 = smul.addr %s436, 8
        %s440 = sadd.s32 %s438, %s439
        %s441 = smul.addr %s440, 8
        %s442 = scalar_lea.vmem %s0, %s441
        %s443 = smul.u32 8, %s28
      $region72: #{ramplus_forward.12} parent=67 // pred_fallthru
        _
    $region68: #{ramplus_forward.12} parent=5 // pred_fallthru
      _
    %p444 = scmp.le.s32.totalorder 1, %s20
    %p445 = scmp.lt.s32.totalorder %s20, 3
    %p446 = pnand %p444, %p445
    %p447 = pneg %p446
    // Predicated region
    $region73: #{ramplus_forward.12} parent=5 // pred_check
      _
    $region74: #{ramplus_forward.12} parent=5 // pred_check_branch
      %449 = sbr.rel (%p446) target = $region76
    $region75: #{ramplus_forward.12} parent=5 // pred_region
      %s450 = ssub.s32 %s20, 1
      %s451 = smul.u32 8, %s30
      %p452 = scmp.lt.s32.totalorder %s29, 1
      %s453 = scalar_select %p452, %s29, 1
      %p454 = scmp.lt.s32.totalorder %s451, 7
      %s455 = scalar_select %p454, %s451, 7
      %s456 = smul.addr %s453, 8
      %s457 = sadd.s32 %s455, %s456
      %s458 = smul.addr %s457, 8
      %s459 = scalar_lea.vmem %s0, %s458
      %p460 = pneg %p60
      %p461 = pneg %p57
      %s462 = smul.u32 4, %s30
      %p463 = scmp.lt.s32.totalorder %s462, 3
      %s464 = scalar_select %p463, %s462, 3
      %s465 = smul.addr %s464, 2
      %s466 = smul.addr %s465, 4
      %s467 = scalar_lea.vmem %s1, %s466
      %p468 = pneg %p86
      %p469 = pneg %p83
      %p470 = pneg %p107
      %p471 = pneg %p104
      %p472 = pneg %p128
      %p473 = pneg %p125
      %p474 = pneg %p149
      %p475 = pneg %p146
      %p476 = pneg %p170
      %p477 = pneg %p167
      %p478 = pneg %p191
      %p479 = pneg %p188
      %p480 = pneg %p212
      %p481 = pneg %p209
      %p482 = pneg %p233
      %p483 = pneg %p230
      %p484 = pneg %p254
      %p485 = pneg %p251
      %p486 = pneg %p275
      %p487 = pneg %p272
      %p488 = pneg %p296
      %p489 = pneg %p293
      %p490 = pneg %p317
      %p491 = pneg %p314
      %p492 = pneg %p338
      %p493 = pneg %p335
      %p494 = pneg %p366
      %p495 = pneg %p363
      %s496 = smul.u32 8, %s30
      %p497 = scmp.lt.s32.totalorder %s29, 1
      %s498 = scalar_select %p497, %s29, 1
      %p499 = scmp.lt.s32.totalorder %s496, 7
      %s500 = scalar_select %p499, %s496, 7
      %s501 = smul.addr %s498, 8
      %s502 = sadd.s32 %s500, %s501
      %s503 = smul.addr %s502, 8
      %s504 = scalar_lea.vmem %s14, %s503
      %s505 = smul.u32 8, %s30
      %p506 = scmp.lt.s32.totalorder %s29, 1
      %s507 = scalar_select %p506, %s29, 1
      %p508 = scmp.lt.s32.totalorder %s505, 7
      %s509 = scalar_select %p508, %s505, 7
      %s510 = smul.addr %s507, 8
      %s511 = sadd.s32 %s509, %s510
      %s512 = smul.addr %s511, 8
      %s513 = scalar_lea.vmem %s0, %s512
      %s514 = smul.u32 8, %s30
      %s515 = smul.u32 4, %s30
      %p516 = scmp.lt.s32.totalorder %s515, 3
      %s517 = scalar_select %p516, %s515, 3
      %s518 = smul.addr %s517, 2
      %s519 = smul.addr %s518, 4
      %s520 = scalar_lea.vmem %s1, %s519
      %s521 = smul.u32 4, %s30
      %s522 = smul.u32 8, %s30
      %p523 = scmp.lt.s32.totalorder %s29, 1
      %s524 = scalar_select %p523, %s29, 1
      %p525 = scmp.lt.s32.totalorder %s522, 7
      %s526 = scalar_select %p525, %s522, 7
      %s527 = smul.addr %s524, 8
      %s528 = sadd.s32 %s526, %s527
      %s529 = smul.addr %s528, 8
      %s530 = scalar_lea.vmem %s14, %s529
      %s531 = smul.u32 8, %s30
      %v533 = vld [vmem:[%s513] sm:$0xff]
      %v534 = vld [vmem:[%s513 + $0x8] sm:$0xff]
      %v535 = vld [vmem:[%s513 + $0x10] sm:$0xff]
      %v536 = vld [vmem:[%s513 + $0x18] sm:$0xff]
      %v537 = vld [vmem:[%s513 + $0x20] sm:$0xff]
      %v538 = vld [vmem:[%s513 + $0x28] sm:$0xff]
      %v539 = vld [vmem:[%s513 + $0x30] sm:$0xff]
      %v540 = vld [vmem:[%s513 + $0x38] sm:$0xff]
      %v541 = vld [vmem:[%s2] sm:$0x1]
      %v542 = vld [vmem:[%s3] sm:$0x1]
      %vm543 = vcmask 261120
      %v544 = vsel %vm543, %v533, 0.0
      %545 = vadd.xlane.f32.xlu0 %v544
      %v546 = vpop.xlane.xlu0 %545
      %v547 = vsel %vm543, %v534, 0.0
      %548 = vadd.xlane.f32.xlu0 %v547
      %v549 = vpop.xlane.xlu0 %548
      %v550 = vsel %vm543, %v535, 0.0
      %551 = vadd.xlane.f32.xlu0 %v550
      %v552 = vpop.xlane.xlu0 %551
      %v553 = vsel %vm543, %v536, 0.0
      %554 = vadd.xlane.f32.xlu0 %v553
      %v555 = vpop.xlane.xlu0 %554
      %v556 = vsel %vm543, %v537, 0.0
      %557 = vadd.xlane.f32.xlu0 %v556
      %v558 = vpop.xlane.xlu0 %557
      %v559 = vsel %vm543, %v538, 0.0
      %560 = vadd.xlane.f32.xlu0 %v559
      %v561 = vpop.xlane.xlu0 %560
      %v562 = vsel %vm543, %v539, 0.0
      %563 = vadd.xlane.f32.xlu0 %v562
      %v564 = vpop.xlane.xlu0 %563
      %v565 = vsel %vm543, %v540, 0.0
      %566 = vadd.xlane.f32.xlu0 %v565
      %v567 = vpop.xlane.xlu0 %566
      %v568 = vrcp.pop 32.0
      %v569 = vmul.f32 %v546, %v568
      %v570 = vmul.f32 %v549, %v568
      %v571 = vmul.f32 %v552, %v568
      %v572 = vmul.f32 %v555, %v568
      %v573 = vmul.f32 %v558, %v568
      %v574 = vmul.f32 %v561, %v568
      %v575 = vmul.f32 %v564, %v568
      %v576 = vmul.f32 %v567, %v568
      %v577 = vsub.f32 %v533, %v569
      %v578 = vsub.f32 %v534, %v570
      %v579 = vsub.f32 %v535, %v571
      %v580 = vsub.f32 %v536, %v572
      %v581 = vsub.f32 %v537, %v573
      %v582 = vsub.f32 %v538, %v574
      %v583 = vsub.f32 %v539, %v575
      %v584 = vsub.f32 %v540, %v576
      %v585 = vmul.f32 %v577, %v577
      %v586 = vmul.f32 %v578, %v578
      %v587 = vmul.f32 %v579, %v579
      %v588 = vmul.f32 %v580, %v580
      %v589 = vmul.f32 %v581, %v581
      %v590 = vmul.f32 %v582, %v582
      %v591 = vmul.f32 %v583, %v583
      %v592 = vmul.f32 %v584, %v584
      %v593 = vsel %vm543, %v585, 0.0
      %594 = vadd.xlane.f32.xlu0 %v593
      %v595 = vpop.xlane.xlu0 %594
      %v596 = vsel %vm543, %v586, 0.0
      %597 = vadd.xlane.f32.xlu0 %v596
      %v598 = vpop.xlane.xlu0 %597
      %v599 = vsel %vm543, %v587, 0.0
      %600 = vadd.xlane.f32.xlu0 %v599
      %v601 = vpop.xlane.xlu0 %600
      %v602 = vsel %vm543, %v588, 0.0
      %603 = vadd.xlane.f32.xlu0 %v602
      %v604 = vpop.xlane.xlu0 %603
      %v605 = vsel %vm543, %v589, 0.0
      %606 = vadd.xlane.f32.xlu0 %v605
      %v607 = vpop.xlane.xlu0 %606
      %v608 = vsel %vm543, %v590, 0.0
      %609 = vadd.xlane.f32.xlu0 %v608
      %v610 = vpop.xlane.xlu0 %609
      %v611 = vsel %vm543, %v591, 0.0
      %612 = vadd.xlane.f32.xlu0 %v611
      %v613 = vpop.xlane.xlu0 %612
      %v614 = vsel %vm543, %v592, 0.0
      %615 = vadd.xlane.f32.xlu0 %v614
      %v616 = vpop.xlane.xlu0 %615
      %v617 = vmul.f32 %v595, %v568
      %v618 = vmul.f32 %v598, %v568
      %v619 = vmul.f32 %v601, %v568
      %v620 = vmul.f32 %v604, %v568
      %v621 = vmul.f32 %v607, %v568
      %v622 = vmul.f32 %v610, %v568
      %v623 = vmul.f32 %v613, %v568
      %v624 = vmul.f32 %v616, %v568
      %v625 = vadd.f32 %v617, 1e-05
      %v626 = vadd.f32 %v618, 1e-05
      %v627 = vadd.f32 %v619, 1e-05
      %v628 = vadd.f32 %v620, 1e-05
      %v629 = vadd.f32 %v621, 1e-05
      %v630 = vadd.f32 %v622, 1e-05
      %v631 = vadd.f32 %v623, 1e-05
      %v632 = vadd.f32 %v624, 1e-05
      %v633 = vrsqrt.pop %v625
      %v634 = vrsqrt.pop %v626
      %v635 = vrsqrt.pop %v627
      %v636 = vrsqrt.pop %v628
      %v637 = vrsqrt.pop %v629
      %v638 = vrsqrt.pop %v630
      %v639 = vrsqrt.pop %v631
      %v640 = vrsqrt.pop %v632
      %v641 = vmul.f32 %v577, %v633
      %v642 = vmul.f32 %v578, %v634
      %v643 = vmul.f32 %v579, %v635
      %v644 = vmul.f32 %v580, %v636
      %v645 = vmul.f32 %v581, %v637
      %v646 = vmul.f32 %v582, %v638
      %v647 = vmul.f32 %v583, %v639
      %v648 = vmul.f32 %v584, %v640
      %v650 = vlaneseq
      %v651 = vshrl.u32 %v650, 7
      %v652 = vsub.s32 0, %v651
      %v653 = vrot.slane %v541, %v652
      %v655 = vmul.f32 %v641, %v653
      %v656 = vmul.f32 %v642, %v653
      %v657 = vmul.f32 %v643, %v653
      %v658 = vmul.f32 %v644, %v653
      %v659 = vmul.f32 %v645, %v653
      %v660 = vmul.f32 %v646, %v653
      %v661 = vmul.f32 %v647, %v653
      %v662 = vmul.f32 %v648, %v653
      %v664 = vlaneseq
      %v665 = vshrl.u32 %v664, 7
      %v666 = vsub.s32 0, %v665
      %v667 = vrot.slane %v542, %v666
      %v669 = vadd.f32 %v655, %v667
      %v670 = vadd.f32 %v656, %v667
      %v671 = vadd.f32 %v657, %v667
      %v672 = vadd.f32 %v658, %v667
      %v673 = vadd.f32 %v659, %v667
      %v674 = vadd.f32 %v660, %v667
      %v675 = vadd.f32 %v661, %v667
      %v676 = vadd.f32 %v662, %v667
      %v677 = vld [vmem:[%s4] sm:$0xf]
      %v678 = vld [vmem:[%s4 + $0x4] sm:$0xf]
      %v679 = vld [vmem:[%s4 + $0x8] sm:$0xf]
      %v680 = vld [vmem:[%s4 + $0xc] sm:$0xf]
      %v681 = vpack.c.bf16 %v670, %v669
      %v682 = vpack.c.bf16 %v672, %v671
      %v683 = vpack.c.bf16 %v674, %v673
      %v684 = vpack.c.bf16 %v676, %v675
      %v685 = vld [vmem:[%s5] sm:$0x1]
      %v687 = vlaneseq
      %v688 = vshrl.u32 %v687, 7
      %v689 = vsub.s32 0, %v688
      %v690 = vrot.slane %v685, %v689
      %v696 = vunpack.c.l.b16 %v677
      %v697 = vunpack.c.l.b16 %v678
      %v698 = vunpack.c.l.b16 %v679
      %v699 = vunpack.c.l.b16 %v680
      %v700 = vpack.c.b16 %v697, %v696
      %v701 = vpack.c.b16 %v699, %v698
      %v705 = vsel %vm543, %v681, 0
      %v708 = vsel %vm543, %v682, 0
      %v711 = vsel %vm543, %v683, 0
      %v714 = vsel %vm543, %v684, 0
      %716 = vmatprep.subr.bf16.mxu0 0
      %717 = vmatpush1.bf16.msra.mxu0 %v700
      %718 = vmatprep.subr.bf16.mxu0 0
      %719 = vmatpush1.bf16.msra.mxu0 %v701
      %720 = vmatprep.subr.bf16.mxu0 0
      %721 = vmatpush1.bf16.msra.mxu0 0
      %722 = vmatprep.subr.bf16.mxu0 0
      %723 = vmatpush1.bf16.msra.mxu0 0
      %724 = vmatprep.subr.bf16.mxu0 0
      %725 = vmatpush1.bf16.msra.mxu0 0
      %726 = vmatprep.subr.bf16.mxu0 0
      %727 = vmatpush1.bf16.msra.mxu0 0
      %728 = vmatprep.subr.bf16.mxu0 0
      %729 = vmatpush1.bf16.msra.mxu0 0
      %730 = vmatprep.subr.bf16.mxu0 0
      %731 = vmatpush1.bf16.msra.mxu0 0
      %732 = vmatprep.subr.bf16.mxu0 0
      %733 = vmatpush1.bf16.msra.mxu0 0
      %734 = vmatprep.subr.bf16.mxu0 0
      %735 = vmatpush1.bf16.msra.mxu0 0
      %736 = vmatprep.subr.bf16.mxu0 0
      %737 = vmatpush1.bf16.msra.mxu0 0
      %738 = vmatprep.subr.bf16.mxu0 0
      %739 = vmatpush1.bf16.msra.mxu0 0
      %740 = vmatprep.subr.bf16.mxu0 0
      %741 = vmatpush1.bf16.msra.mxu0 0
      %742 = vmatprep.subr.bf16.mxu0 0
      %743 = vmatpush1.bf16.msra.mxu0 0
      %744 = vmatprep.subr.bf16.mxu0 0
      %745 = vmatpush1.bf16.msra.mxu0 0
      %746 = vmatprep.subr.bf16.mxu0 0
      %747 = vmatpush1.bf16.msra.mxu0 0
      %748 = vmatprep.mubr.bf16.mxu0 0
      %749 = vmatmul.mubr.bf16.gmra.mrb[0].mxu0 %v705
      %v750 = vpop.f32.mrb[0].mxu0
      %v751 = vadd.f32 %v690, %v750
      %v752 = vpop.f32.mrb[0].mxu0
      %v753 = vpop.f32.mrb[0].mxu0
      %v754 = vadd.f32 %v690, %v753
      %v755 = vpop.f32.mrb[0].mxu0
      %756 = vmatprep.mubr.bf16.mxu0 0
      %757 = vmatmul.mubr.bf16.gmra.mrb[0].mxu0 %v708
      %v758 = vpop.f32.mrb[0].mxu0
      %v759 = vadd.f32 %v690, %v758
      %v760 = vpop.f32.mrb[0].mxu0
      %v761 = vpop.f32.mrb[0].mxu0
      %v762 = vadd.f32 %v690, %v761
      %v763 = vpop.f32.mrb[0].mxu0
      %764 = vmatprep.mubr.bf16.mxu0 0
      %765 = vmatmul.mubr.bf16.gmra.mrb[0].mxu0 %v711
      %v766 = vpop.f32.mrb[0].mxu0
      %v767 = vadd.f32 %v690, %v766
      %v768 = vpop.f32.mrb[0].mxu0
      %v769 = vpop.f32.mrb[0].mxu0
      %v770 = vadd.f32 %v690, %v769
      %v771 = vpop.f32.mrb[0].mxu0
      %772 = vmatprep.mubr.bf16.mxu0 0
      %773 = vmatmul.mubr.bf16.gmra.mrb[0].mxu0 %v714
      %v774 = vpop.f32.mrb[0].mxu0
      %v775 = vadd.f32 %v690, %v774
      %v776 = vpop.f32.mrb[0].mxu0
      %v777 = vpop.f32.mrb[0].mxu0
      %v778 = vadd.f32 %v690, %v777
      %v779 = vpop.f32.mrb[0].mxu0
      %780 = vdwg.mxu0
      %v781 = vmul.f32 %v751, 0.25
      %v782 = vmul.f32 %v754, 0.25
      %v783 = vmul.f32 %v759, 0.25
      %v784 = vmul.f32 %v762, 0.25
      %v785 = vmul.f32 %v767, 0.25
      %v786 = vmul.f32 %v770, 0.25
      %v787 = vmul.f32 %v775, 0.25
      %v788 = vmul.f32 %v778, 0.25
      %v789 = vld [vmem:[%s520] sm:$0xf]
      %v790 = vld [vmem:[%s520 + $0x4] sm:$0xf]
      %v791 = vld [vmem:[%s520 + $0x8] sm:$0xf]
      %v792 = vld [vmem:[%s520 + $0xc] sm:$0xf]
      %v793 = vld [vmem:[%s520 + $0x10] sm:$0xf]
      %v794 = vld [vmem:[%s520 + $0x14] sm:$0xf]
      %v795 = vld [vmem:[%s520 + $0x18] sm:$0xf]
      %v796 = vld [vmem:[%s520 + $0x1c] sm:$0xf]
      %v797 = vld [vmem:[%s520 + $0x20] sm:$0xf]
      %v798 = vld [vmem:[%s520 + $0x24] sm:$0xf]
      %v799 = vld [vmem:[%s520 + $0x28] sm:$0xf]
      %v800 = vld [vmem:[%s520 + $0x2c] sm:$0xf]
      %v801 = vld [vmem:[%s520 + $0x30] sm:$0xf]
      %v802 = vld [vmem:[%s520 + $0x34] sm:$0xf]
      %v803 = vld [vmem:[%s520 + $0x38] sm:$0xf]
      %v804 = vld [vmem:[%s520 + $0x3c] sm:$0xf]
      %v805 = vunpack.c.l.bf16 %v789
      %v806 = vunpack.c.l.bf16 %v790
      %v807 = vunpack.c.l.bf16 %v791
      %v808 = vunpack.c.l.bf16 %v792
      %v809 = vunpack.c.l.bf16 %v793
      %v810 = vunpack.c.l.bf16 %v794
      %v811 = vunpack.c.l.bf16 %v795
      %v812 = vunpack.c.l.bf16 %v796
      %v813 = vunpack.c.l.bf16 %v797
      %v814 = vunpack.c.l.bf16 %v798
      %v815 = vunpack.c.l.bf16 %v799
      %v816 = vunpack.c.l.bf16 %v800
      %v817 = vunpack.c.l.bf16 %v801
      %v818 = vunpack.c.l.bf16 %v802
      %v819 = vunpack.c.l.bf16 %v803
      %v820 = vunpack.c.l.bf16 %v804
      %v821 = vpack.c.bf16 %v782, %v781
      %v822 = vpack.c.bf16 %v784, %v783
      %v823 = vpack.c.bf16 %v786, %v785
      %v824 = vpack.c.bf16 %v788, %v787
      %v825 = vpack.c.bf16 %v754, %v751
      %v826 = vpack.c.bf16 %v762, %v759
      %v827 = vpack.c.bf16 %v770, %v767
      %v828 = vpack.c.bf16 %v778, %v775
      %830 = vrot.lane.b32.xlu0 %v825, 96
      %v831 = vpop.permute.xlu0 %830
      %vm832 = vcmask 130048
      %v834 = vsel %vm832, %v821, 0
      %v837 = vsel %vm832, %v831, 0
      %839 = vmatprep.subr.bf16.mxu0 0
      %840 = vmatpush1.bf16.xpose.msra.mxu0 %v837
      %841 = vmatprep.subr.bf16.mxu0 0
      %842 = vmatpush1.bf16.xpose.msra.mxu0 0
      %843 = vmatprep.subr.bf16.mxu0 0
      %844 = vmatpush1.bf16.xpose.msra.mxu0 0
      %845 = vmatprep.subr.bf16.mxu0 0
      %846 = vmatpush1.bf16.xpose.msra.mxu0 0
      %847 = vmatprep.subr.bf16.mxu0 0
      %848 = vmatpush1.bf16.xpose.msra.mxu0 0
      %849 = vmatprep.subr.bf16.mxu0 0
      %850 = vmatpush1.bf16.xpose.msra.mxu0 0
      %851 = vmatprep.subr.bf16.mxu0 0
      %852 = vmatpush1.bf16.xpose.msra.mxu0 0
      %853 = vmatprep.subr.bf16.mxu0 0
      %854 = vmatpush1.bf16.xpose.msra.mxu0 0
      %855 = vmatprep.subr.bf16.mxu0 0
      %856 = vmatpush1.bf16.xpose.msra.mxu0 0
      %857 = vmatprep.subr.bf16.mxu0 0
      %858 = vmatpush1.bf16.xpose.msra.mxu0 0
      %859 = vmatprep.subr.bf16.mxu0 0
      %860 = vmatpush1.bf16.xpose.msra.mxu0 0
      %861 = vmatprep.subr.bf16.mxu0 0
      %862 = vmatpush1.bf16.xpose.msra.mxu0 0
      %863 = vmatprep.subr.bf16.mxu0 0
      %864 = vmatpush1.bf16.xpose.msra.mxu0 0
      %865 = vmatprep.subr.bf16.mxu0 0
      %866 = vmatpush1.bf16.xpose.msra.mxu0 0
      %867 = vmatprep.subr.bf16.mxu0 0
      %868 = vmatpush1.bf16.xpose.msra.mxu0 0
      %869 = vmatprep.subr.bf16.mxu0 0
      %870 = vmatpush1.bf16.xpose.msra.mxu0 0
      %871 = vmatprep.mubr.bf16.mxu0 0
      %872 = vmatmul.mubr.bf16.gmra.mrb[0].mxu0 %v834
      %v873 = vpop.f32.mrb[0].mxu0
      %v874 = vadd.f32 %v805, %v873
      %v875 = vpop.f32.mrb[0].mxu0
      %v876 = vpop.f32.mrb[0].mxu0
      %v877 = vadd.f32 %v806, %v876
      %v878 = vpop.f32.mrb[0].mxu0
      %879 = vdwg.mxu0
      %881 = vrot.lane.b32.xlu0 %v826, 96
      %v882 = vpop.permute.xlu0 %881
      %v884 = vsel %vm832, %v822, 0
      %v887 = vsel %vm832, %v882, 0
      %889 = vmatprep.subr.bf16.mxu0 0
      %890 = vmatpush1.bf16.xpose.msra.mxu0 %v887
      %891 = vmatprep.subr.bf16.mxu0 0
      %892 = vmatpush1.bf16.xpose.msra.mxu0 0
      %893 = vmatprep.subr.bf16.mxu0 0
      %894 = vmatpush1.bf16.xpose.msra.mxu0 0
      %895 = vmatprep.subr.bf16.mxu0 0
      %896 = vmatpush1.bf16.xpose.msra.mxu0 0
      %897 = vmatprep.subr.bf16.mxu0 0
      %898 = vmatpush1.bf16.xpose.msra.mxu0 0
      %899 = vmatprep.subr.bf16.mxu0 0
      %900 = vmatpush1.bf16.xpose.msra.mxu0 0
      %901 = vmatprep.subr.bf16.mxu0 0
      %902 = vmatpush1.bf16.xpose.msra.mxu0 0
      %903 = vmatprep.subr.bf16.mxu0 0
      %904 = vmatpush1.bf16.xpose.msra.mxu0 0
      %905 = vmatprep.subr.bf16.mxu0 0
      %906 = vmatpush1.bf16.xpose.msra.mxu0 0
      %907 = vmatprep.subr.bf16.mxu0 0
      %908 = vmatpush1.bf16.xpose.msra.mxu0 0
      %909 = vmatprep.subr.bf16.mxu0 0
      %910 = vmatpush1.bf16.xpose.msra.mxu0 0
      %911 = vmatprep.subr.bf16.mxu0 0
      %912 = vmatpush1.bf16.xpose.msra.mxu0 0
      %913 = vmatprep.subr.bf16.mxu0 0
      %914 = vmatpush1.bf16.xpose.msra.mxu0 0
      %915 = vmatprep.subr.bf16.mxu0 0
      %916 = vmatpush1.bf16.xpose.msra.mxu0 0
      %917 = vmatprep.subr.bf16.mxu0 0
      %918 = vmatpush1.bf16.xpose.msra.mxu0 0
      %919 = vmatprep.subr.bf16.mxu0 0
      %920 = vmatpush1.bf16.xpose.msra.mxu0 0
      %921 = vmatprep.mubr.bf16.mxu0 0
      %922 = vmatmul.mubr.bf16.gmra.mrb[0].mxu0 %v884
      %v923 = vpop.f32.mrb[0].mxu0
      %v924 = vadd.f32 %v807, %v923
      %v925 = vpop.f32.mrb[0].mxu0
      %v926 = vpop.f32.mrb[0].mxu0
      %v927 = vadd.f32 %v808, %v926
      %v928 = vpop.f32.mrb[0].mxu0
      %929 = vdwg.mxu0
      %931 = vrot.lane.b32.xlu0 %v827, 96
      %v932 = vpop.permute.xlu0 %931
      %v934 = vsel %vm832, %v823, 0
      %v937 = vsel %vm832, %v932, 0
      %939 = vmatprep.subr.bf16.mxu0 0
      %940 = vmatpush1.bf16.xpose.msra.mxu0 %v937
      %941 = vmatprep.subr.bf16.mxu0 0
      %942 = vmatpush1.bf16.xpose.msra.mxu0 0
      %943 = vmatprep.subr.bf16.mxu0 0
      %944 = vmatpush1.bf16.xpose.msra.mxu0 0
      %945 = vmatprep.subr.bf16.mxu0 0
      %946 = vmatpush1.bf16.xpose.msra.mxu0 0
      %947 = vmatprep.subr.bf16.mxu0 0
      %948 = vmatpush1.bf16.xpose.msra.mxu0 0
      %949 = vmatprep.subr.bf16.mxu0 0
      %950 = vmatpush1.bf16.xpose.msra.mxu0 0
      %951 = vmatprep.subr.bf16.mxu0 0
      %952 = vmatpush1.bf16.xpose.msra.mxu0 0
      %953 = vmatprep.subr.bf16.mxu0 0
      %954 = vmatpush1.bf16.xpose.msra.mxu0 0
      %955 = vmatprep.subr.bf16.mxu0 0
      %956 = vmatpush1.bf16.xpose.msra.mxu0 0
      %957 = vmatprep.subr.bf16.mxu0 0
      %958 = vmatpush1.bf16.xpose.msra.mxu0 0
      %959 = vmatprep.subr.bf16.mxu0 0
      %960 = vmatpush1.bf16.xpose.msra.mxu0 0
      %961 = vmatprep.subr.bf16.mxu0 0
      %962 = vmatpush1.bf16.xpose.msra.mxu0 0
      %963 = vmatprep.subr.bf16.mxu0 0
      %964 = vmatpush1.bf16.xpose.msra.mxu0 0
      %965 = vmatprep.subr.bf16.mxu0 0
      %966 = vmatpush1.bf16.xpose.msra.mxu0 0
      %967 = vmatprep.subr.bf16.mxu0 0
      %968 = vmatpush1.bf16.xpose.msra.mxu0 0
      %969 = vmatprep.subr.bf16.mxu0 0
      %970 = vmatpush1.bf16.xpose.msra.mxu0 0
      %971 = vmatprep.mubr.bf16.mxu0 0
      %972 = vmatmul.mubr.bf16.gmra.mrb[0].mxu0 %v934
      %v973 = vpop.f32.mrb[0].mxu0
      %v974 = vadd.f32 %v809, %v973
      %v975 = vpop.f32.mrb[0].mxu0
      %v976 = vpop.f32.mrb[0].mxu0
      %v977 = vadd.f32 %v810, %v976
      %v978 = vpop.f32.mrb[0].mxu0
      %979 = vdwg.mxu0
      %981 = vrot.lane.b32.xlu0 %v828, 96
      %v982 = vpop.permute.xlu0 %981
      %v984 = vsel %vm832, %v824, 0
      %v987 = vsel %vm832, %v982, 0
      %989 = vmatprep.subr.bf16.mxu0 0
      %990 = vmatpush1.bf16.xpose.msra.mxu0 %v987
      %991 = vmatprep.subr.bf16.mxu0 0
      %992 = vmatpush1.bf16.xpose.msra.mxu0 0
      %993 = vmatprep.subr.bf16.mxu0 0
      %994 = vmatpush1.bf16.xpose.msra.mxu0 0
      %995 = vmatprep.subr.bf16.mxu0 0
      %996 = vmatpush1.bf16.xpose.msra.mxu0 0
      %997 = vmatprep.subr.bf16.mxu0 0
      %998 = vmatpush1.bf16.xpose.msra.mxu0 0
      %999 = vmatprep.subr.bf16.mxu0 0
      %1000 = vmatpush1.bf16.xpose.msra.mxu0 0
      %1001 = vmatprep.subr.bf16.mxu0 0
      %1002 = vmatpush1.bf16.xpose.msra.mxu0 0
      %1003 = vmatprep.subr.bf16.mxu0 0
      %1004 = vmatpush1.bf16.xpose.msra.mxu0 0
      %1005 = vmatprep.subr.bf16.mxu0 0
      %1006 = vmatpush1.bf16.xpose.msra.mxu0 0
      %1007 = vmatprep.subr.bf16.mxu0 0
      %1008 = vmatpush1.bf16.xpose.msra.mxu0 0
      %1009 = vmatprep.subr.bf16.mxu0 0
      %1010 = vmatpush1.bf16.xpose.msra.mxu0 0
      %1011 = vmatprep.subr.bf16.mxu0 0
      %1012 = vmatpush1.bf16.xpose.msra.mxu0 0
      %1013 = vmatprep.subr.bf16.mxu0 0
      %1014 = vmatpush1.bf16.xpose.msra.mxu0 0
      %1015 = vmatprep.subr.bf16.mxu0 0
      %1016 = vmatpush1.bf16.xpose.msra.mxu0 0
      %1017 = vmatprep.subr.bf16.mxu0 0
      %1018 = vmatpush1.bf16.xpose.msra.mxu0 0
      %1019 = vmatprep.subr.bf16.mxu0 0
      %1020 = vmatpush1.bf16.xpose.msra.mxu0 0
      %1021 = vmatprep.mubr.bf16.mxu0 0
      %1022 = vmatmul.mubr.bf16.gmra.mrb[0].mxu0 %v984
      %v1023 = vpop.f32.mrb[0].mxu0
      %v1024 = vadd.f32 %v811, %v1023
      %v1025 = vpop.f32.mrb[0].mxu0
      %v1026 = vpop.f32.mrb[0].mxu0
      %v1027 = vadd.f32 %v812, %v1026
      %v1028 = vpop.f32.mrb[0].mxu0
      %1029 = vdwg.mxu0
      %v1030 = vsel %vm832, %v874, -inf
      %1031 = vmax.xlane.f32.xlu0 %v1030
      %v1032 = vpop.xlane.xlu0 %1031
      %v1033 = vsel %vm832, %v877, -inf
      %1034 = vmax.xlane.f32.xlu0 %v1033
      %v1035 = vpop.xlane.xlu0 %1034
      %v1036 = vsel %vm832, %v924, -inf
      %1037 = vmax.xlane.f32.xlu0 %v1036
      %v1038 = vpop.xlane.xlu0 %1037
      %v1039 = vsel %vm832, %v927, -inf
      %1040 = vmax.xlane.f32.xlu0 %v1039
      %v1041 = vpop.xlane.xlu0 %1040
      %v1042 = vsel %vm832, %v974, -inf
      %1043 = vmax.xlane.f32.xlu0 %v1042
      %v1044 = vpop.xlane.xlu0 %1043
      %v1045 = vsel %vm832, %v977, -inf
      %1046 = vmax.xlane.f32.xlu0 %v1045
      %v1047 = vpop.xlane.xlu0 %1046
      %v1048 = vsel %vm832, %v1024, -inf
      %1049 = vmax.xlane.f32.xlu0 %v1048
      %v1050 = vpop.xlane.xlu0 %1049
      %v1051 = vsel %vm832, %v1027, -inf
      %1052 = vmax.xlane.f32.xlu0 %v1051
      %v1053 = vpop.xlane.xlu0 %1052
      %v1054 = vsub.f32 %v874, %v1032
      %v1055 = vsub.f32 %v877, %v1035
      %v1056 = vsub.f32 %v924, %v1038
      %v1057 = vsub.f32 %v927, %v1041
      %v1058 = vsub.f32 %v974, %v1044
      %v1059 = vsub.f32 %v977, %v1047
      %v1060 = vsub.f32 %v1024, %v1050
      %v1061 = vsub.f32 %v1027, %v1053
      %v1062 = vmul.f32 %v1054, 1.442695
      %v1063 = vpow.pop %v1062
      %v1064 = vmul.f32 %v1055, 1.442695
      %v1065 = vpow.pop %v1064
      %v1066 = vmul.f32 %v1056, 1.442695
      %v1067 = vpow.pop %v1066
      %v1068 = vmul.f32 %v1057, 1.442695
      %v1069 = vpow.pop %v1068
      %v1070 = vmul.f32 %v1058, 1.442695
      %v1071 = vpow.pop %v1070
      %v1072 = vmul.f32 %v1059, 1.442695
      %v1073 = vpow.pop %v1072
      %v1074 = vmul.f32 %v1060, 1.442695
      %v1075 = vpow.pop %v1074
      %v1076 = vmul.f32 %v1061, 1.442695
      %v1077 = vpow.pop %v1076
      %v1078 = vsel %vm832, %v1063, 0.0
      %1079 = vadd.xlane.f32.xlu0 %v1078
      %v1080 = vpop.xlane.xlu0 %1079
      %v1081 = vsel %vm832, %v1065, 0.0
      %1082 = vadd.xlane.f32.xlu0 %v1081
      %v1083 = vpop.xlane.xlu0 %1082
      %v1084 = vsel %vm832, %v1067, 0.0
      %1085 = vadd.xlane.f32.xlu0 %v1084
      %v1086 = vpop.xlane.xlu0 %1085
      %v1087 = vsel %vm832, %v1069, 0.0
      %1088 = vadd.xlane.f32.xlu0 %v1087
      %v1089 = vpop.xlane.xlu0 %1088
      %v1090 = vsel %vm832, %v1071, 0.0
      %1091 = vadd.xlane.f32.xlu0 %v1090
      %v1092 = vpop.xlane.xlu0 %1091
      %v1093 = vsel %vm832, %v1073, 0.0
      %1094 = vadd.xlane.f32.xlu0 %v1093
      %v1095 = vpop.xlane.xlu0 %1094
      %v1096 = vsel %vm832, %v1075, 0.0
      %1097 = vadd.xlane.f32.xlu0 %v1096
      %v1098 = vpop.xlane.xlu0 %1097
      %v1099 = vsel %vm832, %v1077, 0.0
      %1100 = vadd.xlane.f32.xlu0 %v1099
      %v1101 = vpop.xlane.xlu0 %1100
      %v1102 = vrcp.pop %v1080
      %v1103 = vrcp.pop %v1083
      %v1104 = vrcp.pop %v1086
      %v1105 = vrcp.pop %v1089
      %v1106 = vrcp.pop %v1092
      %v1107 = vrcp.pop %v1095
      %v1108 = vrcp.pop %v1098
      %v1109 = vrcp.pop %v1101
      %v1110 = vmul.f32 %v1063, %v1102
      %v1111 = vmul.f32 %v1065, %v1103
      %v1112 = vmul.f32 %v1067, %v1104
      %v1113 = vmul.f32 %v1069, %v1105
      %v1114 = vmul.f32 %v1071, %v1106
      %v1115 = vmul.f32 %v1073, %v1107
      %v1116 = vmul.f32 %v1075, %v1108
      %v1117 = vmul.f32 %v1077, %v1109
      %v1118 = vpack.c.bf16 %v1111, %v1110
      %v1119 = vpack.c.bf16 %v1113, %v1112
      %v1120 = vpack.c.bf16 %v1115, %v1114
      %v1121 = vpack.c.bf16 %v1117, %v1116
      %1122 = vrot.lane.b32.xlu0 %v825, 64
      %v1123 = vpop.permute.xlu0 %1122
      %v1126 = vsel %vm832, %v1118, 0
      %1128 = vmatprep.subr.bf16.mxu0 0
      %1129 = vmatpush1.bf16.msra.mxu0 %v1123
      %1130 = vmatprep.subr.bf16.mxu0 0
      %1131 = vmatpush1.bf16.msra.mxu0 0
      %1132 = vmatprep.subr.bf16.mxu0 0
      %1133 = vmatpush1.bf16.msra.mxu0 0
      %1134 = vmatprep.subr.bf16.mxu0 0
      %1135 = vmatpush1.bf16.msra.mxu0 0
      %1136 = vmatprep.subr.bf16.mxu0 0
      %1137 = vmatpush1.bf16.msra.mxu0 0
      %1138 = vmatprep.subr.bf16.mxu0 0
      %1139 = vmatpush1.bf16.msra.mxu0 0
      %1140 = vmatprep.subr.bf16.mxu0 0
      %1141 = vmatpush1.bf16.msra.mxu0 0
      %1142 = vmatprep.subr.bf16.mxu0 0
      %1143 = vmatpush1.bf16.msra.mxu0 0
      %1144 = vmatprep.subr.bf16.mxu0 0
      %1145 = vmatpush1.bf16.msra.mxu0 0
      %1146 = vmatprep.subr.bf16.mxu0 0
      %1147 = vmatpush1.bf16.msra.mxu0 0
      %1148 = vmatprep.subr.bf16.mxu0 0
      %1149 = vmatpush1.bf16.msra.mxu0 0
      %1150 = vmatprep.subr.bf16.mxu0 0
      %1151 = vmatpush1.bf16.msra.mxu0 0
      %1152 = vmatprep.subr.bf16.mxu0 0
      %1153 = vmatpush1.bf16.msra.mxu0 0
      %1154 = vmatprep.subr.bf16.mxu0 0
      %1155 = vmatpush1.bf16.msra.mxu0 0
      %1156 = vmatprep.subr.bf16.mxu0 0
      %1157 = vmatpush1.bf16.msra.mxu0 0
      %1158 = vmatprep.subr.bf16.mxu0 0
      %1159 = vmatpush1.bf16.msra.mxu0 0
      %1160 = vmatprep.mubr.bf16.mxu0 0
      %1161 = vmatmul.mubr.bf16.gmra.mrb[0].mxu0 %v1126
      %v1162 = vpop.f32.mrb[0].mxu0
      %v1163 = vadd.f32 0.0, %v1162
      %v1164 = vpop.f32.mrb[0].mxu0
      %v1165 = vpop.f32.mrb[0].mxu0
      %v1166 = vadd.f32 0.0, %v1165
      %v1167 = vpop.f32.mrb[0].mxu0
      %1168 = vdwg.mxu0
      %1169 = vrot.lane.b32.xlu0 %v826, 64
      %v1170 = vpop.permute.xlu0 %1169
      %v1173 = vsel %vm832, %v1119, 0
      %1175 = vmatprep.subr.bf16.mxu0 0
      %1176 = vmatpush1.bf16.msra.mxu0 %v1170
      %1177 = vmatprep.subr.bf16.mxu0 0
      %1178 = vmatpush1.bf16.msra.mxu0 0
      %1179 = vmatprep.subr.bf16.mxu0 0
      %1180 = vmatpush1.bf16.msra.mxu0 0
      %1181 = vmatprep.subr.bf16.mxu0 0
      %1182 = vmatpush1.bf16.msra.mxu0 0
      %1183 = vmatprep.subr.bf16.mxu0 0
      %1184 = vmatpush1.bf16.msra.mxu0 0
      %1185 = vmatprep.subr.bf16.mxu0 0
      %1186 = vmatpush1.bf16.msra.mxu0 0
      %1187 = vmatprep.subr.bf16.mxu0 0
      %1188 = vmatpush1.bf16.msra.mxu0 0
      %1189 = vmatprep.subr.bf16.mxu0 0
      %1190 = vmatpush1.bf16.msra.mxu0 0
      %1191 = vmatprep.subr.bf16.mxu0 0
      %1192 = vmatpush1.bf16.msra.mxu0 0
      %1193 = vmatprep.subr.bf16.mxu0 0
      %1194 = vmatpush1.bf16.msra.mxu0 0
      %1195 = vmatprep.subr.bf16.mxu0 0
      %1196 = vmatpush1.bf16.msra.mxu0 0
      %1197 = vmatprep.subr.bf16.mxu0 0
      %1198 = vmatpush1.bf16.msra.mxu0 0
      %1199 = vmatprep.subr.bf16.mxu0 0
      %1200 = vmatpush1.bf16.msra.mxu0 0
      %1201 = vmatprep.subr.bf16.mxu0 0
      %1202 = vmatpush1.bf16.msra.mxu0 0
      %1203 = vmatprep.subr.bf16.mxu0 0
      %1204 = vmatpush1.bf16.msra.mxu0 0
      %1205 = vmatprep.subr.bf16.mxu0 0
      %1206 = vmatpush1.bf16.msra.mxu0 0
      %1207 = vmatprep.mubr.bf16.mxu0 0
      %1208 = vmatmul.mubr.bf16.gmra.mrb[0].mxu0 %v1173
      %v1209 = vpop.f32.mrb[0].mxu0
      %v1210 = vadd.f32 0.0, %v1209
      %v1211 = vpop.f32.mrb[0].mxu0
      %v1212 = vpop.f32.mrb[0].mxu0
      %v1213 = vadd.f32 0.0, %v1212
      %v1214 = vpop.f32.mrb[0].mxu0
      %1215 = vdwg.mxu0
      %1216 = vrot.lane.b32.xlu0 %v827, 64
      %v1217 = vpop.permute.xlu0 %1216
      %v1220 = vsel %vm832, %v1120, 0
      %1222 = vmatprep.subr.bf16.mxu0 0
      %1223 = vmatpush1.bf16.msra.mxu0 %v1217
      %1224 = vmatprep.subr.bf16.mxu0 0
      %1225 = vmatpush1.bf16.msra.mxu0 0
      %1226 = vmatprep.subr.bf16.mxu0 0
      %1227 = vmatpush1.bf16.msra.mxu0 0
      %1228 = vmatprep.subr.bf16.mxu0 0
      %1229 = vmatpush1.bf16.msra.mxu0 0
      %1230 = vmatprep.subr.bf16.mxu0 0
      %1231 = vmatpush1.bf16.msra.mxu0 0
      %1232 = vmatprep.subr.bf16.mxu0 0
      %1233 = vmatpush1.bf16.msra.mxu0 0
      %1234 = vmatprep.subr.bf16.mxu0 0
      %1235 = vmatpush1.bf16.msra.mxu0 0
      %1236 = vmatprep.subr.bf16.mxu0 0
      %1237 = vmatpush1.bf16.msra.mxu0 0
      %1238 = vmatprep.subr.bf16.mxu0 0
      %1239 = vmatpush1.bf16.msra.mxu0 0
      %1240 = vmatprep.subr.bf16.mxu0 0
      %1241 = vmatpush1.bf16.msra.mxu0 0
      %1242 = vmatprep.subr.bf16.mxu0 0
      %1243 = vmatpush1.bf16.msra.mxu0 0
      %1244 = vmatprep.subr.bf16.mxu0 0
      %1245 = vmatpush1.bf16.msra.mxu0 0
      %1246 = vmatprep.subr.bf16.mxu0 0
      %1247 = vmatpush1.bf16.msra.mxu0 0
      %1248 = vmatprep.subr.bf16.mxu0 0
      %1249 = vmatpush1.bf16.msra.mxu0 0
      %1250 = vmatprep.subr.bf16.mxu0 0
      %1251 = vmatpush1.bf16.msra.mxu0 0
      %1252 = vmatprep.subr.bf16.mxu0 0
      %1253 = vmatpush1.bf16.msra.mxu0 0
      %1254 = vmatprep.mubr.bf16.mxu0 0
      %1255 = vmatmul.mubr.bf16.gmra.mrb[0].mxu0 %v1220
      %v1256 = vpop.f32.mrb[0].mxu0
      %v1257 = vadd.f32 0.0, %v1256
      %v1258 = vpop.f32.mrb[0].mxu0
      %v1259 = vpop.f32.mrb[0].mxu0
      %v1260 = vadd.f32 0.0, %v1259
      %v1261 = vpop.f32.mrb[0].mxu0
      %1262 = vdwg.mxu0
      %1263 = vrot.lane.b32.xlu0 %v828, 64
      %v1264 = vpop.permute.xlu0 %1263
      %v1267 = vsel %vm832, %v1121, 0
      %1269 = vmatprep.subr.bf16.mxu0 0
      %1270 = vmatpush1.bf16.msra.mxu0 %v1264
      %1271 = vmatprep.subr.bf16.mxu0 0
      %1272 = vmatpush1.bf16.msra.mxu0 0
      %1273 = vmatprep.subr.bf16.mxu0 0
      %1274 = vmatpush1.bf16.msra.mxu0 0
      %1275 = vmatprep.subr.bf16.mxu0 0
      %1276 = vmatpush1.bf16.msra.mxu0 0
      %1277 = vmatprep.subr.bf16.mxu0 0
      %1278 = vmatpush1.bf16.msra.mxu0 0
      %1279 = vmatprep.subr.bf16.mxu0 0
      %1280 = vmatpush1.bf16.msra.mxu0 0
      %1281 = vmatprep.subr.bf16.mxu0 0
      %1282 = vmatpush1.bf16.msra.mxu0 0
      %1283 = vmatprep.subr.bf16.mxu0 0
      %1284 = vmatpush1.bf16.msra.mxu0 0
      %1285 = vmatprep.subr.bf16.mxu0 0
      %1286 = vmatpush1.bf16.msra.mxu0 0
      %1287 = vmatprep.subr.bf16.mxu0 0
      %1288 = vmatpush1.bf16.msra.mxu0 0
      %1289 = vmatprep.subr.bf16.mxu0 0
      %1290 = vmatpush1.bf16.msra.mxu0 0
      %1291 = vmatprep.subr.bf16.mxu0 0
      %1292 = vmatpush1.bf16.msra.mxu0 0
      %1293 = vmatprep.subr.bf16.mxu0 0
      %1294 = vmatpush1.bf16.msra.mxu0 0
      %1295 = vmatprep.subr.bf16.mxu0 0
      %1296 = vmatpush1.bf16.msra.mxu0 0
      %1297 = vmatprep.subr.bf16.mxu0 0
      %1298 = vmatpush1.bf16.msra.mxu0 0
      %1299 = vmatprep.subr.bf16.mxu0 0
      %1300 = vmatpush1.bf16.msra.mxu0 0
      %1301 = vmatprep.mubr.bf16.mxu0 0
      %1302 = vmatmul.mubr.bf16.gmra.mrb[0].mxu0 %v1267
      %v1303 = vpop.f32.mrb[0].mxu0
      %v1304 = vadd.f32 0.0, %v1303
      %v1305 = vpop.f32.mrb[0].mxu0
      %v1306 = vpop.f32.mrb[0].mxu0
      %v1307 = vadd.f32 0.0, %v1306
      %v1308 = vpop.f32.mrb[0].mxu0
      %1309 = vdwg.mxu0
      %1311 = vrot.lane.b32.xlu0 %v821, 112
      %v1312 = vpop.permute.xlu0 %1311
      %1313 = vrot.lane.b32.xlu0 %v825, 80
      %v1314 = vpop.permute.xlu0 %1313
      %v1316 = vsel %vm832, %v1312, 0
      %v1319 = vsel %vm832, %v1314, 0
      %1321 = vmatprep.subr.bf16.mxu0 0
      %1322 = vmatpush1.bf16.xpose.msra.mxu0 %v1319
      %1323 = vmatprep.subr.bf16.mxu0 0
      %1324 = vmatpush1.bf16.xpose.msra.mxu0 0
      %1325 = vmatprep.subr.bf16.mxu0 0
      %1326 = vmatpush1.bf16.xpose.msra.mxu0 0
      %1327 = vmatprep.subr.bf16.mxu0 0
      %1328 = vmatpush1.bf16.xpose.msra.mxu0 0
      %1329 = vmatprep.subr.bf16.mxu0 0
      %1330 = vmatpush1.bf16.xpose.msra.mxu0 0
      %1331 = vmatprep.subr.bf16.mxu0 0
      %1332 = vmatpush1.bf16.xpose.msra.mxu0 0
      %1333 = vmatprep.subr.bf16.mxu0 0
      %1334 = vmatpush1.bf16.xpose.msra.mxu0 0
      %1335 = vmatprep.subr.bf16.mxu0 0
      %1336 = vmatpush1.bf16.xpose.msra.mxu0 0
      %1337 = vmatprep.subr.bf16.mxu0 0
      %1338 = vmatpush1.bf16.xpose.msra.mxu0 0
      %1339 = vmatprep.subr.bf16.mxu0 0
      %1340 = vmatpush1.bf16.xpose.msra.mxu0 0
      %1341 = vmatprep.subr.bf16.mxu0 0
      %1342 = vmatpush1.bf16.xpose.msra.mxu0 0
      %1343 = vmatprep.subr.bf16.mxu0 0
      %1344 = vmatpush1.bf16.xpose.msra.mxu0 0
      %1345 = vmatprep.subr.bf16.mxu0 0
      %1346 = vmatpush1.bf16.xpose.msra.mxu0 0
      %1347 = vmatprep.subr.bf16.mxu0 0
      %1348 = vmatpush1.bf16.xpose.msra.mxu0 0
      %1349 = vmatprep.subr.bf16.mxu0 0
      %1350 = vmatpush1.bf16.xpose.msra.mxu0 0
      %1351 = vmatprep.subr.bf16.mxu0 0
      %1352 = vmatpush1.bf16.xpose.msra.mxu0 0
      %1353 = vmatprep.mubr.bf16.mxu0 0
      %1354 = vmatmul.mubr.bf16.gmra.mrb[0].mxu0 %v1316
      %v1355 = vpop.f32.mrb[0].mxu0
      %v1356 = vadd.f32 %v813, %v1355
      %v1357 = vpop.f32.mrb[0].mxu0
      %v1358 = vpop.f32.mrb[0].mxu0
      %v1359 = vadd.f32 %v814, %v1358
      %v1360 = vpop.f32.mrb[0].mxu0
      %1361 = vdwg.mxu0
      %1363 = vrot.lane.b32.xlu0 %v822, 112
      %v1364 = vpop.permute.xlu0 %1363
      %1365 = vrot.lane.b32.xlu0 %v826, 80
      %v1366 = vpop.permute.xlu0 %1365
      %v1368 = vsel %vm832, %v1364, 0
      %v1371 = vsel %vm832, %v1366, 0
      %1373 = vmatprep.subr.bf16.mxu0 0
      %1374 = vmatpush1.bf16.xpose.msra.mxu0 %v1371
      %1375 = vmatprep.subr.bf16.mxu0 0
      %1376 = vmatpush1.bf16.xpose.msra.mxu0 0
      %1377 = vmatprep.subr.bf16.mxu0 0
      %1378 = vmatpush1.bf16.xpose.msra.mxu0 0
      %1379 = vmatprep.subr.bf16.mxu0 0
      %1380 = vmatpush1.bf16.xpose.msra.mxu0 0
      %1381 = vmatprep.subr.bf16.mxu0 0
      %1382 = vmatpush1.bf16.xpose.msra.mxu0 0
      %1383 = vmatprep.subr.bf16.mxu0 0
      %1384 = vmatpush1.bf16.xpose.msra.mxu0 0
      %1385 = vmatprep.subr.bf16.mxu0 0
      %1386 = vmatpush1.bf16.xpose.msra.mxu0 0
      %1387 = vmatprep.subr.bf16.mxu0 0
      %1388 = vmatpush1.bf16.xpose.msra.mxu0 0
      %1389 = vmatprep.subr.bf16.mxu0 0
      %1390 = vmatpush1.bf16.xpose.msra.mxu0 0
      %1391 = vmatprep.subr.bf16.mxu0 0
      %1392 = vmatpush1.bf16.xpose.msra.mxu0 0
      %1393 = vmatprep.subr.bf16.mxu0 0
      %1394 = vmatpush1.bf16.xpose.msra.mxu0 0
      %1395 = vmatprep.subr.bf16.mxu0 0
      %1396 = vmatpush1.bf16.xpose.msra.mxu0 0
      %1397 = vmatprep.subr.bf16.mxu0 0
      %1398 = vmatpush1.bf16.xpose.msra.mxu0 0
      %1399 = vmatprep.subr.bf16.mxu0 0
      %1400 = vmatpush1.bf16.xpose.msra.mxu0 0
      %1401 = vmatprep.subr.bf16.mxu0 0
      %1402 = vmatpush1.bf16.xpose.msra.mxu0 0
      %1403 = vmatprep.subr.bf16.mxu0 0
      %1404 = vmatpush1.bf16.xpose.msra.mxu0 0
      %1405 = vmatprep.mubr.bf16.mxu0 0
      %1406 = vmatmul.mubr.bf16.gmra.mrb[0].mxu0 %v1368
      %v1407 = vpop.f32.mrb[0].mxu0
      %v1408 = vadd.f32 %v815, %v1407
      %v1409 = vpop.f32.mrb[0].mxu0
      %v1410 = vpop.f32.mrb[0].mxu0
      %v1411 = vadd.f32 %v816, %v1410
      %v1412 = vpop.f32.mrb[0].mxu0
      %1413 = vdwg.mxu0
      %1415 = vrot.lane.b32.xlu0 %v823, 112
      %v1416 = vpop.permute.xlu0 %1415
      %1417 = vrot.lane.b32.xlu0 %v827, 80
      %v1418 = vpop.permute.xlu0 %1417
      %v1420 = vsel %vm832, %v1416, 0
      %v1423 = vsel %vm832, %v1418, 0
      %1425 = vmatprep.subr.bf16.mxu0 0
      %1426 = vmatpush1.bf16.xpose.msra.mxu0 %v1423
      %1427 = vmatprep.subr.bf16.mxu0 0
      %1428 = vmatpush1.bf16.xpose.msra.mxu0 0
      %1429 = vmatprep.subr.bf16.mxu0 0
      %1430 = vmatpush1.bf16.xpose.msra.mxu0 0
      %1431 = vmatprep.subr.bf16.mxu0 0
      %1432 = vmatpush1.bf16.xpose.msra.mxu0 0
      %1433 = vmatprep.subr.bf16.mxu0 0
      %1434 = vmatpush1.bf16.xpose.msra.mxu0 0
      %1435 = vmatprep.subr.bf16.mxu0 0
      %1436 = vmatpush1.bf16.xpose.msra.mxu0 0
      %1437 = vmatprep.subr.bf16.mxu0 0
      %1438 = vmatpush1.bf16.xpose.msra.mxu0 0
      %1439 = vmatprep.subr.bf16.mxu0 0
      %1440 = vmatpush1.bf16.xpose.msra.mxu0 0
      %1441 = vmatprep.subr.bf16.mxu0 0
      %1442 = vmatpush1.bf16.xpose.msra.mxu0 0
      %1443 = vmatprep.subr.bf16.mxu0 0
      %1444 = vmatpush1.bf16.xpose.msra.mxu0 0
      %1445 = vmatprep.subr.bf16.mxu0 0
      %1446 = vmatpush1.bf16.xpose.msra.mxu0 0
      %1447 = vmatprep.subr.bf16.mxu0 0
      %1448 = vmatpush1.bf16.xpose.msra.mxu0 0
      %1449 = vmatprep.subr.bf16.mxu0 0
      %1450 = vmatpush1.bf16.xpose.msra.mxu0 0
      %1451 = vmatprep.subr.bf16.mxu0 0
      %1452 = vmatpush1.bf16.xpose.msra.mxu0 0
      %1453 = vmatprep.subr.bf16.mxu0 0
      %1454 = vmatpush1.bf16.xpose.msra.mxu0 0
      %1455 = vmatprep.subr.bf16.mxu0 0
      %1456 = vmatpush1.bf16.xpose.msra.mxu0 0
      %1457 = vmatprep.mubr.bf16.mxu0 0
      %1458 = vmatmul.mubr.bf16.gmra.mrb[0].mxu0 %v1420
      %v1459 = vpop.f32.mrb[0].mxu0
      %v1460 = vadd.f32 %v817, %v1459
      %v1461 = vpop.f32.mrb[0].mxu0
      %v1462 = vpop.f32.mrb[0].mxu0
      %v1463 = vadd.f32 %v818, %v1462
      %v1464 = vpop.f32.mrb[0].mxu0
      %1465 = vdwg.mxu0
      %1467 = vrot.lane.b32.xlu0 %v824, 112
      %v1468 = vpop.permute.xlu0 %1467
      %1469 = vrot.lane.b32.xlu0 %v828, 80
      %v1470 = vpop.permute.xlu0 %1469
      %v1472 = vsel %vm832, %v1468, 0
      %v1475 = vsel %vm832, %v1470, 0
      %1477 = vmatprep.subr.bf16.mxu0 0
      %1478 = vmatpush1.bf16.xpose.msra.mxu0 %v1475
      %1479 = vmatprep.subr.bf16.mxu0 0
      %1480 = vmatpush1.bf16.xpose.msra.mxu0 0
      %1481 = vmatprep.subr.bf16.mxu0 0
      %1482 = vmatpush1.bf16.xpose.msra.mxu0 0
      %1483 = vmatprep.subr.bf16.mxu0 0
      %1484 = vmatpush1.bf16.xpose.msra.mxu0 0
      %1485 = vmatprep.subr.bf16.mxu0 0
      %1486 = vmatpush1.bf16.xpose.msra.mxu0 0
      %1487 = vmatprep.subr.bf16.mxu0 0
      %1488 = vmatpush1.bf16.xpose.msra.mxu0 0
      %1489 = vmatprep.subr.bf16.mxu0 0
      %1490 = vmatpush1.bf16.xpose.msra.mxu0 0
      %1491 = vmatprep.subr.bf16.mxu0 0
      %1492 = vmatpush1.bf16.xpose.msra.mxu0 0
      %1493 = vmatprep.subr.bf16.mxu0 0
      %1494 = vmatpush1.bf16.xpose.msra.mxu0 0
      %1495 = vmatprep.subr.bf16.mxu0 0
      %1496 = vmatpush1.bf16.xpose.msra.mxu0 0
      %1497 = vmatprep.subr.bf16.mxu0 0
      %1498 = vmatpush1.bf16.xpose.msra.mxu0 0
      %1499 = vmatprep.subr.bf16.mxu0 0
      %1500 = vmatpush1.bf16.xpose.msra.mxu0 0
      %1501 = vmatprep.subr.bf16.mxu0 0
      %1502 = vmatpush1.bf16.xpose.msra.mxu0 0
      %1503 = vmatprep.subr.bf16.mxu0 0
      %1504 = vmatpush1.bf16.xpose.msra.mxu0 0
      %1505 = vmatprep.subr.bf16.mxu0 0
      %1506 = vmatpush1.bf16.xpose.msra.mxu0 0
      %1507 = vmatprep.subr.bf16.mxu0 0
      %1508 = vmatpush1.bf16.xpose.msra.mxu0 0
      %1509 = vmatprep.mubr.bf16.mxu0 0
      %1510 = vmatmul.mubr.bf16.gmra.mrb[0].mxu0 %v1472
      %v1511 = vpop.f32.mrb[0].mxu0
      %v1512 = vadd.f32 %v819, %v1511
      %v1513 = vpop.f32.mrb[0].mxu0
      %v1514 = vpop.f32.mrb[0].mxu0
      %v1515 = vadd.f32 %v820, %v1514
      %v1516 = vpop.f32.mrb[0].mxu0
      %1517 = vdwg.mxu0
      %v1518 = vsel %vm832, %v1356, -inf
      %1519 = vmax.xlane.f32.xlu0 %v1518
      %v1520 = vpop.xlane.xlu0 %1519
      %v1521 = vsel %vm832, %v1359, -inf
      %1522 = vmax.xlane.f32.xlu0 %v1521
      %v1523 = vpop.xlane.xlu0 %1522
      %v1524 = vsel %vm832, %v1408, -inf
      %1525 = vmax.xlane.f32.xlu0 %v1524
      %v1526 = vpop.xlane.xlu0 %1525
      %v1527 = vsel %vm832, %v1411, -inf
      %1528 = vmax.xlane.f32.xlu0 %v1527
      %v1529 = vpop.xlane.xlu0 %1528
      %v1530 = vsel %vm832, %v1460, -inf
      %1531 = vmax.xlane.f32.xlu0 %v1530
      %v1532 = vpop.xlane.xlu0 %1531
      %v1533 = vsel %vm832, %v1463, -inf
      %1534 = vmax.xlane.f32.xlu0 %v1533
      %v1535 = vpop.xlane.xlu0 %1534
      %v1536 = vsel %vm832, %v1512, -inf
      %1537 = vmax.xlane.f32.xlu0 %v1536
      %v1538 = vpop.xlane.xlu0 %1537
      %v1539 = vsel %vm832, %v1515, -inf
      %1540 = vmax.xlane.f32.xlu0 %v1539
      %v1541 = vpop.xlane.xlu0 %1540
      %v1542 = vsub.f32 %v1356, %v1520
      %v1543 = vsub.f32 %v1359, %v1523
      %v1544 = vsub.f32 %v1408, %v1526
      %v1545 = vsub.f32 %v1411, %v1529
      %v1546 = vsub.f32 %v1460, %v1532
      %v1547 = vsub.f32 %v1463, %v1535
      %v1548 = vsub.f32 %v1512, %v1538
      %v1549 = vsub.f32 %v1515, %v1541
      %v1550 = vmul.f32 %v1542, 1.442695
      %v1551 = vpow.pop %v1550
      %v1552 = vmul.f32 %v1543, 1.442695
      %v1553 = vpow.pop %v1552
      %v1554 = vmul.f32 %v1544, 1.442695
      %v1555 = vpow.pop %v1554
      %v1556 = vmul.f32 %v1545, 1.442695
      %v1557 = vpow.pop %v1556
      %v1558 = vmul.f32 %v1546, 1.442695
      %v1559 = vpow.pop %v1558
      %v1560 = vmul.f32 %v1547, 1.442695
      %v1561 = vpow.pop %v1560
      %v1562 = vmul.f32 %v1548, 1.442695
      %v1563 = vpow.pop %v1562
      %v1564 = vmul.f32 %v1549, 1.442695
      %v1565 = vpow.pop %v1564
      %v1566 = vsel %vm832, %v1551, 0.0
      %1567 = vadd.xlane.f32.xlu0 %v1566
      %v1568 = vpop.xlane.xlu0 %1567
      %v1569 = vsel %vm832, %v1553, 0.0
      %1570 = vadd.xlane.f32.xlu0 %v1569
      %v1571 = vpop.xlane.xlu0 %1570
      %v1572 = vsel %vm832, %v1555, 0.0
      %1573 = vadd.xlane.f32.xlu0 %v1572
      %v1574 = vpop.xlane.xlu0 %1573
      %v1575 = vsel %vm832, %v1557, 0.0
      %1576 = vadd.xlane.f32.xlu0 %v1575
      %v1577 = vpop.xlane.xlu0 %1576
      %v1578 = vsel %vm832, %v1559, 0.0
      %1579 = vadd.xlane.f32.xlu0 %v1578
      %v1580 = vpop.xlane.xlu0 %1579
      %v1581 = vsel %vm832, %v1561, 0.0
      %1582 = vadd.xlane.f32.xlu0 %v1581
      %v1583 = vpop.xlane.xlu0 %1582
      %v1584 = vsel %vm832, %v1563, 0.0
      %1585 = vadd.xlane.f32.xlu0 %v1584
      %v1586 = vpop.xlane.xlu0 %1585
      %v1587 = vsel %vm832, %v1565, 0.0
      %1588 = vadd.xlane.f32.xlu0 %v1587
      %v1589 = vpop.xlane.xlu0 %1588
      %v1590 = vrcp.pop %v1568
      %v1591 = vrcp.pop %v1571
      %v1592 = vrcp.pop %v1574
      %v1593 = vrcp.pop %v1577
      %v1594 = vrcp.pop %v1580
      %v1595 = vrcp.pop %v1583
      %v1596 = vrcp.pop %v1586
      %v1597 = vrcp.pop %v1589
      %v1598 = vmul.f32 %v1551, %v1590
      %v1599 = vmul.f32 %v1553, %v1591
      %v1600 = vmul.f32 %v1555, %v1592
      %v1601 = vmul.f32 %v1557, %v1593
      %v1602 = vmul.f32 %v1559, %v1594
      %v1603 = vmul.f32 %v1561, %v1595
      %v1604 = vmul.f32 %v1563, %v1596
      %v1605 = vmul.f32 %v1565, %v1597
      %v1606 = vpack.c.bf16 %v1599, %v1598
      %v1607 = vpack.c.bf16 %v1601, %v1600
      %v1608 = vpack.c.bf16 %v1603, %v1602
      %v1609 = vpack.c.bf16 %v1605, %v1604
      %1610 = vrot.lane.b32.xlu0 %v825, 48
      %v1611 = vpop.permute.xlu0 %1610
      %v1614 = vsel %vm832, %v1606, 0
      %1616 = vmatprep.subr.bf16.mxu0 0
      %1617 = vmatpush1.bf16.msra.mxu0 %v1611
      %1618 = vmatprep.subr.bf16.mxu0 0
      %1619 = vmatpush1.bf16.msra.mxu0 0
      %1620 = vmatprep.subr.bf16.mxu0 0
      %1621 = vmatpush1.bf16.msra.mxu0 0
      %1622 = vmatprep.subr.bf16.mxu0 0
      %1623 = vmatpush1.bf16.msra.mxu0 0
      %1624 = vmatprep.subr.bf16.mxu0 0
      %1625 = vmatpush1.bf16.msra.mxu0 0
      %1626 = vmatprep.subr.bf16.mxu0 0
      %1627 = vmatpush1.bf16.msra.mxu0 0
      %1628 = vmatprep.subr.bf16.mxu0 0
      %1629 = vmatpush1.bf16.msra.mxu0 0
      %1630 = vmatprep.subr.bf16.mxu0 0
      %1631 = vmatpush1.bf16.msra.mxu0 0
      %1632 = vmatprep.subr.bf16.mxu0 0
      %1633 = vmatpush1.bf16.msra.mxu0 0
      %1634 = vmatprep.subr.bf16.mxu0 0
      %1635 = vmatpush1.bf16.msra.mxu0 0
      %1636 = vmatprep.subr.bf16.mxu0 0
      %1637 = vmatpush1.bf16.msra.mxu0 0
      %1638 = vmatprep.subr.bf16.mxu0 0
      %1639 = vmatpush1.bf16.msra.mxu0 0
      %1640 = vmatprep.subr.bf16.mxu0 0
      %1641 = vmatpush1.bf16.msra.mxu0 0
      %1642 = vmatprep.subr.bf16.mxu0 0
      %1643 = vmatpush1.bf16.msra.mxu0 0
      %1644 = vmatprep.subr.bf16.mxu0 0
      %1645 = vmatpush1.bf16.msra.mxu0 0
      %1646 = vmatprep.subr.bf16.mxu0 0
      %1647 = vmatpush1.bf16.msra.mxu0 0
      %1648 = vmatprep.mubr.bf16.mxu0 0
      %1649 = vmatmul.mubr.bf16.gmra.mrb[0].mxu0 %v1614
      %v1650 = vpop.f32.mrb[0].mxu0
      %v1651 = vadd.f32 0.0, %v1650
      %v1652 = vpop.f32.mrb[0].mxu0
      %v1653 = vpop.f32.mrb[0].mxu0
      %v1654 = vadd.f32 0.0, %v1653
      %v1655 = vpop.f32.mrb[0].mxu0
      %1656 = vdwg.mxu0
      %1657 = vrot.lane.b32.xlu0 %v826, 48
      %v1658 = vpop.permute.xlu0 %1657
      %v1661 = vsel %vm832, %v1607, 0
      %1663 = vmatprep.subr.bf16.mxu0 0
      %1664 = vmatpush1.bf16.msra.mxu0 %v1658
      %1665 = vmatprep.subr.bf16.mxu0 0
      %1666 = vmatpush1.bf16.msra.mxu0 0
      %1667 = vmatprep.subr.bf16.mxu0 0
      %1668 = vmatpush1.bf16.msra.mxu0 0
      %1669 = vmatprep.subr.bf16.mxu0 0
      %1670 = vmatpush1.bf16.msra.mxu0 0
      %1671 = vmatprep.subr.bf16.mxu0 0
      %1672 = vmatpush1.bf16.msra.mxu0 0
      %1673 = vmatprep.subr.bf16.mxu0 0
      %1674 = vmatpush1.bf16.msra.mxu0 0
      %1675 = vmatprep.subr.bf16.mxu0 0
      %1676 = vmatpush1.bf16.msra.mxu0 0
      %1677 = vmatprep.subr.bf16.mxu0 0
      %1678 = vmatpush1.bf16.msra.mxu0 0
      %1679 = vmatprep.subr.bf16.mxu0 0
      %1680 = vmatpush1.bf16.msra.mxu0 0
      %1681 = vmatprep.subr.bf16.mxu0 0
      %1682 = vmatpush1.bf16.msra.mxu0 0
      %1683 = vmatprep.subr.bf16.mxu0 0
      %1684 = vmatpush1.bf16.msra.mxu0 0
      %1685 = vmatprep.subr.bf16.mxu0 0
      %1686 = vmatpush1.bf16.msra.mxu0 0
      %1687 = vmatprep.subr.bf16.mxu0 0
      %1688 = vmatpush1.bf16.msra.mxu0 0
      %1689 = vmatprep.subr.bf16.mxu0 0
      %1690 = vmatpush1.bf16.msra.mxu0 0
      %1691 = vmatprep.subr.bf16.mxu0 0
      %1692 = vmatpush1.bf16.msra.mxu0 0
      %1693 = vmatprep.subr.bf16.mxu0 0
      %1694 = vmatpush1.bf16.msra.mxu0 0
      %1695 = vmatprep.mubr.bf16.mxu0 0
      %1696 = vmatmul.mubr.bf16.gmra.mrb[0].mxu0 %v1661
      %v1697 = vpop.f32.mrb[0].mxu0
      %v1698 = vadd.f32 0.0, %v1697
      %v1699 = vpop.f32.mrb[0].mxu0
      %v1700 = vpop.f32.mrb[0].mxu0
      %v1701 = vadd.f32 0.0, %v1700
      %v1702 = vpop.f32.mrb[0].mxu0
      %1703 = vdwg.mxu0
      %1704 = vrot.lane.b32.xlu0 %v827, 48
      %v1705 = vpop.permute.xlu0 %1704
      %v1708 = vsel %vm832, %v1608, 0
      %1710 = vmatprep.subr.bf16.mxu0 0
      %1711 = vmatpush1.bf16.msra.mxu0 %v1705
      %1712 = vmatprep.subr.bf16.mxu0 0
      %1713 = vmatpush1.bf16.msra.mxu0 0
      %1714 = vmatprep.subr.bf16.mxu0 0
      %1715 = vmatpush1.bf16.msra.mxu0 0
      %1716 = vmatprep.subr.bf16.mxu0 0
      %1717 = vmatpush1.bf16.msra.mxu0 0
      %1718 = vmatprep.subr.bf16.mxu0 0
      %1719 = vmatpush1.bf16.msra.mxu0 0
      %1720 = vmatprep.subr.bf16.mxu0 0
      %1721 = vmatpush1.bf16.msra.mxu0 0
      %1722 = vmatprep.subr.bf16.mxu0 0
      %1723 = vmatpush1.bf16.msra.mxu0 0
      %1724 = vmatprep.subr.bf16.mxu0 0
      %1725 = vmatpush1.bf16.msra.mxu0 0
      %1726 = vmatprep.subr.bf16.mxu0 0
      %1727 = vmatpush1.bf16.msra.mxu0 0
      %1728 = vmatprep.subr.bf16.mxu0 0
      %1729 = vmatpush1.bf16.msra.mxu0 0
      %1730 = vmatprep.subr.bf16.mxu0 0
      %1731 = vmatpush1.bf16.msra.mxu0 0
      %1732 = vmatprep.subr.bf16.mxu0 0
      %1733 = vmatpush1.bf16.msra.mxu0 0
      %1734 = vmatprep.subr.bf16.mxu0 0
      %1735 = vmatpush1.bf16.msra.mxu0 0
      %1736 = vmatprep.subr.bf16.mxu0 0
      %1737 = vmatpush1.bf16.msra.mxu0 0
      %1738 = vmatprep.subr.bf16.mxu0 0
      %1739 = vmatpush1.bf16.msra.mxu0 0
      %1740 = vmatprep.subr.bf16.mxu0 0
      %1741 = vmatpush1.bf16.msra.mxu0 0
      %1742 = vmatprep.mubr.bf16.mxu0 0
      %1743 = vmatmul.mubr.bf16.gmra.mrb[0].mxu0 %v1708
      %v1744 = vpop.f32.mrb[0].mxu0
      %v1745 = vadd.f32 0.0, %v1744
      %v1746 = vpop.f32.mrb[0].mxu0
      %v1747 = vpop.f32.mrb[0].mxu0
      %v1748 = vadd.f32 0.0, %v1747
      %v1749 = vpop.f32.mrb[0].mxu0
      %1750 = vdwg.mxu0
      %1751 = vrot.lane.b32.xlu0 %v828, 48
      %v1752 = vpop.permute.xlu0 %1751
      %v1755 = vsel %vm832, %v1609, 0
      %1757 = vmatprep.subr.bf16.mxu0 0
      %1758 = vmatpush1.bf16.msra.mxu0 %v1752
      %1759 = vmatprep.subr.bf16.mxu0 0
      %1760 = vmatpush1.bf16.msra.mxu0 0
      %1761 = vmatprep.subr.bf16.mxu0 0
      %1762 = vmatpush1.bf16.msra.mxu0 0
      %1763 = vmatprep.subr.bf16.mxu0 0
      %1764 = vmatpush1.bf16.msra.mxu0 0
      %1765 = vmatprep.subr.bf16.mxu0 0
      %1766 = vmatpush1.bf16.msra.mxu0 0
      %1767 = vmatprep.subr.bf16.mxu0 0
      %1768 = vmatpush1.bf16.msra.mxu0 0
      %1769 = vmatprep.subr.bf16.mxu0 0
      %1770 = vmatpush1.bf16.msra.mxu0 0
      %1771 = vmatprep.subr.bf16.mxu0 0
      %1772 = vmatpush1.bf16.msra.mxu0 0
      %1773 = vmatprep.subr.bf16.mxu0 0
      %1774 = vmatpush1.bf16.msra.mxu0 0
      %1775 = vmatprep.subr.bf16.mxu0 0
      %1776 = vmatpush1.bf16.msra.mxu0 0
      %1777 = vmatprep.subr.bf16.mxu0 0
      %1778 = vmatpush1.bf16.msra.mxu0 0
      %1779 = vmatprep.subr.bf16.mxu0 0
      %1780 = vmatpush1.bf16.msra.mxu0 0
      %1781 = vmatprep.subr.bf16.mxu0 0
      %1782 = vmatpush1.bf16.msra.mxu0 0
      %1783 = vmatprep.subr.bf16.mxu0 0
      %1784 = vmatpush1.bf16.msra.mxu0 0
      %1785 = vmatprep.subr.bf16.mxu0 0
      %1786 = vmatpush1.bf16.msra.mxu0 0
      %1787 = vmatprep.subr.bf16.mxu0 0
      %1788 = vmatpush1.bf16.msra.mxu0 0
      %1789 = vmatprep.mubr.bf16.mxu0 0
      %1790 = vmatmul.mubr.bf16.gmra.mrb[0].mxu0 %v1755
      %v1791 = vpop.f32.mrb[0].mxu0
      %v1792 = vadd.f32 0.0, %v1791
      %v1793 = vpop.f32.mrb[0].mxu0
      %v1794 = vpop.f32.mrb[0].mxu0
      %v1795 = vadd.f32 0.0, %v1794
      %v1796 = vpop.f32.mrb[0].mxu0
      %1797 = vdwg.mxu0
      %1806 = vrot.lane.b32.xlu0 %v1651, 16
      %v1807 = vpop.permute.xlu0 %1806
      %1808 = vrot.lane.b32.xlu0 %v1654, 16
      %v1809 = vpop.permute.xlu0 %1808
      %1810 = vrot.lane.b32.xlu0 %v1698, 16
      %v1811 = vpop.permute.xlu0 %1810
      %1812 = vrot.lane.b32.xlu0 %v1701, 16
      %v1813 = vpop.permute.xlu0 %1812
      %1814 = vrot.lane.b32.xlu0 %v1745, 16
      %v1815 = vpop.permute.xlu0 %1814
      %1816 = vrot.lane.b32.xlu0 %v1748, 16
      %v1817 = vpop.permute.xlu0 %1816
      %1818 = vrot.lane.b32.xlu0 %v1792, 16
      %v1819 = vpop.permute.xlu0 %1818
      %1820 = vrot.lane.b32.xlu0 %v1795, 16
      %v1821 = vpop.permute.xlu0 %1820
      %v1830 = vsel %vm832, %v1163, %v1807
      %v1831 = vsel %vm832, %v1166, %v1809
      %v1832 = vsel %vm832, %v1210, %v1811
      %v1833 = vsel %vm832, %v1213, %v1813
      %v1834 = vsel %vm832, %v1257, %v1815
      %v1835 = vsel %vm832, %v1260, %v1817
      %v1836 = vsel %vm832, %v1304, %v1819
      %v1837 = vsel %vm832, %v1307, %v1821
      %v1838 = vld [vmem:[%s6] sm:$0xf]
      %v1839 = vld [vmem:[%s6 + $0x4] sm:$0xf]
      %v1840 = vld [vmem:[%s6 + $0x8] sm:$0xf]
      %v1841 = vld [vmem:[%s6 + $0xc] sm:$0xf]
      %v1842 = vpack.c.bf16 %v1831, %v1830
      %v1843 = vpack.c.bf16 %v1833, %v1832
      %v1844 = vpack.c.bf16 %v1835, %v1834
      %v1845 = vpack.c.bf16 %v1837, %v1836
      %v1850 = vunpack.c.l.b16 %v1838
      %v1851 = vunpack.c.l.b16 %v1839
      %v1852 = vunpack.c.l.b16 %v1840
      %v1853 = vunpack.c.l.b16 %v1841
      %v1854 = vpack.c.b16 %v1851, %v1850
      %v1855 = vpack.c.b16 %v1853, %v1852
      %v1859 = vsel %vm543, %v1842, 0
      %v1862 = vsel %vm543, %v1843, 0
      %v1865 = vsel %vm543, %v1844, 0
      %v1868 = vsel %vm543, %v1845, 0
      %1870 = vmatprep.subr.bf16.mxu0 0
      %1871 = vmatpush1.bf16.msra.mxu0 %v1854
      %1872 = vmatprep.subr.bf16.mxu0 0
      %1873 = vmatpush1.bf16.msra.mxu0 %v1855
      %1874 = vmatprep.subr.bf16.mxu0 0
      %1875 = vmatpush1.bf16.msra.mxu0 0
      %1876 = vmatprep.subr.bf16.mxu0 0
      %1877 = vmatpush1.bf16.msra.mxu0 0
      %1878 = vmatprep.subr.bf16.mxu0 0
      %1879 = vmatpush1.bf16.msra.mxu0 0
      %1880 = vmatprep.subr.bf16.mxu0 0
      %1881 = vmatpush1.bf16.msra.mxu0 0
      %1882 = vmatprep.subr.bf16.mxu0 0
      %1883 = vmatpush1.bf16.msra.mxu0 0
      %1884 = vmatprep.subr.bf16.mxu0 0
      %1885 = vmatpush1.bf16.msra.mxu0 0
      %1886 = vmatprep.subr.bf16.mxu0 0
      %1887 = vmatpush1.bf16.msra.mxu0 0
      %1888 = vmatprep.subr.bf16.mxu0 0
      %1889 = vmatpush1.bf16.msra.mxu0 0
      %1890 = vmatprep.subr.bf16.mxu0 0
      %1891 = vmatpush1.bf16.msra.mxu0 0
      %1892 = vmatprep.subr.bf16.mxu0 0
      %1893 = vmatpush1.bf16.msra.mxu0 0
      %1894 = vmatprep.subr.bf16.mxu0 0
      %1895 = vmatpush1.bf16.msra.mxu0 0
      %1896 = vmatprep.subr.bf16.mxu0 0
      %1897 = vmatpush1.bf16.msra.mxu0 0
      %1898 = vmatprep.subr.bf16.mxu0 0
      %1899 = vmatpush1.bf16.msra.mxu0 0
      %1900 = vmatprep.subr.bf16.mxu0 0
      %1901 = vmatpush1.bf16.msra.mxu0 0
      %1902 = vmatprep.mubr.bf16.mxu0 0
      %1903 = vmatmul.mubr.bf16.gmra.mrb[0].mxu0 %v1859
      %v1904 = vpop.f32.mrb[0].mxu0
      %v1905 = vadd.f32 0.0, %v1904
      %v1906 = vpop.f32.mrb[0].mxu0
      %v1907 = vpop.f32.mrb[0].mxu0
      %v1908 = vadd.f32 0.0, %v1907
      %v1909 = vpop.f32.mrb[0].mxu0
      %1910 = vmatprep.mubr.bf16.mxu0 0
      %1911 = vmatmul.mubr.bf16.gmra.mrb[0].mxu0 %v1862
      %v1912 = vpop.f32.mrb[0].mxu0
      %v1913 = vadd.f32 0.0, %v1912
      %v1914 = vpop.f32.mrb[0].mxu0
      %v1915 = vpop.f32.mrb[0].mxu0
      %v1916 = vadd.f32 0.0, %v1915
      %v1917 = vpop.f32.mrb[0].mxu0
      %1918 = vmatprep.mubr.bf16.mxu0 0
      %1919 = vmatmul.mubr.bf16.gmra.mrb[0].mxu0 %v1865
      %v1920 = vpop.f32.mrb[0].mxu0
      %v1921 = vadd.f32 0.0, %v1920
      %v1922 = vpop.f32.mrb[0].mxu0
      %v1923 = vpop.f32.mrb[0].mxu0
      %v1924 = vadd.f32 0.0, %v1923
      %v1925 = vpop.f32.mrb[0].mxu0
      %1926 = vmatprep.mubr.bf16.mxu0 0
      %1927 = vmatmul.mubr.bf16.gmra.mrb[0].mxu0 %v1868
      %v1928 = vpop.f32.mrb[0].mxu0
      %v1929 = vadd.f32 0.0, %v1928
      %v1930 = vpop.f32.mrb[0].mxu0
      %v1931 = vpop.f32.mrb[0].mxu0
      %v1932 = vadd.f32 0.0, %v1931
      %v1933 = vpop.f32.mrb[0].mxu0
      %1934 = vdwg.mxu0
      %v1935 = vadd.f32 %v533, %v1905
      %v1936 = vadd.f32 %v534, %v1908
      %v1937 = vadd.f32 %v535, %v1913
      %v1938 = vadd.f32 %v536, %v1916
      %v1939 = vadd.f32 %v537, %v1921
      %v1940 = vadd.f32 %v538, %v1924
      %v1941 = vadd.f32 %v539, %v1929
      %v1942 = vadd.f32 %v540, %v1932
      %v1943 = vld [vmem:[%s7] sm:$0x1]
      %v1945 = vlaneseq
      %v1946 = vshrl.u32 %v1945, 7
      %v1947 = vsub.s32 0, %v1946
      %v1948 = vrot.slane %v1943, %v1947
      %v1950 = vadd.f32 %v1935, %v1948
      %v1951 = vadd.f32 %v1936, %v1948
      %v1952 = vadd.f32 %v1937, %v1948
      %v1953 = vadd.f32 %v1938, %v1948
      %v1954 = vadd.f32 %v1939, %v1948
      %v1955 = vadd.f32 %v1940, %v1948
      %v1956 = vadd.f32 %v1941, %v1948
      %v1957 = vadd.f32 %v1942, %v1948
      %v1958 = vld [vmem:[%s8] sm:$0x1]
      %v1959 = vld [vmem:[%s9] sm:$0x1]
      %v1960 = vsel %vm543, %v1950, 0.0
      %1961 = vadd.xlane.f32.xlu0 %v1960
      %v1962 = vpop.xlane.xlu0 %1961
      %v1963 = vsel %vm543, %v1951, 0.0
      %1964 = vadd.xlane.f32.xlu0 %v1963
      %v1965 = vpop.xlane.xlu0 %1964
      %v1966 = vsel %vm543, %v1952, 0.0
      %1967 = vadd.xlane.f32.xlu0 %v1966
      %v1968 = vpop.xlane.xlu0 %1967
      %v1969 = vsel %vm543, %v1953, 0.0
      %1970 = vadd.xlane.f32.xlu0 %v1969
      %v1971 = vpop.xlane.xlu0 %1970
      %v1972 = vsel %vm543, %v1954, 0.0
      %1973 = vadd.xlane.f32.xlu0 %v1972
      %v1974 = vpop.xlane.xlu0 %1973
      %v1975 = vsel %vm543, %v1955, 0.0
      %1976 = vadd.xlane.f32.xlu0 %v1975
      %v1977 = vpop.xlane.xlu0 %1976
      %v1978 = vsel %vm543, %v1956, 0.0
      %1979 = vadd.xlane.f32.xlu0 %v1978
      %v1980 = vpop.xlane.xlu0 %1979
      %v1981 = vsel %vm543, %v1957, 0.0
      %1982 = vadd.xlane.f32.xlu0 %v1981
      %v1983 = vpop.xlane.xlu0 %1982
      %v1984 = vmul.f32 %v1962, %v568
      %v1985 = vmul.f32 %v1965, %v568
      %v1986 = vmul.f32 %v1968, %v568
      %v1987 = vmul.f32 %v1971, %v568
      %v1988 = vmul.f32 %v1974, %v568
      %v1989 = vmul.f32 %v1977, %v568
      %v1990 = vmul.f32 %v1980, %v568
      %v1991 = vmul.f32 %v1983, %v568
      %v1992 = vsub.f32 %v1950, %v1984
      %v1993 = vsub.f32 %v1951, %v1985
      %v1994 = vsub.f32 %v1952, %v1986
      %v1995 = vsub.f32 %v1953, %v1987
      %v1996 = vsub.f32 %v1954, %v1988
      %v1997 = vsub.f32 %v1955, %v1989
      %v1998 = vsub.f32 %v1956, %v1990
      %v1999 = vsub.f32 %v1957, %v1991
      %v2000 = vmul.f32 %v1992, %v1992
      %v2001 = vmul.f32 %v1993, %v1993
      %v2002 = vmul.f32 %v1994, %v1994
      %v2003 = vmul.f32 %v1995, %v1995
      %v2004 = vmul.f32 %v1996, %v1996
      %v2005 = vmul.f32 %v1997, %v1997
      %v2006 = vmul.f32 %v1998, %v1998
      %v2007 = vmul.f32 %v1999, %v1999
      %v2008 = vsel %vm543, %v2000, 0.0
      %2009 = vadd.xlane.f32.xlu0 %v2008
      %v2010 = vpop.xlane.xlu0 %2009
      %v2011 = vsel %vm543, %v2001, 0.0
      %2012 = vadd.xlane.f32.xlu0 %v2011
      %v2013 = vpop.xlane.xlu0 %2012
      %v2014 = vsel %vm543, %v2002, 0.0
      %2015 = vadd.xlane.f32.xlu0 %v2014
      %v2016 = vpop.xlane.xlu0 %2015
      %v2017 = vsel %vm543, %v2003, 0.0
      %2018 = vadd.xlane.f32.xlu0 %v2017
      %v2019 = vpop.xlane.xlu0 %2018
      %v2020 = vsel %vm543, %v2004, 0.0
      %2021 = vadd.xlane.f32.xlu0 %v2020
      %v2022 = vpop.xlane.xlu0 %2021
      %v2023 = vsel %vm543, %v2005, 0.0
      %2024 = vadd.xlane.f32.xlu0 %v2023
      %v2025 = vpop.xlane.xlu0 %2024
      %v2026 = vsel %vm543, %v2006, 0.0
      %2027 = vadd.xlane.f32.xlu0 %v2026
      %v2028 = vpop.xlane.xlu0 %2027
      %v2029 = vsel %vm543, %v2007, 0.0
      %2030 = vadd.xlane.f32.xlu0 %v2029
      %v2031 = vpop.xlane.xlu0 %2030
      %v2032 = vmul.f32 %v2010, %v568
      %v2033 = vmul.f32 %v2013, %v568
      %v2034 = vmul.f32 %v2016, %v568
      %v2035 = vmul.f32 %v2019, %v568
      %v2036 = vmul.f32 %v2022, %v568
      %v2037 = vmul.f32 %v2025, %v568
      %v2038 = vmul.f32 %v2028, %v568
      %v2039 = vmul.f32 %v2031, %v568
      %v2040 = vadd.f32 %v2032, 1e-05
      %v2041 = vadd.f32 %v2033, 1e-05
      %v2042 = vadd.f32 %v2034, 1e-05
      %v2043 = vadd.f32 %v2035, 1e-05
      %v2044 = vadd.f32 %v2036, 1e-05
      %v2045 = vadd.f32 %v2037, 1e-05
      %v2046 = vadd.f32 %v2038, 1e-05
      %v2047 = vadd.f32 %v2039, 1e-05
      %v2048 = vrsqrt.pop %v2040
      %v2049 = vrsqrt.pop %v2041
      %v2050 = vrsqrt.pop %v2042
      %v2051 = vrsqrt.pop %v2043
      %v2052 = vrsqrt.pop %v2044
      %v2053 = vrsqrt.pop %v2045
      %v2054 = vrsqrt.pop %v2046
      %v2055 = vrsqrt.pop %v2047
      %v2056 = vmul.f32 %v1992, %v2048
      %v2057 = vmul.f32 %v1993, %v2049
      %v2058 = vmul.f32 %v1994, %v2050
      %v2059 = vmul.f32 %v1995, %v2051
      %v2060 = vmul.f32 %v1996, %v2052
      %v2061 = vmul.f32 %v1997, %v2053
      %v2062 = vmul.f32 %v1998, %v2054
      %v2063 = vmul.f32 %v1999, %v2055
      %v2065 = vlaneseq
      %v2066 = vshrl.u32 %v2065, 7
      %v2067 = vsub.s32 0, %v2066
      %v2068 = vrot.slane %v1958, %v2067
      %v2070 = vmul.f32 %v2056, %v2068
      %v2071 = vmul.f32 %v2057, %v2068
      %v2072 = vmul.f32 %v2058, %v2068
      %v2073 = vmul.f32 %v2059, %v2068
      %v2074 = vmul.f32 %v2060, %v2068
      %v2075 = vmul.f32 %v2061, %v2068
      %v2076 = vmul.f32 %v2062, %v2068
      %v2077 = vmul.f32 %v2063, %v2068
      %v2079 = vlaneseq
      %v2080 = vshrl.u32 %v2079, 7
      %v2081 = vsub.s32 0, %v2080
      %v2082 = vrot.slane %v1959, %v2081
      %v2084 = vadd.f32 %v2070, %v2082
      %v2085 = vadd.f32 %v2071, %v2082
      %v2086 = vadd.f32 %v2072, %v2082
      %v2087 = vadd.f32 %v2073, %v2082
      %v2088 = vadd.f32 %v2074, %v2082
      %v2089 = vadd.f32 %v2075, %v2082
      %v2090 = vadd.f32 %v2076, %v2082
      %v2091 = vadd.f32 %v2077, %v2082
      %v2092 = vld [vmem:[%s10] sm:$0xf]
      %v2093 = vld [vmem:[%s10 + $0x4] sm:$0xf]
      %v2094 = vld [vmem:[%s10 + $0x8] sm:$0xf]
      %v2095 = vld [vmem:[%s10 + $0xc] sm:$0xf]
      %v2096 = vpack.c.bf16 %v2085, %v2084
      %v2097 = vpack.c.bf16 %v2087, %v2086
      %v2098 = vpack.c.bf16 %v2089, %v2088
      %v2099 = vpack.c.bf16 %v2091, %v2090
      %v2100 = vld [vmem:[%s11] sm:$0x1]
      %v2102 = vlaneseq
      %v2103 = vshrl.u32 %v2102, 7
      %v2104 = vsub.s32 0, %v2103
      %v2105 = vrot.slane %v2100, %v2104
      %v2111 = vunpack.c.l.b16 %v2092
      %v2112 = vunpack.c.l.b16 %v2093
      %v2113 = vunpack.c.l.b16 %v2094
      %v2114 = vunpack.c.l.b16 %v2095
      %v2115 = vpack.c.b16 %v2112, %v2111
      %v2116 = vpack.c.b16 %v2114, %v2113
      %v2120 = vsel %vm543, %v2096, 0
      %v2123 = vsel %vm543, %v2097, 0
      %v2126 = vsel %vm543, %v2098, 0
      %v2129 = vsel %vm543, %v2099, 0
      %2131 = vmatprep.subr.bf16.mxu0 0
      %2132 = vmatpush1.bf16.msra.mxu0 %v2115
      %2133 = vmatprep.subr.bf16.mxu0 0
      %2134 = vmatpush1.bf16.msra.mxu0 %v2116
      %2135 = vmatprep.subr.bf16.mxu0 0
      %2136 = vmatpush1.bf16.msra.mxu0 0
      %2137 = vmatprep.subr.bf16.mxu0 0
      %2138 = vmatpush1.bf16.msra.mxu0 0
      %2139 = vmatprep.subr.bf16.mxu0 0
      %2140 = vmatpush1.bf16.msra.mxu0 0
      %2141 = vmatprep.subr.bf16.mxu0 0
      %2142 = vmatpush1.bf16.msra.mxu0 0
      %2143 = vmatprep.subr.bf16.mxu0 0
      %2144 = vmatpush1.bf16.msra.mxu0 0
      %2145 = vmatprep.subr.bf16.mxu0 0
      %2146 = vmatpush1.bf16.msra.mxu0 0
      %2147 = vmatprep.subr.bf16.mxu0 0
      %2148 = vmatpush1.bf16.msra.mxu0 0
      %2149 = vmatprep.subr.bf16.mxu0 0
      %2150 = vmatpush1.bf16.msra.mxu0 0
      %2151 = vmatprep.subr.bf16.mxu0 0
      %2152 = vmatpush1.bf16.msra.mxu0 0
      %2153 = vmatprep.subr.bf16.mxu0 0
      %2154 = vmatpush1.bf16.msra.mxu0 0
      %2155 = vmatprep.subr.bf16.mxu0 0
      %2156 = vmatpush1.bf16.msra.mxu0 0
      %2157 = vmatprep.subr.bf16.mxu0 0
      %2158 = vmatpush1.bf16.msra.mxu0 0
      %2159 = vmatprep.subr.bf16.mxu0 0
      %2160 = vmatpush1.bf16.msra.mxu0 0
      %2161 = vmatprep.subr.bf16.mxu0 0
      %2162 = vmatpush1.bf16.msra.mxu0 0
      %2163 = vmatprep.mubr.bf16.mxu0 0
      %2164 = vmatmul.mubr.bf16.gmra.mrb[0].mxu0 %v2120
      %v2165 = vpop.f32.mrb[0].mxu0
      %v2166 = vadd.f32 %v2105, %v2165
      %v2167 = vpop.f32.mrb[0].mxu0
      %v2168 = vpop.f32.mrb[0].mxu0
      %v2169 = vadd.f32 %v2105, %v2168
      %v2170 = vpop.f32.mrb[0].mxu0
      %2171 = vmatprep.mubr.bf16.mxu0 0
      %2172 = vmatmul.mubr.bf16.gmra.mrb[0].mxu0 %v2123
      %v2173 = vpop.f32.mrb[0].mxu0
      %v2174 = vadd.f32 %v2105, %v2173
      %v2175 = vpop.f32.mrb[0].mxu0
      %v2176 = vpop.f32.mrb[0].mxu0
      %v2177 = vadd.f32 %v2105, %v2176
      %v2178 = vpop.f32.mrb[0].mxu0
      %2179 = vmatprep.mubr.bf16.mxu0 0
      %2180 = vmatmul.mubr.bf16.gmra.mrb[0].mxu0 %v2126
      %v2181 = vpop.f32.mrb[0].mxu0
      %v2182 = vadd.f32 %v2105, %v2181
      %v2183 = vpop.f32.mrb[0].mxu0
      %v2184 = vpop.f32.mrb[0].mxu0
      %v2185 = vadd.f32 %v2105, %v2184
      %v2186 = vpop.f32.mrb[0].mxu0
      %2187 = vmatprep.mubr.bf16.mxu0 0
      %2188 = vmatmul.mubr.bf16.gmra.mrb[0].mxu0 %v2129
      %v2189 = vpop.f32.mrb[0].mxu0
      %v2190 = vadd.f32 %v2105, %v2189
      %v2191 = vpop.f32.mrb[0].mxu0
      %v2192 = vpop.f32.mrb[0].mxu0
      %v2193 = vadd.f32 %v2105, %v2192
      %v2194 = vpop.f32.mrb[0].mxu0
      %2195 = vdwg.mxu0
      %v2196 = vmul.f32 %v2166, 0.5
      %v2197 = vmul.f32 %v2169, 0.5
      %v2198 = vmul.f32 %v2174, 0.5
      %v2199 = vmul.f32 %v2177, 0.5
      %v2200 = vmul.f32 %v2182, 0.5
      %v2201 = vmul.f32 %v2185, 0.5
      %v2202 = vmul.f32 %v2190, 0.5
      %v2203 = vmul.f32 %v2193, 0.5
      %v2204 = vmul.f32 %v2166, 0.044715
      %v2205 = vmul.f32 %v2169, 0.044715
      %v2206 = vmul.f32 %v2174, 0.044715
      %v2207 = vmul.f32 %v2177, 0.044715
      %v2208 = vmul.f32 %v2182, 0.044715
      %v2209 = vmul.f32 %v2185, 0.044715
      %v2210 = vmul.f32 %v2190, 0.044715
      %v2211 = vmul.f32 %v2193, 0.044715
      %v2212 = vmul.f32 %v2204, %v2166
      %v2213 = vmul.f32 %v2205, %v2169
      %v2214 = vmul.f32 %v2206, %v2174
      %v2215 = vmul.f32 %v2207, %v2177
      %v2216 = vmul.f32 %v2208, %v2182
      %v2217 = vmul.f32 %v2209, %v2185
      %v2218 = vmul.f32 %v2210, %v2190
      %v2219 = vmul.f32 %v2211, %v2193
      %v2220 = vmul.f32 %v2212, %v2166
      %v2221 = vmul.f32 %v2213, %v2169
      %v2222 = vmul.f32 %v2214, %v2174
      %v2223 = vmul.f32 %v2215, %v2177
      %v2224 = vmul.f32 %v2216, %v2182
      %v2225 = vmul.f32 %v2217, %v2185
      %v2226 = vmul.f32 %v2218, %v2190
      %v2227 = vmul.f32 %v2219, %v2193
      %v2228 = vadd.f32 %v2166, %v2220
      %v2229 = vadd.f32 %v2169, %v2221
      %v2230 = vadd.f32 %v2174, %v2222
      %v2231 = vadd.f32 %v2177, %v2223
      %v2232 = vadd.f32 %v2182, %v2224
      %v2233 = vadd.f32 %v2185, %v2225
      %v2234 = vadd.f32 %v2190, %v2226
      %v2235 = vadd.f32 %v2193, %v2227
      %v2236 = vmul.f32 %v2228, 0.7978846
      %v2237 = vmul.f32 %v2229, 0.7978846
      %v2238 = vmul.f32 %v2230, 0.7978846
      %v2239 = vmul.f32 %v2231, 0.7978846
      %v2240 = vmul.f32 %v2232, 0.7978846
      %v2241 = vmul.f32 %v2233, 0.7978846
      %v2242 = vmul.f32 %v2234, 0.7978846
      %v2243 = vmul.f32 %v2235, 0.7978846
      %v2244 = vtanh.pop %v2236
      %v2245 = vtanh.pop %v2237
      %v2246 = vtanh.pop %v2238
      %v2247 = vtanh.pop %v2239
      %v2248 = vtanh.pop %v2240
      %v2249 = vtanh.pop %v2241
      %v2250 = vtanh.pop %v2242
      %v2251 = vtanh.pop %v2243
      %v2252 = vadd.f32 %v2244, 1.0
      %v2253 = vadd.f32 %v2245, 1.0
      %v2254 = vadd.f32 %v2246, 1.0
      %v2255 = vadd.f32 %v2247, 1.0
      %v2256 = vadd.f32 %v2248, 1.0
      %v2257 = vadd.f32 %v2249, 1.0
      %v2258 = vadd.f32 %v2250, 1.0
      %v2259 = vadd.f32 %v2251, 1.0
      %v2260 = vmul.f32 %v2196, %v2252
      %v2261 = vmul.f32 %v2197, %v2253
      %v2262 = vmul.f32 %v2198, %v2254
      %v2263 = vmul.f32 %v2199, %v2255
      %v2264 = vmul.f32 %v2200, %v2256
      %v2265 = vmul.f32 %v2201, %v2257
      %v2266 = vmul.f32 %v2202, %v2258
      %v2267 = vmul.f32 %v2203, %v2259
      %v2268 = vld [vmem:[%s12] sm:$0xf]
      %v2269 = vld [vmem:[%s12 + $0x4] sm:$0xf]
      %v2270 = vld [vmem:[%s12 + $0x8] sm:$0xf]
      %v2271 = vld [vmem:[%s12 + $0xc] sm:$0xf]
      %v2272 = vld [vmem:[%s12 + $0x10] sm:$0xf]
      %v2273 = vld [vmem:[%s12 + $0x14] sm:$0xf]
      %v2274 = vld [vmem:[%s12 + $0x18] sm:$0xf]
      %v2275 = vld [vmem:[%s12 + $0x1c] sm:$0xf]
      %v2276 = vld [vmem:[%s12 + $0x20] sm:$0xf]
      %v2277 = vld [vmem:[%s12 + $0x24] sm:$0xf]
      %v2278 = vld [vmem:[%s12 + $0x28] sm:$0xf]
      %v2279 = vld [vmem:[%s12 + $0x2c] sm:$0xf]
      %v2280 = vld [vmem:[%s12 + $0x30] sm:$0xf]
      %v2281 = vld [vmem:[%s12 + $0x34] sm:$0xf]
      %v2282 = vld [vmem:[%s12 + $0x38] sm:$0xf]
      %v2283 = vld [vmem:[%s12 + $0x3c] sm:$0xf]
      %v2284 = vpack.c.bf16 %v2261, %v2260
      %v2285 = vpack.c.bf16 %v2263, %v2262
      %v2286 = vpack.c.bf16 %v2265, %v2264
      %v2287 = vpack.c.bf16 %v2267, %v2266
      %v2288 = vld [vmem:[%s13] sm:$0x1]
      %v2290 = vlaneseq
      %v2291 = vshrl.u32 %v2290, 7
      %v2292 = vsub.s32 0, %v2291
      %v2293 = vrot.slane %v2288, %v2292
      %v2311 = vunpack.c.l.b16 %v2268
      %v2312 = vunpack.c.l.b16 %v2269
      %v2313 = vunpack.c.l.b16 %v2270
      %v2314 = vunpack.c.l.b16 %v2271
      %v2315 = vunpack.c.l.b16 %v2272
      %v2316 = vunpack.c.l.b16 %v2273
      %v2317 = vunpack.c.l.b16 %v2274
      %v2318 = vunpack.c.l.b16 %v2275
      %v2319 = vunpack.c.l.b16 %v2276
      %v2320 = vunpack.c.l.b16 %v2277
      %v2321 = vunpack.c.l.b16 %v2278
      %v2322 = vunpack.c.l.b16 %v2279
      %v2323 = vunpack.c.l.b16 %v2280
      %v2324 = vunpack.c.l.b16 %v2281
      %v2325 = vunpack.c.l.b16 %v2282
      %v2326 = vunpack.c.l.b16 %v2283
      %v2327 = vpack.c.b16 %v2312, %v2311
      %v2328 = vpack.c.b16 %v2314, %v2313
      %v2329 = vpack.c.b16 %v2316, %v2315
      %v2330 = vpack.c.b16 %v2318, %v2317
      %v2331 = vpack.c.b16 %v2320, %v2319
      %v2332 = vpack.c.b16 %v2322, %v2321
      %v2333 = vpack.c.b16 %v2324, %v2323
      %v2334 = vpack.c.b16 %v2326, %v2325
      %2343 = vmatprep.subr.bf16.mxu0 0
      %2344 = vmatpush1.bf16.msra.mxu0 %v2327
      %2345 = vmatprep.subr.bf16.mxu0 0
      %2346 = vmatpush1.bf16.msra.mxu0 %v2328
      %2347 = vmatprep.subr.bf16.mxu0 0
      %2348 = vmatpush1.bf16.msra.mxu0 %v2329
      %2349 = vmatprep.subr.bf16.mxu0 0
      %2350 = vmatpush1.bf16.msra.mxu0 %v2330
      %2351 = vmatprep.subr.bf16.mxu0 0
      %2352 = vmatpush1.bf16.msra.mxu0 %v2331
      %2353 = vmatprep.subr.bf16.mxu0 0
      %2354 = vmatpush1.bf16.msra.mxu0 %v2332
      %2355 = vmatprep.subr.bf16.mxu0 0
      %2356 = vmatpush1.bf16.msra.mxu0 %v2333
      %2357 = vmatprep.subr.bf16.mxu0 0
      %2358 = vmatpush1.bf16.msra.mxu0 %v2334
      %2359 = vmatprep.subr.bf16.mxu0 0
      %2360 = vmatpush1.bf16.msra.mxu0 0
      %2361 = vmatprep.subr.bf16.mxu0 0
      %2362 = vmatpush1.bf16.msra.mxu0 0
      %2363 = vmatprep.subr.bf16.mxu0 0
      %2364 = vmatpush1.bf16.msra.mxu0 0
      %2365 = vmatprep.subr.bf16.mxu0 0
      %2366 = vmatpush1.bf16.msra.mxu0 0
      %2367 = vmatprep.subr.bf16.mxu0 0
      %2368 = vmatpush1.bf16.msra.mxu0 0
      %2369 = vmatprep.subr.bf16.mxu0 0
      %2370 = vmatpush1.bf16.msra.mxu0 0
      %2371 = vmatprep.subr.bf16.mxu0 0
      %2372 = vmatpush1.bf16.msra.mxu0 0
      %2373 = vmatprep.subr.bf16.mxu0 0
      %2374 = vmatpush1.bf16.msra.mxu0 0
      %2375 = vmatprep.mubr.bf16.mxu0 0
      %2376 = vmatmul.mubr.bf16.gmra.mrb[0].mxu0 %v2284
      %v2377 = vpop.f32.mrb[0].mxu0
      %v2378 = vadd.f32 %v2293, %v2377
      %v2379 = vpop.f32.mrb[0].mxu0
      %v2380 = vpop.f32.mrb[0].mxu0
      %v2381 = vadd.f32 %v2293, %v2380
      %v2382 = vpop.f32.mrb[0].mxu0
      %2383 = vmatprep.mubr.bf16.mxu0 0
      %2384 = vmatmul.mubr.bf16.gmra.mrb[0].mxu0 %v2285
      %v2385 = vpop.f32.mrb[0].mxu0
      %v2386 = vadd.f32 %v2293, %v2385
      %v2387 = vpop.f32.mrb[0].mxu0
      %v2388 = vpop.f32.mrb[0].mxu0
      %v2389 = vadd.f32 %v2293, %v2388
      %v2390 = vpop.f32.mrb[0].mxu0
      %2391 = vmatprep.mubr.bf16.mxu0 0
      %2392 = vmatmul.mubr.bf16.gmra.mrb[0].mxu0 %v2286
      %v2393 = vpop.f32.mrb[0].mxu0
      %v2394 = vadd.f32 %v2293, %v2393
      %v2395 = vpop.f32.mrb[0].mxu0
      %v2396 = vpop.f32.mrb[0].mxu0
      %v2397 = vadd.f32 %v2293, %v2396
      %v2398 = vpop.f32.mrb[0].mxu0
      %2399 = vmatprep.mubr.bf16.mxu0 0
      %2400 = vmatmul.mubr.bf16.gmra.mrb[0].mxu0 %v2287
      %v2401 = vpop.f32.mrb[0].mxu0
      %v2402 = vadd.f32 %v2293, %v2401
      %v2403 = vpop.f32.mrb[0].mxu0
      %v2404 = vpop.f32.mrb[0].mxu0
      %v2405 = vadd.f32 %v2293, %v2404
      %v2406 = vpop.f32.mrb[0].mxu0
      %2407 = vdwg.mxu0
      %v2408 = vadd.f32 %v1950, %v2378
      %v2409 = vadd.f32 %v1951, %v2381
      %v2410 = vadd.f32 %v1952, %v2386
      %v2411 = vadd.f32 %v1953, %v2389
      %v2412 = vadd.f32 %v1954, %v2394
      %v2413 = vadd.f32 %v1955, %v2397
      %v2414 = vadd.f32 %v1956, %v2402
      %v2415 = vadd.f32 %v1957, %v2405
      %2416 = vst.msk [vmem:[%s530] sm:$0xff] %vm543, %v2408
      %2417 = vst.msk [vmem:[%s530 + $0x8] sm:$0xff] %vm543, %v2409
      %2418 = vst.msk [vmem:[%s530 + $0x10] sm:$0xff] %vm543, %v2410
      %2419 = vst.msk [vmem:[%s530 + $0x18] sm:$0xff] %vm543, %v2411
      %2420 = vst.msk [vmem:[%s530 + $0x20] sm:$0xff] %vm543, %v2412
      %2421 = vst.msk [vmem:[%s530 + $0x28] sm:$0xff] %vm543, %v2413
      %2422 = vst.msk [vmem:[%s530 + $0x30] sm:$0xff] %vm543, %v2414
      %2423 = vst.msk [vmem:[%s530 + $0x38] sm:$0xff] %vm543, %v2415
      %s2424 = smul.u32 8, %s30
      %p2425 = scmp.lt.s32.totalorder %s29, 1
      %s2426 = scalar_select %p2425, %s29, 1
      %p2427 = scmp.lt.s32.totalorder %s2424, 7
      %s2428 = scalar_select %p2427, %s2424, 7
      %s2429 = smul.addr %s2426, 8
      %s2430 = sadd.s32 %s2428, %s2429
      %s2431 = smul.addr %s2430, 8
      %s2432 = scalar_lea.vmem %s14, %s2431
      // Predicated region
      $region77: #{ramplus_forward.12} parent=75 // pred_check
        %p2433 = pneg %p363
      $region78: #{ramplus_forward.12} parent=75 // pred_check_branch
        %2435 = sbr.rel (%p2433) target = $region80
      $region79: #{ramplus_forward.12} parent=75 // pred_region
        %s2436 = smul.u32 8, %s30
      $region80: #{ramplus_forward.12} parent=75 // pred_fallthru
        _
    $region76: #{ramplus_forward.12} parent=5 // pred_fallthru
      _
    %p2437 = scmp.le.s32.totalorder 2, %s20
    // Predicated region
    $region81: #{ramplus_forward.12} parent=5 // pred_check
      %p2438 = pneg %p2437
    $region82: #{ramplus_forward.12} parent=5 // pred_check_branch
      %2440 = sbr.rel (%p2438) target = $region84
    $region83: #{ramplus_forward.12} parent=5 // pred_region
      %s2441 = ssub.s32 %s20, 2
      // Predicated region
      $region85: #{ramplus_forward.12} parent=83 // pred_check
        %p2442 = pneg %p369
      $region86: #{ramplus_forward.12} parent=83 // pred_check_branch
        %2444 = sbr.rel (%p2442) target = $region88
      $region87: #{ramplus_forward.12} parent=83 // pred_region
        %s2445 = smul.u32 8, %s32
        %p2446 = scmp.lt.s32.totalorder %s31, 1
        %s2447 = scalar_select %p2446, %s31, 1
        %p2448 = scmp.lt.s32.totalorder %s2445, 7
        %s2449 = scalar_select %p2448, %s2445, 7
        %s2450 = smul.addr %s2447, 8
        %s2451 = sadd.s32 %s2449, %s2450
        %s2452 = smul.addr %s2451, 8
        %s2453 = scalar_lea.vmem %s14, %s2452
      $region88: #{ramplus_forward.12} parent=83 // pred_fallthru
        _
    $region84: #{ramplus_forward.12} parent=5 // pred_fallthru
      _
  $region6: #{ramplus_forward.12} parent=0 // loop_footer
    %s24 = sadd.s32 1, %s20
  $region7: #{ramplus_forward.12} parent=0 // loop_footer_branch
    %19 = sbr.rel target = $region3
  $region8: #{ramplus_forward.12} parent=0 // loop_exit
    _

// kernel: ramplus_forward.14
$region0: #{ramplus_forward.14}
  #allocation0 [shape = 'u32[]', space=smem, size = 0x4, offset = 0x4, fixed_abs, tag = 'smem constant byte address 0x4 - core index']
  #allocation1 [shape = 'u32[144,128]{1,0:T(1,128)}', space=vmem, size = 0x12000, scoped, tag = 'internal scratch']
  %s0 = inlined_call_operand.vmem [shape: f32[32,128], index: 0, kind: input, shape index: {}]
  %s1 = inlined_call_operand.vmem [shape: f32[1,128], index: 1, kind: input, shape index: {}]
  %s2 = inlined_call_operand.vmem [shape: f32[1,128], index: 2, kind: input, shape index: {}]
  %s3 = inlined_call_operand.vmem [shape: bf16[128,64], index: 3, kind: input, shape index: {}]
  %s4 = inlined_call_operand.vmem [shape: f32[32,64], index: 4, kind: output, shape index: {}]
  %s5 = sld [smem:[#allocation0]]
  $region26: #{ramplus_forward.14} parent=0
    _
  %s7 = ssub.s32 1, %s5
  %s8 = scalar_select 0, %s7, %s5
  // Predicated region
  $region2: #{ramplus_forward.14} parent=0 // pred_check
    _
  $region3: #{ramplus_forward.14} parent=0 // pred_check_branch
    %10 = sbr.rel (0) target = $region5
  $region4: #{ramplus_forward.14} parent=0 // pred_region
    _
  $region5: #{ramplus_forward.14} parent=0 // pred_fallthru
    _
  // Predicated region
  $region6: #{ramplus_forward.14} parent=0 // pred_check
    _
  $region7: #{ramplus_forward.14} parent=0 // pred_check_branch
    %12 = sbr.rel (0) target = $region9
  $region8: #{ramplus_forward.14} parent=0 // pred_region
    _
  $region9: #{ramplus_forward.14} parent=0 // pred_fallthru
    _
  // Predicated region
  $region10: #{ramplus_forward.14} parent=0 // pred_check
    _
  $region11: #{ramplus_forward.14} parent=0 // pred_check_branch
    %14 = sbr.rel (0) target = $region13
  $region12: #{ramplus_forward.14} parent=0 // pred_region
    _
  $region13: #{ramplus_forward.14} parent=0 // pred_fallthru
    _
  // Predicated region
  $region14: #{ramplus_forward.14} parent=0 // pred_check
    _
  $region15: #{ramplus_forward.14} parent=0 // pred_check_branch
    %16 = sbr.rel (0) target = $region17
  $region16: #{ramplus_forward.14} parent=0 // pred_region
    _
  $region17: #{ramplus_forward.14} parent=0 // pred_fallthru
    _
  %v18 = vld [vmem:[%s0] sm:$0xff]
  %v19 = vld [vmem:[%s0 + $0x8] sm:$0xff]
  %v20 = vld [vmem:[%s0 + $0x10] sm:$0xff]
  %v21 = vld [vmem:[%s0 + $0x18] sm:$0xff]
  %v22 = vld [vmem:[%s1] sm:$0x1]
  %v23 = vld [vmem:[%s2] sm:$0x1]
  %24 = vadd.xlane.f32.xlu0 %v18
  %v25 = vpop.xlane.xlu0 %24
  %26 = vadd.xlane.f32.xlu0 %v19
  %v27 = vpop.xlane.xlu0 %26
  %28 = vadd.xlane.f32.xlu0 %v20
  %v29 = vpop.xlane.xlu0 %28
  %30 = vadd.xlane.f32.xlu0 %v21
  %v31 = vpop.xlane.xlu0 %30
  %v32 = vrcp.pop 128.0
  %v33 = vmul.f32 %v25, %v32
  %v34 = vmul.f32 %v27, %v32
  %v35 = vmul.f32 %v29, %v32
  %v36 = vmul.f32 %v31, %v32
  %v37 = vsub.f32 %v18, %v33
  %v38 = vsub.f32 %v19, %v34
  %v39 = vsub.f32 %v20, %v35
  %v40 = vsub.f32 %v21, %v36
  %v41 = vmul.f32 %v37, %v37
  %v42 = vmul.f32 %v38, %v38
  %v43 = vmul.f32 %v39, %v39
  %v44 = vmul.f32 %v40, %v40
  %45 = vadd.xlane.f32.xlu0 %v41
  %v46 = vpop.xlane.xlu0 %45
  %47 = vadd.xlane.f32.xlu0 %v42
  %v48 = vpop.xlane.xlu0 %47
  %49 = vadd.xlane.f32.xlu0 %v43
  %v50 = vpop.xlane.xlu0 %49
  %51 = vadd.xlane.f32.xlu0 %v44
  %v52 = vpop.xlane.xlu0 %51
  %v53 = vmul.f32 %v46, %v32
  %v54 = vmul.f32 %v48, %v32
  %v55 = vmul.f32 %v50, %v32
  %v56 = vmul.f32 %v52, %v32
  %v57 = vadd.f32 %v53, 1e-05
  %v58 = vadd.f32 %v54, 1e-05
  %v59 = vadd.f32 %v55, 1e-05
  %v60 = vadd.f32 %v56, 1e-05
  %v61 = vrsqrt.pop %v57
  %v62 = vrsqrt.pop %v58
  %v63 = vrsqrt.pop %v59
  %v64 = vrsqrt.pop %v60
  %v65 = vmul.f32 %v37, %v61
  %v66 = vmul.f32 %v38, %v62
  %v67 = vmul.f32 %v39, %v63
  %v68 = vmul.f32 %v40, %v64
  %v70 = vlaneseq
  %v71 = vshrl.u32 %v70, 7
  %v72 = vsub.s32 0, %v71
  %v73 = vrot.slane %v22, %v72
  %v75 = vmul.f32 %v65, %v73
  %v76 = vmul.f32 %v66, %v73
  %v77 = vmul.f32 %v67, %v73
  %v78 = vmul.f32 %v68, %v73
  %v80 = vlaneseq
  %v81 = vshrl.u32 %v80, 7
  %v82 = vsub.s32 0, %v81
  %v83 = vrot.slane %v23, %v82
  %v85 = vadd.f32 %v75, %v83
  %v86 = vadd.f32 %v76, %v83
  %v87 = vadd.f32 %v77, %v83
  %v88 = vadd.f32 %v78, %v83
  %v89 = vld [vmem:[%s3] sm:$0xf]
  %v90 = vld [vmem:[%s3 + $0x4] sm:$0xf]
  %v91 = vld [vmem:[%s3 + $0x8] sm:$0xf]
  %v92 = vld [vmem:[%s3 + $0xc] sm:$0xf]
  %v93 = vld [vmem:[%s3 + $0x10] sm:$0xf]
  %v94 = vld [vmem:[%s3 + $0x14] sm:$0xf]
  %v95 = vld [vmem:[%s3 + $0x18] sm:$0xf]
  %v96 = vld [vmem:[%s3 + $0x1c] sm:$0xf]
  %v97 = vld [vmem:[%s3 + $0x20] sm:$0xf]
  %v98 = vld [vmem:[%s3 + $0x24] sm:$0xf]
  %v99 = vld [vmem:[%s3 + $0x28] sm:$0xf]
  %v100 = vld [vmem:[%s3 + $0x2c] sm:$0xf]
  %v101 = vld [vmem:[%s3 + $0x30] sm:$0xf]
  %v102 = vld [vmem:[%s3 + $0x34] sm:$0xf]
  %v103 = vld [vmem:[%s3 + $0x38] sm:$0xf]
  %v104 = vld [vmem:[%s3 + $0x3c] sm:$0xf]
  %v105 = vpack.c.bf16 %v86, %v85
  %v106 = vpack.c.bf16 %v88, %v87
  %v123 = vunpack.c.l.b16 %v89
  %v124 = vunpack.c.l.b16 %v90
  %v125 = vunpack.c.l.b16 %v91
  %v126 = vunpack.c.l.b16 %v92
  %v127 = vunpack.c.l.b16 %v93
  %v128 = vunpack.c.l.b16 %v94
  %v129 = vunpack.c.l.b16 %v95
  %v130 = vunpack.c.l.b16 %v96
  %v131 = vunpack.c.l.b16 %v97
  %v132 = vunpack.c.l.b16 %v98
  %v133 = vunpack.c.l.b16 %v99
  %v134 = vunpack.c.l.b16 %v100
  %v135 = vunpack.c.l.b16 %v101
  %v136 = vunpack.c.l.b16 %v102
  %v137 = vunpack.c.l.b16 %v103
  %v138 = vunpack.c.l.b16 %v104
  %v139 = vpack.c.b16 %v124, %v123
  %v140 = vpack.c.b16 %v126, %v125
  %v141 = vpack.c.b16 %v128, %v127
  %v142 = vpack.c.b16 %v130, %v129
  %v143 = vpack.c.b16 %v132, %v131
  %v144 = vpack.c.b16 %v134, %v133
  %v145 = vpack.c.b16 %v136, %v135
  %v146 = vpack.c.b16 %v138, %v137
  %155 = vmatprep.subr.bf16.mxu0 0
  %156 = vmatpush1.bf16.msra.mxu0 %v139
  %157 = vmatprep.subr.bf16.mxu0 0
  %158 = vmatpush1.bf16.msra.mxu0 %v140
  %159 = vmatprep.subr.bf16.mxu0 0
  %160 = vmatpush1.bf16.msra.mxu0 %v141
  %161 = vmatprep.subr.bf16.mxu0 0
  %162 = vmatpush1.bf16.msra.mxu0 %v142
  %163 = vmatprep.subr.bf16.mxu0 0
  %164 = vmatpush1.bf16.msra.mxu0 %v143
  %165 = vmatprep.subr.bf16.mxu0 0
  %166 = vmatpush1.bf16.msra.mxu0 %v144
  %167 = vmatprep.subr.bf16.mxu0 0
  %168 = vmatpush1.bf16.msra.mxu0 %v145
  %169 = vmatprep.subr.bf16.mxu0 0
  %170 = vmatpush1.bf16.msra.mxu0 %v146
  %171 = vmatprep.subr.bf16.mxu0 0
  %172 = vmatpush1.bf16.msra.mxu0 0
  %173 = vmatprep.subr.bf16.mxu0 0
  %174 = vmatpush1.bf16.msra.mxu0 0
  %175 = vmatprep.subr.bf16.mxu0 0
  %176 = vmatpush1.bf16.msra.mxu0 0
  %177 = vmatprep.subr.bf16.mxu0 0
  %178 = vmatpush1.bf16.msra.mxu0 0
  %179 = vmatprep.subr.bf16.mxu0 0
  %180 = vmatpush1.bf16.msra.mxu0 0
  %181 = vmatprep.subr.bf16.mxu0 0
  %182 = vmatpush1.bf16.msra.mxu0 0
  %183 = vmatprep.subr.bf16.mxu0 0
  %184 = vmatpush1.bf16.msra.mxu0 0
  %185 = vmatprep.subr.bf16.mxu0 0
  %186 = vmatpush1.bf16.msra.mxu0 0
  %187 = vmatprep.mubr.bf16.mxu0 0
  %188 = vmatmul.mubr.bf16.gmra.mrb[0].mxu0 %v105
  %v189 = vpop.f32.mrb[0].mxu0
  %v190 = vadd.f32 0.0, %v189
  %v191 = vpop.f32.mrb[0].mxu0
  %v192 = vpop.f32.mrb[0].mxu0
  %v193 = vadd.f32 0.0, %v192
  %v194 = vpop.f32.mrb[0].mxu0
  %195 = vmatprep.mubr.bf16.mxu0 0
  %196 = vmatmul.mubr.bf16.gmra.mrb[0].mxu0 %v106
  %v197 = vpop.f32.mrb[0].mxu0
  %v198 = vadd.f32 0.0, %v197
  %v199 = vpop.f32.mrb[0].mxu0
  %v200 = vpop.f32.mrb[0].mxu0
  %v201 = vadd.f32 0.0, %v200
  %v202 = vpop.f32.mrb[0].mxu0
  %203 = vdwg.mxu0
  %vm204 = vcmask 523264
  %205 = vst.msk [vmem:[%s4] sm:$0xff] %vm204, %v190
  %206 = vst.msk [vmem:[%s4 + $0x8] sm:$0xff] %vm204, %v193
  %207 = vst.msk [vmem:[%s4 + $0x10] sm:$0xff] %vm204, %v198
  %208 = vst.msk [vmem:[%s4 + $0x18] sm:$0xff] %vm204, %v201
  // Predicated region
  $region18: #{ramplus_forward.14} parent=0 // pred_check
    _
  $region19: #{ramplus_forward.14} parent=0 // pred_check_branch
    %210 = sbr.rel (0) target = $region21
  $region20: #{ramplus_forward.14} parent=0 // pred_region
    _
  $region21: #{ramplus_forward.14} parent=0 // pred_fallthru
    _
  // Predicated region
  $region22: #{ramplus_forward.14} parent=0 // pred_check
    _
  $region23: #{ramplus_forward.14} parent=0 // pred_check_branch
    %212 = sbr.rel (0) target = $region25
  $region24: #{ramplus_forward.14} parent=0 // pred_region
    _
  $region25: #{ramplus_forward.14} parent=0 // pred_fallthru
    _

// kernel: ramplus_forward.17
$region0: #{ramplus_forward.17}
  #allocation0 [shape = 'u32[]', space=smem, size = 0x4, offset = 0x4, fixed_abs, tag = 'smem constant byte address 0x4 - core index']
  #allocation1 [shape = 'u32[144,128]{1,0:T(1,128)}', space=vmem, size = 0x12000, scoped, tag = 'internal scratch']
  %s0 = inlined_call_operand.vmem [shape: f32[2,16,64], index: 0, kind: input, shape index: {}]
  %s1 = inlined_call_operand.vmem [shape: f32[1,64], index: 1, kind: input, shape index: {}]
  %s2 = inlined_call_operand.vmem [shape: f32[1,64], index: 2, kind: input, shape index: {}]
  %s3 = inlined_call_operand.vmem [shape: bf16[64,32], index: 3, kind: input, shape index: {}]
  %s4 = inlined_call_operand.vmem [shape: f32[1,32], index: 4, kind: input, shape index: {}]
  %s5 = inlined_call_operand.vmem [shape: f32[2,1,32], index: 5, kind: output, shape index: {0}]
  %s6 = inlined_call_operand.vmem [shape: f32[2,16,32], index: 6, kind: output, shape index: {1}]
  %7 = xla_tuple %s5, %s6
  %s8 = sld [smem:[#allocation0]]
  $region61: #{ramplus_forward.17} parent=0
    _
  %s10 = ssub.s32 1, %s8
  %s11 = scalar_select 0, %s10, %s8
  loop: start=0, step=1, limit=4
  $region2: #{ramplus_forward.17} parent=0 // loop_pre_header
    _
  $region3: #{ramplus_forward.17} parent=0 // loop_header
    %s13 = sphi 0, %s17
    %p14 = scmp.ge.s32.totalorder %s13, 4
    %s23 = sphi 0, %s25
    %s26 = sphi 0, %s23
    %s27 = sphi 0, %s26
    %s43 = sphi 0, %s27
    %s47 = sphi 0, %s47
    %s49 = sphi 0, %s47
    %s50 = sphi 0, %s49
    %s64 = sphi 0, %s50
    %s68 = sphi 0, %s68
    %s70 = sphi 0, %s68
    %s71 = sphi 0, %s70
    %s85 = sphi 0, %s71
    %s89 = sphi 0, %s89
    %s91 = sphi 0, %s89
    %s92 = sphi 0, %s91
    %s106 = sphi 0, %s92
    %s110 = sphi 0, %s110
    %s112 = sphi 0, %s110
    %s113 = sphi 0, %s112
    %s127 = sphi 0, %s113
    %s133 = sphi 0, %s135
    %s136 = sphi 0, %s133
    %s137 = sphi 0, %s136
    %s153 = sphi 0, %s137
    %s159 = sphi 0, %s161
    %s162 = sphi 0, %s159
    %s163 = sphi 0, %s162
    %s179 = sphi 0, %s163
  $region4: #{ramplus_forward.17} parent=0 // loop_header_branch
    %16 = sbr.rel (%p14) target = $region8
  $region5: #{ramplus_forward.17} parent=0 // loop_body
    %s18 = ssub.s32 %s13, 1
    %s19 = ssub.s32 %s13, 2
    %s20 = sadd.s32 %s13, 1
    %s21 = ssub.s32 %s13, %s20
    %p22 = scmp.eq.s32.totalorder %s21, 0
    %s24 = sadd.s32 %s23, 1
    %s25 = scalar_select %p22, %s23, %s24
    %p28 = pneg %p22
    %p29 = scmp.eq.s32.totalorder %s13, 1
    %p30 = por %p28, %p29
    %p31 = scmp.ne.s32.totalorder %s23, %s26
    %p32 = scmp.eq.s32.totalorder %s13, 0
    %p33 = por %p31, %p32
    %p34 = scmp.ne.s32.totalorder %s23, %s26
    %p35 = scmp.eq.s32.totalorder %s18, 1
    %p36 = por %p34, %p35
    %p37 = scmp.ne.s32.totalorder %s26, %s27
    %p38 = scmp.eq.s32.totalorder %s18, 0
    %p39 = por %p37, %p38
    %p40 = scmp.ne.s32.totalorder %s26, %s27
    %p41 = scmp.eq.s32.totalorder %s19, 1
    %p42 = por %p40, %p41
    %p44 = scmp.ne.s32.totalorder %s27, %s43
    %p45 = scmp.eq.s32.totalorder %s19, 0
    %p46 = por %p44, %p45
    %s48 = sadd.s32 %s47, 1
    %p51 = scmp.eq.s32.totalorder %s13, 1
    %p52 = scmp.ne.s32.totalorder %s47, %s49
    %p53 = scmp.eq.s32.totalorder %s13, 0
    %p54 = por %p52, %p53
    %p55 = scmp.ne.s32.totalorder %s47, %s49
    %p56 = scmp.eq.s32.totalorder %s18, 1
    %p57 = por %p55, %p56
    %p58 = scmp.ne.s32.totalorder %s49, %s50
    %p59 = scmp.eq.s32.totalorder %s18, 0
    %p60 = por %p58, %p59
    %p61 = scmp.ne.s32.totalorder %s49, %s50
    %p62 = scmp.eq.s32.totalorder %s19, 1
    %p63 = por %p61, %p62
    %p65 = scmp.ne.s32.totalorder %s50, %s64
    %p66 = scmp.eq.s32.totalorder %s19, 0
    %p67 = por %p65, %p66
    %s69 = sadd.s32 %s68, 1
    %p72 = scmp.eq.s32.totalorder %s13, 1
    %p73 = scmp.ne.s32.totalorder %s68, %s70
    %p74 = scmp.eq.s32.totalorder %s13, 0
    %p75 = por %p73, %p74
    %p76 = scmp.ne.s32.totalorder %s68, %s70
    %p77 = scmp.eq.s32.totalorder %s18, 1
    %p78 = por %p76, %p77
    %p79 = scmp.ne.s32.totalorder %s70, %s71
    %p80 = scmp.eq.s32.totalorder %s18, 0
    %p81 = por %p79, %p80
    %p82 = scmp.ne.s32.totalorder %s70, %s71
    %p83 = scmp.eq.s32.totalorder %s19, 1
    %p84 = por %p82, %p83
    %p86 = scmp.ne.s32.totalorder %s71, %s85
    %p87 = scmp.eq.s32.totalorder %s19, 0
    %p88 = por %p86, %p87
    %s90 = sadd.s32 %s89, 1
    %p93 = scmp.eq.s32.totalorder %s13, 1
    %p94 = scmp.ne.s32.totalorder %s89, %s91
    %p95 = scmp.eq.s32.totalorder %s13, 0
    %p96 = por %p94, %p95
    %p97 = scmp.ne.s32.totalorder %s89, %s91
    %p98 = scmp.eq.s32.totalorder %s18, 1
    %p99 = por %p97, %p98
    %p100 = scmp.ne.s32.totalorder %s91, %s92
    %p101 = scmp.eq.s32.totalorder %s18, 0
    %p102 = por %p100, %p101
    %p103 = scmp.ne.s32.totalorder %s91, %s92
    %p104 = scmp.eq.s32.totalorder %s19, 1
    %p105 = por %p103, %p104
    %p107 = scmp.ne.s32.totalorder %s92, %s106
    %p108 = scmp.eq.s32.totalorder %s19, 0
    %p109 = por %p107, %p108
    %s111 = sadd.s32 %s110, 1
    %p114 = scmp.eq.s32.totalorder %s13, 1
    %p115 = scmp.ne.s32.totalorder %s110, %s112
    %p116 = scmp.eq.s32.totalorder %s13, 0
    %p117 = por %p115, %p116
    %p118 = scmp.ne.s32.totalorder %s110, %s112
    %p119 = scmp.eq.s32.totalorder %s18, 1
    %p120 = por %p118, %p119
    %p121 = scmp.ne.s32.totalorder %s112, %s113
    %p122 = scmp.eq.s32.totalorder %s18, 0
    %p123 = por %p121, %p122
    %p124 = scmp.ne.s32.totalorder %s112, %s113
    %p125 = scmp.eq.s32.totalorder %s19, 1
    %p126 = por %p124, %p125
    %p128 = scmp.ne.s32.totalorder %s113, %s127
    %p129 = scmp.eq.s32.totalorder %s19, 0
    %p130 = por %p128, %p129
    %s131 = ssub.s32 %s13, %s20
    %p132 = scmp.eq.s32.totalorder %s131, 0
    %s134 = sadd.s32 %s133, 1
    %s135 = scalar_select %p132, %s133, %s134
    %p138 = pneg %p132
    %p139 = scmp.eq.s32.totalorder %s13, 1
    %p140 = por %p138, %p139
    %p141 = scmp.ne.s32.totalorder %s133, %s136
    %p142 = scmp.eq.s32.totalorder %s13, 0
    %p143 = por %p141, %p142
    %p144 = scmp.ne.s32.totalorder %s133, %s136
    %p145 = scmp.eq.s32.totalorder %s18, 1
    %p146 = por %p144, %p145
    %p147 = scmp.ne.s32.totalorder %s136, %s137
    %p148 = scmp.eq.s32.totalorder %s18, 0
    %p149 = por %p147, %p148
    %p150 = scmp.ne.s32.totalorder %s136, %s137
    %p151 = scmp.eq.s32.totalorder %s19, 1
    %p152 = por %p150, %p151
    %p154 = scmp.ne.s32.totalorder %s137, %s153
    %p155 = scmp.eq.s32.totalorder %s19, 0
    %p156 = por %p154, %p155
    %s157 = ssub.s32 %s13, %s20
    %p158 = scmp.eq.s32.totalorder %s157, 0
    %s160 = sadd.s32 %s159, 1
    %s161 = scalar_select %p158, %s159, %s160
    %p164 = pneg %p158
    %p165 = scmp.eq.s32.totalorder %s13, 1
    %p166 = por %p164, %p165
    %p167 = scmp.ne.s32.totalorder %s159, %s162
    %p168 = scmp.eq.s32.totalorder %s13, 0
    %p169 = por %p167, %p168
    %p170 = scmp.ne.s32.totalorder %s159, %s162
    %p171 = scmp.eq.s32.totalorder %s18, 1
    %p172 = por %p170, %p171
    %p173 = scmp.ne.s32.totalorder %s162, %s163
    %p174 = scmp.eq.s32.totalorder %s18, 0
    %p175 = por %p173, %p174
    %p176 = scmp.ne.s32.totalorder %s162, %s163
    %p177 = scmp.eq.s32.totalorder %s19, 1
    %p178 = por %p176, %p177
    %p180 = scmp.ne.s32.totalorder %s163, %s179
    %p181 = scmp.eq.s32.totalorder %s19, 0
    %p182 = por %p180, %p181
    %p183 = scmp.le.s32.totalorder 1, %s13
    %p184 = scmp.lt.s32.totalorder %s13, 3
    %p185 = pnand %p183, %p184
    %p186 = pneg %p185
    // Predicated region
    $region9: #{ramplus_forward.17} parent=5 // pred_check
      _
    $region10: #{ramplus_forward.17} parent=5 // pred_check_branch
      %188 = sbr.rel (%p185) target = $region12
    $region11: #{ramplus_forward.17} parent=5 // pred_region
      %s189 = ssub.s32 %s13, 1
      // Predicated region
      $region13: #{ramplus_forward.17} parent=11 // pred_check
        %p190 = pneg %p60
      $region14: #{ramplus_forward.17} parent=11 // pred_check_branch
        %192 = sbr.rel (%p190) target = $region16
      $region15: #{ramplus_forward.17} parent=11 // pred_region
        _
      $region16: #{ramplus_forward.17} parent=11 // pred_fallthru
        _
      // Predicated region
      $region17: #{ramplus_forward.17} parent=11 // pred_check
        %p193 = pneg %p81
      $region18: #{ramplus_forward.17} parent=11 // pred_check_branch
        %195 = sbr.rel (%p193) target = $region20
      $region19: #{ramplus_forward.17} parent=11 // pred_region
        _
      $region20: #{ramplus_forward.17} parent=11 // pred_fallthru
        _
      // Predicated region
      $region21: #{ramplus_forward.17} parent=11 // pred_check
        %p196 = pneg %p102
      $region22: #{ramplus_forward.17} parent=11 // pred_check_branch
        %198 = sbr.rel (%p196) target = $region24
      $region23: #{ramplus_forward.17} parent=11 // pred_region
        _
      $region24: #{ramplus_forward.17} parent=11 // pred_fallthru
        _
      // Predicated region
      $region25: #{ramplus_forward.17} parent=11 // pred_check
        %p199 = pneg %p123
      $region26: #{ramplus_forward.17} parent=11 // pred_check_branch
        %201 = sbr.rel (%p199) target = $region28
      $region27: #{ramplus_forward.17} parent=11 // pred_region
        _
      $region28: #{ramplus_forward.17} parent=11 // pred_fallthru
        _
    $region12: #{ramplus_forward.17} parent=5 // pred_fallthru
      _
    %p202 = scmp.lt.s32.totalorder %s13, 2
    // Predicated region
    $region29: #{ramplus_forward.17} parent=5 // pred_check
      %p203 = pneg %p202
    $region30: #{ramplus_forward.17} parent=5 // pred_check_branch
      %205 = sbr.rel (%p203) target = $region32
    $region31: #{ramplus_forward.17} parent=5 // pred_region
      // Predicated region
      $region33: #{ramplus_forward.17} parent=31 // pred_check
        %p206 = pneg %p33
      $region34: #{ramplus_forward.17} parent=31 // pred_check_branch
        %208 = sbr.rel (%p206) target = $region36
      $region35: #{ramplus_forward.17} parent=31 // pred_region
        %p209 = scmp.lt.s32.totalorder %s13, 1
        %s210 = scalar_select %p209, %s13, 1
        %s211 = smul.addr %s210, 2
        %s212 = smul.addr %s211, 8
        %s213 = scalar_lea.vmem %s0, %s212
      $region36: #{ramplus_forward.17} parent=31 // pred_fallthru
        _
    $region32: #{ramplus_forward.17} parent=5 // pred_fallthru
      _
    %p214 = scmp.le.s32.totalorder 1, %s13
    %p215 = scmp.lt.s32.totalorder %s13, 3
    %p216 = pnand %p214, %p215
    %p217 = pneg %p216
    // Predicated region
    $region37: #{ramplus_forward.17} parent=5 // pred_check
      _
    $region38: #{ramplus_forward.17} parent=5 // pred_check_branch
      %219 = sbr.rel (%p216) target = $region40
    $region39: #{ramplus_forward.17} parent=5 // pred_region
      %s220 = ssub.s32 %s13, 1
      %p221 = scmp.lt.s32.totalorder %s18, 1
      %s222 = scalar_select %p221, %s18, 1
      %s223 = smul.addr %s222, 2
      %s224 = smul.addr %s223, 8
      %s225 = scalar_lea.vmem %s0, %s224
      %p226 = pneg %p39
      %p227 = pneg %p36
      %p228 = pneg %p60
      %p229 = pneg %p57
      %p230 = pneg %p81
      %p231 = pneg %p78
      %p232 = pneg %p102
      %p233 = pneg %p99
      %p234 = pneg %p123
      %p235 = pneg %p120
      %p236 = pneg %p149
      %p237 = pneg %p146
      %p238 = scmp.lt.s32.totalorder %s18, 1
      %s239 = scalar_select %p238, %s18, 1
      %s240 = scalar_lea.vmem %s5, %s239
      %p241 = pneg %p175
      %p242 = pneg %p172
      %p243 = scmp.lt.s32.totalorder %s18, 1
      %s244 = scalar_select %p243, %s18, 1
      %s245 = smul.addr %s244, 2
      %s246 = smul.addr %s245, 8
      %s247 = scalar_lea.vmem %s6, %s246
      %p248 = scmp.lt.s32.totalorder %s18, 1
      %s249 = scalar_select %p248, %s18, 1
      %s250 = smul.addr %s249, 2
      %s251 = smul.addr %s250, 8
      %s252 = scalar_lea.vmem %s0, %s251
      %p253 = scmp.lt.s32.totalorder %s18, 1
      %s254 = scalar_select %p253, %s18, 1
      %s255 = scalar_lea.vmem %s5, %s254
      %p256 = scmp.lt.s32.totalorder %s18, 1
      %s257 = scalar_select %p256, %s18, 1
      %s258 = smul.addr %s257, 2
      %s259 = smul.addr %s258, 8
      %s260 = scalar_lea.vmem %s6, %s259
      %v262 = vld [vmem:[%s252] sm:$0xff]
      %v263 = vld [vmem:[%s252 + $0x8] sm:$0xff]
      %v264 = vld [vmem:[%s1] sm:$0x1]
      %v265 = vld [vmem:[%s2] sm:$0x1]
      %vm266 = vcmask 523264
      %v267 = vsel %vm266, %v262, 0.0
      %268 = vadd.xlane.f32.xlu0 %v267
      %v269 = vpop.xlane.xlu0 %268
      %v270 = vsel %vm266, %v263, 0.0
      %271 = vadd.xlane.f32.xlu0 %v270
      %v272 = vpop.xlane.xlu0 %271
      %v273 = vrcp.pop 64.0
      %v274 = vmul.f32 %v269, %v273
      %v275 = vmul.f32 %v272, %v273
      %v276 = vsub.f32 %v262, %v274
      %v277 = vsub.f32 %v263, %v275
      %v278 = vmul.f32 %v276, %v276
      %v279 = vmul.f32 %v277, %v277
      %v280 = vsel %vm266, %v278, 0.0
      %281 = vadd.xlane.f32.xlu0 %v280
      %v282 = vpop.xlane.xlu0 %281
      %v283 = vsel %vm266, %v279, 0.0
      %284 = vadd.xlane.f32.xlu0 %v283
      %v285 = vpop.xlane.xlu0 %284
      %v286 = vmul.f32 %v282, %v273
      %v287 = vmul.f32 %v285, %v273
      %v288 = vadd.f32 %v286, 1e-05
      %v289 = vadd.f32 %v287, 1e-05
      %v290 = vrsqrt.pop %v288
      %v291 = vrsqrt.pop %v289
      %v292 = vmul.f32 %v276, %v290
      %v293 = vmul.f32 %v277, %v291
      %v295 = vlaneseq
      %v296 = vshrl.u32 %v295, 7
      %v297 = vsub.s32 0, %v296
      %v298 = vrot.slane %v264, %v297
      %v300 = vmul.f32 %v292, %v298
      %v301 = vmul.f32 %v293, %v298
      %v303 = vlaneseq
      %v304 = vshrl.u32 %v303, 7
      %v305 = vsub.s32 0, %v304
      %v306 = vrot.slane %v265, %v305
      %v308 = vadd.f32 %v300, %v306
      %v309 = vadd.f32 %v301, %v306
      %v310 = vld [vmem:[%s3] sm:$0xf]
      %v311 = vld [vmem:[%s3 + $0x4] sm:$0xf]
      %v312 = vld [vmem:[%s3 + $0x8] sm:$0xf]
      %v313 = vld [vmem:[%s3 + $0xc] sm:$0xf]
      %v314 = vld [vmem:[%s3 + $0x10] sm:$0xf]
      %v315 = vld [vmem:[%s3 + $0x14] sm:$0xf]
      %v316 = vld [vmem:[%s3 + $0x18] sm:$0xf]
      %v317 = vld [vmem:[%s3 + $0x1c] sm:$0xf]
      %v318 = vpack.c.bf16 %v309, %v308
      %v319 = vld [vmem:[%s4] sm:$0x1]
      %v321 = vlaneseq
      %v322 = vshrl.u32 %v321, 7
      %v323 = vsub.s32 0, %v322
      %v324 = vrot.slane %v319, %v323
      %v334 = vunpack.c.l.b16 %v310
      %v335 = vunpack.c.l.b16 %v311
      %v336 = vunpack.c.l.b16 %v312
      %v337 = vunpack.c.l.b16 %v313
      %v338 = vunpack.c.l.b16 %v314
      %v339 = vunpack.c.l.b16 %v315
      %v340 = vunpack.c.l.b16 %v316
      %v341 = vunpack.c.l.b16 %v317
      %v342 = vpack.c.b16 %v335, %v334
      %v343 = vpack.c.b16 %v337, %v336
      %v344 = vpack.c.b16 %v339, %v338
      %v345 = vpack.c.b16 %v341, %v340
      %v351 = vsel %vm266, %v318, 0
      %353 = vmatprep.subr.bf16.mxu0 0
      %354 = vmatpush1.bf16.msra.mxu0 %v342
      %355 = vmatprep.subr.bf16.mxu0 0
      %356 = vmatpush1.bf16.msra.mxu0 %v343
      %357 = vmatprep.subr.bf16.mxu0 0
      %358 = vmatpush1.bf16.msra.mxu0 %v344
      %359 = vmatprep.subr.bf16.mxu0 0
      %360 = vmatpush1.bf16.msra.mxu0 %v345
      %361 = vmatprep.subr.bf16.mxu0 0
      %362 = vmatpush1.bf16.msra.mxu0 0
      %363 = vmatprep.subr.bf16.mxu0 0
      %364 = vmatpush1.bf16.msra.mxu0 0
      %365 = vmatprep.subr.bf16.mxu0 0
      %366 = vmatpush1.bf16.msra.mxu0 0
      %367 = vmatprep.subr.bf16.mxu0 0
      %368 = vmatpush1.bf16.msra.mxu0 0
      %369 = vmatprep.subr.bf16.mxu0 0
      %370 = vmatpush1.bf16.msra.mxu0 0
      %371 = vmatprep.subr.bf16.mxu0 0
      %372 = vmatpush1.bf16.msra.mxu0 0
      %373 = vmatprep.subr.bf16.mxu0 0
      %374 = vmatpush1.bf16.msra.mxu0 0
      %375 = vmatprep.subr.bf16.mxu0 0
      %376 = vmatpush1.bf16.msra.mxu0 0
      %377 = vmatprep.subr.bf16.mxu0 0
      %378 = vmatpush1.bf16.msra.mxu0 0
      %379 = vmatprep.subr.bf16.mxu0 0
      %380 = vmatpush1.bf16.msra.mxu0 0
      %381 = vmatprep.subr.bf16.mxu0 0
      %382 = vmatpush1.bf16.msra.mxu0 0
      %383 = vmatprep.subr.bf16.mxu0 0
      %384 = vmatpush1.bf16.msra.mxu0 0
      %385 = vmatprep.mubr.bf16.mxu0 0
      %386 = vmatmul.mubr.bf16.gmra.mrb[0].mxu0 %v351
      %v387 = vpop.f32.mrb[0].mxu0
      %v388 = vadd.f32 %v324, %v387
      %v389 = vpop.f32.mrb[0].mxu0
      %v390 = vpop.f32.mrb[0].mxu0
      %v391 = vadd.f32 %v324, %v390
      %v392 = vpop.f32.mrb[0].mxu0
      %393 = vdwg.mxu0
      %vm394 = vcmask 261120
      %v395 = vsel %vm394, %v388, 0.0
      %v396 = vsel %vm394, %v391, 0.0
      %v397 = vadd.f32 %v395, %v396
      %v398 = vrot.slane %v397, 4
      %v399 = vadd.f32 %v397, %v398
      %v400 = vrot.slane %v399, 2
      %v401 = vadd.f32 %v399, %v400
      %v402 = vrot.slane %v401, 1
      %v403 = vadd.f32 %v401, %v402
      %v404 = vrcp.pop 16.0
      %v405 = vmul.f32 %v403, %v404
      %vm406 = vcmask 253952
      %407 = vst.msk [vmem:[%s255] sm:$0x1] %vm406, %v405
      %408 = vst.msk [vmem:[%s260] sm:$0xff] %vm394, %v388
      %409 = vst.msk [vmem:[%s260 + $0x8] sm:$0xff] %vm394, %v391
      %p410 = scmp.lt.s32.totalorder %s18, 1
      %s411 = scalar_select %p410, %s18, 1
      %s412 = scalar_lea.vmem %s5, %s411
      %p413 = scmp.lt.s32.totalorder %s18, 1
      %s414 = scalar_select %p413, %s18, 1
      %s415 = smul.addr %s414, 2
      %s416 = smul.addr %s415, 8
      %s417 = scalar_lea.vmem %s6, %s416
      // Predicated region
      $region41: #{ramplus_forward.17} parent=39 // pred_check
        %p418 = pneg %p146
      $region42: #{ramplus_forward.17} parent=39 // pred_check_branch
        %420 = sbr.rel (%p418) target = $region44
      $region43: #{ramplus_forward.17} parent=39 // pred_region
        _
      $region44: #{ramplus_forward.17} parent=39 // pred_fallthru
        _
      // Predicated region
      $region45: #{ramplus_forward.17} parent=39 // pred_check
        %p421 = pneg %p172
      $region46: #{ramplus_forward.17} parent=39 // pred_check_branch
        %423 = sbr.rel (%p421) target = $region48
      $region47: #{ramplus_forward.17} parent=39 // pred_region
        _
      $region48: #{ramplus_forward.17} parent=39 // pred_fallthru
        _
    $region40: #{ramplus_forward.17} parent=5 // pred_fallthru
      _
    %p424 = scmp.le.s32.totalorder 2, %s13
    // Predicated region
    $region49: #{ramplus_forward.17} parent=5 // pred_check
      %p425 = pneg %p424
    $region50: #{ramplus_forward.17} parent=5 // pred_check_branch
      %427 = sbr.rel (%p425) target = $region52
    $region51: #{ramplus_forward.17} parent=5 // pred_region
      %s428 = ssub.s32 %s13, 2
      // Predicated region
      $region53: #{ramplus_forward.17} parent=51 // pred_check
        %p429 = pneg %p152
      $region54: #{ramplus_forward.17} parent=51 // pred_check_branch
        %431 = sbr.rel (%p429) target = $region56
      $region55: #{ramplus_forward.17} parent=51 // pred_region
        %p432 = scmp.lt.s32.totalorder %s19, 1
        %s433 = scalar_select %p432, %s19, 1
        %s434 = scalar_lea.vmem %s5, %s433
      $region56: #{ramplus_forward.17} parent=51 // pred_fallthru
        _
      // Predicated region
      $region57: #{ramplus_forward.17} parent=51 // pred_check
        %p435 = pneg %p178
      $region58: #{ramplus_forward.17} parent=51 // pred_check_branch
        %437 = sbr.rel (%p435) target = $region60
      $region59: #{ramplus_forward.17} parent=51 // pred_region
        %p438 = scmp.lt.s32.totalorder %s19, 1
        %s439 = scalar_select %p438, %s19, 1
        %s440 = smul.addr %s439, 2
        %s441 = smul.addr %s440, 8
        %s442 = scalar_lea.vmem %s6, %s441
      $region60: #{ramplus_forward.17} parent=51 // pred_fallthru
        _
    $region52: #{ramplus_forward.17} parent=5 // pred_fallthru
      _
  $region6: #{ramplus_forward.17} parent=0 // loop_footer
    %s17 = sadd.s32 1, %s13
  $region7: #{ramplus_forward.17} parent=0 // loop_footer_branch
    %12 = sbr.rel target = $region3
  $region8: #{ramplus_forward.17} parent=0 // loop_exit
    _

// kernel: ramplus_forward.18
$region0: #{ramplus_forward.18}
  #allocation0 [shape = 'u32[]', space=smem, size = 0x4, offset = 0x4, fixed_abs, tag = 'smem constant byte address 0x4 - core index']
  #allocation1 [shape = 'u32[144,128]{1,0:T(1,128)}', space=vmem, size = 0x12000, scoped, tag = 'internal scratch']
  %s0 = inlined_call_operand.vmem [shape: f32[2,32], index: 0, kind: input, shape index: {}]
  %s1 = inlined_call_operand.vmem [shape: bf16[16,8,32], index: 1, kind: input, shape index: {}]
  %s2 = inlined_call_operand.vmem [shape: bf16[32,128], index: 2, kind: input, shape index: {}]
  %s3 = inlined_call_operand.vmem [shape: f32[1,128], index: 3, kind: input, shape index: {}]
  %s4 = inlined_call_operand.vmem [shape: f32[2,2048], index: 4, kind: output, shape index: {}]
  %s5 = sld [smem:[#allocation0]]
  $region49: #{ramplus_forward.18} parent=0
    _
  %s7 = ssub.s32 1, %s5
  %s8 = scalar_select 0, %s7, %s5
  loop: start=0, step=1, limit=18
  $region2: #{ramplus_forward.18} parent=0 // loop_pre_header
    _
  $region3: #{ramplus_forward.18} parent=0 // loop_header
    %s10 = sphi 0, %s14
    %p11 = scmp.ge.s32.totalorder %s10, 18
    %s18 = sphi 0, %s18
    %s20 = sphi 0, %s18
    %s21 = sphi 0, %s20
    %s35 = sphi 0, %s21
    %s41 = sphi 0, %s43
    %s44 = sphi 0, %s41
    %s45 = sphi 0, %s44
    %s61 = sphi 0, %s45
    %s65 = sphi 0, %s65
    %s67 = sphi 0, %s65
    %s68 = sphi 0, %s67
    %s82 = sphi 0, %s68
    %s86 = sphi 0, %s86
    %s88 = sphi 0, %s86
    %s89 = sphi 0, %s88
    %s103 = sphi 0, %s89
    %s109 = sphi 0, %s111
    %s112 = sphi 0, %s109
    %s113 = sphi 0, %s112
    %s129 = sphi 0, %s113
  $region4: #{ramplus_forward.18} parent=0 // loop_header_branch
    %13 = sbr.rel (%p11) target = $region8
  $region5: #{ramplus_forward.18} parent=0 // loop_body
    %s15 = ssub.s32 %s10, 1
    %s16 = ssub.s32 %s10, 2
    %s17 = sadd.s32 %s10, 1
    %s19 = sadd.s32 %s18, 1
    %p22 = scmp.eq.s32.totalorder %s10, 15
    %p23 = scmp.ne.s32.totalorder %s18, %s20
    %p24 = scmp.eq.s32.totalorder %s10, 0
    %p25 = por %p23, %p24
    %p26 = scmp.ne.s32.totalorder %s18, %s20
    %p27 = scmp.eq.s32.totalorder %s15, 15
    %p28 = por %p26, %p27
    %p29 = scmp.ne.s32.totalorder %s20, %s21
    %p30 = scmp.eq.s32.totalorder %s15, 0
    %p31 = por %p29, %p30
    %p32 = scmp.ne.s32.totalorder %s20, %s21
    %p33 = scmp.eq.s32.totalorder %s16, 15
    %p34 = por %p32, %p33
    %p36 = scmp.ne.s32.totalorder %s21, %s35
    %p37 = scmp.eq.s32.totalorder %s16, 0
    %p38 = por %p36, %p37
    %s39 = ssub.s32 %s10, %s17
    %p40 = scmp.eq.s32.totalorder %s39, 0
    %s42 = sadd.s32 %s41, 1
    %s43 = scalar_select %p40, %s41, %s42
    %p46 = pneg %p40
    %p47 = scmp.eq.s32.totalorder %s10, 15
    %p48 = por %p46, %p47
    %p49 = scmp.ne.s32.totalorder %s41, %s44
    %p50 = scmp.eq.s32.totalorder %s10, 0
    %p51 = por %p49, %p50
    %p52 = scmp.ne.s32.totalorder %s41, %s44
    %p53 = scmp.eq.s32.totalorder %s15, 15
    %p54 = por %p52, %p53
    %p55 = scmp.ne.s32.totalorder %s44, %s45
    %p56 = scmp.eq.s32.totalorder %s15, 0
    %p57 = por %p55, %p56
    %p58 = scmp.ne.s32.totalorder %s44, %s45
    %p59 = scmp.eq.s32.totalorder %s16, 15
    %p60 = por %p58, %p59
    %p62 = scmp.ne.s32.totalorder %s45, %s61
    %p63 = scmp.eq.s32.totalorder %s16, 0
    %p64 = por %p62, %p63
    %s66 = sadd.s32 %s65, 1
    %p69 = scmp.eq.s32.totalorder %s10, 15
    %p70 = scmp.ne.s32.totalorder %s65, %s67
    %p71 = scmp.eq.s32.totalorder %s10, 0
    %p72 = por %p70, %p71
    %p73 = scmp.ne.s32.totalorder %s65, %s67
    %p74 = scmp.eq.s32.totalorder %s15, 15
    %p75 = por %p73, %p74
    %p76 = scmp.ne.s32.totalorder %s67, %s68
    %p77 = scmp.eq.s32.totalorder %s15, 0
    %p78 = por %p76, %p77
    %p79 = scmp.ne.s32.totalorder %s67, %s68
    %p80 = scmp.eq.s32.totalorder %s16, 15
    %p81 = por %p79, %p80
    %p83 = scmp.ne.s32.totalorder %s68, %s82
    %p84 = scmp.eq.s32.totalorder %s16, 0
    %p85 = por %p83, %p84
    %s87 = sadd.s32 %s86, 1
    %p90 = scmp.eq.s32.totalorder %s10, 15
    %p91 = scmp.ne.s32.totalorder %s86, %s88
    %p92 = scmp.eq.s32.totalorder %s10, 0
    %p93 = por %p91, %p92
    %p94 = scmp.ne.s32.totalorder %s86, %s88
    %p95 = scmp.eq.s32.totalorder %s15, 15
    %p96 = por %p94, %p95
    %p97 = scmp.ne.s32.totalorder %s88, %s89
    %p98 = scmp.eq.s32.totalorder %s15, 0
    %p99 = por %p97, %p98
    %p100 = scmp.ne.s32.totalorder %s88, %s89
    %p101 = scmp.eq.s32.totalorder %s16, 15
    %p102 = por %p100, %p101
    %p104 = scmp.ne.s32.totalorder %s89, %s103
    %p105 = scmp.eq.s32.totalorder %s16, 0
    %p106 = por %p104, %p105
    %s107 = ssub.s32 %s10, %s17
    %p108 = scmp.eq.s32.totalorder %s107, 0
    %s110 = sadd.s32 %s109, 1
    %s111 = scalar_select %p108, %s109, %s110
    %p114 = pneg %p108
    %p115 = scmp.eq.s32.totalorder %s10, 15
    %p116 = por %p114, %p115
    %p117 = scmp.ne.s32.totalorder %s109, %s112
    %p118 = scmp.eq.s32.totalorder %s10, 0
    %p119 = por %p117, %p118
    %p120 = scmp.ne.s32.totalorder %s109, %s112
    %p121 = scmp.eq.s32.totalorder %s15, 15
    %p122 = por %p120, %p121
    %p123 = scmp.ne.s32.totalorder %s112, %s113
    %p124 = scmp.eq.s32.totalorder %s15, 0
    %p125 = por %p123, %p124
    %p126 = scmp.ne.s32.totalorder %s112, %s113
    %p127 = scmp.eq.s32.totalorder %s16, 15
    %p128 = por %p126, %p127
    %p130 = scmp.ne.s32.totalorder %s113, %s129
    %p131 = scmp.eq.s32.totalorder %s16, 0
    %p132 = por %p130, %p131
    %p133 = scmp.le.s32.totalorder 1, %s10
    %p134 = scmp.lt.s32.totalorder %s10, 17
    %p135 = pnand %p133, %p134
    %p136 = pneg %p135
    // Predicated region
    $region9: #{ramplus_forward.18} parent=5 // pred_check
      _
    $region10: #{ramplus_forward.18} parent=5 // pred_check_branch
      %138 = sbr.rel (%p135) target = $region12
    $region11: #{ramplus_forward.18} parent=5 // pred_region
      %s139 = ssub.s32 %s10, 1
      // Predicated region
      $region13: #{ramplus_forward.18} parent=11 // pred_check
        %p140 = pneg %p31
      $region14: #{ramplus_forward.18} parent=11 // pred_check_branch
        %142 = sbr.rel (%p140) target = $region16
      $region15: #{ramplus_forward.18} parent=11 // pred_region
        _
      $region16: #{ramplus_forward.18} parent=11 // pred_fallthru
        _
      // Predicated region
      $region17: #{ramplus_forward.18} parent=11 // pred_check
        %p143 = pneg %p78
      $region18: #{ramplus_forward.18} parent=11 // pred_check_branch
        %145 = sbr.rel (%p143) target = $region20
      $region19: #{ramplus_forward.18} parent=11 // pred_region
        _
      $region20: #{ramplus_forward.18} parent=11 // pred_fallthru
        _
      // Predicated region
      $region21: #{ramplus_forward.18} parent=11 // pred_check
        %p146 = pneg %p99
      $region22: #{ramplus_forward.18} parent=11 // pred_check_branch
        %148 = sbr.rel (%p146) target = $region24
      $region23: #{ramplus_forward.18} parent=11 // pred_region
        _
      $region24: #{ramplus_forward.18} parent=11 // pred_fallthru
        _
    $region12: #{ramplus_forward.18} parent=5 // pred_fallthru
      _
    %p149 = scmp.lt.s32.totalorder %s10, 16
    // Predicated region
    $region25: #{ramplus_forward.18} parent=5 // pred_check
      %p150 = pneg %p149
    $region26: #{ramplus_forward.18} parent=5 // pred_check_branch
      %152 = sbr.rel (%p150) target = $region28
    $region27: #{ramplus_forward.18} parent=5 // pred_region
      // Predicated region
      $region29: #{ramplus_forward.18} parent=27 // pred_check
        %p153 = pneg %p51
      $region30: #{ramplus_forward.18} parent=27 // pred_check_branch
        %155 = sbr.rel (%p153) target = $region32
      $region31: #{ramplus_forward.18} parent=27 // pred_region
        %p156 = scmp.lt.s32.totalorder %s10, 15
        %s157 = scalar_select %p156, %s10, 15
        %s158 = smul.addr %s157, 4
        %s159 = scalar_lea.vmem %s1, %s158
      $region32: #{ramplus_forward.18} parent=27 // pred_fallthru
        _
    $region28: #{ramplus_forward.18} parent=5 // pred_fallthru
      _
    %p160 = scmp.le.s32.totalorder 1, %s10
    %p161 = scmp.lt.s32.totalorder %s10, 17
    %p162 = pnand %p160, %p161
    %p163 = pneg %p162
    // Predicated region
    $region33: #{ramplus_forward.18} parent=5 // pred_check
      _
    $region34: #{ramplus_forward.18} parent=5 // pred_check_branch
      %165 = sbr.rel (%p162) target = $region36
    $region35: #{ramplus_forward.18} parent=5 // pred_region
      %s166 = ssub.s32 %s10, 1
      %p167 = pneg %p31
      %p168 = pneg %p28
      %p169 = scmp.lt.s32.totalorder %s15, 15
      %s170 = scalar_select %p169, %s15, 15
      %s171 = smul.addr %s170, 4
      %s172 = scalar_lea.vmem %s1, %s171
      %p173 = pneg %p57
      %p174 = pneg %p54
      %p175 = pneg %p78
      %p176 = pneg %p75
      %p177 = pneg %p99
      %p178 = pneg %p96
      %p179 = pneg %p125
      %p180 = pneg %p122
      %p181 = scmp.lt.s32.totalorder %s15, 15
      %s182 = scalar_select %p181, %s15, 15
      %s183 = smul.addr %s182, 2
      %s184 = scalar_lea.vmem %s4, %s183
      %p185 = scmp.lt.s32.totalorder %s15, 15
      %s186 = scalar_select %p185, %s15, 15
      %s187 = smul.addr %s186, 4
      %s188 = scalar_lea.vmem %s1, %s187
      %p189 = scmp.lt.s32.totalorder %s15, 15
      %s190 = scalar_select %p189, %s15, 15
      %s191 = smul.addr %s190, 2
      %s192 = scalar_lea.vmem %s4, %s191
      %v194 = vld [vmem:[%s0] sm:$0x3]
      %v195 = vmul.f32 %v194, %v194
      %vm196 = vcmask 254976
      %v197 = vsel %vm196, %v195, 0.0
      %198 = vadd.xlane.f32.xlu0 %v197
      %v199 = vpop.xlane.xlu0 %198
      %v200 = vrsqrt.pop %v199
      %v201 = vmul.f32 %v199, %v200
      %vm202 = vcmp.eq.f32.partialorder %v199, inf
      %v203 = vsel %vm202, %v199, %v201
      %vm204 = vcmp.eq.f32.partialorder %v199, 0.0
      %v205 = vand.u32 %v199, 2147483648
      %v206 = vsel %vm204, %v205, %v203
      %v207 = vmax.f32 %v206, 1e-12
      %v208 = vrcp.pop %v207
      %v209 = vmul.f32 %v194, %v208
      %v210 = vld [vmem:[%s188] sm:$0xf]
      %v211 = vpack.c.bf16 %v209, %v209
      %vm212 = vcmask 261120
      %v214 = vsel %vm212, %v211, 0
      %v217 = vsel %vm212, %v210, 0
      %219 = vmatprep.subr.bf16.mxu0 0
      %220 = vmatpush1.bf16.xpose.msra.mxu0 %v217
      %221 = vmatprep.subr.bf16.mxu0 0
      %222 = vmatpush1.bf16.xpose.msra.mxu0 0
      %223 = vmatprep.subr.bf16.mxu0 0
      %224 = vmatpush1.bf16.xpose.msra.mxu0 0
      %225 = vmatprep.subr.bf16.mxu0 0
      %226 = vmatpush1.bf16.xpose.msra.mxu0 0
      %227 = vmatprep.subr.bf16.mxu0 0
      %228 = vmatpush1.bf16.xpose.msra.mxu0 0
      %229 = vmatprep.subr.bf16.mxu0 0
      %230 = vmatpush1.bf16.xpose.msra.mxu0 0
      %231 = vmatprep.subr.bf16.mxu0 0
      %232 = vmatpush1.bf16.xpose.msra.mxu0 0
      %233 = vmatprep.subr.bf16.mxu0 0
      %234 = vmatpush1.bf16.xpose.msra.mxu0 0
      %235 = vmatprep.subr.bf16.mxu0 0
      %236 = vmatpush1.bf16.xpose.msra.mxu0 0
      %237 = vmatprep.subr.bf16.mxu0 0
      %238 = vmatpush1.bf16.xpose.msra.mxu0 0
      %239 = vmatprep.subr.bf16.mxu0 0
      %240 = vmatpush1.bf16.xpose.msra.mxu0 0
      %241 = vmatprep.subr.bf16.mxu0 0
      %242 = vmatpush1.bf16.xpose.msra.mxu0 0
      %243 = vmatprep.subr.bf16.mxu0 0
      %244 = vmatpush1.bf16.xpose.msra.mxu0 0
      %245 = vmatprep.subr.bf16.mxu0 0
      %246 = vmatpush1.bf16.xpose.msra.mxu0 0
      %247 = vmatprep.subr.bf16.mxu0 0
      %248 = vmatpush1.bf16.xpose.msra.mxu0 0
      %249 = vmatprep.subr.bf16.mxu0 0
      %250 = vmatpush1.bf16.xpose.msra.mxu0 0
      %251 = vmatprep.mubr.bf16.mxu0 0
      %252 = vmatmul.mubr.bf16.gmra.mrb[0].mxu0 %v214
      %v253 = vpop.f32.mrb[0].mxu0
      %v254 = vadd.f32 0.0, %v253
      %v255 = vpop.f32.mrb[0].mxu0
      %v256 = vpop.f32.mrb[0].mxu0
      %v257 = vpop.f32.mrb[0].mxu0
      %258 = vdwg.mxu0
      %v259 = vmul.f32 %v254, 14.285714
      %vm260 = vcmask 58368
      %v261 = vsel %vm260, %v259, -inf
      %262 = vmax.xlane.f32.xlu0 %v261
      %v263 = vpop.xlane.xlu0 %262
      %v264 = vsub.f32 %v259, %v263
      %v265 = vmul.f32 %v264, 1.442695
      %v266 = vpow.pop %v265
      %v267 = vsel %vm260, %v266, 0.0
      %268 = vadd.xlane.f32.xlu0 %v267
      %v269 = vpop.xlane.xlu0 %268
      %v270 = vrcp.pop %v269
      %v271 = vmul.f32 %v266, %v270
      %v272 = vpack.c.bf16 %v271, %v271
      %vm273 = vcmask 64512
      %v275 = vsel %vm273, %v272, 0
      %vm277 = vcmask 1043456
      %v278 = vsel %vm277, %v210, 0
      %280 = vmatprep.subr.bf16.mxu0 0
      %281 = vmatpush1.bf16.msra.mxu0 %v278
      %282 = vmatprep.subr.bf16.mxu0 0
      %283 = vmatpush1.bf16.msra.mxu0 0
      %284 = vmatprep.subr.bf16.mxu0 0
      %285 = vmatpush1.bf16.msra.mxu0 0
      %286 = vmatprep.subr.bf16.mxu0 0
      %287 = vmatpush1.bf16.msra.mxu0 0
      %288 = vmatprep.subr.bf16.mxu0 0
      %289 = vmatpush1.bf16.msra.mxu0 0
      %290 = vmatprep.subr.bf16.mxu0 0
      %291 = vmatpush1.bf16.msra.mxu0 0
      %292 = vmatprep.subr.bf16.mxu0 0
      %293 = vmatpush1.bf16.msra.mxu0 0
      %294 = vmatprep.subr.bf16.mxu0 0
      %295 = vmatpush1.bf16.msra.mxu0 0
      %296 = vmatprep.subr.bf16.mxu0 0
      %297 = vmatpush1.bf16.msra.mxu0 0
      %298 = vmatprep.subr.bf16.mxu0 0
      %299 = vmatpush1.bf16.msra.mxu0 0
      %300 = vmatprep.subr.bf16.mxu0 0
      %301 = vmatpush1.bf16.msra.mxu0 0
      %302 = vmatprep.subr.bf16.mxu0 0
      %303 = vmatpush1.bf16.msra.mxu0 0
      %304 = vmatprep.subr.bf16.mxu0 0
      %305 = vmatpush1.bf16.msra.mxu0 0
      %306 = vmatprep.subr.bf16.mxu0 0
      %307 = vmatpush1.bf16.msra.mxu0 0
      %308 = vmatprep.subr.bf16.mxu0 0
      %309 = vmatpush1.bf16.msra.mxu0 0
      %310 = vmatprep.subr.bf16.mxu0 0
      %311 = vmatpush1.bf16.msra.mxu0 0
      %312 = vmatprep.mubr.bf16.mxu0 0
      %313 = vmatmul.mubr.bf16.gmra.mrb[0].mxu0 %v275
      %v314 = vpop.f32.mrb[0].mxu0
      %v315 = vadd.f32 0.0, %v314
      %v316 = vpop.f32.mrb[0].mxu0
      %v317 = vpop.f32.mrb[0].mxu0
      %v318 = vpop.f32.mrb[0].mxu0
      %319 = vdwg.mxu0
      %v320 = vld [vmem:[%s2] sm:$0xf]
      %v321 = vld [vmem:[%s2 + $0x4] sm:$0xf]
      %v322 = vld [vmem:[%s2 + $0x8] sm:$0xf]
      %v323 = vld [vmem:[%s2 + $0xc] sm:$0xf]
      %v324 = vpack.c.bf16 %v315, %v315
      %v325 = vld [vmem:[%s3] sm:$0x1]
      %v327 = vlaneseq
      %v328 = vshrl.u32 %v327, 7
      %v329 = vsub.s32 0, %v328
      %v330 = vrot.slane %v325, %v329
      %v336 = vunpack.c.l.b16 %v320
      %v337 = vunpack.c.l.b16 %v321
      %v338 = vunpack.c.l.b16 %v322
      %v339 = vunpack.c.l.b16 %v323
      %v340 = vpack.c.b16 %v337, %v336
      %v341 = vpack.c.b16 %v339, %v338
      %v345 = vsel %vm212, %v324, 0
      %347 = vmatprep.subr.bf16.mxu0 0
      %348 = vmatpush1.bf16.msra.mxu0 %v340
      %349 = vmatprep.subr.bf16.mxu0 0
      %350 = vmatpush1.bf16.msra.mxu0 %v341
      %351 = vmatprep.subr.bf16.mxu0 0
      %352 = vmatpush1.bf16.msra.mxu0 0
      %353 = vmatprep.subr.bf16.mxu0 0
      %354 = vmatpush1.bf16.msra.mxu0 0
      %355 = vmatprep.subr.bf16.mxu0 0
      %356 = vmatpush1.bf16.msra.mxu0 0
      %357 = vmatprep.subr.bf16.mxu0 0
      %358 = vmatpush1.bf16.msra.mxu0 0
      %359 = vmatprep.subr.bf16.mxu0 0
      %360 = vmatpush1.bf16.msra.mxu0 0
      %361 = vmatprep.subr.bf16.mxu0 0
      %362 = vmatpush1.bf16.msra.mxu0 0
      %363 = vmatprep.subr.bf16.mxu0 0
      %364 = vmatpush1.bf16.msra.mxu0 0
      %365 = vmatprep.subr.bf16.mxu0 0
      %366 = vmatpush1.bf16.msra.mxu0 0
      %367 = vmatprep.subr.bf16.mxu0 0
      %368 = vmatpush1.bf16.msra.mxu0 0
      %369 = vmatprep.subr.bf16.mxu0 0
      %370 = vmatpush1.bf16.msra.mxu0 0
      %371 = vmatprep.subr.bf16.mxu0 0
      %372 = vmatpush1.bf16.msra.mxu0 0
      %373 = vmatprep.subr.bf16.mxu0 0
      %374 = vmatpush1.bf16.msra.mxu0 0
      %375 = vmatprep.subr.bf16.mxu0 0
      %376 = vmatpush1.bf16.msra.mxu0 0
      %377 = vmatprep.subr.bf16.mxu0 0
      %378 = vmatpush1.bf16.msra.mxu0 0
      %379 = vmatprep.mubr.bf16.mxu0 0
      %380 = vmatmul.mubr.bf16.gmra.mrb[0].mxu0 %v345
      %v381 = vpop.f32.mrb[0].mxu0
      %v382 = vadd.f32 %v330, %v381
      %v383 = vpop.f32.mrb[0].mxu0
      %v384 = vpop.f32.mrb[0].mxu0
      %v385 = vpop.f32.mrb[0].mxu0
      %386 = vdwg.mxu0
      %v387 = vmax.f32 %v382, 0.0
      %388 = vst [vmem:[%s192] sm:$0x3] %v387
      %p389 = scmp.lt.s32.totalorder %s15, 15
      %s390 = scalar_select %p389, %s15, 15
      %s391 = smul.addr %s390, 2
      %s392 = scalar_lea.vmem %s4, %s391
      // Predicated region
      $region37: #{ramplus_forward.18} parent=35 // pred_check
        %p393 = pneg %p122
      $region38: #{ramplus_forward.18} parent=35 // pred_check_branch
        %395 = sbr.rel (%p393) target = $region40
      $region39: #{ramplus_forward.18} parent=35 // pred_region
        _
      $region40: #{ramplus_forward.18} parent=35 // pred_fallthru
        _
    $region36: #{ramplus_forward.18} parent=5 // pred_fallthru
      _
    %p396 = scmp.le.s32.totalorder 2, %s10
    // Predicated region
    $region41: #{ramplus_forward.18} parent=5 // pred_check
      %p397 = pneg %p396
    $region42: #{ramplus_forward.18} parent=5 // pred_check_branch
      %399 = sbr.rel (%p397) target = $region44
    $region43: #{ramplus_forward.18} parent=5 // pred_region
      %s400 = ssub.s32 %s10, 2
      // Predicated region
      $region45: #{ramplus_forward.18} parent=43 // pred_check
        %p401 = pneg %p128
      $region46: #{ramplus_forward.18} parent=43 // pred_check_branch
        %403 = sbr.rel (%p401) target = $region48
      $region47: #{ramplus_forward.18} parent=43 // pred_region
        %p404 = scmp.lt.s32.totalorder %s16, 15
        %s405 = scalar_select %p404, %s16, 15
        %s406 = smul.addr %s405, 2
        %s407 = scalar_lea.vmem %s4, %s406
      $region48: #{ramplus_forward.18} parent=43 // pred_fallthru
        _
    $region44: #{ramplus_forward.18} parent=5 // pred_fallthru
      _
  $region6: #{ramplus_forward.18} parent=0 // loop_footer
    %s14 = sadd.s32 1, %s10
  $region7: #{ramplus_forward.18} parent=0 // loop_footer_branch
    %9 = sbr.rel target = $region3
  $region8: #{ramplus_forward.18} parent=0 // loop_exit
    _

// kernel: ramplus_forward.15
$region0: #{ramplus_forward.15}
  #allocation0 [shape = 'u32[]', space=smem, size = 0x4, offset = 0x4, fixed_abs, tag = 'smem constant byte address 0x4 - core index']
  #allocation1 [shape = 'u32[144,128]{1,0:T(1,128)}', space=vmem, size = 0x12000, scoped, tag = 'internal scratch']
  %s0 = inlined_call_operand.vmem [shape: f32[2,16,64], index: 0, kind: input, shape index: {}]
  %s1 = inlined_call_operand.vmem [shape: bf16[4,1,16,16], index: 1, kind: input, shape index: {}]
  %s2 = inlined_call_operand.vmem [shape: f32[1,64], index: 2, kind: input, shape index: {}]
  %s3 = inlined_call_operand.vmem [shape: f32[1,64], index: 3, kind: input, shape index: {}]
  %s4 = inlined_call_operand.vmem [shape: bf16[64,192], index: 4, kind: input, shape index: {}]
  %s5 = inlined_call_operand.vmem [shape: f32[1,192], index: 5, kind: input, shape index: {}]
  %s6 = inlined_call_operand.vmem [shape: bf16[64,64], index: 6, kind: input, shape index: {}]
  %s7 = inlined_call_operand.vmem [shape: f32[1,64], index: 7, kind: input, shape index: {}]
  %s8 = inlined_call_operand.vmem [shape: f32[1,64], index: 8, kind: input, shape index: {}]
  %s9 = inlined_call_operand.vmem [shape: f32[1,64], index: 9, kind: input, shape index: {}]
  %s10 = inlined_call_operand.vmem [shape: bf16[64,256], index: 10, kind: input, shape index: {}]
  %s11 = inlined_call_operand.vmem [shape: f32[1,256], index: 11, kind: input, shape index: {}]
  %s12 = inlined_call_operand.vmem [shape: bf16[256,64], index: 12, kind: input, shape index: {}]
  %s13 = inlined_call_operand.vmem [shape: f32[1,64], index: 13, kind: input, shape index: {}]
  %s14 = inlined_call_operand.vmem [shape: f32[2,16,64], index: 14, kind: output, shape index: {}]
  %s15 = sld [smem:[#allocation0]]
  $region89: #{ramplus_forward.15} parent=0
    _
  %s17 = ssub.s32 1, %s15
  %s18 = scalar_select 0, %s17, %s15
  loop: start=0, step=1, limit=4
  $region2: #{ramplus_forward.15} parent=0 // loop_pre_header
    _
  $region3: #{ramplus_forward.15} parent=0 // loop_header
    %s20 = sphi 0, %s24
    %p21 = scmp.ge.s32.totalorder %s20, 4
    %s27 = sphi 0, %s39
    %s28 = sphi 0, %s35
    %s29 = sphi 0, %s27
    %s30 = sphi 0, %s28
    %s31 = sphi 0, %s29
    %s32 = sphi 0, %s30
    %s44 = sphi 0, %s46
    %s47 = sphi 0, %s44
    %s48 = sphi 0, %s47
    %s64 = sphi 0, %s48
    %s70 = sphi 0, %s72
    %s73 = sphi 0, %s70
    %s74 = sphi 0, %s73
    %s90 = sphi 0, %s74
    %s94 = sphi 0, %s94
    %s96 = sphi 0, %s94
    %s97 = sphi 0, %s96
    %s111 = sphi 0, %s97
    %s115 = sphi 0, %s115
    %s117 = sphi 0, %s115
    %s118 = sphi 0, %s117
    %s132 = sphi 0, %s118
    %s136 = sphi 0, %s136
    %s138 = sphi 0, %s136
    %s139 = sphi 0, %s138
    %s153 = sphi 0, %s139
    %s157 = sphi 0, %s157
    %s159 = sphi 0, %s157
    %s160 = sphi 0, %s159
    %s174 = sphi 0, %s160
    %s178 = sphi 0, %s178
    %s180 = sphi 0, %s178
    %s181 = sphi 0, %s180
    %s195 = sphi 0, %s181
    %s199 = sphi 0, %s199
    %s201 = sphi 0, %s199
    %s202 = sphi 0, %s201
    %s216 = sphi 0, %s202
    %s220 = sphi 0, %s220
    %s222 = sphi 0, %s220
    %s223 = sphi 0, %s222
    %s237 = sphi 0, %s223
    %s241 = sphi 0, %s241
    %s243 = sphi 0, %s241
    %s244 = sphi 0, %s243
    %s258 = sphi 0, %s244
    %s262 = sphi 0, %s262
    %s264 = sphi 0, %s262
    %s265 = sphi 0, %s264
    %s279 = sphi 0, %s265
    %s283 = sphi 0, %s283
    %s285 = sphi 0, %s283
    %s286 = sphi 0, %s285
    %s300 = sphi 0, %s286
    %s304 = sphi 0, %s304
    %s306 = sphi 0, %s304
    %s307 = sphi 0, %s306
    %s321 = sphi 0, %s307
    %s325 = sphi 0, %s325
    %s327 = sphi 0, %s325
    %s328 = sphi 0, %s327
    %s342 = sphi 0, %s328
    %s350 = sphi 0, %s352
    %s353 = sphi 0, %s350
    %s354 = sphi 0, %s353
    %s370 = sphi 0, %s354
  $region4: #{ramplus_forward.15} parent=0 // loop_header_branch
    %23 = sbr.rel (%p21) target = $region8
  $region5: #{ramplus_forward.15} parent=0 // loop_body
    %s25 = ssub.s32 %s20, 1
    %s26 = ssub.s32 %s20, 2
    %s33 = sadd.s32 1, %s28
    %p34 = scmp.ge.s32.totalorder %s33, 1
    %s35 = scalar_select %p34, 0, %s33
    %s36 = sadd.s32 1, %s27
    %s37 = scalar_select %p34, %s36, %s27
    %p38 = scmp.ge.s32.totalorder %s37, 2
    %s39 = scalar_select %p38, 0, %s37
    %s40 = ssub.s32 %s27, %s39
    %s41 = ssub.s32 %s28, %s35
    %s42 = sor.u32 %s40, %s41
    %p43 = scmp.eq.s32.totalorder %s42, 0
    %s45 = sadd.s32 %s44, 1
    %s46 = scalar_select %p43, %s44, %s45
    %p49 = pneg %p43
    %p50 = scmp.eq.s32.totalorder %s20, 1
    %p51 = por %p49, %p50
    %p52 = scmp.ne.s32.totalorder %s44, %s47
    %p53 = scmp.eq.s32.totalorder %s20, 0
    %p54 = por %p52, %p53
    %p55 = scmp.ne.s32.totalorder %s44, %s47
    %p56 = scmp.eq.s32.totalorder %s25, 1
    %p57 = por %p55, %p56
    %p58 = scmp.ne.s32.totalorder %s47, %s48
    %p59 = scmp.eq.s32.totalorder %s25, 0
    %p60 = por %p58, %p59
    %p61 = scmp.ne.s32.totalorder %s47, %s48
    %p62 = scmp.eq.s32.totalorder %s26, 1
    %p63 = por %p61, %p62
    %p65 = scmp.ne.s32.totalorder %s48, %s64
    %p66 = scmp.eq.s32.totalorder %s26, 0
    %p67 = por %p65, %p66
    %s68 = ssub.s32 %s28, %s35
    %p69 = scmp.eq.s32.totalorder %s68, 0
    %s71 = sadd.s32 %s70, 1
    %s72 = scalar_select %p69, %s70, %s71
    %p75 = pneg %p69
    %p76 = scmp.eq.s32.totalorder %s20, 1
    %p77 = por %p75, %p76
    %p78 = scmp.ne.s32.totalorder %s70, %s73
    %p79 = scmp.eq.s32.totalorder %s20, 0
    %p80 = por %p78, %p79
    %p81 = scmp.ne.s32.totalorder %s70, %s73
    %p82 = scmp.eq.s32.totalorder %s25, 1
    %p83 = por %p81, %p82
    %p84 = scmp.ne.s32.totalorder %s73, %s74
    %p85 = scmp.eq.s32.totalorder %s25, 0
    %p86 = por %p84, %p85
    %p87 = scmp.ne.s32.totalorder %s73, %s74
    %p88 = scmp.eq.s32.totalorder %s26, 1
    %p89 = por %p87, %p88
    %p91 = scmp.ne.s32.totalorder %s74, %s90
    %p92 = scmp.eq.s32.totalorder %s26, 0
    %p93 = por %p91, %p92
    %s95 = sadd.s32 %s94, 1
    %p98 = scmp.eq.s32.totalorder %s20, 1
    %p99 = scmp.ne.s32.totalorder %s94, %s96
    %p100 = scmp.eq.s32.totalorder %s20, 0
    %p101 = por %p99, %p100
    %p102 = scmp.ne.s32.totalorder %s94, %s96
    %p103 = scmp.eq.s32.totalorder %s25, 1
    %p104 = por %p102, %p103
    %p105 = scmp.ne.s32.totalorder %s96, %s97
    %p106 = scmp.eq.s32.totalorder %s25, 0
    %p107 = por %p105, %p106
    %p108 = scmp.ne.s32.totalorder %s96, %s97
    %p109 = scmp.eq.s32.totalorder %s26, 1
    %p110 = por %p108, %p109
    %p112 = scmp.ne.s32.totalorder %s97, %s111
    %p113 = scmp.eq.s32.totalorder %s26, 0
    %p114 = por %p112, %p113
    %s116 = sadd.s32 %s115, 1
    %p119 = scmp.eq.s32.totalorder %s20, 1
    %p120 = scmp.ne.s32.totalorder %s115, %s117
    %p121 = scmp.eq.s32.totalorder %s20, 0
    %p122 = por %p120, %p121
    %p123 = scmp.ne.s32.totalorder %s115, %s117
    %p124 = scmp.eq.s32.totalorder %s25, 1
    %p125 = por %p123, %p124
    %p126 = scmp.ne.s32.totalorder %s117, %s118
    %p127 = scmp.eq.s32.totalorder %s25, 0
    %p128 = por %p126, %p127
    %p129 = scmp.ne.s32.totalorder %s117, %s118
    %p130 = scmp.eq.s32.totalorder %s26, 1
    %p131 = por %p129, %p130
    %p133 = scmp.ne.s32.totalorder %s118, %s132
    %p134 = scmp.eq.s32.totalorder %s26, 0
    %p135 = por %p133, %p134
    %s137 = sadd.s32 %s136, 1
    %p140 = scmp.eq.s32.totalorder %s20, 1
    %p141 = scmp.ne.s32.totalorder %s136, %s138
    %p142 = scmp.eq.s32.totalorder %s20, 0
    %p143 = por %p141, %p142
    %p144 = scmp.ne.s32.totalorder %s136, %s138
    %p145 = scmp.eq.s32.totalorder %s25, 1
    %p146 = por %p144, %p145
    %p147 = scmp.ne.s32.totalorder %s138, %s139
    %p148 = scmp.eq.s32.totalorder %s25, 0
    %p149 = por %p147, %p148
    %p150 = scmp.ne.s32.totalorder %s138, %s139
    %p151 = scmp.eq.s32.totalorder %s26, 1
    %p152 = por %p150, %p151
    %p154 = scmp.ne.s32.totalorder %s139, %s153
    %p155 = scmp.eq.s32.totalorder %s26, 0
    %p156 = por %p154, %p155
    %s158 = sadd.s32 %s157, 1
    %p161 = scmp.eq.s32.totalorder %s20, 1
    %p162 = scmp.ne.s32.totalorder %s157, %s159
    %p163 = scmp.eq.s32.totalorder %s20, 0
    %p164 = por %p162, %p163
    %p165 = scmp.ne.s32.totalorder %s157, %s159
    %p166 = scmp.eq.s32.totalorder %s25, 1
    %p167 = por %p165, %p166
    %p168 = scmp.ne.s32.totalorder %s159, %s160
    %p169 = scmp.eq.s32.totalorder %s25, 0
    %p170 = por %p168, %p169
    %p171 = scmp.ne.s32.totalorder %s159, %s160
    %p172 = scmp.eq.s32.totalorder %s26, 1
    %p173 = por %p171, %p172
    %p175 = scmp.ne.s32.totalorder %s160, %s174
    %p176 = scmp.eq.s32.totalorder %s26, 0
    %p177 = por %p175, %p176
    %s179 = sadd.s32 %s178, 1
    %p182 = scmp.eq.s32.totalorder %s20, 1
    %p183 = scmp.ne.s32.totalorder %s178, %s180
    %p184 = scmp.eq.s32.totalorder %s20, 0
    %p185 = por %p183, %p184
    %p186 = scmp.ne.s32.totalorder %s178, %s180
    %p187 = scmp.eq.s32.totalorder %s25, 1
    %p188 = por %p186, %p187
    %p189 = scmp.ne.s32.totalorder %s180, %s181
    %p190 = scmp.eq.s32.totalorder %s25, 0
    %p191 = por %p189, %p190
    %p192 = scmp.ne.s32.totalorder %s180, %s181
    %p193 = scmp.eq.s32.totalorder %s26, 1
    %p194 = por %p192, %p193
    %p196 = scmp.ne.s32.totalorder %s181, %s195
    %p197 = scmp.eq.s32.totalorder %s26, 0
    %p198 = por %p196, %p197
    %s200 = sadd.s32 %s199, 1
    %p203 = scmp.eq.s32.totalorder %s20, 1
    %p204 = scmp.ne.s32.totalorder %s199, %s201
    %p205 = scmp.eq.s32.totalorder %s20, 0
    %p206 = por %p204, %p205
    %p207 = scmp.ne.s32.totalorder %s199, %s201
    %p208 = scmp.eq.s32.totalorder %s25, 1
    %p209 = por %p207, %p208
    %p210 = scmp.ne.s32.totalorder %s201, %s202
    %p211 = scmp.eq.s32.totalorder %s25, 0
    %p212 = por %p210, %p211
    %p213 = scmp.ne.s32.totalorder %s201, %s202
    %p214 = scmp.eq.s32.totalorder %s26, 1
    %p215 = por %p213, %p214
    %p217 = scmp.ne.s32.totalorder %s202, %s216
    %p218 = scmp.eq.s32.totalorder %s26, 0
    %p219 = por %p217, %p218
    %s221 = sadd.s32 %s220, 1
    %p224 = scmp.eq.s32.totalorder %s20, 1
    %p225 = scmp.ne.s32.totalorder %s220, %s222
    %p226 = scmp.eq.s32.totalorder %s20, 0
    %p227 = por %p225, %p226
    %p228 = scmp.ne.s32.totalorder %s220, %s222
    %p229 = scmp.eq.s32.totalorder %s25, 1
    %p230 = por %p228, %p229
    %p231 = scmp.ne.s32.totalorder %s222, %s223
    %p232 = scmp.eq.s32.totalorder %s25, 0
    %p233 = por %p231, %p232
    %p234 = scmp.ne.s32.totalorder %s222, %s223
    %p235 = scmp.eq.s32.totalorder %s26, 1
    %p236 = por %p234, %p235
    %p238 = scmp.ne.s32.totalorder %s223, %s237
    %p239 = scmp.eq.s32.totalorder %s26, 0
    %p240 = por %p238, %p239
    %s242 = sadd.s32 %s241, 1
    %p245 = scmp.eq.s32.totalorder %s20, 1
    %p246 = scmp.ne.s32.totalorder %s241, %s243
    %p247 = scmp.eq.s32.totalorder %s20, 0
    %p248 = por %p246, %p247
    %p249 = scmp.ne.s32.totalorder %s241, %s243
    %p250 = scmp.eq.s32.totalorder %s25, 1
    %p251 = por %p249, %p250
    %p252 = scmp.ne.s32.totalorder %s243, %s244
    %p253 = scmp.eq.s32.totalorder %s25, 0
    %p254 = por %p252, %p253
    %p255 = scmp.ne.s32.totalorder %s243, %s244
    %p256 = scmp.eq.s32.totalorder %s26, 1
    %p257 = por %p255, %p256
    %p259 = scmp.ne.s32.totalorder %s244, %s258
    %p260 = scmp.eq.s32.totalorder %s26, 0
    %p261 = por %p259, %p260
    %s263 = sadd.s32 %s262, 1
    %p266 = scmp.eq.s32.totalorder %s20, 1
    %p267 = scmp.ne.s32.totalorder %s262, %s264
    %p268 = scmp.eq.s32.totalorder %s20, 0
    %p269 = por %p267, %p268
    %p270 = scmp.ne.s32.totalorder %s262, %s264
    %p271 = scmp.eq.s32.totalorder %s25, 1
    %p272 = por %p270, %p271
    %p273 = scmp.ne.s32.totalorder %s264, %s265
    %p274 = scmp.eq.s32.totalorder %s25, 0
    %p275 = por %p273, %p274
    %p276 = scmp.ne.s32.totalorder %s264, %s265
    %p277 = scmp.eq.s32.totalorder %s26, 1
    %p278 = por %p276, %p277
    %p280 = scmp.ne.s32.totalorder %s265, %s279
    %p281 = scmp.eq.s32.totalorder %s26, 0
    %p282 = por %p280, %p281
    %s284 = sadd.s32 %s283, 1
    %p287 = scmp.eq.s32.totalorder %s20, 1
    %p288 = scmp.ne.s32.totalorder %s283, %s285
    %p289 = scmp.eq.s32.totalorder %s20, 0
    %p290 = por %p288, %p289
    %p291 = scmp.ne.s32.totalorder %s283, %s285
    %p292 = scmp.eq.s32.totalorder %s25, 1
    %p293 = por %p291, %p292
    %p294 = scmp.ne.s32.totalorder %s285, %s286
    %p295 = scmp.eq.s32.totalorder %s25, 0
    %p296 = por %p294, %p295
    %p297 = scmp.ne.s32.totalorder %s285, %s286
    %p298 = scmp.eq.s32.totalorder %s26, 1
    %p299 = por %p297, %p298
    %p301 = scmp.ne.s32.totalorder %s286, %s300
    %p302 = scmp.eq.s32.totalorder %s26, 0
    %p303 = por %p301, %p302
    %s305 = sadd.s32 %s304, 1
    %p308 = scmp.eq.s32.totalorder %s20, 1
    %p309 = scmp.ne.s32.totalorder %s304, %s306
    %p310 = scmp.eq.s32.totalorder %s20, 0
    %p311 = por %p309, %p310
    %p312 = scmp.ne.s32.totalorder %s304, %s306
    %p313 = scmp.eq.s32.totalorder %s25, 1
    %p314 = por %p312, %p313
    %p315 = scmp.ne.s32.totalorder %s306, %s307
    %p316 = scmp.eq.s32.totalorder %s25, 0
    %p317 = por %p315, %p316
    %p318 = scmp.ne.s32.totalorder %s306, %s307
    %p319 = scmp.eq.s32.totalorder %s26, 1
    %p320 = por %p318, %p319
    %p322 = scmp.ne.s32.totalorder %s307, %s321
    %p323 = scmp.eq.s32.totalorder %s26, 0
    %p324 = por %p322, %p323
    %s326 = sadd.s32 %s325, 1
    %p329 = scmp.eq.s32.totalorder %s20, 1
    %p330 = scmp.ne.s32.totalorder %s325, %s327
    %p331 = scmp.eq.s32.totalorder %s20, 0
    %p332 = por %p330, %p331
    %p333 = scmp.ne.s32.totalorder %s325, %s327
    %p334 = scmp.eq.s32.totalorder %s25, 1
    %p335 = por %p333, %p334
    %p336 = scmp.ne.s32.totalorder %s327, %s328
    %p337 = scmp.eq.s32.totalorder %s25, 0
    %p338 = por %p336, %p337
    %p339 = scmp.ne.s32.totalorder %s327, %s328
    %p340 = scmp.eq.s32.totalorder %s26, 1
    %p341 = por %p339, %p340
    %p343 = scmp.ne.s32.totalorder %s328, %s342
    %p344 = scmp.eq.s32.totalorder %s26, 0
    %p345 = por %p343, %p344
    %s346 = ssub.s32 %s27, %s39
    %s347 = ssub.s32 %s28, %s35
    %s348 = sor.u32 %s346, %s347
    %p349 = scmp.eq.s32.totalorder %s348, 0
    %s351 = sadd.s32 %s350, 1
    %s352 = scalar_select %p349, %s350, %s351
    %p355 = pneg %p349
    %p356 = scmp.eq.s32.totalorder %s20, 1
    %p357 = por %p355, %p356
    %p358 = scmp.ne.s32.totalorder %s350, %s353
    %p359 = scmp.eq.s32.totalorder %s20, 0
    %p360 = por %p358, %p359
    %p361 = scmp.ne.s32.totalorder %s350, %s353
    %p362 = scmp.eq.s32.totalorder %s25, 1
    %p363 = por %p361, %p362
    %p364 = scmp.ne.s32.totalorder %s353, %s354
    %p365 = scmp.eq.s32.totalorder %s25, 0
    %p366 = por %p364, %p365
    %p367 = scmp.ne.s32.totalorder %s353, %s354
    %p368 = scmp.eq.s32.totalorder %s26, 1
    %p369 = por %p367, %p368
    %p371 = scmp.ne.s32.totalorder %s354, %s370
    %p372 = scmp.eq.s32.totalorder %s26, 0
    %p373 = por %p371, %p372
    %p374 = scmp.le.s32.totalorder 1, %s20
    %p375 = scmp.lt.s32.totalorder %s20, 3
    %p376 = pnand %p374, %p375
    %p377 = pneg %p376
    // Predicated region
    $region9: #{ramplus_forward.15} parent=5 // pred_check
      _
    $region10: #{ramplus_forward.15} parent=5 // pred_check_branch
      %379 = sbr.rel (%p376) target = $region12
    $region11: #{ramplus_forward.15} parent=5 // pred_region
      %s380 = ssub.s32 %s20, 1
      // Predicated region
      $region13: #{ramplus_forward.15} parent=11 // pred_check
        %p381 = pneg %p86
      $region14: #{ramplus_forward.15} parent=11 // pred_check_branch
        %383 = sbr.rel (%p381) target = $region16
      $region15: #{ramplus_forward.15} parent=11 // pred_region
        %p384 = scmp.lt.s32.totalorder %s30, 0
        %s385 = scalar_select %p384, %s30, 0
        %s386 = smul.addr %s385, 2
        %s387 = smul.addr %s386, 4
        %s388 = scalar_lea.vmem %s1, %s387
      $region16: #{ramplus_forward.15} parent=11 // pred_fallthru
        _
      // Predicated region
      $region17: #{ramplus_forward.15} parent=11 // pred_check
        %p389 = pneg %p107
      $region18: #{ramplus_forward.15} parent=11 // pred_check_branch
        %391 = sbr.rel (%p389) target = $region20
      $region19: #{ramplus_forward.15} parent=11 // pred_region
        _
      $region20: #{ramplus_forward.15} parent=11 // pred_fallthru
        _
      // Predicated region
      $region21: #{ramplus_forward.15} parent=11 // pred_check
        %p392 = pneg %p128
      $region22: #{ramplus_forward.15} parent=11 // pred_check_branch
        %394 = sbr.rel (%p392) target = $region24
      $region23: #{ramplus_forward.15} parent=11 // pred_region
        _
      $region24: #{ramplus_forward.15} parent=11 // pred_fallthru
        _
      // Predicated region
      $region25: #{ramplus_forward.15} parent=11 // pred_check
        %p395 = pneg %p149
      $region26: #{ramplus_forward.15} parent=11 // pred_check_branch
        %397 = sbr.rel (%p395) target = $region28
      $region27: #{ramplus_forward.15} parent=11 // pred_region
        _
      $region28: #{ramplus_forward.15} parent=11 // pred_fallthru
        _
      // Predicated region
      $region29: #{ramplus_forward.15} parent=11 // pred_check
        %p398 = pneg %p170
      $region30: #{ramplus_forward.15} parent=11 // pred_check_branch
        %400 = sbr.rel (%p398) target = $region32
      $region31: #{ramplus_forward.15} parent=11 // pred_region
        _
      $region32: #{ramplus_forward.15} parent=11 // pred_fallthru
        _
      // Predicated region
      $region33: #{ramplus_forward.15} parent=11 // pred_check
        %p401 = pneg %p191
      $region34: #{ramplus_forward.15} parent=11 // pred_check_branch
        %403 = sbr.rel (%p401) target = $region36
      $region35: #{ramplus_forward.15} parent=11 // pred_region
        _
      $region36: #{ramplus_forward.15} parent=11 // pred_fallthru
        _
      // Predicated region
      $region37: #{ramplus_forward.15} parent=11 // pred_check
        %p404 = pneg %p212
      $region38: #{ramplus_forward.15} parent=11 // pred_check_branch
        %406 = sbr.rel (%p404) target = $region40
      $region39: #{ramplus_forward.15} parent=11 // pred_region
        _
      $region40: #{ramplus_forward.15} parent=11 // pred_fallthru
        _
      // Predicated region
      $region41: #{ramplus_forward.15} parent=11 // pred_check
        %p407 = pneg %p233
      $region42: #{ramplus_forward.15} parent=11 // pred_check_branch
        %409 = sbr.rel (%p407) target = $region44
      $region43: #{ramplus_forward.15} parent=11 // pred_region
        _
      $region44: #{ramplus_forward.15} parent=11 // pred_fallthru
        _
      // Predicated region
      $region45: #{ramplus_forward.15} parent=11 // pred_check
        %p410 = pneg %p254
      $region46: #{ramplus_forward.15} parent=11 // pred_check_branch
        %412 = sbr.rel (%p410) target = $region48
      $region47: #{ramplus_forward.15} parent=11 // pred_region
        _
      $region48: #{ramplus_forward.15} parent=11 // pred_fallthru
        _
      // Predicated region
      $region49: #{ramplus_forward.15} parent=11 // pred_check
        %p413 = pneg %p275
      $region50: #{ramplus_forward.15} parent=11 // pred_check_branch
        %415 = sbr.rel (%p413) target = $region52
      $region51: #{ramplus_forward.15} parent=11 // pred_region
        _
      $region52: #{ramplus_forward.15} parent=11 // pred_fallthru
        _
      // Predicated region
      $region53: #{ramplus_forward.15} parent=11 // pred_check
        %p416 = pneg %p296
      $region54: #{ramplus_forward.15} parent=11 // pred_check_branch
        %418 = sbr.rel (%p416) target = $region56
      $region55: #{ramplus_forward.15} parent=11 // pred_region
        _
      $region56: #{ramplus_forward.15} parent=11 // pred_fallthru
        _
      // Predicated region
      $region57: #{ramplus_forward.15} parent=11 // pred_check
        %p419 = pneg %p317
      $region58: #{ramplus_forward.15} parent=11 // pred_check_branch
        %421 = sbr.rel (%p419) target = $region60
      $region59: #{ramplus_forward.15} parent=11 // pred_region
        _
      $region60: #{ramplus_forward.15} parent=11 // pred_fallthru
        _
      // Predicated region
      $region61: #{ramplus_forward.15} parent=11 // pred_check
        %p422 = pneg %p338
      $region62: #{ramplus_forward.15} parent=11 // pred_check_branch
        %424 = sbr.rel (%p422) target = $region64
      $region63: #{ramplus_forward.15} parent=11 // pred_region
        _
      $region64: #{ramplus_forward.15} parent=11 // pred_fallthru
        _
    $region12: #{ramplus_forward.15} parent=5 // pred_fallthru
      _
    %p425 = scmp.lt.s32.totalorder %s20, 2
    // Predicated region
    $region65: #{ramplus_forward.15} parent=5 // pred_check
      %p426 = pneg %p425
    $region66: #{ramplus_forward.15} parent=5 // pred_check_branch
      %428 = sbr.rel (%p426) target = $region68
    $region67: #{ramplus_forward.15} parent=5 // pred_region
      // Predicated region
      $region69: #{ramplus_forward.15} parent=67 // pred_check
        %p429 = pneg %p54
      $region70: #{ramplus_forward.15} parent=67 // pred_check_branch
        %431 = sbr.rel (%p429) target = $region72
      $region71: #{ramplus_forward.15} parent=67 // pred_region
        %s432 = smul.u32 2, %s28
        %p433 = scmp.lt.s32.totalorder %s27, 1
        %s434 = scalar_select %p433, %s27, 1
        %p435 = scmp.lt.s32.totalorder %s432, 1
        %s436 = scalar_select %p435, %s432, 1
        %s437 = smul.addr %s434, 2
        %s438 = sadd.s32 %s436, %s437
        %s439 = smul.addr %s438, 8
        %s440 = scalar_lea.vmem %s0, %s439
        %s441 = smul.u32 2, %s28
      $region72: #{ramplus_forward.15} parent=67 // pred_fallthru
        _
    $region68: #{ramplus_forward.15} parent=5 // pred_fallthru
      _
    %p442 = scmp.le.s32.totalorder 1, %s20
    %p443 = scmp.lt.s32.totalorder %s20, 3
    %p444 = pnand %p442, %p443
    %p445 = pneg %p444
    // Predicated region
    $region73: #{ramplus_forward.15} parent=5 // pred_check
      _
    $region74: #{ramplus_forward.15} parent=5 // pred_check_branch
      %447 = sbr.rel (%p444) target = $region76
    $region75: #{ramplus_forward.15} parent=5 // pred_region
      %s448 = ssub.s32 %s20, 1
      %s449 = smul.u32 2, %s30
      %p450 = scmp.lt.s32.totalorder %s29, 1
      %s451 = scalar_select %p450, %s29, 1
      %p452 = scmp.lt.s32.totalorder %s449, 1
      %s453 = scalar_select %p452, %s449, 1
      %s454 = smul.addr %s451, 2
      %s455 = sadd.s32 %s453, %s454
      %s456 = smul.addr %s455, 8
      %s457 = scalar_lea.vmem %s0, %s456
      %p458 = pneg %p60
      %p459 = pneg %p57
      %p460 = scmp.lt.s32.totalorder %s30, 0
      %s461 = scalar_select %p460, %s30, 0
      %s462 = smul.addr %s461, 2
      %s463 = smul.addr %s462, 4
      %s464 = scalar_lea.vmem %s1, %s463
      %p465 = pneg %p86
      %p466 = pneg %p83
      %p467 = pneg %p107
      %p468 = pneg %p104
      %p469 = pneg %p128
      %p470 = pneg %p125
      %p471 = pneg %p149
      %p472 = pneg %p146
      %p473 = pneg %p170
      %p474 = pneg %p167
      %p475 = pneg %p191
      %p476 = pneg %p188
      %p477 = pneg %p212
      %p478 = pneg %p209
      %p479 = pneg %p233
      %p480 = pneg %p230
      %p481 = pneg %p254
      %p482 = pneg %p251
      %p483 = pneg %p275
      %p484 = pneg %p272
      %p485 = pneg %p296
      %p486 = pneg %p293
      %p487 = pneg %p317
      %p488 = pneg %p314
      %p489 = pneg %p338
      %p490 = pneg %p335
      %p491 = pneg %p366
      %p492 = pneg %p363
      %s493 = smul.u32 2, %s30
      %p494 = scmp.lt.s32.totalorder %s29, 1
      %s495 = scalar_select %p494, %s29, 1
      %p496 = scmp.lt.s32.totalorder %s493, 1
      %s497 = scalar_select %p496, %s493, 1
      %s498 = smul.addr %s495, 2
      %s499 = sadd.s32 %s497, %s498
      %s500 = smul.addr %s499, 8
      %s501 = scalar_lea.vmem %s14, %s500
      %s502 = smul.u32 2, %s30
      %p503 = scmp.lt.s32.totalorder %s29, 1
      %s504 = scalar_select %p503, %s29, 1
      %p505 = scmp.lt.s32.totalorder %s502, 1
      %s506 = scalar_select %p505, %s502, 1
      %s507 = smul.addr %s504, 2
      %s508 = sadd.s32 %s506, %s507
      %s509 = smul.addr %s508, 8
      %s510 = scalar_lea.vmem %s0, %s509
      %s511 = smul.u32 2, %s30
      %p512 = scmp.lt.s32.totalorder %s30, 0
      %s513 = scalar_select %p512, %s30, 0
      %s514 = smul.addr %s513, 2
      %s515 = smul.addr %s514, 4
      %s516 = scalar_lea.vmem %s1, %s515
      %s517 = smul.u32 2, %s30
      %p518 = scmp.lt.s32.totalorder %s29, 1
      %s519 = scalar_select %p518, %s29, 1
      %p520 = scmp.lt.s32.totalorder %s517, 1
      %s521 = scalar_select %p520, %s517, 1
      %s522 = smul.addr %s519, 2
      %s523 = sadd.s32 %s521, %s522
      %s524 = smul.addr %s523, 8
      %s525 = scalar_lea.vmem %s14, %s524
      %s526 = smul.u32 2, %s30
      %v528 = vld [vmem:[%s510] sm:$0xff]
      %v529 = vld [vmem:[%s510 + $0x8] sm:$0xff]
      %v530 = vld [vmem:[%s2] sm:$0x1]
      %v531 = vld [vmem:[%s3] sm:$0x1]
      %vm532 = vcmask 523264
      %v533 = vsel %vm532, %v528, 0.0
      %534 = vadd.xlane.f32.xlu0 %v533
      %v535 = vpop.xlane.xlu0 %534
      %v536 = vsel %vm532, %v529, 0.0
      %537 = vadd.xlane.f32.xlu0 %v536
      %v538 = vpop.xlane.xlu0 %537
      %v539 = vrcp.pop 64.0
      %v540 = vmul.f32 %v535, %v539
      %v541 = vmul.f32 %v538, %v539
      %v542 = vsub.f32 %v528, %v540
      %v543 = vsub.f32 %v529, %v541
      %v544 = vmul.f32 %v542, %v542
      %v545 = vmul.f32 %v543, %v543
      %v546 = vsel %vm532, %v544, 0.0
      %547 = vadd.xlane.f32.xlu0 %v546
      %v548 = vpop.xlane.xlu0 %547
      %v549 = vsel %vm532, %v545, 0.0
      %550 = vadd.xlane.f32.xlu0 %v549
      %v551 = vpop.xlane.xlu0 %550
      %v552 = vmul.f32 %v548, %v539
      %v553 = vmul.f32 %v551, %v539
      %v554 = vadd.f32 %v552, 1e-05
      %v555 = vadd.f32 %v553, 1e-05
      %v556 = vrsqrt.pop %v554
      %v557 = vrsqrt.pop %v555
      %v558 = vmul.f32 %v542, %v556
      %v559 = vmul.f32 %v543, %v557
      %v561 = vlaneseq
      %v562 = vshrl.u32 %v561, 7
      %v563 = vsub.s32 0, %v562
      %v564 = vrot.slane %v530, %v563
      %v566 = vmul.f32 %v558, %v564
      %v567 = vmul.f32 %v559, %v564
      %v569 = vlaneseq
      %v570 = vshrl.u32 %v569, 7
      %v571 = vsub.s32 0, %v570
      %v572 = vrot.slane %v531, %v571
      %v574 = vadd.f32 %v566, %v572
      %v575 = vadd.f32 %v567, %v572
      %v576 = vld [vmem:[%s4] sm:$0xff]
      %v577 = vld [vmem:[%s4 + $0x8] sm:$0xff]
      %v578 = vld [vmem:[%s4 + $0x10] sm:$0xff]
      %v579 = vld [vmem:[%s4 + $0x18] sm:$0xff]
      %v580 = vld [vmem:[%s4 + $0x20] sm:$0xff]
      %v581 = vld [vmem:[%s4 + $0x28] sm:$0xff]
      %v582 = vld [vmem:[%s4 + $0x30] sm:$0xff]
      %v583 = vld [vmem:[%s4 + $0x38] sm:$0xff]
      %v584 = vpack.c.bf16 %v575, %v574
      %v585 = vld [vmem:[%s5] sm:$0x3]
      %v587 = vlaneseq
      %v588 = vshrl.u32 %v587, 7
      %v589 = vsub.s32 0, %v588
      %v590 = vrot.slane %v585, %v589
      %v591 = vlaneseq
      %v592 = vshrl.u32 %v591, 7
      %v593 = vsub.s32 1, %v592
      %v594 = vrot.slane %v585, %v593
      %v605 = vunpack.c.l.b16 %v576
      %v606 = vunpack.c.h.b16 %v576
      %v607 = vunpack.c.l.b16 %v577
      %v608 = vunpack.c.h.b16 %v577
      %v609 = vunpack.c.l.b16 %v578
      %v610 = vunpack.c.h.b16 %v578
      %v611 = vunpack.c.l.b16 %v579
      %v612 = vunpack.c.h.b16 %v579
      %v613 = vunpack.c.l.b16 %v580
      %v614 = vunpack.c.h.b16 %v580
      %v615 = vunpack.c.l.b16 %v581
      %v616 = vunpack.c.h.b16 %v581
      %v617 = vunpack.c.l.b16 %v582
      %v618 = vunpack.c.h.b16 %v582
      %v619 = vunpack.c.l.b16 %v583
      %v620 = vunpack.c.h.b16 %v583
      %v621 = vpack.c.b16 %v607, %v605
      %v622 = vpack.c.b16 %v608, %v606
      %v623 = vpack.c.b16 %v611, %v609
      %v624 = vpack.c.b16 %v612, %v610
      %v625 = vpack.c.b16 %v615, %v613
      %v626 = vpack.c.b16 %v616, %v614
      %v627 = vpack.c.b16 %v619, %v617
      %v628 = vpack.c.b16 %v620, %v618
      %v638 = vsel %vm532, %v584, 0
      %640 = vmatprep.subr.bf16.mxu0 %v622
      %641 = vmatpush1.bf16.msra.mxu0 %v621
      %642 = vmatprep.subr.bf16.mxu0 %v624
      %643 = vmatpush1.bf16.msra.mxu0 %v623
      %644 = vmatprep.subr.bf16.mxu0 %v626
      %645 = vmatpush1.bf16.msra.mxu0 %v625
      %646 = vmatprep.subr.bf16.mxu0 %v628
      %647 = vmatpush1.bf16.msra.mxu0 %v627
      %648 = vmatprep.subr.bf16.mxu0 0
      %649 = vmatpush1.bf16.msra.mxu0 0
      %650 = vmatprep.subr.bf16.mxu0 0
      %651 = vmatpush1.bf16.msra.mxu0 0
      %652 = vmatprep.subr.bf16.mxu0 0
      %653 = vmatpush1.bf16.msra.mxu0 0
      %654 = vmatprep.subr.bf16.mxu0 0
      %655 = vmatpush1.bf16.msra.mxu0 0
      %656 = vmatprep.subr.bf16.mxu0 0
      %657 = vmatpush1.bf16.msra.mxu0 0
      %658 = vmatprep.subr.bf16.mxu0 0
      %659 = vmatpush1.bf16.msra.mxu0 0
      %660 = vmatprep.subr.bf16.mxu0 0
      %661 = vmatpush1.bf16.msra.mxu0 0
      %662 = vmatprep.subr.bf16.mxu0 0
      %663 = vmatpush1.bf16.msra.mxu0 0
      %664 = vmatprep.subr.bf16.mxu0 0
      %665 = vmatpush1.bf16.msra.mxu0 0
      %666 = vmatprep.subr.bf16.mxu0 0
      %667 = vmatpush1.bf16.msra.mxu0 0
      %668 = vmatprep.subr.bf16.mxu0 0
      %669 = vmatpush1.bf16.msra.mxu0 0
      %670 = vmatprep.subr.bf16.mxu0 0
      %671 = vmatpush1.bf16.msra.mxu0 0
      %672 = vmatprep.mubr.bf16.mxu0 0
      %673 = vmatmul.mubr.bf16.gmra.mrb[0].mxu0 %v638
      %v674 = vpop.f32.mrb[0].mxu0
      %v675 = vadd.f32 %v590, %v674
      %v676 = vpop.f32.mrb[0].mxu0
      %v677 = vadd.f32 %v594, %v676
      %v678 = vpop.f32.mrb[0].mxu0
      %v679 = vadd.f32 %v590, %v678
      %v680 = vpop.f32.mrb[0].mxu0
      %v681 = vadd.f32 %v594, %v680
      %682 = vdwg.mxu0
      %v683 = vmul.f32 %v675, 0.25
      %v684 = vmul.f32 %v679, 0.25
      %v685 = vld [vmem:[%s516] sm:$0xf]
      %v686 = vld [vmem:[%s516 + $0x4] sm:$0xf]
      %v687 = vld [vmem:[%s516 + $0x8] sm:$0xf]
      %v688 = vld [vmem:[%s516 + $0xc] sm:$0xf]
      %v689 = vld [vmem:[%s516 + $0x10] sm:$0xf]
      %v690 = vld [vmem:[%s516 + $0x14] sm:$0xf]
      %v691 = vld [vmem:[%s516 + $0x18] sm:$0xf]
      %v692 = vld [vmem:[%s516 + $0x1c] sm:$0xf]
      %v693 = vunpack.c.l.bf16 %v685
      %v694 = vunpack.c.l.bf16 %v686
      %v695 = vunpack.c.l.bf16 %v687
      %v696 = vunpack.c.l.bf16 %v688
      %v697 = vunpack.c.l.bf16 %v689
      %v698 = vunpack.c.l.bf16 %v690
      %v699 = vunpack.c.l.bf16 %v691
      %v700 = vunpack.c.l.bf16 %v692
      %v701 = vpack.c.bf16 %v684, %v683
      %v702 = vpack.c.bf16 %v679, %v675
      %704 = vrot.lane.b32.xlu0 %v702, 64
      %v705 = vpop.permute.xlu0 %704
      %vm706 = vcmask 130048
      %v708 = vsel %vm706, %v701, 0
      %v711 = vsel %vm706, %v705, 0
      %713 = vmatprep.subr.bf16.mxu0 0
      %714 = vmatpush1.bf16.xpose.msra.mxu0 %v711
      %715 = vmatprep.subr.bf16.mxu0 0
      %716 = vmatpush1.bf16.xpose.msra.mxu0 0
      %717 = vmatprep.subr.bf16.mxu0 0
      %718 = vmatpush1.bf16.xpose.msra.mxu0 0
      %719 = vmatprep.subr.bf16.mxu0 0
      %720 = vmatpush1.bf16.xpose.msra.mxu0 0
      %721 = vmatprep.subr.bf16.mxu0 0
      %722 = vmatpush1.bf16.xpose.msra.mxu0 0
      %723 = vmatprep.subr.bf16.mxu0 0
      %724 = vmatpush1.bf16.xpose.msra.mxu0 0
      %725 = vmatprep.subr.bf16.mxu0 0
      %726 = vmatpush1.bf16.xpose.msra.mxu0 0
      %727 = vmatprep.subr.bf16.mxu0 0
      %728 = vmatpush1.bf16.xpose.msra.mxu0 0
      %729 = vmatprep.subr.bf16.mxu0 0
      %730 = vmatpush1.bf16.xpose.msra.mxu0 0
      %731 = vmatprep.subr.bf16.mxu0 0
      %732 = vmatpush1.bf16.xpose.msra.mxu0 0
      %733 = vmatprep.subr.bf16.mxu0 0
      %734 = vmatpush1.bf16.xpose.msra.mxu0 0
      %735 = vmatprep.subr.bf16.mxu0 0
      %736 = vmatpush1.bf16.xpose.msra.mxu0 0
      %737 = vmatprep.subr.bf16.mxu0 0
      %738 = vmatpush1.bf16.xpose.msra.mxu0 0
      %739 = vmatprep.subr.bf16.mxu0 0
      %740 = vmatpush1.bf16.xpose.msra.mxu0 0
      %741 = vmatprep.subr.bf16.mxu0 0
      %742 = vmatpush1.bf16.xpose.msra.mxu0 0
      %743 = vmatprep.subr.bf16.mxu0 0
      %744 = vmatpush1.bf16.xpose.msra.mxu0 0
      %745 = vmatprep.mubr.bf16.mxu0 0
      %746 = vmatmul.mubr.bf16.gmra.mrb[0].mxu0 %v708
      %v747 = vpop.f32.mrb[0].mxu0
      %v748 = vadd.f32 %v693, %v747
      %v749 = vpop.f32.mrb[0].mxu0
      %v750 = vpop.f32.mrb[0].mxu0
      %v751 = vadd.f32 %v694, %v750
      %v752 = vpop.f32.mrb[0].mxu0
      %753 = vdwg.mxu0
      %v754 = vsel %vm706, %v748, -inf
      %755 = vmax.xlane.f32.xlu0 %v754
      %v756 = vpop.xlane.xlu0 %755
      %v757 = vsel %vm706, %v751, -inf
      %758 = vmax.xlane.f32.xlu0 %v757
      %v759 = vpop.xlane.xlu0 %758
      %v760 = vsub.f32 %v748, %v756
      %v761 = vsub.f32 %v751, %v759
      %v762 = vmul.f32 %v760, 1.442695
      %v763 = vpow.pop %v762
      %v764 = vmul.f32 %v761, 1.442695
      %v765 = vpow.pop %v764
      %v766 = vsel %vm706, %v763, 0.0
      %767 = vadd.xlane.f32.xlu0 %v766
      %v768 = vpop.xlane.xlu0 %767
      %v769 = vsel %vm706, %v765, 0.0
      %770 = vadd.xlane.f32.xlu0 %v769
      %v771 = vpop.xlane.xlu0 %770
      %v772 = vrcp.pop %v768
      %v773 = vrcp.pop %v771
      %v774 = vmul.f32 %v763, %v772
      %v775 = vmul.f32 %v765, %v773
      %v776 = vpack.c.bf16 %v775, %v774
      %v777 = vpack.c.bf16 %v681, %v677
      %v779 = vsel %vm706, %v776, 0
      %781 = vmatprep.subr.bf16.mxu0 0
      %782 = vmatpush1.bf16.msra.mxu0 %v777
      %783 = vmatprep.subr.bf16.mxu0 0
      %784 = vmatpush1.bf16.msra.mxu0 0
      %785 = vmatprep.subr.bf16.mxu0 0
      %786 = vmatpush1.bf16.msra.mxu0 0
      %787 = vmatprep.subr.bf16.mxu0 0
      %788 = vmatpush1.bf16.msra.mxu0 0
      %789 = vmatprep.subr.bf16.mxu0 0
      %790 = vmatpush1.bf16.msra.mxu0 0
      %791 = vmatprep.subr.bf16.mxu0 0
      %792 = vmatpush1.bf16.msra.mxu0 0
      %793 = vmatprep.subr.bf16.mxu0 0
      %794 = vmatpush1.bf16.msra.mxu0 0
      %795 = vmatprep.subr.bf16.mxu0 0
      %796 = vmatpush1.bf16.msra.mxu0 0
      %797 = vmatprep.subr.bf16.mxu0 0
      %798 = vmatpush1.bf16.msra.mxu0 0
      %799 = vmatprep.subr.bf16.mxu0 0
      %800 = vmatpush1.bf16.msra.mxu0 0
      %801 = vmatprep.subr.bf16.mxu0 0
      %802 = vmatpush1.bf16.msra.mxu0 0
      %803 = vmatprep.subr.bf16.mxu0 0
      %804 = vmatpush1.bf16.msra.mxu0 0
      %805 = vmatprep.subr.bf16.mxu0 0
      %806 = vmatpush1.bf16.msra.mxu0 0
      %807 = vmatprep.subr.bf16.mxu0 0
      %808 = vmatpush1.bf16.msra.mxu0 0
      %809 = vmatprep.subr.bf16.mxu0 0
      %810 = vmatpush1.bf16.msra.mxu0 0
      %811 = vmatprep.subr.bf16.mxu0 0
      %812 = vmatpush1.bf16.msra.mxu0 0
      %813 = vmatprep.mubr.bf16.mxu0 0
      %814 = vmatmul.mubr.bf16.gmra.mrb[0].mxu0 %v779
      %v815 = vpop.f32.mrb[0].mxu0
      %v816 = vadd.f32 0.0, %v815
      %v817 = vpop.f32.mrb[0].mxu0
      %v818 = vpop.f32.mrb[0].mxu0
      %v819 = vadd.f32 0.0, %v818
      %v820 = vpop.f32.mrb[0].mxu0
      %821 = vdwg.mxu0
      %823 = vrot.lane.b32.xlu0 %v701, 112
      %v824 = vpop.permute.xlu0 %823
      %825 = vrot.lane.b32.xlu0 %v702, 48
      %v826 = vpop.permute.xlu0 %825
      %v828 = vsel %vm706, %v824, 0
      %v831 = vsel %vm706, %v826, 0
      %833 = vmatprep.subr.bf16.mxu0 0
      %834 = vmatpush1.bf16.xpose.msra.mxu0 %v831
      %835 = vmatprep.subr.bf16.mxu0 0
      %836 = vmatpush1.bf16.xpose.msra.mxu0 0
      %837 = vmatprep.subr.bf16.mxu0 0
      %838 = vmatpush1.bf16.xpose.msra.mxu0 0
      %839 = vmatprep.subr.bf16.mxu0 0
      %840 = vmatpush1.bf16.xpose.msra.mxu0 0
      %841 = vmatprep.subr.bf16.mxu0 0
      %842 = vmatpush1.bf16.xpose.msra.mxu0 0
      %843 = vmatprep.subr.bf16.mxu0 0
      %844 = vmatpush1.bf16.xpose.msra.mxu0 0
      %845 = vmatprep.subr.bf16.mxu0 0
      %846 = vmatpush1.bf16.xpose.msra.mxu0 0
      %847 = vmatprep.subr.bf16.mxu0 0
      %848 = vmatpush1.bf16.xpose.msra.mxu0 0
      %849 = vmatprep.subr.bf16.mxu0 0
      %850 = vmatpush1.bf16.xpose.msra.mxu0 0
      %851 = vmatprep.subr.bf16.mxu0 0
      %852 = vmatpush1.bf16.xpose.msra.mxu0 0
      %853 = vmatprep.subr.bf16.mxu0 0
      %854 = vmatpush1.bf16.xpose.msra.mxu0 0
      %855 = vmatprep.subr.bf16.mxu0 0
      %856 = vmatpush1.bf16.xpose.msra.mxu0 0
      %857 = vmatprep.subr.bf16.mxu0 0
      %858 = vmatpush1.bf16.xpose.msra.mxu0 0
      %859 = vmatprep.subr.bf16.mxu0 0
      %860 = vmatpush1.bf16.xpose.msra.mxu0 0
      %861 = vmatprep.subr.bf16.mxu0 0
      %862 = vmatpush1.bf16.xpose.msra.mxu0 0
      %863 = vmatprep.subr.bf16.mxu0 0
      %864 = vmatpush1.bf16.xpose.msra.mxu0 0
      %865 = vmatprep.mubr.bf16.mxu0 0
      %866 = vmatmul.mubr.bf16.gmra.mrb[0].mxu0 %v828
      %v867 = vpop.f32.mrb[0].mxu0
      %v868 = vadd.f32 %v695, %v867
      %v869 = vpop.f32.mrb[0].mxu0
      %v870 = vpop.f32.mrb[0].mxu0
      %v871 = vadd.f32 %v696, %v870
      %v872 = vpop.f32.mrb[0].mxu0
      %873 = vdwg.mxu0
      %v874 = vsel %vm706, %v868, -inf
      %875 = vmax.xlane.f32.xlu0 %v874
      %v876 = vpop.xlane.xlu0 %875
      %v877 = vsel %vm706, %v871, -inf
      %878 = vmax.xlane.f32.xlu0 %v877
      %v879 = vpop.xlane.xlu0 %878
      %v880 = vsub.f32 %v868, %v876
      %v881 = vsub.f32 %v871, %v879
      %v882 = vmul.f32 %v880, 1.442695
      %v883 = vpow.pop %v882
      %v884 = vmul.f32 %v881, 1.442695
      %v885 = vpow.pop %v884
      %v886 = vsel %vm706, %v883, 0.0
      %887 = vadd.xlane.f32.xlu0 %v886
      %v888 = vpop.xlane.xlu0 %887
      %v889 = vsel %vm706, %v885, 0.0
      %890 = vadd.xlane.f32.xlu0 %v889
      %v891 = vpop.xlane.xlu0 %890
      %v892 = vrcp.pop %v888
      %v893 = vrcp.pop %v891
      %v894 = vmul.f32 %v883, %v892
      %v895 = vmul.f32 %v885, %v893
      %v896 = vpack.c.bf16 %v895, %v894
      %898 = vrot.lane.b32.xlu0 %v777, 112
      %v899 = vpop.permute.xlu0 %898
      %v902 = vsel %vm706, %v896, 0
      %904 = vmatprep.subr.bf16.mxu0 0
      %905 = vmatpush1.bf16.msra.mxu0 %v899
      %906 = vmatprep.subr.bf16.mxu0 0
      %907 = vmatpush1.bf16.msra.mxu0 0
      %908 = vmatprep.subr.bf16.mxu0 0
      %909 = vmatpush1.bf16.msra.mxu0 0
      %910 = vmatprep.subr.bf16.mxu0 0
      %911 = vmatpush1.bf16.msra.mxu0 0
      %912 = vmatprep.subr.bf16.mxu0 0
      %913 = vmatpush1.bf16.msra.mxu0 0
      %914 = vmatprep.subr.bf16.mxu0 0
      %915 = vmatpush1.bf16.msra.mxu0 0
      %916 = vmatprep.subr.bf16.mxu0 0
      %917 = vmatpush1.bf16.msra.mxu0 0
      %918 = vmatprep.subr.bf16.mxu0 0
      %919 = vmatpush1.bf16.msra.mxu0 0
      %920 = vmatprep.subr.bf16.mxu0 0
      %921 = vmatpush1.bf16.msra.mxu0 0
      %922 = vmatprep.subr.bf16.mxu0 0
      %923 = vmatpush1.bf16.msra.mxu0 0
      %924 = vmatprep.subr.bf16.mxu0 0
      %925 = vmatpush1.bf16.msra.mxu0 0
      %926 = vmatprep.subr.bf16.mxu0 0
      %927 = vmatpush1.bf16.msra.mxu0 0
      %928 = vmatprep.subr.bf16.mxu0 0
      %929 = vmatpush1.bf16.msra.mxu0 0
      %930 = vmatprep.subr.bf16.mxu0 0
      %931 = vmatpush1.bf16.msra.mxu0 0
      %932 = vmatprep.subr.bf16.mxu0 0
      %933 = vmatpush1.bf16.msra.mxu0 0
      %934 = vmatprep.subr.bf16.mxu0 0
      %935 = vmatpush1.bf16.msra.mxu0 0
      %936 = vmatprep.mubr.bf16.mxu0 0
      %937 = vmatmul.mubr.bf16.gmra.mrb[0].mxu0 %v902
      %v938 = vpop.f32.mrb[0].mxu0
      %v939 = vadd.f32 0.0, %v938
      %v940 = vpop.f32.mrb[0].mxu0
      %v941 = vpop.f32.mrb[0].mxu0
      %v942 = vadd.f32 0.0, %v941
      %v943 = vpop.f32.mrb[0].mxu0
      %944 = vdwg.mxu0
      %945 = vrot.lane.b32.xlu0 %v701, 96
      %v946 = vpop.permute.xlu0 %945
      %947 = vrot.lane.b32.xlu0 %v702, 32
      %v948 = vpop.permute.xlu0 %947
      %v950 = vsel %vm706, %v946, 0
      %v953 = vsel %vm706, %v948, 0
      %955 = vmatprep.subr.bf16.mxu0 0
      %956 = vmatpush1.bf16.xpose.msra.mxu0 %v953
      %957 = vmatprep.subr.bf16.mxu0 0
      %958 = vmatpush1.bf16.xpose.msra.mxu0 0
      %959 = vmatprep.subr.bf16.mxu0 0
      %960 = vmatpush1.bf16.xpose.msra.mxu0 0
      %961 = vmatprep.subr.bf16.mxu0 0
      %962 = vmatpush1.bf16.xpose.msra.mxu0 0
      %963 = vmatprep.subr.bf16.mxu0 0
      %964 = vmatpush1.bf16.xpose.msra.mxu0 0
      %965 = vmatprep.subr.bf16.mxu0 0
      %966 = vmatpush1.bf16.xpose.msra.mxu0 0
      %967 = vmatprep.subr.bf16.mxu0 0
      %968 = vmatpush1.bf16.xpose.msra.mxu0 0
      %969 = vmatprep.subr.bf16.mxu0 0
      %970 = vmatpush1.bf16.xpose.msra.mxu0 0
      %971 = vmatprep.subr.bf16.mxu0 0
      %972 = vmatpush1.bf16.xpose.msra.mxu0 0
      %973 = vmatprep.subr.bf16.mxu0 0
      %974 = vmatpush1.bf16.xpose.msra.mxu0 0
      %975 = vmatprep.subr.bf16.mxu0 0
      %976 = vmatpush1.bf16.xpose.msra.mxu0 0
      %977 = vmatprep.subr.bf16.mxu0 0
      %978 = vmatpush1.bf16.xpose.msra.mxu0 0
      %979 = vmatprep.subr.bf16.mxu0 0
      %980 = vmatpush1.bf16.xpose.msra.mxu0 0
      %981 = vmatprep.subr.bf16.mxu0 0
      %982 = vmatpush1.bf16.xpose.msra.mxu0 0
      %983 = vmatprep.subr.bf16.mxu0 0
      %984 = vmatpush1.bf16.xpose.msra.mxu0 0
      %985 = vmatprep.subr.bf16.mxu0 0
      %986 = vmatpush1.bf16.xpose.msra.mxu0 0
      %987 = vmatprep.mubr.bf16.mxu0 0
      %988 = vmatmul.mubr.bf16.gmra.mrb[0].mxu0 %v950
      %v989 = vpop.f32.mrb[0].mxu0
      %v990 = vadd.f32 %v697, %v989
      %v991 = vpop.f32.mrb[0].mxu0
      %v992 = vpop.f32.mrb[0].mxu0
      %v993 = vadd.f32 %v698, %v992
      %v994 = vpop.f32.mrb[0].mxu0
      %995 = vdwg.mxu0
      %v996 = vsel %vm706, %v990, -inf
      %997 = vmax.xlane.f32.xlu0 %v996
      %v998 = vpop.xlane.xlu0 %997
      %v999 = vsel %vm706, %v993, -inf
      %1000 = vmax.xlane.f32.xlu0 %v999
      %v1001 = vpop.xlane.xlu0 %1000
      %v1002 = vsub.f32 %v990, %v998
      %v1003 = vsub.f32 %v993, %v1001
      %v1004 = vmul.f32 %v1002, 1.442695
      %v1005 = vpow.pop %v1004
      %v1006 = vmul.f32 %v1003, 1.442695
      %v1007 = vpow.pop %v1006
      %v1008 = vsel %vm706, %v1005, 0.0
      %1009 = vadd.xlane.f32.xlu0 %v1008
      %v1010 = vpop.xlane.xlu0 %1009
      %v1011 = vsel %vm706, %v1007, 0.0
      %1012 = vadd.xlane.f32.xlu0 %v1011
      %v1013 = vpop.xlane.xlu0 %1012
      %v1014 = vrcp.pop %v1010
      %v1015 = vrcp.pop %v1013
      %v1016 = vmul.f32 %v1005, %v1014
      %v1017 = vmul.f32 %v1007, %v1015
      %v1018 = vpack.c.bf16 %v1017, %v1016
      %1019 = vrot.lane.b32.xlu0 %v777, 96
      %v1020 = vpop.permute.xlu0 %1019
      %v1023 = vsel %vm706, %v1018, 0
      %1025 = vmatprep.subr.bf16.mxu0 0
      %1026 = vmatpush1.bf16.msra.mxu0 %v1020
      %1027 = vmatprep.subr.bf16.mxu0 0
      %1028 = vmatpush1.bf16.msra.mxu0 0
      %1029 = vmatprep.subr.bf16.mxu0 0
      %1030 = vmatpush1.bf16.msra.mxu0 0
      %1031 = vmatprep.subr.bf16.mxu0 0
      %1032 = vmatpush1.bf16.msra.mxu0 0
      %1033 = vmatprep.subr.bf16.mxu0 0
      %1034 = vmatpush1.bf16.msra.mxu0 0
      %1035 = vmatprep.subr.bf16.mxu0 0
      %1036 = vmatpush1.bf16.msra.mxu0 0
      %1037 = vmatprep.subr.bf16.mxu0 0
      %1038 = vmatpush1.bf16.msra.mxu0 0
      %1039 = vmatprep.subr.bf16.mxu0 0
      %1040 = vmatpush1.bf16.msra.mxu0 0
      %1041 = vmatprep.subr.bf16.mxu0 0
      %1042 = vmatpush1.bf16.msra.mxu0 0
      %1043 = vmatprep.subr.bf16.mxu0 0
      %1044 = vmatpush1.bf16.msra.mxu0 0
      %1045 = vmatprep.subr.bf16.mxu0 0
      %1046 = vmatpush1.bf16.msra.mxu0 0
      %1047 = vmatprep.subr.bf16.mxu0 0
      %1048 = vmatpush1.bf16.msra.mxu0 0
      %1049 = vmatprep.subr.bf16.mxu0 0
      %1050 = vmatpush1.bf16.msra.mxu0 0
      %1051 = vmatprep.subr.bf16.mxu0 0
      %1052 = vmatpush1.bf16.msra.mxu0 0
      %1053 = vmatprep.subr.bf16.mxu0 0
      %1054 = vmatpush1.bf16.msra.mxu0 0
      %1055 = vmatprep.subr.bf16.mxu0 0
      %1056 = vmatpush1.bf16.msra.mxu0 0
      %1057 = vmatprep.mubr.bf16.mxu0 0
      %1058 = vmatmul.mubr.bf16.gmra.mrb[0].mxu0 %v1023
      %v1059 = vpop.f32.mrb[0].mxu0
      %v1060 = vadd.f32 0.0, %v1059
      %v1061 = vpop.f32.mrb[0].mxu0
      %v1062 = vpop.f32.mrb[0].mxu0
      %v1063 = vadd.f32 0.0, %v1062
      %v1064 = vpop.f32.mrb[0].mxu0
      %1065 = vdwg.mxu0
      %1066 = vrot.lane.b32.xlu0 %v701, 80
      %v1067 = vpop.permute.xlu0 %1066
      %1068 = vrot.lane.b32.xlu0 %v702, 16
      %v1069 = vpop.permute.xlu0 %1068
      %v1071 = vsel %vm706, %v1067, 0
      %v1074 = vsel %vm706, %v1069, 0
      %1076 = vmatprep.subr.bf16.mxu0 0
      %1077 = vmatpush1.bf16.xpose.msra.mxu0 %v1074
      %1078 = vmatprep.subr.bf16.mxu0 0
      %1079 = vmatpush1.bf16.xpose.msra.mxu0 0
      %1080 = vmatprep.subr.bf16.mxu0 0
      %1081 = vmatpush1.bf16.xpose.msra.mxu0 0
      %1082 = vmatprep.subr.bf16.mxu0 0
      %1083 = vmatpush1.bf16.xpose.msra.mxu0 0
      %1084 = vmatprep.subr.bf16.mxu0 0
      %1085 = vmatpush1.bf16.xpose.msra.mxu0 0
      %1086 = vmatprep.subr.bf16.mxu0 0
      %1087 = vmatpush1.bf16.xpose.msra.mxu0 0
      %1088 = vmatprep.subr.bf16.mxu0 0
      %1089 = vmatpush1.bf16.xpose.msra.mxu0 0
      %1090 = vmatprep.subr.bf16.mxu0 0
      %1091 = vmatpush1.bf16.xpose.msra.mxu0 0
      %1092 = vmatprep.subr.bf16.mxu0 0
      %1093 = vmatpush1.bf16.xpose.msra.mxu0 0
      %1094 = vmatprep.subr.bf16.mxu0 0
      %1095 = vmatpush1.bf16.xpose.msra.mxu0 0
      %1096 = vmatprep.subr.bf16.mxu0 0
      %1097 = vmatpush1.bf16.xpose.msra.mxu0 0
      %1098 = vmatprep.subr.bf16.mxu0 0
      %1099 = vmatpush1.bf16.xpose.msra.mxu0 0
      %1100 = vmatprep.subr.bf16.mxu0 0
      %1101 = vmatpush1.bf16.xpose.msra.mxu0 0
      %1102 = vmatprep.subr.bf16.mxu0 0
      %1103 = vmatpush1.bf16.xpose.msra.mxu0 0
      %1104 = vmatprep.subr.bf16.mxu0 0
      %1105 = vmatpush1.bf16.xpose.msra.mxu0 0
      %1106 = vmatprep.subr.bf16.mxu0 0
      %1107 = vmatpush1.bf16.xpose.msra.mxu0 0
      %1108 = vmatprep.mubr.bf16.mxu0 0
      %1109 = vmatmul.mubr.bf16.gmra.mrb[0].mxu0 %v1071
      %v1110 = vpop.f32.mrb[0].mxu0
      %v1111 = vadd.f32 %v699, %v1110
      %v1112 = vpop.f32.mrb[0].mxu0
      %v1113 = vpop.f32.mrb[0].mxu0
      %v1114 = vadd.f32 %v700, %v1113
      %v1115 = vpop.f32.mrb[0].mxu0
      %1116 = vdwg.mxu0
      %v1117 = vsel %vm706, %v1111, -inf
      %1118 = vmax.xlane.f32.xlu0 %v1117
      %v1119 = vpop.xlane.xlu0 %1118
      %v1120 = vsel %vm706, %v1114, -inf
      %1121 = vmax.xlane.f32.xlu0 %v1120
      %v1122 = vpop.xlane.xlu0 %1121
      %v1123 = vsub.f32 %v1111, %v1119
      %v1124 = vsub.f32 %v1114, %v1122
      %v1125 = vmul.f32 %v1123, 1.442695
      %v1126 = vpow.pop %v1125
      %v1127 = vmul.f32 %v1124, 1.442695
      %v1128 = vpow.pop %v1127
      %v1129 = vsel %vm706, %v1126, 0.0
      %1130 = vadd.xlane.f32.xlu0 %v1129
      %v1131 = vpop.xlane.xlu0 %1130
      %v1132 = vsel %vm706, %v1128, 0.0
      %1133 = vadd.xlane.f32.xlu0 %v1132
      %v1134 = vpop.xlane.xlu0 %1133
      %v1135 = vrcp.pop %v1131
      %v1136 = vrcp.pop %v1134
      %v1137 = vmul.f32 %v1126, %v1135
      %v1138 = vmul.f32 %v1128, %v1136
      %v1139 = vpack.c.bf16 %v1138, %v1137
      %1140 = vrot.lane.b32.xlu0 %v777, 80
      %v1141 = vpop.permute.xlu0 %1140
      %v1144 = vsel %vm706, %v1139, 0
      %1146 = vmatprep.subr.bf16.mxu0 0
      %1147 = vmatpush1.bf16.msra.mxu0 %v1141
      %1148 = vmatprep.subr.bf16.mxu0 0
      %1149 = vmatpush1.bf16.msra.mxu0 0
      %1150 = vmatprep.subr.bf16.mxu0 0
      %1151 = vmatpush1.bf16.msra.mxu0 0
      %1152 = vmatprep.subr.bf16.mxu0 0
      %1153 = vmatpush1.bf16.msra.mxu0 0
      %1154 = vmatprep.subr.bf16.mxu0 0
      %1155 = vmatpush1.bf16.msra.mxu0 0
      %1156 = vmatprep.subr.bf16.mxu0 0
      %1157 = vmatpush1.bf16.msra.mxu0 0
      %1158 = vmatprep.subr.bf16.mxu0 0
      %1159 = vmatpush1.bf16.msra.mxu0 0
      %1160 = vmatprep.subr.bf16.mxu0 0
      %1161 = vmatpush1.bf16.msra.mxu0 0
      %1162 = vmatprep.subr.bf16.mxu0 0
      %1163 = vmatpush1.bf16.msra.mxu0 0
      %1164 = vmatprep.subr.bf16.mxu0 0
      %1165 = vmatpush1.bf16.msra.mxu0 0
      %1166 = vmatprep.subr.bf16.mxu0 0
      %1167 = vmatpush1.bf16.msra.mxu0 0
      %1168 = vmatprep.subr.bf16.mxu0 0
      %1169 = vmatpush1.bf16.msra.mxu0 0
      %1170 = vmatprep.subr.bf16.mxu0 0
      %1171 = vmatpush1.bf16.msra.mxu0 0
      %1172 = vmatprep.subr.bf16.mxu0 0
      %1173 = vmatpush1.bf16.msra.mxu0 0
      %1174 = vmatprep.subr.bf16.mxu0 0
      %1175 = vmatpush1.bf16.msra.mxu0 0
      %1176 = vmatprep.subr.bf16.mxu0 0
      %1177 = vmatpush1.bf16.msra.mxu0 0
      %1178 = vmatprep.mubr.bf16.mxu0 0
      %1179 = vmatmul.mubr.bf16.gmra.mrb[0].mxu0 %v1144
      %v1180 = vpop.f32.mrb[0].mxu0
      %v1181 = vadd.f32 0.0, %v1180
      %v1182 = vpop.f32.mrb[0].mxu0
      %v1183 = vpop.f32.mrb[0].mxu0
      %v1184 = vadd.f32 0.0, %v1183
      %v1185 = vpop.f32.mrb[0].mxu0
      %1186 = vdwg.mxu0
      %1189 = vrot.lane.b32.xlu0 %v939, 16
      %v1190 = vpop.permute.xlu0 %1189
      %1191 = vrot.lane.b32.xlu0 %v942, 16
      %v1192 = vpop.permute.xlu0 %1191
      %1197 = vrot.lane.b32.xlu0 %v1060, 32
      %v1198 = vpop.permute.xlu0 %1197
      %1199 = vrot.lane.b32.xlu0 %v1063, 32
      %v1200 = vpop.permute.xlu0 %1199
      %1205 = vrot.lane.b32.xlu0 %v1181, 48
      %v1206 = vpop.permute.xlu0 %1205
      %1207 = vrot.lane.b32.xlu0 %v1184, 48
      %v1208 = vpop.permute.xlu0 %1207
      %v1211 = vsel %vm706, %v816, %v1190
      %v1212 = vsel %vm706, %v819, %v1192
      %vm1213 = vcmask 261120
      %v1214 = vsel %vm1213, %v1211, %v1198
      %v1215 = vsel %vm1213, %v1212, %v1200
      %vm1216 = vcmask 392192
      %v1217 = vsel %vm1216, %v1214, %v1206
      %v1218 = vsel %vm1216, %v1215, %v1208
      %v1219 = vld [vmem:[%s6] sm:$0xf]
      %v1220 = vld [vmem:[%s6 + $0x4] sm:$0xf]
      %v1221 = vld [vmem:[%s6 + $0x8] sm:$0xf]
      %v1222 = vld [vmem:[%s6 + $0xc] sm:$0xf]
      %v1223 = vld [vmem:[%s6 + $0x10] sm:$0xf]
      %v1224 = vld [vmem:[%s6 + $0x14] sm:$0xf]
      %v1225 = vld [vmem:[%s6 + $0x18] sm:$0xf]
      %v1226 = vld [vmem:[%s6 + $0x1c] sm:$0xf]
      %v1227 = vpack.c.bf16 %v1218, %v1217
      %v1236 = vunpack.c.l.b16 %v1219
      %v1237 = vunpack.c.l.b16 %v1220
      %v1238 = vunpack.c.l.b16 %v1221
      %v1239 = vunpack.c.l.b16 %v1222
      %v1240 = vunpack.c.l.b16 %v1223
      %v1241 = vunpack.c.l.b16 %v1224
      %v1242 = vunpack.c.l.b16 %v1225
      %v1243 = vunpack.c.l.b16 %v1226
      %v1244 = vpack.c.b16 %v1237, %v1236
      %v1245 = vpack.c.b16 %v1239, %v1238
      %v1246 = vpack.c.b16 %v1241, %v1240
      %v1247 = vpack.c.b16 %v1243, %v1242
      %v1253 = vsel %vm532, %v1227, 0
      %1255 = vmatprep.subr.bf16.mxu0 0
      %1256 = vmatpush1.bf16.msra.mxu0 %v1244
      %1257 = vmatprep.subr.bf16.mxu0 0
      %1258 = vmatpush1.bf16.msra.mxu0 %v1245
      %1259 = vmatprep.subr.bf16.mxu0 0
      %1260 = vmatpush1.bf16.msra.mxu0 %v1246
      %1261 = vmatprep.subr.bf16.mxu0 0
      %1262 = vmatpush1.bf16.msra.mxu0 %v1247
      %1263 = vmatprep.subr.bf16.mxu0 0
      %1264 = vmatpush1.bf16.msra.mxu0 0
      %1265 = vmatprep.subr.bf16.mxu0 0
      %1266 = vmatpush1.bf16.msra.mxu0 0
      %1267 = vmatprep.subr.bf16.mxu0 0
      %1268 = vmatpush1.bf16.msra.mxu0 0
      %1269 = vmatprep.subr.bf16.mxu0 0
      %1270 = vmatpush1.bf16.msra.mxu0 0
      %1271 = vmatprep.subr.bf16.mxu0 0
      %1272 = vmatpush1.bf16.msra.mxu0 0
      %1273 = vmatprep.subr.bf16.mxu0 0
      %1274 = vmatpush1.bf16.msra.mxu0 0
      %1275 = vmatprep.subr.bf16.mxu0 0
      %1276 = vmatpush1.bf16.msra.mxu0 0
      %1277 = vmatprep.subr.bf16.mxu0 0
      %1278 = vmatpush1.bf16.msra.mxu0 0
      %1279 = vmatprep.subr.bf16.mxu0 0
      %1280 = vmatpush1.bf16.msra.mxu0 0
      %1281 = vmatprep.subr.bf16.mxu0 0
      %1282 = vmatpush1.bf16.msra.mxu0 0
      %1283 = vmatprep.subr.bf16.mxu0 0
      %1284 = vmatpush1.bf16.msra.mxu0 0
      %1285 = vmatprep.subr.bf16.mxu0 0
      %1286 = vmatpush1.bf16.msra.mxu0 0
      %1287 = vmatprep.mubr.bf16.mxu0 0
      %1288 = vmatmul.mubr.bf16.gmra.mrb[0].mxu0 %v1253
      %v1289 = vpop.f32.mrb[0].mxu0
      %v1290 = vadd.f32 0.0, %v1289
      %v1291 = vpop.f32.mrb[0].mxu0
      %v1292 = vpop.f32.mrb[0].mxu0
      %v1293 = vadd.f32 0.0, %v1292
      %v1294 = vpop.f32.mrb[0].mxu0
      %1295 = vdwg.mxu0
      %v1296 = vadd.f32 %v528, %v1290
      %v1297 = vadd.f32 %v529, %v1293
      %v1298 = vld [vmem:[%s7] sm:$0x1]
      %v1300 = vlaneseq
      %v1301 = vshrl.u32 %v1300, 7
      %v1302 = vsub.s32 0, %v1301
      %v1303 = vrot.slane %v1298, %v1302
      %v1305 = vadd.f32 %v1296, %v1303
      %v1306 = vadd.f32 %v1297, %v1303
      %v1307 = vld [vmem:[%s8] sm:$0x1]
      %v1308 = vld [vmem:[%s9] sm:$0x1]
      %v1309 = vsel %vm532, %v1305, 0.0
      %1310 = vadd.xlane.f32.xlu0 %v1309
      %v1311 = vpop.xlane.xlu0 %1310
      %v1312 = vsel %vm532, %v1306, 0.0
      %1313 = vadd.xlane.f32.xlu0 %v1312
      %v1314 = vpop.xlane.xlu0 %1313
      %v1315 = vmul.f32 %v1311, %v539
      %v1316 = vmul.f32 %v1314, %v539
      %v1317 = vsub.f32 %v1305, %v1315
      %v1318 = vsub.f32 %v1306, %v1316
      %v1319 = vmul.f32 %v1317, %v1317
      %v1320 = vmul.f32 %v1318, %v1318
      %v1321 = vsel %vm532, %v1319, 0.0
      %1322 = vadd.xlane.f32.xlu0 %v1321
      %v1323 = vpop.xlane.xlu0 %1322
      %v1324 = vsel %vm532, %v1320, 0.0
      %1325 = vadd.xlane.f32.xlu0 %v1324
      %v1326 = vpop.xlane.xlu0 %1325
      %v1327 = vmul.f32 %v1323, %v539
      %v1328 = vmul.f32 %v1326, %v539
      %v1329 = vadd.f32 %v1327, 1e-05
      %v1330 = vadd.f32 %v1328, 1e-05
      %v1331 = vrsqrt.pop %v1329
      %v1332 = vrsqrt.pop %v1330
      %v1333 = vmul.f32 %v1317, %v1331
      %v1334 = vmul.f32 %v1318, %v1332
      %v1336 = vlaneseq
      %v1337 = vshrl.u32 %v1336, 7
      %v1338 = vsub.s32 0, %v1337
      %v1339 = vrot.slane %v1307, %v1338
      %v1341 = vmul.f32 %v1333, %v1339
      %v1342 = vmul.f32 %v1334, %v1339
      %v1344 = vlaneseq
      %v1345 = vshrl.u32 %v1344, 7
      %v1346 = vsub.s32 0, %v1345
      %v1347 = vrot.slane %v1308, %v1346
      %v1349 = vadd.f32 %v1341, %v1347
      %v1350 = vadd.f32 %v1342, %v1347
      %v1351 = vld [vmem:[%s10] sm:$0xff]
      %v1352 = vld [vmem:[%s10 + $0x8] sm:$0xff]
      %v1353 = vld [vmem:[%s10 + $0x10] sm:$0xff]
      %v1354 = vld [vmem:[%s10 + $0x18] sm:$0xff]
      %v1355 = vld [vmem:[%s10 + $0x20] sm:$0xff]
      %v1356 = vld [vmem:[%s10 + $0x28] sm:$0xff]
      %v1357 = vld [vmem:[%s10 + $0x30] sm:$0xff]
      %v1358 = vld [vmem:[%s10 + $0x38] sm:$0xff]
      %v1359 = vpack.c.bf16 %v1350, %v1349
      %v1360 = vld [vmem:[%s11] sm:$0x3]
      %v1362 = vlaneseq
      %v1363 = vshrl.u32 %v1362, 7
      %v1364 = vsub.s32 0, %v1363
      %v1365 = vrot.slane %v1360, %v1364
      %v1366 = vlaneseq
      %v1367 = vshrl.u32 %v1366, 7
      %v1368 = vsub.s32 1, %v1367
      %v1369 = vrot.slane %v1360, %v1368
      %v1380 = vunpack.c.l.b16 %v1351
      %v1381 = vunpack.c.h.b16 %v1351
      %v1382 = vunpack.c.l.b16 %v1352
      %v1383 = vunpack.c.h.b16 %v1352
      %v1384 = vunpack.c.l.b16 %v1353
      %v1385 = vunpack.c.h.b16 %v1353
      %v1386 = vunpack.c.l.b16 %v1354
      %v1387 = vunpack.c.h.b16 %v1354
      %v1388 = vunpack.c.l.b16 %v1355
      %v1389 = vunpack.c.h.b16 %v1355
      %v1390 = vunpack.c.l.b16 %v1356
      %v1391 = vunpack.c.h.b16 %v1356
      %v1392 = vunpack.c.l.b16 %v1357
      %v1393 = vunpack.c.h.b16 %v1357
      %v1394 = vunpack.c.l.b16 %v1358
      %v1395 = vunpack.c.h.b16 %v1358
      %v1396 = vpack.c.b16 %v1382, %v1380
      %v1397 = vpack.c.b16 %v1383, %v1381
      %v1398 = vpack.c.b16 %v1386, %v1384
      %v1399 = vpack.c.b16 %v1387, %v1385
      %v1400 = vpack.c.b16 %v1390, %v1388
      %v1401 = vpack.c.b16 %v1391, %v1389
      %v1402 = vpack.c.b16 %v1394, %v1392
      %v1403 = vpack.c.b16 %v1395, %v1393
      %v1413 = vsel %vm532, %v1359, 0
      %1415 = vmatprep.subr.bf16.mxu0 %v1397
      %1416 = vmatpush1.bf16.msra.mxu0 %v1396
      %1417 = vmatprep.subr.bf16.mxu0 %v1399
      %1418 = vmatpush1.bf16.msra.mxu0 %v1398
      %1419 = vmatprep.subr.bf16.mxu0 %v1401
      %1420 = vmatpush1.bf16.msra.mxu0 %v1400
      %1421 = vmatprep.subr.bf16.mxu0 %v1403
      %1422 = vmatpush1.bf16.msra.mxu0 %v1402
      %1423 = vmatprep.subr.bf16.mxu0 0
      %1424 = vmatpush1.bf16.msra.mxu0 0
      %1425 = vmatprep.subr.bf16.mxu0 0
      %1426 = vmatpush1.bf16.msra.mxu0 0
      %1427 = vmatprep.subr.bf16.mxu0 0
      %1428 = vmatpush1.bf16.msra.mxu0 0
      %1429 = vmatprep.subr.bf16.mxu0 0
      %1430 = vmatpush1.bf16.msra.mxu0 0
      %1431 = vmatprep.subr.bf16.mxu0 0
      %1432 = vmatpush1.bf16.msra.mxu0 0
      %1433 = vmatprep.subr.bf16.mxu0 0
      %1434 = vmatpush1.bf16.msra.mxu0 0
      %1435 = vmatprep.subr.bf16.mxu0 0
      %1436 = vmatpush1.bf16.msra.mxu0 0
      %1437 = vmatprep.subr.bf16.mxu0 0
      %1438 = vmatpush1.bf16.msra.mxu0 0
      %1439 = vmatprep.subr.bf16.mxu0 0
      %1440 = vmatpush1.bf16.msra.mxu0 0
      %1441 = vmatprep.subr.bf16.mxu0 0
      %1442 = vmatpush1.bf16.msra.mxu0 0
      %1443 = vmatprep.subr.bf16.mxu0 0
      %1444 = vmatpush1.bf16.msra.mxu0 0
      %1445 = vmatprep.subr.bf16.mxu0 0
      %1446 = vmatpush1.bf16.msra.mxu0 0
      %1447 = vmatprep.mubr.bf16.mxu0 0
      %1448 = vmatmul.mubr.bf16.gmra.mrb[0].mxu0 %v1413
      %v1449 = vpop.f32.mrb[0].mxu0
      %v1450 = vadd.f32 %v1365, %v1449
      %v1451 = vpop.f32.mrb[0].mxu0
      %v1452 = vadd.f32 %v1369, %v1451
      %v1453 = vpop.f32.mrb[0].mxu0
      %v1454 = vadd.f32 %v1365, %v1453
      %v1455 = vpop.f32.mrb[0].mxu0
      %v1456 = vadd.f32 %v1369, %v1455
      %1457 = vdwg.mxu0
      %v1458 = vmul.f32 %v1450, 0.5
      %v1459 = vmul.f32 %v1452, 0.5
      %v1460 = vmul.f32 %v1454, 0.5
      %v1461 = vmul.f32 %v1456, 0.5
      %v1462 = vmul.f32 %v1450, 0.044715
      %v1463 = vmul.f32 %v1452, 0.044715
      %v1464 = vmul.f32 %v1454, 0.044715
      %v1465 = vmul.f32 %v1456, 0.044715
      %v1466 = vmul.f32 %v1462, %v1450
      %v1467 = vmul.f32 %v1463, %v1452
      %v1468 = vmul.f32 %v1464, %v1454
      %v1469 = vmul.f32 %v1465, %v1456
      %v1470 = vmul.f32 %v1466, %v1450
      %v1471 = vmul.f32 %v1467, %v1452
      %v1472 = vmul.f32 %v1468, %v1454
      %v1473 = vmul.f32 %v1469, %v1456
      %v1474 = vadd.f32 %v1450, %v1470
      %v1475 = vadd.f32 %v1452, %v1471
      %v1476 = vadd.f32 %v1454, %v1472
      %v1477 = vadd.f32 %v1456, %v1473
      %v1478 = vmul.f32 %v1474, 0.7978846
      %v1479 = vmul.f32 %v1475, 0.7978846
      %v1480 = vmul.f32 %v1476, 0.7978846
      %v1481 = vmul.f32 %v1477, 0.7978846
      %v1482 = vtanh.pop %v1478
      %v1483 = vtanh.pop %v1479
      %v1484 = vtanh.pop %v1480
      %v1485 = vtanh.pop %v1481
      %v1486 = vadd.f32 %v1482, 1.0
      %v1487 = vadd.f32 %v1483, 1.0
      %v1488 = vadd.f32 %v1484, 1.0
      %v1489 = vadd.f32 %v1485, 1.0
      %v1490 = vmul.f32 %v1458, %v1486
      %v1491 = vmul.f32 %v1459, %v1487
      %v1492 = vmul.f32 %v1460, %v1488
      %v1493 = vmul.f32 %v1461, %v1489
      %v1494 = vld [vmem:[%s12] sm:$0xf]
      %v1495 = vld [vmem:[%s12 + $0x4] sm:$0xf]
      %v1496 = vld [vmem:[%s12 + $0x8] sm:$0xf]
      %v1497 = vld [vmem:[%s12 + $0xc] sm:$0xf]
      %v1498 = vld [vmem:[%s12 + $0x10] sm:$0xf]
      %v1499 = vld [vmem:[%s12 + $0x14] sm:$0xf]
      %v1500 = vld [vmem:[%s12 + $0x18] sm:$0xf]
      %v1501 = vld [vmem:[%s12 + $0x1c] sm:$0xf]
      %v1502 = vld [vmem:[%s12 + $0x20] sm:$0xf]
      %v1503 = vld [vmem:[%s12 + $0x24] sm:$0xf]
      %v1504 = vld [vmem:[%s12 + $0x28] sm:$0xf]
      %v1505 = vld [vmem:[%s12 + $0x2c] sm:$0xf]
      %v1506 = vld [vmem:[%s12 + $0x30] sm:$0xf]
      %v1507 = vld [vmem:[%s12 + $0x34] sm:$0xf]
      %v1508 = vld [vmem:[%s12 + $0x38] sm:$0xf]
      %v1509 = vld [vmem:[%s12 + $0x3c] sm:$0xf]
      %v1510 = vld [vmem:[%s12 + $0x40] sm:$0xf]
      %v1511 = vld [vmem:[%s12 + $0x44] sm:$0xf]
      %v1512 = vld [vmem:[%s12 + $0x48] sm:$0xf]
      %v1513 = vld [vmem:[%s12 + $0x4c] sm:$0xf]
      %v1514 = vld [vmem:[%s12 + $0x50] sm:$0xf]
      %v1515 = vld [vmem:[%s12 + $0x54] sm:$0xf]
      %v1516 = vld [vmem:[%s12 + $0x58] sm:$0xf]
      %v1517 = vld [vmem:[%s12 + $0x5c] sm:$0xf]
      %v1518 = vld [vmem:[%s12 + $0x60] sm:$0xf]
      %v1519 = vld [vmem:[%s12 + $0x64] sm:$0xf]
      %v1520 = vld [vmem:[%s12 + $0x68] sm:$0xf]
      %v1521 = vld [vmem:[%s12 + $0x6c] sm:$0xf]
      %v1522 = vld [vmem:[%s12 + $0x70] sm:$0xf]
      %v1523 = vld [vmem:[%s12 + $0x74] sm:$0xf]
      %v1524 = vld [vmem:[%s12 + $0x78] sm:$0xf]
      %v1525 = vld [vmem:[%s12 + $0x7c] sm:$0xf]
      %v1526 = vpack.c.bf16 %v1492, %v1490
      %v1527 = vpack.c.bf16 %v1493, %v1491
      %v1528 = vld [vmem:[%s13] sm:$0x1]
      %v1530 = vlaneseq
      %v1531 = vshrl.u32 %v1530, 7
      %v1532 = vsub.s32 0, %v1531
      %v1533 = vrot.slane %v1528, %v1532
      %v1567 = vunpack.c.l.b16 %v1494
      %v1568 = vunpack.c.l.b16 %v1495
      %v1569 = vunpack.c.l.b16 %v1496
      %v1570 = vunpack.c.l.b16 %v1497
      %v1571 = vunpack.c.l.b16 %v1498
      %v1572 = vunpack.c.l.b16 %v1499
      %v1573 = vunpack.c.l.b16 %v1500
      %v1574 = vunpack.c.l.b16 %v1501
      %v1575 = vunpack.c.l.b16 %v1502
      %v1576 = vunpack.c.l.b16 %v1503
      %v1577 = vunpack.c.l.b16 %v1504
      %v1578 = vunpack.c.l.b16 %v1505
      %v1579 = vunpack.c.l.b16 %v1506
      %v1580 = vunpack.c.l.b16 %v1507
      %v1581 = vunpack.c.l.b16 %v1508
      %v1582 = vunpack.c.l.b16 %v1509
      %v1583 = vunpack.c.l.b16 %v1510
      %v1584 = vunpack.c.l.b16 %v1511
      %v1585 = vunpack.c.l.b16 %v1512
      %v1586 = vunpack.c.l.b16 %v1513
      %v1587 = vunpack.c.l.b16 %v1514
      %v1588 = vunpack.c.l.b16 %v1515
      %v1589 = vunpack.c.l.b16 %v1516
      %v1590 = vunpack.c.l.b16 %v1517
      %v1591 = vunpack.c.l.b16 %v1518
      %v1592 = vunpack.c.l.b16 %v1519
      %v1593 = vunpack.c.l.b16 %v1520
      %v1594 = vunpack.c.l.b16 %v1521
      %v1595 = vunpack.c.l.b16 %v1522
      %v1596 = vunpack.c.l.b16 %v1523
      %v1597 = vunpack.c.l.b16 %v1524
      %v1598 = vunpack.c.l.b16 %v1525
      %v1599 = vpack.c.b16 %v1568, %v1567
      %v1600 = vpack.c.b16 %v1570, %v1569
      %v1601 = vpack.c.b16 %v1572, %v1571
      %v1602 = vpack.c.b16 %v1574, %v1573
      %v1603 = vpack.c.b16 %v1576, %v1575
      %v1604 = vpack.c.b16 %v1578, %v1577
      %v1605 = vpack.c.b16 %v1580, %v1579
      %v1606 = vpack.c.b16 %v1582, %v1581
      %v1607 = vpack.c.b16 %v1584, %v1583
      %v1608 = vpack.c.b16 %v1586, %v1585
      %v1609 = vpack.c.b16 %v1588, %v1587
      %v1610 = vpack.c.b16 %v1590, %v1589
      %v1611 = vpack.c.b16 %v1592, %v1591
      %v1612 = vpack.c.b16 %v1594, %v1593
      %v1613 = vpack.c.b16 %v1596, %v1595
      %v1614 = vpack.c.b16 %v1598, %v1597
      %1631 = vmatprep.subr.bf16.mxu0 0
      %1632 = vmatpush1.bf16.msra.mxu0 %v1599
      %1633 = vmatprep.subr.bf16.mxu0 0
      %1634 = vmatpush1.bf16.msra.mxu0 %v1600
      %1635 = vmatprep.subr.bf16.mxu0 0
      %1636 = vmatpush1.bf16.msra.mxu0 %v1601
      %1637 = vmatprep.subr.bf16.mxu0 0
      %1638 = vmatpush1.bf16.msra.mxu0 %v1602
      %1639 = vmatprep.subr.bf16.mxu0 0
      %1640 = vmatpush1.bf16.msra.mxu0 %v1603
      %1641 = vmatprep.subr.bf16.mxu0 0
      %1642 = vmatpush1.bf16.msra.mxu0 %v1604
      %1643 = vmatprep.subr.bf16.mxu0 0
      %1644 = vmatpush1.bf16.msra.mxu0 %v1605
      %1645 = vmatprep.subr.bf16.mxu0 0
      %1646 = vmatpush1.bf16.msra.mxu0 %v1606
      %1647 = vmatprep.subr.bf16.mxu0 0
      %1648 = vmatpush1.bf16.msra.mxu0 %v1607
      %1649 = vmatprep.subr.bf16.mxu0 0
      %1650 = vmatpush1.bf16.msra.mxu0 %v1608
      %1651 = vmatprep.subr.bf16.mxu0 0
      %1652 = vmatpush1.bf16.msra.mxu0 %v1609
      %1653 = vmatprep.subr.bf16.mxu0 0
      %1654 = vmatpush1.bf16.msra.mxu0 %v1610
      %1655 = vmatprep.subr.bf16.mxu0 0
      %1656 = vmatpush1.bf16.msra.mxu0 %v1611
      %1657 = vmatprep.subr.bf16.mxu0 0
      %1658 = vmatpush1.bf16.msra.mxu0 %v1612
      %1659 = vmatprep.subr.bf16.mxu0 0
      %1660 = vmatpush1.bf16.msra.mxu0 %v1613
      %1661 = vmatprep.subr.bf16.mxu0 0
      %1662 = vmatpush1.bf16.msra.mxu0 %v1614
      %1663 = vmatprep.mubr.bf16.mxu0 %v1527
      %1664 = vmatmul.mubr.bf16.gmra.mrb[0].mxu0 %v1526
      %v1665 = vpop.f32.mrb[0].mxu0
      %v1666 = vadd.f32 %v1533, %v1665
      %v1667 = vpop.f32.mrb[0].mxu0
      %v1668 = vpop.f32.mrb[0].mxu0
      %v1669 = vadd.f32 %v1533, %v1668
      %v1670 = vpop.f32.mrb[0].mxu0
      %1671 = vdwg.mxu0
      %v1672 = vadd.f32 %v1305, %v1666
      %v1673 = vadd.f32 %v1306, %v1669
      %1674 = vst.msk [vmem:[%s525] sm:$0xff] %vm532, %v1672
      %1675 = vst.msk [vmem:[%s525 + $0x8] sm:$0xff] %vm532, %v1673
      %s1676 = smul.u32 2, %s30
      %p1677 = scmp.lt.s32.totalorder %s29, 1
      %s1678 = scalar_select %p1677, %s29, 1
      %p1679 = scmp.lt.s32.totalorder %s1676, 1
      %s1680 = scalar_select %p1679, %s1676, 1
      %s1681 = smul.addr %s1678, 2
      %s1682 = sadd.s32 %s1680, %s1681
      %s1683 = smul.addr %s1682, 8
      %s1684 = scalar_lea.vmem %s14, %s1683
      // Predicated region
      $region77: #{ramplus_forward.15} parent=75 // pred_check
        %p1685 = pneg %p363
      $region78: #{ramplus_forward.15} parent=75 // pred_check_branch
        %1687 = sbr.rel (%p1685) target = $region80
      $region79: #{ramplus_forward.15} parent=75 // pred_region
        %s1688 = smul.u32 2, %s30
      $region80: #{ramplus_forward.15} parent=75 // pred_fallthru
        _
    $region76: #{ramplus_forward.15} parent=5 // pred_fallthru
      _
    %p1689 = scmp.le.s32.totalorder 2, %s20
    // Predicated region
    $region81: #{ramplus_forward.15} parent=5 // pred_check
      %p1690 = pneg %p1689
    $region82: #{ramplus_forward.15} parent=5 // pred_check_branch
      %1692 = sbr.rel (%p1690) target = $region84
    $region83: #{ramplus_forward.15} parent=5 // pred_region
      %s1693 = ssub.s32 %s20, 2
      // Predicated region
      $region85: #{ramplus_forward.15} parent=83 // pred_check
        %p1694 = pneg %p369
      $region86: #{ramplus_forward.15} parent=83 // pred_check_branch
        %1696 = sbr.rel (%p1694) target = $region88
      $region87: #{ramplus_forward.15} parent=83 // pred_region
        %s1697 = smul.u32 2, %s32
        %p1698 = scmp.lt.s32.totalorder %s31, 1
        %s1699 = scalar_select %p1698, %s31, 1
        %p1700 = scmp.lt.s32.totalorder %s1697, 1
        %s1701 = scalar_select %p1700, %s1697, 1
        %s1702 = smul.addr %s1699, 2
        %s1703 = sadd.s32 %s1701, %s1702
        %s1704 = smul.addr %s1703, 8
        %s1705 = scalar_lea.vmem %s14, %s1704
      $region88: #{ramplus_forward.15} parent=83 // pred_fallthru
        _
    $region84: #{ramplus_forward.15} parent=5 // pred_fallthru
      _
  $region6: #{ramplus_forward.15} parent=0 // loop_footer
    %s24 = sadd.s32 1, %s20
  $region7: #{ramplus_forward.15} parent=0 // loop_footer_branch
    %19 = sbr.rel target = $region3
  $region8: #{ramplus_forward.15} parent=0 // loop_exit
    _

// kernel: ramplus_forward.21
$region0: #{ramplus_forward.21}
  #allocation0 [shape = 'u32[]', space=smem, size = 0x4, offset = 0x4, fixed_abs, tag = 'smem constant byte address 0x4 - core index']
  #allocation1 [shape = 'u32[144,128]{1,0:T(1,128)}', space=vmem, size = 0x12000, scoped, tag = 'internal scratch']
  #allocation2 [shape = 'f32[1,1]{1,0:T(1,128)S(1)}', space=vmem, size = 0x200, scoped, tag = 'scoped memory for ramplus_forward.21']
  %s0 = inlined_call_operand.vmem [shape: f32[2,16,128], index: 0, kind: input, shape index: {}]
  %s1 = inlined_call_operand.vmem [shape: bf16[1,1,128], index: 1, kind: input, shape index: {}]
  %s2 = inlined_call_operand.<no memory space> [shape: f32[1,1], index: 2, kind: input, shape index: {}]
  %s3 = inlined_call_operand.hbm [shape: f32[2,16], index: 3, kind: output, shape index: {}]
  %s4 = sld [smem:[#allocation0]]
  $region22: #{ramplus_forward.21} parent=0
    _
  %s6 = ssub.s32 1, %s4
  %s7 = scalar_select 0, %s6, %s4
  %v8 = vstv %s2
  %9 = vst [vmem:[#allocation2] sm:$0x1] %v8
  $region1: #{ramplus_forward.21} parent=0
    #allocation3 [shape = 'u8[1024]{0}', space=vmem, size = 0x400, scoped, tag = 'output window, operand 0, single buffered']
    #allocation4 [shape = 's32[1]{0}', space=sflag, size = 0x4, scoped, tag = 'scoped memory for ramplus_forward.21']
    %10 = vsyncpa [#allocation4], 0
    // Predicated region
    $region2: #{ramplus_forward.21} parent=1 // pred_check
      _
    $region3: #{ramplus_forward.21} parent=1 // pred_check_branch
      %12 = sbr.rel (0) target = $region5
    $region4: #{ramplus_forward.21} parent=1 // pred_region
      _
    $region5: #{ramplus_forward.21} parent=1 // pred_fallthru
      _
    // Predicated region
    $region6: #{ramplus_forward.21} parent=1 // pred_check
      _
    $region7: #{ramplus_forward.21} parent=1 // pred_check_branch
      %14 = sbr.rel (0) target = $region9
    $region8: #{ramplus_forward.21} parent=1 // pred_region
      _
    $region9: #{ramplus_forward.21} parent=1 // pred_fallthru
      _
    // Predicated region
    $region10: #{ramplus_forward.21} parent=1 // pred_check
      _
    $region11: #{ramplus_forward.21} parent=1 // pred_check_branch
      %16 = sbr.rel (0) target = $region13
    $region12: #{ramplus_forward.21} parent=1 // pred_region
      _
    $region13: #{ramplus_forward.21} parent=1 // pred_fallthru
      _
    %v17 = vld [vmem:[%s0] sm:$0xff]
    %v18 = vld [vmem:[%s0 + $0x8] sm:$0xff]
    %v19 = vld [vmem:[%s0 + $0x10] sm:$0xff]
    %v20 = vld [vmem:[%s0 + $0x18] sm:$0xff]
    %v21 = vld [vmem:[%s1] sm:$0x1]
    %v22 = vunpack.c.l.bf16 %v21
    %v23 = vlaneseq
    %v24 = vshrl.u32 %v23, 7
    %v25 = vsub.s32 0, %v24
    %v26 = vrot.slane %v22, %v25
    %v27 = vmul.f32 %v17, %v26
    %v28 = vmul.f32 %v18, %v26
    %v29 = vmul.f32 %v19, %v26
    %v30 = vmul.f32 %v20, %v26
    %31 = vadd.xlane.f32.xlu0 %v27
    %v32 = vpop.xlane.xlu0 %31
    %33 = vadd.xlane.f32.xlu0 %v28
    %v34 = vpop.xlane.xlu0 %33
    %35 = vadd.xlane.f32.xlu0 %v29
    %v36 = vpop.xlane.xlu0 %35
    %37 = vadd.xlane.f32.xlu0 %v30
    %v38 = vpop.xlane.xlu0 %37
    %v39 = vld [vmem:[#allocation2] sm:$0x1]
    %v41 = vlaneseq
    %v42 = vshrl.u32 %v41, 7
    %v43 = vsub.s32 0, %v42
    %v44 = vrot.slane %v39, %v43
    %45 = vset.pattern.permute.xlu0 0
    %46 = vperm.xlu0 %45, %v44
    %v47 = vpop.permute.xlu0 %46
    %v49 = vadd.f32 %v32, %v47
    %v50 = vadd.f32 %v34, %v47
    %v51 = vadd.f32 %v36, %v47
    %v52 = vadd.f32 %v38, %v47
    %v57 = vlaneseq
    %v58 = vand.u32 %v57, 127
    %v59 = vlaneseq
    %v60 = vshrl.u32 %v59, 7
    %v61 = vsub.s32 %v58, %v60
    %v62 = vrot.slane %v49, %v61
    %v63 = vadd.s32 %v58, 4294967288
    %v64 = vlaneseq
    %v65 = vshrl.u32 %v64, 7
    %v66 = vsub.s32 %v63, %v65
    %v67 = vrot.slane %v50, %v66
    %vm68 = vcmask 130112
    %v69 = vsel %vm68, %v67, %v62
    %v70 = vlaneseq
    %v71 = vshrl.u32 %v70, 7
    %v72 = vsub.s32 %v58, %v71
    %v73 = vrot.slane %v51, %v72
    %v74 = vlaneseq
    %v75 = vshrl.u32 %v74, 7
    %v76 = vsub.s32 %v63, %v75
    %v77 = vrot.slane %v52, %v76
    %v78 = vsel %vm68, %v77, %v73
    %vm79 = vcmask 1041409
    %v80 = vsel %vm79, %v78, %v69
    %vm82 = vcmask 123904
    %83 = vst.msk [vmem:[#allocation3] sm:$0x3] %vm82, %v80
    // Predicated region
    $region14: #{ramplus_forward.21} parent=1 // pred_check
      _
    $region15: #{ramplus_forward.21} parent=1 // pred_check_branch
      %85 = sbr.rel (0) target = $region17
    $region16: #{ramplus_forward.21} parent=1 // pred_region
      %s87 = ssub.s32 32, 32
      %88 = vsyncadd [#allocation4], %s87
      %s90 = sshll.u32 [#allocation3], 4
      %s91 = int_to_ptr.vmem [resolvable:$true] %s90
      %93 = dma.vmem_to_hbm [thread:$0]  %s91, 32, %s3, [#allocation4]
    $region17: #{ramplus_forward.21} parent=1 // pred_fallthru
      _
    // Predicated region
    $region18: #{ramplus_forward.21} parent=1 // pred_check
      _
    $region19: #{ramplus_forward.21} parent=1 // pred_check_branch
      %95 = sbr.rel (0) target = $region21
    $region20: #{ramplus_forward.21} parent=1 // pred_region
      %96 = dma.done [#allocation4], 32
    $region21: #{ramplus_forward.21} parent=1 // pred_fallthru
      _
    %97 = vsyncpa [#allocation4], 1

// kernel: ramplus_forward.19
$region0: #{ramplus_forward.19}
  #allocation0 [shape = 'u32[]', space=smem, size = 0x4, offset = 0x4, fixed_abs, tag = 'smem constant byte address 0x4 - core index']
  #allocation1 [shape = 'u32[144,128]{1,0:T(1,128)}', space=vmem, size = 0x12000, scoped, tag = 'internal scratch']
  %s0 = inlined_call_operand.vmem [shape: f32[2,16,128], index: 0, kind: input, shape index: {}]
  %s1 = inlined_call_operand.vmem [shape: f32[2,17,32], index: 1, kind: input, shape index: {}]
  %s2 = inlined_call_operand.vmem [shape: bf16[128,128], index: 2, kind: input, shape index: {}]
  %s3 = inlined_call_operand.vmem [shape: f32[1,128], index: 3, kind: input, shape index: {}]
  %s4 = inlined_call_operand.vmem [shape: bf16[32,128], index: 4, kind: input, shape index: {}]
  %s5 = inlined_call_operand.vmem [shape: f32[1,128], index: 5, kind: input, shape index: {}]
  %s6 = inlined_call_operand.vmem [shape: bf16[32,128], index: 6, kind: input, shape index: {}]
  %s7 = inlined_call_operand.vmem [shape: f32[1,128], index: 7, kind: input, shape index: {}]
  %s8 = inlined_call_operand.vmem [shape: bf16[128,128], index: 8, kind: input, shape index: {}]
  %s9 = inlined_call_operand.vmem [shape: f32[1,128], index: 9, kind: input, shape index: {}]
  %s10 = inlined_call_operand.vmem [shape: f32[1,128], index: 10, kind: input, shape index: {}]
  %s11 = inlined_call_operand.vmem [shape: f32[1,128], index: 11, kind: input, shape index: {}]
  %s12 = inlined_call_operand.vmem [shape: bf16[128,512], index: 12, kind: input, shape index: {}]
  %s13 = inlined_call_operand.vmem [shape: f32[1,512], index: 13, kind: input, shape index: {}]
  %s14 = inlined_call_operand.vmem [shape: bf16[512,128], index: 14, kind: input, shape index: {}]
  %s15 = inlined_call_operand.vmem [shape: f32[1,128], index: 15, kind: input, shape index: {}]
  %s16 = inlined_call_operand.vmem [shape: f32[1,128], index: 16, kind: input, shape index: {}]
  %s17 = inlined_call_operand.vmem [shape: f32[1,128], index: 17, kind: input, shape index: {}]
  %s18 = inlined_call_operand.vmem [shape: f32[2,16,128], index: 18, kind: output, shape index: {}]
  %s19 = sld [smem:[#allocation0]]
  $region105: #{ramplus_forward.19} parent=0
    _
  %s21 = ssub.s32 1, %s19
  %s22 = scalar_select 0, %s21, %s19
  loop: start=0, step=1, limit=4
  $region2: #{ramplus_forward.19} parent=0 // loop_pre_header
    _
  $region3: #{ramplus_forward.19} parent=0 // loop_header
    %s24 = sphi 0, %s28
    %p25 = scmp.ge.s32.totalorder %s24, 4
    %s34 = sphi 0, %s36
    %s37 = sphi 0, %s34
    %s38 = sphi 0, %s37
    %s54 = sphi 0, %s38
    %s60 = sphi 0, %s62
    %s63 = sphi 0, %s60
    %s64 = sphi 0, %s63
    %s80 = sphi 0, %s64
    %s84 = sphi 0, %s84
    %s86 = sphi 0, %s84
    %s87 = sphi 0, %s86
    %s101 = sphi 0, %s87
    %s105 = sphi 0, %s105
    %s107 = sphi 0, %s105
    %s108 = sphi 0, %s107
    %s122 = sphi 0, %s108
    %s126 = sphi 0, %s126
    %s128 = sphi 0, %s126
    %s129 = sphi 0, %s128
    %s143 = sphi 0, %s129
    %s147 = sphi 0, %s147
    %s149 = sphi 0, %s147
    %s150 = sphi 0, %s149
    %s164 = sphi 0, %s150
    %s168 = sphi 0, %s168
    %s170 = sphi 0, %s168
    %s171 = sphi 0, %s170
    %s185 = sphi 0, %s171
    %s189 = sphi 0, %s189
    %s191 = sphi 0, %s189
    %s192 = sphi 0, %s191
    %s206 = sphi 0, %s192
    %s210 = sphi 0, %s210
    %s212 = sphi 0, %s210
    %s213 = sphi 0, %s212
    %s227 = sphi 0, %s213
    %s231 = sphi 0, %s231
    %s233 = sphi 0, %s231
    %s234 = sphi 0, %s233
    %s248 = sphi 0, %s234
    %s252 = sphi 0, %s252
    %s254 = sphi 0, %s252
    %s255 = sphi 0, %s254
    %s269 = sphi 0, %s255
    %s273 = sphi 0, %s273
    %s275 = sphi 0, %s273
    %s276 = sphi 0, %s275
    %s290 = sphi 0, %s276
    %s294 = sphi 0, %s294
    %s296 = sphi 0, %s294
    %s297 = sphi 0, %s296
    %s311 = sphi 0, %s297
    %s315 = sphi 0, %s315
    %s317 = sphi 0, %s315
    %s318 = sphi 0, %s317
    %s332 = sphi 0, %s318
    %s336 = sphi 0, %s336
    %s338 = sphi 0, %s336
    %s339 = sphi 0, %s338
    %s353 = sphi 0, %s339
    %s357 = sphi 0, %s357
    %s359 = sphi 0, %s357
    %s360 = sphi 0, %s359
    %s374 = sphi 0, %s360
    %s378 = sphi 0, %s378
    %s380 = sphi 0, %s378
    %s381 = sphi 0, %s380
    %s395 = sphi 0, %s381
    %s399 = sphi 0, %s399
    %s401 = sphi 0, %s399
    %s402 = sphi 0, %s401
    %s416 = sphi 0, %s402
    %s422 = sphi 0, %s424
    %s425 = sphi 0, %s422
    %s426 = sphi 0, %s425
    %s442 = sphi 0, %s426
  $region4: #{ramplus_forward.19} parent=0 // loop_header_branch
    %27 = sbr.rel (%p25) target = $region8
  $region5: #{ramplus_forward.19} parent=0 // loop_body
    %s29 = ssub.s32 %s24, 1
    %s30 = ssub.s32 %s24, 2
    %s31 = sadd.s32 %s24, 1
    %s32 = ssub.s32 %s24, %s31
    %p33 = scmp.eq.s32.totalorder %s32, 0
    %s35 = sadd.s32 %s34, 1
    %s36 = scalar_select %p33, %s34, %s35
    %p39 = pneg %p33
    %p40 = scmp.eq.s32.totalorder %s24, 1
    %p41 = por %p39, %p40
    %p42 = scmp.ne.s32.totalorder %s34, %s37
    %p43 = scmp.eq.s32.totalorder %s24, 0
    %p44 = por %p42, %p43
    %p45 = scmp.ne.s32.totalorder %s34, %s37
    %p46 = scmp.eq.s32.totalorder %s29, 1
    %p47 = por %p45, %p46
    %p48 = scmp.ne.s32.totalorder %s37, %s38
    %p49 = scmp.eq.s32.totalorder %s29, 0
    %p50 = por %p48, %p49
    %p51 = scmp.ne.s32.totalorder %s37, %s38
    %p52 = scmp.eq.s32.totalorder %s30, 1
    %p53 = por %p51, %p52
    %p55 = scmp.ne.s32.totalorder %s38, %s54
    %p56 = scmp.eq.s32.totalorder %s30, 0
    %p57 = por %p55, %p56
    %s58 = ssub.s32 %s24, %s31
    %p59 = scmp.eq.s32.totalorder %s58, 0
    %s61 = sadd.s32 %s60, 1
    %s62 = scalar_select %p59, %s60, %s61
    %p65 = pneg %p59
    %p66 = scmp.eq.s32.totalorder %s24, 1
    %p67 = por %p65, %p66
    %p68 = scmp.ne.s32.totalorder %s60, %s63
    %p69 = scmp.eq.s32.totalorder %s24, 0
    %p70 = por %p68, %p69
    %p71 = scmp.ne.s32.totalorder %s60, %s63
    %p72 = scmp.eq.s32.totalorder %s29, 1
    %p73 = por %p71, %p72
    %p74 = scmp.ne.s32.totalorder %s63, %s64
    %p75 = scmp.eq.s32.totalorder %s29, 0
    %p76 = por %p74, %p75
    %p77 = scmp.ne.s32.totalorder %s63, %s64
    %p78 = scmp.eq.s32.totalorder %s30, 1
    %p79 = por %p77, %p78
    %p81 = scmp.ne.s32.totalorder %s64, %s80
    %p82 = scmp.eq.s32.totalorder %s30, 0
    %p83 = por %p81, %p82
    %s85 = sadd.s32 %s84, 1
    %p88 = scmp.eq.s32.totalorder %s24, 1
    %p89 = scmp.ne.s32.totalorder %s84, %s86
    %p90 = scmp.eq.s32.totalorder %s24, 0
    %p91 = por %p89, %p90
    %p92 = scmp.ne.s32.totalorder %s84, %s86
    %p93 = scmp.eq.s32.totalorder %s29, 1
    %p94 = por %p92, %p93
    %p95 = scmp.ne.s32.totalorder %s86, %s87
    %p96 = scmp.eq.s32.totalorder %s29, 0
    %p97 = por %p95, %p96
    %p98 = scmp.ne.s32.totalorder %s86, %s87
    %p99 = scmp.eq.s32.totalorder %s30, 1
    %p100 = por %p98, %p99
    %p102 = scmp.ne.s32.totalorder %s87, %s101
    %p103 = scmp.eq.s32.totalorder %s30, 0
    %p104 = por %p102, %p103
    %s106 = sadd.s32 %s105, 1
    %p109 = scmp.eq.s32.totalorder %s24, 1
    %p110 = scmp.ne.s32.totalorder %s105, %s107
    %p111 = scmp.eq.s32.totalorder %s24, 0
    %p112 = por %p110, %p111
    %p113 = scmp.ne.s32.totalorder %s105, %s107
    %p114 = scmp.eq.s32.totalorder %s29, 1
    %p115 = por %p113, %p114
    %p116 = scmp.ne.s32.totalorder %s107, %s108
    %p117 = scmp.eq.s32.totalorder %s29, 0
    %p118 = por %p116, %p117
    %p119 = scmp.ne.s32.totalorder %s107, %s108
    %p120 = scmp.eq.s32.totalorder %s30, 1
    %p121 = por %p119, %p120
    %p123 = scmp.ne.s32.totalorder %s108, %s122
    %p124 = scmp.eq.s32.totalorder %s30, 0
    %p125 = por %p123, %p124
    %s127 = sadd.s32 %s126, 1
    %p130 = scmp.eq.s32.totalorder %s24, 1
    %p131 = scmp.ne.s32.totalorder %s126, %s128
    %p132 = scmp.eq.s32.totalorder %s24, 0
    %p133 = por %p131, %p132
    %p134 = scmp.ne.s32.totalorder %s126, %s128
    %p135 = scmp.eq.s32.totalorder %s29, 1
    %p136 = por %p134, %p135
    %p137 = scmp.ne.s32.totalorder %s128, %s129
    %p138 = scmp.eq.s32.totalorder %s29, 0
    %p139 = por %p137, %p138
    %p140 = scmp.ne.s32.totalorder %s128, %s129
    %p141 = scmp.eq.s32.totalorder %s30, 1
    %p142 = por %p140, %p141
    %p144 = scmp.ne.s32.totalorder %s129, %s143
    %p145 = scmp.eq.s32.totalorder %s30, 0
    %p146 = por %p144, %p145
    %s148 = sadd.s32 %s147, 1
    %p151 = scmp.eq.s32.totalorder %s24, 1
    %p152 = scmp.ne.s32.totalorder %s147, %s149
    %p153 = scmp.eq.s32.totalorder %s24, 0
    %p154 = por %p152, %p153
    %p155 = scmp.ne.s32.totalorder %s147, %s149
    %p156 = scmp.eq.s32.totalorder %s29, 1
    %p157 = por %p155, %p156
    %p158 = scmp.ne.s32.totalorder %s149, %s150
    %p159 = scmp.eq.s32.totalorder %s29, 0
    %p160 = por %p158, %p159
    %p161 = scmp.ne.s32.totalorder %s149, %s150
    %p162 = scmp.eq.s32.totalorder %s30, 1
    %p163 = por %p161, %p162
    %p165 = scmp.ne.s32.totalorder %s150, %s164
    %p166 = scmp.eq.s32.totalorder %s30, 0
    %p167 = por %p165, %p166
    %s169 = sadd.s32 %s168, 1
    %p172 = scmp.eq.s32.totalorder %s24, 1
    %p173 = scmp.ne.s32.totalorder %s168, %s170
    %p174 = scmp.eq.s32.totalorder %s24, 0
    %p175 = por %p173, %p174
    %p176 = scmp.ne.s32.totalorder %s168, %s170
    %p177 = scmp.eq.s32.totalorder %s29, 1
    %p178 = por %p176, %p177
    %p179 = scmp.ne.s32.totalorder %s170, %s171
    %p180 = scmp.eq.s32.totalorder %s29, 0
    %p181 = por %p179, %p180
    %p182 = scmp.ne.s32.totalorder %s170, %s171
    %p183 = scmp.eq.s32.totalorder %s30, 1
    %p184 = por %p182, %p183
    %p186 = scmp.ne.s32.totalorder %s171, %s185
    %p187 = scmp.eq.s32.totalorder %s30, 0
    %p188 = por %p186, %p187
    %s190 = sadd.s32 %s189, 1
    %p193 = scmp.eq.s32.totalorder %s24, 1
    %p194 = scmp.ne.s32.totalorder %s189, %s191
    %p195 = scmp.eq.s32.totalorder %s24, 0
    %p196 = por %p194, %p195
    %p197 = scmp.ne.s32.totalorder %s189, %s191
    %p198 = scmp.eq.s32.totalorder %s29, 1
    %p199 = por %p197, %p198
    %p200 = scmp.ne.s32.totalorder %s191, %s192
    %p201 = scmp.eq.s32.totalorder %s29, 0
    %p202 = por %p200, %p201
    %p203 = scmp.ne.s32.totalorder %s191, %s192
    %p204 = scmp.eq.s32.totalorder %s30, 1
    %p205 = por %p203, %p204
    %p207 = scmp.ne.s32.totalorder %s192, %s206
    %p208 = scmp.eq.s32.totalorder %s30, 0
    %p209 = por %p207, %p208
    %s211 = sadd.s32 %s210, 1
    %p214 = scmp.eq.s32.totalorder %s24, 1
    %p215 = scmp.ne.s32.totalorder %s210, %s212
    %p216 = scmp.eq.s32.totalorder %s24, 0
    %p217 = por %p215, %p216
    %p218 = scmp.ne.s32.totalorder %s210, %s212
    %p219 = scmp.eq.s32.totalorder %s29, 1
    %p220 = por %p218, %p219
    %p221 = scmp.ne.s32.totalorder %s212, %s213
    %p222 = scmp.eq.s32.totalorder %s29, 0
    %p223 = por %p221, %p222
    %p224 = scmp.ne.s32.totalorder %s212, %s213
    %p225 = scmp.eq.s32.totalorder %s30, 1
    %p226 = por %p224, %p225
    %p228 = scmp.ne.s32.totalorder %s213, %s227
    %p229 = scmp.eq.s32.totalorder %s30, 0
    %p230 = por %p228, %p229
    %s232 = sadd.s32 %s231, 1
    %p235 = scmp.eq.s32.totalorder %s24, 1
    %p236 = scmp.ne.s32.totalorder %s231, %s233
    %p237 = scmp.eq.s32.totalorder %s24, 0
    %p238 = por %p236, %p237
    %p239 = scmp.ne.s32.totalorder %s231, %s233
    %p240 = scmp.eq.s32.totalorder %s29, 1
    %p241 = por %p239, %p240
    %p242 = scmp.ne.s32.totalorder %s233, %s234
    %p243 = scmp.eq.s32.totalorder %s29, 0
    %p244 = por %p242, %p243
    %p245 = scmp.ne.s32.totalorder %s233, %s234
    %p246 = scmp.eq.s32.totalorder %s30, 1
    %p247 = por %p245, %p246
    %p249 = scmp.ne.s32.totalorder %s234, %s248
    %p250 = scmp.eq.s32.totalorder %s30, 0
    %p251 = por %p249, %p250
    %s253 = sadd.s32 %s252, 1
    %p256 = scmp.eq.s32.totalorder %s24, 1
    %p257 = scmp.ne.s32.totalorder %s252, %s254
    %p258 = scmp.eq.s32.totalorder %s24, 0
    %p259 = por %p257, %p258
    %p260 = scmp.ne.s32.totalorder %s252, %s254
    %p261 = scmp.eq.s32.totalorder %s29, 1
    %p262 = por %p260, %p261
    %p263 = scmp.ne.s32.totalorder %s254, %s255
    %p264 = scmp.eq.s32.totalorder %s29, 0
    %p265 = por %p263, %p264
    %p266 = scmp.ne.s32.totalorder %s254, %s255
    %p267 = scmp.eq.s32.totalorder %s30, 1
    %p268 = por %p266, %p267
    %p270 = scmp.ne.s32.totalorder %s255, %s269
    %p271 = scmp.eq.s32.totalorder %s30, 0
    %p272 = por %p270, %p271
    %s274 = sadd.s32 %s273, 1
    %p277 = scmp.eq.s32.totalorder %s24, 1
    %p278 = scmp.ne.s32.totalorder %s273, %s275
    %p279 = scmp.eq.s32.totalorder %s24, 0
    %p280 = por %p278, %p279
    %p281 = scmp.ne.s32.totalorder %s273, %s275
    %p282 = scmp.eq.s32.totalorder %s29, 1
    %p283 = por %p281, %p282
    %p284 = scmp.ne.s32.totalorder %s275, %s276
    %p285 = scmp.eq.s32.totalorder %s29, 0
    %p286 = por %p284, %p285
    %p287 = scmp.ne.s32.totalorder %s275, %s276
    %p288 = scmp.eq.s32.totalorder %s30, 1
    %p289 = por %p287, %p288
    %p291 = scmp.ne.s32.totalorder %s276, %s290
    %p292 = scmp.eq.s32.totalorder %s30, 0
    %p293 = por %p291, %p292
    %s295 = sadd.s32 %s294, 1
    %p298 = scmp.eq.s32.totalorder %s24, 1
    %p299 = scmp.ne.s32.totalorder %s294, %s296
    %p300 = scmp.eq.s32.totalorder %s24, 0
    %p301 = por %p299, %p300
    %p302 = scmp.ne.s32.totalorder %s294, %s296
    %p303 = scmp.eq.s32.totalorder %s29, 1
    %p304 = por %p302, %p303
    %p305 = scmp.ne.s32.totalorder %s296, %s297
    %p306 = scmp.eq.s32.totalorder %s29, 0
    %p307 = por %p305, %p306
    %p308 = scmp.ne.s32.totalorder %s296, %s297
    %p309 = scmp.eq.s32.totalorder %s30, 1
    %p310 = por %p308, %p309
    %p312 = scmp.ne.s32.totalorder %s297, %s311
    %p313 = scmp.eq.s32.totalorder %s30, 0
    %p314 = por %p312, %p313
    %s316 = sadd.s32 %s315, 1
    %p319 = scmp.eq.s32.totalorder %s24, 1
    %p320 = scmp.ne.s32.totalorder %s315, %s317
    %p321 = scmp.eq.s32.totalorder %s24, 0
    %p322 = por %p320, %p321
    %p323 = scmp.ne.s32.totalorder %s315, %s317
    %p324 = scmp.eq.s32.totalorder %s29, 1
    %p325 = por %p323, %p324
    %p326 = scmp.ne.s32.totalorder %s317, %s318
    %p327 = scmp.eq.s32.totalorder %s29, 0
    %p328 = por %p326, %p327
    %p329 = scmp.ne.s32.totalorder %s317, %s318
    %p330 = scmp.eq.s32.totalorder %s30, 1
    %p331 = por %p329, %p330
    %p333 = scmp.ne.s32.totalorder %s318, %s332
    %p334 = scmp.eq.s32.totalorder %s30, 0
    %p335 = por %p333, %p334
    %s337 = sadd.s32 %s336, 1
    %p340 = scmp.eq.s32.totalorder %s24, 1
    %p341 = scmp.ne.s32.totalorder %s336, %s338
    %p342 = scmp.eq.s32.totalorder %s24, 0
    %p343 = por %p341, %p342
    %p344 = scmp.ne.s32.totalorder %s336, %s338
    %p345 = scmp.eq.s32.totalorder %s29, 1
    %p346 = por %p344, %p345
    %p347 = scmp.ne.s32.totalorder %s338, %s339
    %p348 = scmp.eq.s32.totalorder %s29, 0
    %p349 = por %p347, %p348
    %p350 = scmp.ne.s32.totalorder %s338, %s339
    %p351 = scmp.eq.s32.totalorder %s30, 1
    %p352 = por %p350, %p351
    %p354 = scmp.ne.s32.totalorder %s339, %s353
    %p355 = scmp.eq.s32.totalorder %s30, 0
    %p356 = por %p354, %p355
    %s358 = sadd.s32 %s357, 1
    %p361 = scmp.eq.s32.totalorder %s24, 1
    %p362 = scmp.ne.s32.totalorder %s357, %s359
    %p363 = scmp.eq.s32.totalorder %s24, 0
    %p364 = por %p362, %p363
    %p365 = scmp.ne.s32.totalorder %s357, %s359
    %p366 = scmp.eq.s32.totalorder %s29, 1
    %p367 = por %p365, %p366
    %p368 = scmp.ne.s32.totalorder %s359, %s360
    %p369 = scmp.eq.s32.totalorder %s29, 0
    %p370 = por %p368, %p369
    %p371 = scmp.ne.s32.totalorder %s359, %s360
    %p372 = scmp.eq.s32.totalorder %s30, 1
    %p373 = por %p371, %p372
    %p375 = scmp.ne.s32.totalorder %s360, %s374
    %p376 = scmp.eq.s32.totalorder %s30, 0
    %p377 = por %p375, %p376
    %s379 = sadd.s32 %s378, 1
    %p382 = scmp.eq.s32.totalorder %s24, 1
    %p383 = scmp.ne.s32.totalorder %s378, %s380
    %p384 = scmp.eq.s32.totalorder %s24, 0
    %p385 = por %p383, %p384
    %p386 = scmp.ne.s32.totalorder %s378, %s380
    %p387 = scmp.eq.s32.totalorder %s29, 1
    %p388 = por %p386, %p387
    %p389 = scmp.ne.s32.totalorder %s380, %s381
    %p390 = scmp.eq.s32.totalorder %s29, 0
    %p391 = por %p389, %p390
    %p392 = scmp.ne.s32.totalorder %s380, %s381
    %p393 = scmp.eq.s32.totalorder %s30, 1
    %p394 = por %p392, %p393
    %p396 = scmp.ne.s32.totalorder %s381, %s395
    %p397 = scmp.eq.s32.totalorder %s30, 0
    %p398 = por %p396, %p397
    %s400 = sadd.s32 %s399, 1
    %p403 = scmp.eq.s32.totalorder %s24, 1
    %p404 = scmp.ne.s32.totalorder %s399, %s401
    %p405 = scmp.eq.s32.totalorder %s24, 0
    %p406 = por %p404, %p405
    %p407 = scmp.ne.s32.totalorder %s399, %s401
    %p408 = scmp.eq.s32.totalorder %s29, 1
    %p409 = por %p407, %p408
    %p410 = scmp.ne.s32.totalorder %s401, %s402
    %p411 = scmp.eq.s32.totalorder %s29, 0
    %p412 = por %p410, %p411
    %p413 = scmp.ne.s32.totalorder %s401, %s402
    %p414 = scmp.eq.s32.totalorder %s30, 1
    %p415 = por %p413, %p414
    %p417 = scmp.ne.s32.totalorder %s402, %s416
    %p418 = scmp.eq.s32.totalorder %s30, 0
    %p419 = por %p417, %p418
    %s420 = ssub.s32 %s24, %s31
    %p421 = scmp.eq.s32.totalorder %s420, 0
    %s423 = sadd.s32 %s422, 1
    %s424 = scalar_select %p421, %s422, %s423
    %p427 = pneg %p421
    %p428 = scmp.eq.s32.totalorder %s24, 1
    %p429 = por %p427, %p428
    %p430 = scmp.ne.s32.totalorder %s422, %s425
    %p431 = scmp.eq.s32.totalorder %s24, 0
    %p432 = por %p430, %p431
    %p433 = scmp.ne.s32.totalorder %s422, %s425
    %p434 = scmp.eq.s32.totalorder %s29, 1
    %p435 = por %p433, %p434
    %p436 = scmp.ne.s32.totalorder %s425, %s426
    %p437 = scmp.eq.s32.totalorder %s29, 0
    %p438 = por %p436, %p437
    %p439 = scmp.ne.s32.totalorder %s425, %s426
    %p440 = scmp.eq.s32.totalorder %s30, 1
    %p441 = por %p439, %p440
    %p443 = scmp.ne.s32.totalorder %s426, %s442
    %p444 = scmp.eq.s32.totalorder %s30, 0
    %p445 = por %p443, %p444
    %p446 = scmp.le.s32.totalorder 1, %s24
    %p447 = scmp.lt.s32.totalorder %s24, 3
    %p448 = pnand %p446, %p447
    %p449 = pneg %p448
    // Predicated region
    $region9: #{ramplus_forward.19} parent=5 // pred_check
      _
    $region10: #{ramplus_forward.19} parent=5 // pred_check_branch
      %451 = sbr.rel (%p448) target = $region12
    $region11: #{ramplus_forward.19} parent=5 // pred_region
      %s452 = ssub.s32 %s24, 1
      // Predicated region
      $region13: #{ramplus_forward.19} parent=11 // pred_check
        %p453 = pneg %p97
      $region14: #{ramplus_forward.19} parent=11 // pred_check_branch
        %455 = sbr.rel (%p453) target = $region16
      $region15: #{ramplus_forward.19} parent=11 // pred_region
        _
      $region16: #{ramplus_forward.19} parent=11 // pred_fallthru
        _
      // Predicated region
      $region17: #{ramplus_forward.19} parent=11 // pred_check
        %p456 = pneg %p118
      $region18: #{ramplus_forward.19} parent=11 // pred_check_branch
        %458 = sbr.rel (%p456) target = $region20
      $region19: #{ramplus_forward.19} parent=11 // pred_region
        _
      $region20: #{ramplus_forward.19} parent=11 // pred_fallthru
        _
      // Predicated region
      $region21: #{ramplus_forward.19} parent=11 // pred_check
        %p459 = pneg %p139
      $region22: #{ramplus_forward.19} parent=11 // pred_check_branch
        %461 = sbr.rel (%p459) target = $region24
      $region23: #{ramplus_forward.19} parent=11 // pred_region
        _
      $region24: #{ramplus_forward.19} parent=11 // pred_fallthru
        _
      // Predicated region
      $region25: #{ramplus_forward.19} parent=11 // pred_check
        %p462 = pneg %p160
      $region26: #{ramplus_forward.19} parent=11 // pred_check_branch
        %464 = sbr.rel (%p462) target = $region28
      $region27: #{ramplus_forward.19} parent=11 // pred_region
        _
      $region28: #{ramplus_forward.19} parent=11 // pred_fallthru
        _
      // Predicated region
      $region29: #{ramplus_forward.19} parent=11 // pred_check
        %p465 = pneg %p181
      $region30: #{ramplus_forward.19} parent=11 // pred_check_branch
        %467 = sbr.rel (%p465) target = $region32
      $region31: #{ramplus_forward.19} parent=11 // pred_region
        _
      $region32: #{ramplus_forward.19} parent=11 // pred_fallthru
        _
      // Predicated region
      $region33: #{ramplus_forward.19} parent=11 // pred_check
        %p468 = pneg %p202
      $region34: #{ramplus_forward.19} parent=11 // pred_check_branch
        %470 = sbr.rel (%p468) target = $region36
      $region35: #{ramplus_forward.19} parent=11 // pred_region
        _
      $region36: #{ramplus_forward.19} parent=11 // pred_fallthru
        _
      // Predicated region
      $region37: #{ramplus_forward.19} parent=11 // pred_check
        %p471 = pneg %p223
      $region38: #{ramplus_forward.19} parent=11 // pred_check_branch
        %473 = sbr.rel (%p471) target = $region40
      $region39: #{ramplus_forward.19} parent=11 // pred_region
        _
      $region40: #{ramplus_forward.19} parent=11 // pred_fallthru
        _
      // Predicated region
      $region41: #{ramplus_forward.19} parent=11 // pred_check
        %p474 = pneg %p244
      $region42: #{ramplus_forward.19} parent=11 // pred_check_branch
        %476 = sbr.rel (%p474) target = $region44
      $region43: #{ramplus_forward.19} parent=11 // pred_region
        _
      $region44: #{ramplus_forward.19} parent=11 // pred_fallthru
        _
      // Predicated region
      $region45: #{ramplus_forward.19} parent=11 // pred_check
        %p477 = pneg %p265
      $region46: #{ramplus_forward.19} parent=11 // pred_check_branch
        %479 = sbr.rel (%p477) target = $region48
      $region47: #{ramplus_forward.19} parent=11 // pred_region
        _
      $region48: #{ramplus_forward.19} parent=11 // pred_fallthru
        _
      // Predicated region
      $region49: #{ramplus_forward.19} parent=11 // pred_check
        %p480 = pneg %p286
      $region50: #{ramplus_forward.19} parent=11 // pred_check_branch
        %482 = sbr.rel (%p480) target = $region52
      $region51: #{ramplus_forward.19} parent=11 // pred_region
        _
      $region52: #{ramplus_forward.19} parent=11 // pred_fallthru
        _
      // Predicated region
      $region53: #{ramplus_forward.19} parent=11 // pred_check
        %p483 = pneg %p307
      $region54: #{ramplus_forward.19} parent=11 // pred_check_branch
        %485 = sbr.rel (%p483) target = $region56
      $region55: #{ramplus_forward.19} parent=11 // pred_region
        _
      $region56: #{ramplus_forward.19} parent=11 // pred_fallthru
        _
      // Predicated region
      $region57: #{ramplus_forward.19} parent=11 // pred_check
        %p486 = pneg %p328
      $region58: #{ramplus_forward.19} parent=11 // pred_check_branch
        %488 = sbr.rel (%p486) target = $region60
      $region59: #{ramplus_forward.19} parent=11 // pred_region
        _
      $region60: #{ramplus_forward.19} parent=11 // pred_fallthru
        _
      // Predicated region
      $region61: #{ramplus_forward.19} parent=11 // pred_check
        %p489 = pneg %p349
      $region62: #{ramplus_forward.19} parent=11 // pred_check_branch
        %491 = sbr.rel (%p489) target = $region64
      $region63: #{ramplus_forward.19} parent=11 // pred_region
        _
      $region64: #{ramplus_forward.19} parent=11 // pred_fallthru
        _
      // Predicated region
      $region65: #{ramplus_forward.19} parent=11 // pred_check
        %p492 = pneg %p370
      $region66: #{ramplus_forward.19} parent=11 // pred_check_branch
        %494 = sbr.rel (%p492) target = $region68
      $region67: #{ramplus_forward.19} parent=11 // pred_region
        _
      $region68: #{ramplus_forward.19} parent=11 // pred_fallthru
        _
      // Predicated region
      $region69: #{ramplus_forward.19} parent=11 // pred_check
        %p495 = pneg %p391
      $region70: #{ramplus_forward.19} parent=11 // pred_check_branch
        %497 = sbr.rel (%p495) target = $region72
      $region71: #{ramplus_forward.19} parent=11 // pred_region
        _
      $region72: #{ramplus_forward.19} parent=11 // pred_fallthru
        _
      // Predicated region
      $region73: #{ramplus_forward.19} parent=11 // pred_check
        %p498 = pneg %p412
      $region74: #{ramplus_forward.19} parent=11 // pred_check_branch
        %500 = sbr.rel (%p498) target = $region76
      $region75: #{ramplus_forward.19} parent=11 // pred_region
        _
      $region76: #{ramplus_forward.19} parent=11 // pred_fallthru
        _
    $region12: #{ramplus_forward.19} parent=5 // pred_fallthru
      _
    %p501 = scmp.lt.s32.totalorder %s24, 2
    // Predicated region
    $region77: #{ramplus_forward.19} parent=5 // pred_check
      %p502 = pneg %p501
    $region78: #{ramplus_forward.19} parent=5 // pred_check_branch
      %504 = sbr.rel (%p502) target = $region80
    $region79: #{ramplus_forward.19} parent=5 // pred_region
      // Predicated region
      $region81: #{ramplus_forward.19} parent=79 // pred_check
        %p505 = pneg %p44
      $region82: #{ramplus_forward.19} parent=79 // pred_check_branch
        %507 = sbr.rel (%p505) target = $region84
      $region83: #{ramplus_forward.19} parent=79 // pred_region
        %p508 = scmp.lt.s32.totalorder %s24, 1
        %s509 = scalar_select %p508, %s24, 1
        %s510 = smul.addr %s509, 2
        %s511 = smul.addr %s510, 8
        %s512 = scalar_lea.vmem %s0, %s511
      $region84: #{ramplus_forward.19} parent=79 // pred_fallthru
        _
      // Predicated region
      $region85: #{ramplus_forward.19} parent=79 // pred_check
        %p513 = pneg %p70
      $region86: #{ramplus_forward.19} parent=79 // pred_check_branch
        %515 = sbr.rel (%p513) target = $region88
      $region87: #{ramplus_forward.19} parent=79 // pred_region
        %p516 = scmp.lt.s32.totalorder %s24, 1
        %s517 = scalar_select %p516, %s24, 1
        %s518 = smul.addr %s517, 3
        %s519 = smul.addr %s518, 8
        %s520 = scalar_lea.vmem %s1, %s519
      $region88: #{ramplus_forward.19} parent=79 // pred_fallthru
        _
    $region80: #{ramplus_forward.19} parent=5 // pred_fallthru
      _
    %p521 = scmp.le.s32.totalorder 1, %s24
    %p522 = scmp.lt.s32.totalorder %s24, 3
    %p523 = pnand %p521, %p522
    %p524 = pneg %p523
    // Predicated region
    $region89: #{ramplus_forward.19} parent=5 // pred_check
      _
    $region90: #{ramplus_forward.19} parent=5 // pred_check_branch
      %526 = sbr.rel (%p523) target = $region92
    $region91: #{ramplus_forward.19} parent=5 // pred_region
      %s527 = ssub.s32 %s24, 1
      %p528 = scmp.lt.s32.totalorder %s29, 1
      %s529 = scalar_select %p528, %s29, 1
      %s530 = smul.addr %s529, 2
      %s531 = smul.addr %s530, 8
      %s532 = scalar_lea.vmem %s0, %s531
      %p533 = pneg %p50
      %p534 = pneg %p47
      %p535 = scmp.lt.s32.totalorder %s29, 1
      %s536 = scalar_select %p535, %s29, 1
      %s537 = smul.addr %s536, 3
      %s538 = smul.addr %s537, 8
      %s539 = scalar_lea.vmem %s1, %s538
      %p540 = pneg %p76
      %p541 = pneg %p73
      %p542 = pneg %p97
      %p543 = pneg %p94
      %p544 = pneg %p118
      %p545 = pneg %p115
      %p546 = pneg %p139
      %p547 = pneg %p136
      %p548 = pneg %p160
      %p549 = pneg %p157
      %p550 = pneg %p181
      %p551 = pneg %p178
      %p552 = pneg %p202
      %p553 = pneg %p199
      %p554 = pneg %p223
      %p555 = pneg %p220
      %p556 = pneg %p244
      %p557 = pneg %p241
      %p558 = pneg %p265
      %p559 = pneg %p262
      %p560 = pneg %p286
      %p561 = pneg %p283
      %p562 = pneg %p307
      %p563 = pneg %p304
      %p564 = pneg %p328
      %p565 = pneg %p325
      %p566 = pneg %p349
      %p567 = pneg %p346
      %p568 = pneg %p370
      %p569 = pneg %p367
      %p570 = pneg %p391
      %p571 = pneg %p388
      %p572 = pneg %p412
      %p573 = pneg %p409
      %p574 = pneg %p438
      %p575 = pneg %p435
      %p576 = scmp.lt.s32.totalorder %s29, 1
      %s577 = scalar_select %p576, %s29, 1
      %s578 = smul.addr %s577, 2
      %s579 = smul.addr %s578, 8
      %s580 = scalar_lea.vmem %s18, %s579
      %p581 = scmp.lt.s32.totalorder %s29, 1
      %s582 = scalar_select %p581, %s29, 1
      %s583 = smul.addr %s582, 2
      %s584 = smul.addr %s583, 8
      %s585 = scalar_lea.vmem %s0, %s584
      %p586 = scmp.lt.s32.totalorder %s29, 1
      %s587 = scalar_select %p586, %s29, 1
      %s588 = smul.addr %s587, 3
      %s589 = smul.addr %s588, 8
      %s590 = scalar_lea.vmem %s1, %s589
      %p591 = scmp.lt.s32.totalorder %s29, 1
      %s592 = scalar_select %p591, %s29, 1
      %s593 = smul.addr %s592, 2
      %s594 = smul.addr %s593, 8
      %s595 = scalar_lea.vmem %s18, %s594
      %v597 = vld [vmem:[%s585] sm:$0xff]
      %v598 = vld [vmem:[%s585 + $0x8] sm:$0xff]
      %v599 = vld [vmem:[%s590] sm:$0xff]
      %v600 = vld [vmem:[%s590 + $0x8] sm:$0xff]
      %v601 = vld [vmem:[%s590 + $0x10] sm:$0x1]
      %v602 = vld [vmem:[%s2] sm:$0xf]
      %v603 = vld [vmem:[%s2 + $0x4] sm:$0xf]
      %v604 = vld [vmem:[%s2 + $0x8] sm:$0xf]
      %v605 = vld [vmem:[%s2 + $0xc] sm:$0xf]
      %v606 = vld [vmem:[%s2 + $0x10] sm:$0xf]
      %v607 = vld [vmem:[%s2 + $0x14] sm:$0xf]
      %v608 = vld [vmem:[%s2 + $0x18] sm:$0xf]
      %v609 = vld [vmem:[%s2 + $0x1c] sm:$0xf]
      %v610 = vld [vmem:[%s2 + $0x20] sm:$0xf]
      %v611 = vld [vmem:[%s2 + $0x24] sm:$0xf]
      %v612 = vld [vmem:[%s2 + $0x28] sm:$0xf]
      %v613 = vld [vmem:[%s2 + $0x2c] sm:$0xf]
      %v614 = vld [vmem:[%s2 + $0x30] sm:$0xf]
      %v615 = vld [vmem:[%s2 + $0x34] sm:$0xf]
      %v616 = vld [vmem:[%s2 + $0x38] sm:$0xf]
      %v617 = vld [vmem:[%s2 + $0x3c] sm:$0xf]
      %v618 = vpack.c.bf16 %v598, %v597
      %v619 = vld [vmem:[%s3] sm:$0x1]
      %v621 = vlaneseq
      %v622 = vshrl.u32 %v621, 7
      %v623 = vsub.s32 0, %v622
      %v624 = vrot.slane %v619, %v623
      %v642 = vunpack.c.l.b16 %v602
      %v643 = vunpack.c.l.b16 %v603
      %v644 = vunpack.c.l.b16 %v604
      %v645 = vunpack.c.l.b16 %v605
      %v646 = vunpack.c.l.b16 %v606
      %v647 = vunpack.c.l.b16 %v607
      %v648 = vunpack.c.l.b16 %v608
      %v649 = vunpack.c.l.b16 %v609
      %v650 = vunpack.c.l.b16 %v610
      %v651 = vunpack.c.l.b16 %v611
      %v652 = vunpack.c.l.b16 %v612
      %v653 = vunpack.c.l.b16 %v613
      %v654 = vunpack.c.l.b16 %v614
      %v655 = vunpack.c.l.b16 %v615
      %v656 = vunpack.c.l.b16 %v616
      %v657 = vunpack.c.l.b16 %v617
      %v658 = vpack.c.b16 %v643, %v642
      %v659 = vpack.c.b16 %v645, %v644
      %v660 = vpack.c.b16 %v647, %v646
      %v661 = vpack.c.b16 %v649, %v648
      %v662 = vpack.c.b16 %v651, %v650
      %v663 = vpack.c.b16 %v653, %v652
      %v664 = vpack.c.b16 %v655, %v654
      %v665 = vpack.c.b16 %v657, %v656
      %674 = vmatprep.subr.bf16.mxu0 0
      %675 = vmatpush1.bf16.msra.mxu0 %v658
      %676 = vmatprep.subr.bf16.mxu0 0
      %677 = vmatpush1.bf16.msra.mxu0 %v659
      %678 = vmatprep.subr.bf16.mxu0 0
      %679 = vmatpush1.bf16.msra.mxu0 %v660
      %680 = vmatprep.subr.bf16.mxu0 0
      %681 = vmatpush1.bf16.msra.mxu0 %v661
      %682 = vmatprep.subr.bf16.mxu0 0
      %683 = vmatpush1.bf16.msra.mxu0 %v662
      %684 = vmatprep.subr.bf16.mxu0 0
      %685 = vmatpush1.bf16.msra.mxu0 %v663
      %686 = vmatprep.subr.bf16.mxu0 0
      %687 = vmatpush1.bf16.msra.mxu0 %v664
      %688 = vmatprep.subr.bf16.mxu0 0
      %689 = vmatpush1.bf16.msra.mxu0 %v665
      %690 = vmatprep.subr.bf16.mxu0 0
      %691 = vmatpush1.bf16.msra.mxu0 0
      %692 = vmatprep.subr.bf16.mxu0 0
      %693 = vmatpush1.bf16.msra.mxu0 0
      %694 = vmatprep.subr.bf16.mxu0 0
      %695 = vmatpush1.bf16.msra.mxu0 0
      %696 = vmatprep.subr.bf16.mxu0 0
      %697 = vmatpush1.bf16.msra.mxu0 0
      %698 = vmatprep.subr.bf16.mxu0 0
      %699 = vmatpush1.bf16.msra.mxu0 0
      %700 = vmatprep.subr.bf16.mxu0 0
      %701 = vmatpush1.bf16.msra.mxu0 0
      %702 = vmatprep.subr.bf16.mxu0 0
      %703 = vmatpush1.bf16.msra.mxu0 0
      %704 = vmatprep.subr.bf16.mxu0 0
      %705 = vmatpush1.bf16.msra.mxu0 0
      %706 = vmatprep.mubr.bf16.mxu0 0
      %707 = vmatmul.mubr.bf16.gmra.mrb[0].mxu0 %v618
      %v708 = vpop.f32.mrb[0].mxu0
      %v709 = vadd.f32 %v624, %v708
      %v710 = vpop.f32.mrb[0].mxu0
      %v711 = vpop.f32.mrb[0].mxu0
      %v712 = vadd.f32 %v624, %v711
      %v713 = vpop.f32.mrb[0].mxu0
      %714 = vdwg.mxu0
      %v715 = vld [vmem:[%s4] sm:$0xf]
      %v716 = vld [vmem:[%s4 + $0x4] sm:$0xf]
      %v717 = vld [vmem:[%s4 + $0x8] sm:$0xf]
      %v718 = vld [vmem:[%s4 + $0xc] sm:$0xf]
      %v719 = vpack.c.bf16 %v600, %v599
      %v720 = vpack.c.bf16 %v601, %v601
      %v721 = vld [vmem:[%s5] sm:$0x1]
      %v723 = vlaneseq
      %v724 = vshrl.u32 %v723, 7
      %v725 = vsub.s32 0, %v724
      %v726 = vrot.slane %v721, %v725
      %v732 = vunpack.c.l.b16 %v715
      %v733 = vunpack.c.l.b16 %v716
      %v734 = vunpack.c.l.b16 %v717
      %v735 = vunpack.c.l.b16 %v718
      %v736 = vpack.c.b16 %v733, %v732
      %v737 = vpack.c.b16 %v735, %v734
      %vm740 = vcmask 261120
      %v742 = vsel %vm740, %v719, 0
      %v745 = vsel %vm740, %v720, 0
      %747 = vmatprep.subr.bf16.mxu0 0
      %748 = vmatpush1.bf16.msra.mxu0 %v736
      %749 = vmatprep.subr.bf16.mxu0 0
      %750 = vmatpush1.bf16.msra.mxu0 %v737
      %751 = vmatprep.subr.bf16.mxu0 0
      %752 = vmatpush1.bf16.msra.mxu0 0
      %753 = vmatprep.subr.bf16.mxu0 0
      %754 = vmatpush1.bf16.msra.mxu0 0
      %755 = vmatprep.subr.bf16.mxu0 0
      %756 = vmatpush1.bf16.msra.mxu0 0
      %757 = vmatprep.subr.bf16.mxu0 0
      %758 = vmatpush1.bf16.msra.mxu0 0
      %759 = vmatprep.subr.bf16.mxu0 0
      %760 = vmatpush1.bf16.msra.mxu0 0
      %761 = vmatprep.subr.bf16.mxu0 0
      %762 = vmatpush1.bf16.msra.mxu0 0
      %763 = vmatprep.subr.bf16.mxu0 0
      %764 = vmatpush1.bf16.msra.mxu0 0
      %765 = vmatprep.subr.bf16.mxu0 0
      %766 = vmatpush1.bf16.msra.mxu0 0
      %767 = vmatprep.subr.bf16.mxu0 0
      %768 = vmatpush1.bf16.msra.mxu0 0
      %769 = vmatprep.subr.bf16.mxu0 0
      %770 = vmatpush1.bf16.msra.mxu0 0
      %771 = vmatprep.subr.bf16.mxu0 0
      %772 = vmatpush1.bf16.msra.mxu0 0
      %773 = vmatprep.subr.bf16.mxu0 0
      %774 = vmatpush1.bf16.msra.mxu0 0
      %775 = vmatprep.subr.bf16.mxu0 0
      %776 = vmatpush1.bf16.msra.mxu0 0
      %777 = vmatprep.subr.bf16.mxu0 0
      %778 = vmatpush1.bf16.msra.mxu0 0
      %779 = vmatprep.mubr.bf16.mxu0 0
      %780 = vmatmul.mubr.bf16.gmra.mrb[0].mxu0 %v742
      %v781 = vpop.f32.mrb[0].mxu0
      %v782 = vadd.f32 %v726, %v781
      %v783 = vpop.f32.mrb[0].mxu0
      %v784 = vpop.f32.mrb[0].mxu0
      %v785 = vadd.f32 %v726, %v784
      %v786 = vpop.f32.mrb[0].mxu0
      %787 = vmatprep.mubr.bf16.mxu0 0
      %788 = vmatmul.mubr.bf16.gmra.mrb[0].mxu0 %v745
      %v789 = vpop.f32.mrb[0].mxu0
      %v790 = vadd.f32 %v726, %v789
      %v791 = vpop.f32.mrb[0].mxu0
      %v792 = vpop.f32.mrb[0].mxu0
      %v793 = vpop.f32.mrb[0].mxu0
      %794 = vdwg.mxu0
      %v795 = vld [vmem:[%s6] sm:$0xf]
      %v796 = vld [vmem:[%s6 + $0x4] sm:$0xf]
      %v797 = vld [vmem:[%s6 + $0x8] sm:$0xf]
      %v798 = vld [vmem:[%s6 + $0xc] sm:$0xf]
      %v799 = vld [vmem:[%s7] sm:$0x1]
      %v801 = vlaneseq
      %v802 = vshrl.u32 %v801, 7
      %v803 = vsub.s32 0, %v802
      %v804 = vrot.slane %v799, %v803
      %v810 = vunpack.c.l.b16 %v795
      %v811 = vunpack.c.l.b16 %v796
      %v812 = vunpack.c.l.b16 %v797
      %v813 = vunpack.c.l.b16 %v798
      %v814 = vpack.c.b16 %v811, %v810
      %v815 = vpack.c.b16 %v813, %v812
      %818 = vmatprep.subr.bf16.mxu0 0
      %819 = vmatpush1.bf16.msra.mxu0 %v814
      %820 = vmatprep.subr.bf16.mxu0 0
      %821 = vmatpush1.bf16.msra.mxu0 %v815
      %822 = vmatprep.subr.bf16.mxu0 0
      %823 = vmatpush1.bf16.msra.mxu0 0
      %824 = vmatprep.subr.bf16.mxu0 0
      %825 = vmatpush1.bf16.msra.mxu0 0
      %826 = vmatprep.subr.bf16.mxu0 0
      %827 = vmatpush1.bf16.msra.mxu0 0
      %828 = vmatprep.subr.bf16.mxu0 0
      %829 = vmatpush1.bf16.msra.mxu0 0
      %830 = vmatprep.subr.bf16.mxu0 0
      %831 = vmatpush1.bf16.msra.mxu0 0
      %832 = vmatprep.subr.bf16.mxu0 0
      %833 = vmatpush1.bf16.msra.mxu0 0
      %834 = vmatprep.subr.bf16.mxu0 0
      %835 = vmatpush1.bf16.msra.mxu0 0
      %836 = vmatprep.subr.bf16.mxu0 0
      %837 = vmatpush1.bf16.msra.mxu0 0
      %838 = vmatprep.subr.bf16.mxu0 0
      %839 = vmatpush1.bf16.msra.mxu0 0
      %840 = vmatprep.subr.bf16.mxu0 0
      %841 = vmatpush1.bf16.msra.mxu0 0
      %842 = vmatprep.subr.bf16.mxu0 0
      %843 = vmatpush1.bf16.msra.mxu0 0
      %844 = vmatprep.subr.bf16.mxu0 0
      %845 = vmatpush1.bf16.msra.mxu0 0
      %846 = vmatprep.subr.bf16.mxu0 0
      %847 = vmatpush1.bf16.msra.mxu0 0
      %848 = vmatprep.subr.bf16.mxu0 0
      %849 = vmatpush1.bf16.msra.mxu0 0
      %850 = vmatprep.mubr.bf16.mxu0 0
      %851 = vmatmul.mubr.bf16.gmra.mrb[0].mxu0 %v742
      %v852 = vpop.f32.mrb[0].mxu0
      %v853 = vadd.f32 %v804, %v852
      %v854 = vpop.f32.mrb[0].mxu0
      %v855 = vpop.f32.mrb[0].mxu0
      %v856 = vadd.f32 %v804, %v855
      %v857 = vpop.f32.mrb[0].mxu0
      %858 = vmatprep.mubr.bf16.mxu0 0
      %859 = vmatmul.mubr.bf16.gmra.mrb[0].mxu0 %v745
      %v860 = vpop.f32.mrb[0].mxu0
      %v861 = vadd.f32 %v804, %v860
      %v862 = vpop.f32.mrb[0].mxu0
      %v863 = vpop.f32.mrb[0].mxu0
      %v864 = vpop.f32.mrb[0].mxu0
      %865 = vdwg.mxu0
      %v866 = vmul.f32 %v709, 0.17677669
      %v867 = vmul.f32 %v712, 0.17677669
      %v868 = vpack.c.bf16 %v867, %v866
      %v869 = vpack.c.bf16 %v785, %v782
      %v870 = vpack.c.bf16 %v790, %v790
      %v872 = vsel %vm740, %v868, 0
      %v875 = vsel %vm740, %v869, 0
      %v878 = vsel %vm740, %v870, 0
      %880 = vmatprep.subr.bf16.mxu0 0
      %881 = vmatpush1.bf16.xpose.msra.mxu0 %v875
      %882 = vmatprep.subr.bf16.mxu0 0
      %883 = vmatpush1.bf16.xpose.msra.mxu0 %v878
      %884 = vmatprep.subr.bf16.mxu0 0
      %885 = vmatpush1.bf16.xpose.msra.mxu0 0
      %886 = vmatprep.subr.bf16.mxu0 0
      %887 = vmatpush1.bf16.xpose.msra.mxu0 0
      %888 = vmatprep.subr.bf16.mxu0 0
      %889 = vmatpush1.bf16.xpose.msra.mxu0 0
      %890 = vmatprep.subr.bf16.mxu0 0
      %891 = vmatpush1.bf16.xpose.msra.mxu0 0
      %892 = vmatprep.subr.bf16.mxu0 0
      %893 = vmatpush1.bf16.xpose.msra.mxu0 0
      %894 = vmatprep.subr.bf16.mxu0 0
      %895 = vmatpush1.bf16.xpose.msra.mxu0 0
      %896 = vmatprep.subr.bf16.mxu0 0
      %897 = vmatpush1.bf16.xpose.msra.mxu0 0
      %898 = vmatprep.subr.bf16.mxu0 0
      %899 = vmatpush1.bf16.xpose.msra.mxu0 0
      %900 = vmatprep.subr.bf16.mxu0 0
      %901 = vmatpush1.bf16.xpose.msra.mxu0 0
      %902 = vmatprep.subr.bf16.mxu0 0
      %903 = vmatpush1.bf16.xpose.msra.mxu0 0
      %904 = vmatprep.subr.bf16.mxu0 0
      %905 = vmatpush1.bf16.xpose.msra.mxu0 0
      %906 = vmatprep.subr.bf16.mxu0 0
      %907 = vmatpush1.bf16.xpose.msra.mxu0 0
      %908 = vmatprep.subr.bf16.mxu0 0
      %909 = vmatpush1.bf16.xpose.msra.mxu0 0
      %910 = vmatprep.subr.bf16.mxu0 0
      %911 = vmatpush1.bf16.xpose.msra.mxu0 0
      %912 = vmatprep.mubr.bf16.mxu0 0
      %913 = vmatmul.mubr.bf16.gmra.mrb[0].mxu0 %v872
      %v914 = vpop.f32.mrb[0].mxu0
      %v915 = vadd.f32 0.0, %v914
      %v916 = vpop.f32.mrb[0].mxu0
      %v917 = vpop.f32.mrb[0].mxu0
      %v918 = vadd.f32 0.0, %v917
      %v919 = vpop.f32.mrb[0].mxu0
      %920 = vdwg.mxu0
      %vm921 = vcmask 138240
      %v922 = vsel %vm921, %v915, -inf
      %923 = vmax.xlane.f32.xlu0 %v922
      %v924 = vpop.xlane.xlu0 %923
      %v925 = vsel %vm921, %v918, -inf
      %926 = vmax.xlane.f32.xlu0 %v925
      %v927 = vpop.xlane.xlu0 %926
      %v928 = vsub.f32 %v915, %v924
      %v929 = vsub.f32 %v918, %v927
      %v930 = vmul.f32 %v928, 1.442695
      %v931 = vpow.pop %v930
      %v932 = vmul.f32 %v929, 1.442695
      %v933 = vpow.pop %v932
      %v934 = vsel %vm921, %v931, 0.0
      %935 = vadd.xlane.f32.xlu0 %v934
      %v936 = vpop.xlane.xlu0 %935
      %v937 = vsel %vm921, %v933, 0.0
      %938 = vadd.xlane.f32.xlu0 %v937
      %v939 = vpop.xlane.xlu0 %938
      %v940 = vrcp.pop %v936
      %v941 = vrcp.pop %v939
      %v942 = vmul.f32 %v931, %v940
      %v943 = vmul.f32 %v933, %v941
      %v944 = vpack.c.bf16 %v943, %v942
      %v945 = vpack.c.bf16 %v856, %v853
      %v946 = vpack.c.bf16 %v861, %v861
      %v948 = vsel %vm921, %v944, 0
      %vm950 = vcmask 1040384
      %v951 = vsel 0, 4294967295, 65535
      %v952 = vsel %vm950, %v951, 0
      %v954 = vand.u32 %v946, %v952
      %956 = vmatprep.subr.bf16.mxu0 0
      %957 = vmatpush1.bf16.msra.mxu0 %v945
      %958 = vmatprep.subr.bf16.mxu0 0
      %959 = vmatpush1.bf16.msra.mxu0 %v954
      %960 = vmatprep.subr.bf16.mxu0 0
      %961 = vmatpush1.bf16.msra.mxu0 0
      %962 = vmatprep.subr.bf16.mxu0 0
      %963 = vmatpush1.bf16.msra.mxu0 0
      %964 = vmatprep.subr.bf16.mxu0 0
      %965 = vmatpush1.bf16.msra.mxu0 0
      %966 = vmatprep.subr.bf16.mxu0 0
      %967 = vmatpush1.bf16.msra.mxu0 0
      %968 = vmatprep.subr.bf16.mxu0 0
      %969 = vmatpush1.bf16.msra.mxu0 0
      %970 = vmatprep.subr.bf16.mxu0 0
      %971 = vmatpush1.bf16.msra.mxu0 0
      %972 = vmatprep.subr.bf16.mxu0 0
      %973 = vmatpush1.bf16.msra.mxu0 0
      %974 = vmatprep.subr.bf16.mxu0 0
      %975 = vmatpush1.bf16.msra.mxu0 0
      %976 = vmatprep.subr.bf16.mxu0 0
      %977 = vmatpush1.bf16.msra.mxu0 0
      %978 = vmatprep.subr.bf16.mxu0 0
      %979 = vmatpush1.bf16.msra.mxu0 0
      %980 = vmatprep.subr.bf16.mxu0 0
      %981 = vmatpush1.bf16.msra.mxu0 0
      %982 = vmatprep.subr.bf16.mxu0 0
      %983 = vmatpush1.bf16.msra.mxu0 0
      %984 = vmatprep.subr.bf16.mxu0 0
      %985 = vmatpush1.bf16.msra.mxu0 0
      %986 = vmatprep.subr.bf16.mxu0 0
      %987 = vmatpush1.bf16.msra.mxu0 0
      %988 = vmatprep.mubr.bf16.mxu0 0
      %989 = vmatmul.mubr.bf16.gmra.mrb[0].mxu0 %v948
      %v990 = vpop.f32.mrb[0].mxu0
      %v991 = vadd.f32 0.0, %v990
      %v992 = vpop.f32.mrb[0].mxu0
      %v993 = vpop.f32.mrb[0].mxu0
      %v994 = vadd.f32 0.0, %v993
      %v995 = vpop.f32.mrb[0].mxu0
      %996 = vdwg.mxu0
      %998 = vrot.lane.b32.xlu0 %v868, 96
      %v999 = vpop.permute.xlu0 %998
      %1002 = vrot.lane.b32.xlu0 %v869, 96
      %v1003 = vpop.permute.xlu0 %1002
      %1004 = vrot.lane.b32.xlu0 %v870, 96
      %v1005 = vpop.permute.xlu0 %1004
      %v1007 = vsel %vm740, %v999, 0
      %v1010 = vsel %vm740, %v1003, 0
      %v1013 = vsel %vm740, %v1005, 0
      %1015 = vmatprep.subr.bf16.mxu0 0
      %1016 = vmatpush1.bf16.xpose.msra.mxu0 %v1010
      %1017 = vmatprep.subr.bf16.mxu0 0
      %1018 = vmatpush1.bf16.xpose.msra.mxu0 %v1013
      %1019 = vmatprep.subr.bf16.mxu0 0
      %1020 = vmatpush1.bf16.xpose.msra.mxu0 0
      %1021 = vmatprep.subr.bf16.mxu0 0
      %1022 = vmatpush1.bf16.xpose.msra.mxu0 0
      %1023 = vmatprep.subr.bf16.mxu0 0
      %1024 = vmatpush1.bf16.xpose.msra.mxu0 0
      %1025 = vmatprep.subr.bf16.mxu0 0
      %1026 = vmatpush1.bf16.xpose.msra.mxu0 0
      %1027 = vmatprep.subr.bf16.mxu0 0
      %1028 = vmatpush1.bf16.xpose.msra.mxu0 0
      %1029 = vmatprep.subr.bf16.mxu0 0
      %1030 = vmatpush1.bf16.xpose.msra.mxu0 0
      %1031 = vmatprep.subr.bf16.mxu0 0
      %1032 = vmatpush1.bf16.xpose.msra.mxu0 0
      %1033 = vmatprep.subr.bf16.mxu0 0
      %1034 = vmatpush1.bf16.xpose.msra.mxu0 0
      %1035 = vmatprep.subr.bf16.mxu0 0
      %1036 = vmatpush1.bf16.xpose.msra.mxu0 0
      %1037 = vmatprep.subr.bf16.mxu0 0
      %1038 = vmatpush1.bf16.xpose.msra.mxu0 0
      %1039 = vmatprep.subr.bf16.mxu0 0
      %1040 = vmatpush1.bf16.xpose.msra.mxu0 0
      %1041 = vmatprep.subr.bf16.mxu0 0
      %1042 = vmatpush1.bf16.xpose.msra.mxu0 0
      %1043 = vmatprep.subr.bf16.mxu0 0
      %1044 = vmatpush1.bf16.xpose.msra.mxu0 0
      %1045 = vmatprep.subr.bf16.mxu0 0
      %1046 = vmatpush1.bf16.xpose.msra.mxu0 0
      %1047 = vmatprep.mubr.bf16.mxu0 0
      %1048 = vmatmul.mubr.bf16.gmra.mrb[0].mxu0 %v1007
      %v1049 = vpop.f32.mrb[0].mxu0
      %v1050 = vadd.f32 0.0, %v1049
      %v1051 = vpop.f32.mrb[0].mxu0
      %v1052 = vpop.f32.mrb[0].mxu0
      %v1053 = vadd.f32 0.0, %v1052
      %v1054 = vpop.f32.mrb[0].mxu0
      %1055 = vdwg.mxu0
      %v1056 = vsel %vm921, %v1050, -inf
      %1057 = vmax.xlane.f32.xlu0 %v1056
      %v1058 = vpop.xlane.xlu0 %1057
      %v1059 = vsel %vm921, %v1053, -inf
      %1060 = vmax.xlane.f32.xlu0 %v1059
      %v1061 = vpop.xlane.xlu0 %1060
      %v1062 = vsub.f32 %v1050, %v1058
      %v1063 = vsub.f32 %v1053, %v1061
      %v1064 = vmul.f32 %v1062, 1.442695
      %v1065 = vpow.pop %v1064
      %v1066 = vmul.f32 %v1063, 1.442695
      %v1067 = vpow.pop %v1066
      %v1068 = vsel %vm921, %v1065, 0.0
      %1069 = vadd.xlane.f32.xlu0 %v1068
      %v1070 = vpop.xlane.xlu0 %1069
      %v1071 = vsel %vm921, %v1067, 0.0
      %1072 = vadd.xlane.f32.xlu0 %v1071
      %v1073 = vpop.xlane.xlu0 %1072
      %v1074 = vrcp.pop %v1070
      %v1075 = vrcp.pop %v1073
      %v1076 = vmul.f32 %v1065, %v1074
      %v1077 = vmul.f32 %v1067, %v1075
      %v1078 = vpack.c.bf16 %v1077, %v1076
      %1081 = vrot.lane.b32.xlu0 %v945, 96
      %v1082 = vpop.permute.xlu0 %1081
      %1083 = vrot.lane.b32.xlu0 %v946, 96
      %v1084 = vpop.permute.xlu0 %1083
      %v1087 = vsel %vm921, %v1078, 0
      %v1090 = vand.u32 %v1084, %v952
      %1092 = vmatprep.subr.bf16.mxu0 0
      %1093 = vmatpush1.bf16.msra.mxu0 %v1082
      %1094 = vmatprep.subr.bf16.mxu0 0
      %1095 = vmatpush1.bf16.msra.mxu0 %v1090
      %1096 = vmatprep.subr.bf16.mxu0 0
      %1097 = vmatpush1.bf16.msra.mxu0 0
      %1098 = vmatprep.subr.bf16.mxu0 0
      %1099 = vmatpush1.bf16.msra.mxu0 0
      %1100 = vmatprep.subr.bf16.mxu0 0
      %1101 = vmatpush1.bf16.msra.mxu0 0
      %1102 = vmatprep.subr.bf16.mxu0 0
      %1103 = vmatpush1.bf16.msra.mxu0 0
      %1104 = vmatprep.subr.bf16.mxu0 0
      %1105 = vmatpush1.bf16.msra.mxu0 0
      %1106 = vmatprep.subr.bf16.mxu0 0
      %1107 = vmatpush1.bf16.msra.mxu0 0
      %1108 = vmatprep.subr.bf16.mxu0 0
      %1109 = vmatpush1.bf16.msra.mxu0 0
      %1110 = vmatprep.subr.bf16.mxu0 0
      %1111 = vmatpush1.bf16.msra.mxu0 0
      %1112 = vmatprep.subr.bf16.mxu0 0
      %1113 = vmatpush1.bf16.msra.mxu0 0
      %1114 = vmatprep.subr.bf16.mxu0 0
      %1115 = vmatpush1.bf16.msra.mxu0 0
      %1116 = vmatprep.subr.bf16.mxu0 0
      %1117 = vmatpush1.bf16.msra.mxu0 0
      %1118 = vmatprep.subr.bf16.mxu0 0
      %1119 = vmatpush1.bf16.msra.mxu0 0
      %1120 = vmatprep.subr.bf16.mxu0 0
      %1121 = vmatpush1.bf16.msra.mxu0 0
      %1122 = vmatprep.subr.bf16.mxu0 0
      %1123 = vmatpush1.bf16.msra.mxu0 0
      %1124 = vmatprep.mubr.bf16.mxu0 0
      %1125 = vmatmul.mubr.bf16.gmra.mrb[0].mxu0 %v1087
      %v1126 = vpop.f32.mrb[0].mxu0
      %v1127 = vadd.f32 0.0, %v1126
      %v1128 = vpop.f32.mrb[0].mxu0
      %v1129 = vpop.f32.mrb[0].mxu0
      %v1130 = vadd.f32 0.0, %v1129
      %v1131 = vpop.f32.mrb[0].mxu0
      %1132 = vdwg.mxu0
      %1133 = vrot.lane.b32.xlu0 %v868, 64
      %v1134 = vpop.permute.xlu0 %1133
      %1135 = vrot.lane.b32.xlu0 %v869, 64
      %v1136 = vpop.permute.xlu0 %1135
      %1137 = vrot.lane.b32.xlu0 %v870, 64
      %v1138 = vpop.permute.xlu0 %1137
      %v1140 = vsel %vm740, %v1134, 0
      %v1143 = vsel %vm740, %v1136, 0
      %v1146 = vsel %vm740, %v1138, 0
      %1148 = vmatprep.subr.bf16.mxu0 0
      %1149 = vmatpush1.bf16.xpose.msra.mxu0 %v1143
      %1150 = vmatprep.subr.bf16.mxu0 0
      %1151 = vmatpush1.bf16.xpose.msra.mxu0 %v1146
      %1152 = vmatprep.subr.bf16.mxu0 0
      %1153 = vmatpush1.bf16.xpose.msra.mxu0 0
      %1154 = vmatprep.subr.bf16.mxu0 0
      %1155 = vmatpush1.bf16.xpose.msra.mxu0 0
      %1156 = vmatprep.subr.bf16.mxu0 0
      %1157 = vmatpush1.bf16.xpose.msra.mxu0 0
      %1158 = vmatprep.subr.bf16.mxu0 0
      %1159 = vmatpush1.bf16.xpose.msra.mxu0 0
      %1160 = vmatprep.subr.bf16.mxu0 0
      %1161 = vmatpush1.bf16.xpose.msra.mxu0 0
      %1162 = vmatprep.subr.bf16.mxu0 0
      %1163 = vmatpush1.bf16.xpose.msra.mxu0 0
      %1164 = vmatprep.subr.bf16.mxu0 0
      %1165 = vmatpush1.bf16.xpose.msra.mxu0 0
      %1166 = vmatprep.subr.bf16.mxu0 0
      %1167 = vmatpush1.bf16.xpose.msra.mxu0 0
      %1168 = vmatprep.subr.bf16.mxu0 0
      %1169 = vmatpush1.bf16.xpose.msra.mxu0 0
      %1170 = vmatprep.subr.bf16.mxu0 0
      %1171 = vmatpush1.bf16.xpose.msra.mxu0 0
      %1172 = vmatprep.subr.bf16.mxu0 0
      %1173 = vmatpush1.bf16.xpose.msra.mxu0 0
      %1174 = vmatprep.subr.bf16.mxu0 0
      %1175 = vmatpush1.bf16.xpose.msra.mxu0 0
      %1176 = vmatprep.subr.bf16.mxu0 0
      %1177 = vmatpush1.bf16.xpose.msra.mxu0 0
      %1178 = vmatprep.subr.bf16.mxu0 0
      %1179 = vmatpush1.bf16.xpose.msra.mxu0 0
      %1180 = vmatprep.mubr.bf16.mxu0 0
      %1181 = vmatmul.mubr.bf16.gmra.mrb[0].mxu0 %v1140
      %v1182 = vpop.f32.mrb[0].mxu0
      %v1183 = vadd.f32 0.0, %v1182
      %v1184 = vpop.f32.mrb[0].mxu0
      %v1185 = vpop.f32.mrb[0].mxu0
      %v1186 = vadd.f32 0.0, %v1185
      %v1187 = vpop.f32.mrb[0].mxu0
      %1188 = vdwg.mxu0
      %v1189 = vsel %vm921, %v1183, -inf
      %1190 = vmax.xlane.f32.xlu0 %v1189
      %v1191 = vpop.xlane.xlu0 %1190
      %v1192 = vsel %vm921, %v1186, -inf
      %1193 = vmax.xlane.f32.xlu0 %v1192
      %v1194 = vpop.xlane.xlu0 %1193
      %v1195 = vsub.f32 %v1183, %v1191
      %v1196 = vsub.f32 %v1186, %v1194
      %v1197 = vmul.f32 %v1195, 1.442695
      %v1198 = vpow.pop %v1197
      %v1199 = vmul.f32 %v1196, 1.442695
      %v1200 = vpow.pop %v1199
      %v1201 = vsel %vm921, %v1198, 0.0
      %1202 = vadd.xlane.f32.xlu0 %v1201
      %v1203 = vpop.xlane.xlu0 %1202
      %v1204 = vsel %vm921, %v1200, 0.0
      %1205 = vadd.xlane.f32.xlu0 %v1204
      %v1206 = vpop.xlane.xlu0 %1205
      %v1207 = vrcp.pop %v1203
      %v1208 = vrcp.pop %v1206
      %v1209 = vmul.f32 %v1198, %v1207
      %v1210 = vmul.f32 %v1200, %v1208
      %v1211 = vpack.c.bf16 %v1210, %v1209
      %1212 = vrot.lane.b32.xlu0 %v945, 64
      %v1213 = vpop.permute.xlu0 %1212
      %1214 = vrot.lane.b32.xlu0 %v946, 64
      %v1215 = vpop.permute.xlu0 %1214
      %v1218 = vsel %vm921, %v1211, 0
      %v1221 = vand.u32 %v1215, %v952
      %1223 = vmatprep.subr.bf16.mxu0 0
      %1224 = vmatpush1.bf16.msra.mxu0 %v1213
      %1225 = vmatprep.subr.bf16.mxu0 0
      %1226 = vmatpush1.bf16.msra.mxu0 %v1221
      %1227 = vmatprep.subr.bf16.mxu0 0
      %1228 = vmatpush1.bf16.msra.mxu0 0
      %1229 = vmatprep.subr.bf16.mxu0 0
      %1230 = vmatpush1.bf16.msra.mxu0 0
      %1231 = vmatprep.subr.bf16.mxu0 0
      %1232 = vmatpush1.bf16.msra.mxu0 0
      %1233 = vmatprep.subr.bf16.mxu0 0
      %1234 = vmatpush1.bf16.msra.mxu0 0
      %1235 = vmatprep.subr.bf16.mxu0 0
      %1236 = vmatpush1.bf16.msra.mxu0 0
      %1237 = vmatprep.subr.bf16.mxu0 0
      %1238 = vmatpush1.bf16.msra.mxu0 0
      %1239 = vmatprep.subr.bf16.mxu0 0
      %1240 = vmatpush1.bf16.msra.mxu0 0
      %1241 = vmatprep.subr.bf16.mxu0 0
      %1242 = vmatpush1.bf16.msra.mxu0 0
      %1243 = vmatprep.subr.bf16.mxu0 0
      %1244 = vmatpush1.bf16.msra.mxu0 0
      %1245 = vmatprep.subr.bf16.mxu0 0
      %1246 = vmatpush1.bf16.msra.mxu0 0
      %1247 = vmatprep.subr.bf16.mxu0 0
      %1248 = vmatpush1.bf16.msra.mxu0 0
      %1249 = vmatprep.subr.bf16.mxu0 0
      %1250 = vmatpush1.bf16.msra.mxu0 0
      %1251 = vmatprep.subr.bf16.mxu0 0
      %1252 = vmatpush1.bf16.msra.mxu0 0
      %1253 = vmatprep.subr.bf16.mxu0 0
      %1254 = vmatpush1.bf16.msra.mxu0 0
      %1255 = vmatprep.mubr.bf16.mxu0 0
      %1256 = vmatmul.mubr.bf16.gmra.mrb[0].mxu0 %v1218
      %v1257 = vpop.f32.mrb[0].mxu0
      %v1258 = vadd.f32 0.0, %v1257
      %v1259 = vpop.f32.mrb[0].mxu0
      %v1260 = vpop.f32.mrb[0].mxu0
      %v1261 = vadd.f32 0.0, %v1260
      %v1262 = vpop.f32.mrb[0].mxu0
      %1263 = vdwg.mxu0
      %1264 = vrot.lane.b32.xlu0 %v868, 32
      %v1265 = vpop.permute.xlu0 %1264
      %1266 = vrot.lane.b32.xlu0 %v869, 32
      %v1267 = vpop.permute.xlu0 %1266
      %1268 = vrot.lane.b32.xlu0 %v870, 32
      %v1269 = vpop.permute.xlu0 %1268
      %v1271 = vsel %vm740, %v1265, 0
      %v1274 = vsel %vm740, %v1267, 0
      %v1277 = vsel %vm740, %v1269, 0
      %1279 = vmatprep.subr.bf16.mxu0 0
      %1280 = vmatpush1.bf16.xpose.msra.mxu0 %v1274
      %1281 = vmatprep.subr.bf16.mxu0 0
      %1282 = vmatpush1.bf16.xpose.msra.mxu0 %v1277
      %1283 = vmatprep.subr.bf16.mxu0 0
      %1284 = vmatpush1.bf16.xpose.msra.mxu0 0
      %1285 = vmatprep.subr.bf16.mxu0 0
      %1286 = vmatpush1.bf16.xpose.msra.mxu0 0
      %1287 = vmatprep.subr.bf16.mxu0 0
      %1288 = vmatpush1.bf16.xpose.msra.mxu0 0
      %1289 = vmatprep.subr.bf16.mxu0 0
      %1290 = vmatpush1.bf16.xpose.msra.mxu0 0
      %1291 = vmatprep.subr.bf16.mxu0 0
      %1292 = vmatpush1.bf16.xpose.msra.mxu0 0
      %1293 = vmatprep.subr.bf16.mxu0 0
      %1294 = vmatpush1.bf16.xpose.msra.mxu0 0
      %1295 = vmatprep.subr.bf16.mxu0 0
      %1296 = vmatpush1.bf16.xpose.msra.mxu0 0
      %1297 = vmatprep.subr.bf16.mxu0 0
      %1298 = vmatpush1.bf16.xpose.msra.mxu0 0
      %1299 = vmatprep.subr.bf16.mxu0 0
      %1300 = vmatpush1.bf16.xpose.msra.mxu0 0
      %1301 = vmatprep.subr.bf16.mxu0 0
      %1302 = vmatpush1.bf16.xpose.msra.mxu0 0
      %1303 = vmatprep.subr.bf16.mxu0 0
      %1304 = vmatpush1.bf16.xpose.msra.mxu0 0
      %1305 = vmatprep.subr.bf16.mxu0 0
      %1306 = vmatpush1.bf16.xpose.msra.mxu0 0
      %1307 = vmatprep.subr.bf16.mxu0 0
      %1308 = vmatpush1.bf16.xpose.msra.mxu0 0
      %1309 = vmatprep.subr.bf16.mxu0 0
      %1310 = vmatpush1.bf16.xpose.msra.mxu0 0
      %1311 = vmatprep.mubr.bf16.mxu0 0
      %1312 = vmatmul.mubr.bf16.gmra.mrb[0].mxu0 %v1271
      %v1313 = vpop.f32.mrb[0].mxu0
      %v1314 = vadd.f32 0.0, %v1313
      %v1315 = vpop.f32.mrb[0].mxu0
      %v1316 = vpop.f32.mrb[0].mxu0
      %v1317 = vadd.f32 0.0, %v1316
      %v1318 = vpop.f32.mrb[0].mxu0
      %1319 = vdwg.mxu0
      %v1320 = vsel %vm921, %v1314, -inf
      %1321 = vmax.xlane.f32.xlu0 %v1320
      %v1322 = vpop.xlane.xlu0 %1321
      %v1323 = vsel %vm921, %v1317, -inf
      %1324 = vmax.xlane.f32.xlu0 %v1323
      %v1325 = vpop.xlane.xlu0 %1324
      %v1326 = vsub.f32 %v1314, %v1322
      %v1327 = vsub.f32 %v1317, %v1325
      %v1328 = vmul.f32 %v1326, 1.442695
      %v1329 = vpow.pop %v1328
      %v1330 = vmul.f32 %v1327, 1.442695
      %v1331 = vpow.pop %v1330
      %v1332 = vsel %vm921, %v1329, 0.0
      %1333 = vadd.xlane.f32.xlu0 %v1332
      %v1334 = vpop.xlane.xlu0 %1333
      %v1335 = vsel %vm921, %v1331, 0.0
      %1336 = vadd.xlane.f32.xlu0 %v1335
      %v1337 = vpop.xlane.xlu0 %1336
      %v1338 = vrcp.pop %v1334
      %v1339 = vrcp.pop %v1337
      %v1340 = vmul.f32 %v1329, %v1338
      %v1341 = vmul.f32 %v1331, %v1339
      %v1342 = vpack.c.bf16 %v1341, %v1340
      %1343 = vrot.lane.b32.xlu0 %v945, 32
      %v1344 = vpop.permute.xlu0 %1343
      %1345 = vrot.lane.b32.xlu0 %v946, 32
      %v1346 = vpop.permute.xlu0 %1345
      %v1349 = vsel %vm921, %v1342, 0
      %v1352 = vand.u32 %v1346, %v952
      %1354 = vmatprep.subr.bf16.mxu0 0
      %1355 = vmatpush1.bf16.msra.mxu0 %v1344
      %1356 = vmatprep.subr.bf16.mxu0 0
      %1357 = vmatpush1.bf16.msra.mxu0 %v1352
      %1358 = vmatprep.subr.bf16.mxu0 0
      %1359 = vmatpush1.bf16.msra.mxu0 0
      %1360 = vmatprep.subr.bf16.mxu0 0
      %1361 = vmatpush1.bf16.msra.mxu0 0
      %1362 = vmatprep.subr.bf16.mxu0 0
      %1363 = vmatpush1.bf16.msra.mxu0 0
      %1364 = vmatprep.subr.bf16.mxu0 0
      %1365 = vmatpush1.bf16.msra.mxu0 0
      %1366 = vmatprep.subr.bf16.mxu0 0
      %1367 = vmatpush1.bf16.msra.mxu0 0
      %1368 = vmatprep.subr.bf16.mxu0 0
      %1369 = vmatpush1.bf16.msra.mxu0 0
      %1370 = vmatprep.subr.bf16.mxu0 0
      %1371 = vmatpush1.bf16.msra.mxu0 0
      %1372 = vmatprep.subr.bf16.mxu0 0
      %1373 = vmatpush1.bf16.msra.mxu0 0
      %1374 = vmatprep.subr.bf16.mxu0 0
      %1375 = vmatpush1.bf16.msra.mxu0 0
      %1376 = vmatprep.subr.bf16.mxu0 0
      %1377 = vmatpush1.bf16.msra.mxu0 0
      %1378 = vmatprep.subr.bf16.mxu0 0
      %1379 = vmatpush1.bf16.msra.mxu0 0
      %1380 = vmatprep.subr.bf16.mxu0 0
      %1381 = vmatpush1.bf16.msra.mxu0 0
      %1382 = vmatprep.subr.bf16.mxu0 0
      %1383 = vmatpush1.bf16.msra.mxu0 0
      %1384 = vmatprep.subr.bf16.mxu0 0
      %1385 = vmatpush1.bf16.msra.mxu0 0
      %1386 = vmatprep.mubr.bf16.mxu0 0
      %1387 = vmatmul.mubr.bf16.gmra.mrb[0].mxu0 %v1349
      %v1388 = vpop.f32.mrb[0].mxu0
      %v1389 = vadd.f32 0.0, %v1388
      %v1390 = vpop.f32.mrb[0].mxu0
      %v1391 = vpop.f32.mrb[0].mxu0
      %v1392 = vadd.f32 0.0, %v1391
      %v1393 = vpop.f32.mrb[0].mxu0
      %1394 = vdwg.mxu0
      %1397 = vrot.lane.b32.xlu0 %v1127, 32
      %v1398 = vpop.permute.xlu0 %1397
      %1399 = vrot.lane.b32.xlu0 %v1130, 32
      %v1400 = vpop.permute.xlu0 %1399
      %1405 = vrot.lane.b32.xlu0 %v1258, 64
      %v1406 = vpop.permute.xlu0 %1405
      %1407 = vrot.lane.b32.xlu0 %v1261, 64
      %v1408 = vpop.permute.xlu0 %1407
      %1413 = vrot.lane.b32.xlu0 %v1389, 96
      %v1414 = vpop.permute.xlu0 %1413
      %1415 = vrot.lane.b32.xlu0 %v1392, 96
      %v1416 = vpop.permute.xlu0 %1415
      %v1419 = vsel %vm740, %v991, %v1398
      %v1420 = vsel %vm740, %v994, %v1400
      %vm1421 = vcmask 523264
      %v1422 = vsel %vm1421, %v1419, %v1406
      %v1423 = vsel %vm1421, %v1420, %v1408
      %vm1424 = vcmask 785408
      %v1425 = vsel %vm1424, %v1422, %v1414
      %v1426 = vsel %vm1424, %v1423, %v1416
      %v1427 = vld [vmem:[%s8] sm:$0xf]
      %v1428 = vld [vmem:[%s8 + $0x4] sm:$0xf]
      %v1429 = vld [vmem:[%s8 + $0x8] sm:$0xf]
      %v1430 = vld [vmem:[%s8 + $0xc] sm:$0xf]
      %v1431 = vld [vmem:[%s8 + $0x10] sm:$0xf]
      %v1432 = vld [vmem:[%s8 + $0x14] sm:$0xf]
      %v1433 = vld [vmem:[%s8 + $0x18] sm:$0xf]
      %v1434 = vld [vmem:[%s8 + $0x1c] sm:$0xf]
      %v1435 = vld [vmem:[%s8 + $0x20] sm:$0xf]
      %v1436 = vld [vmem:[%s8 + $0x24] sm:$0xf]
      %v1437 = vld [vmem:[%s8 + $0x28] sm:$0xf]
      %v1438 = vld [vmem:[%s8 + $0x2c] sm:$0xf]
      %v1439 = vld [vmem:[%s8 + $0x30] sm:$0xf]
      %v1440 = vld [vmem:[%s8 + $0x34] sm:$0xf]
      %v1441 = vld [vmem:[%s8 + $0x38] sm:$0xf]
      %v1442 = vld [vmem:[%s8 + $0x3c] sm:$0xf]
      %v1443 = vpack.c.bf16 %v1426, %v1425
      %v1444 = vld [vmem:[%s9] sm:$0x1]
      %v1446 = vlaneseq
      %v1447 = vshrl.u32 %v1446, 7
      %v1448 = vsub.s32 0, %v1447
      %v1449 = vrot.slane %v1444, %v1448
      %v1467 = vunpack.c.l.b16 %v1427
      %v1468 = vunpack.c.l.b16 %v1428
      %v1469 = vunpack.c.l.b16 %v1429
      %v1470 = vunpack.c.l.b16 %v1430
      %v1471 = vunpack.c.l.b16 %v1431
      %v1472 = vunpack.c.l.b16 %v1432
      %v1473 = vunpack.c.l.b16 %v1433
      %v1474 = vunpack.c.l.b16 %v1434
      %v1475 = vunpack.c.l.b16 %v1435
      %v1476 = vunpack.c.l.b16 %v1436
      %v1477 = vunpack.c.l.b16 %v1437
      %v1478 = vunpack.c.l.b16 %v1438
      %v1479 = vunpack.c.l.b16 %v1439
      %v1480 = vunpack.c.l.b16 %v1440
      %v1481 = vunpack.c.l.b16 %v1441
      %v1482 = vunpack.c.l.b16 %v1442
      %v1483 = vpack.c.b16 %v1468, %v1467
      %v1484 = vpack.c.b16 %v1470, %v1469
      %v1485 = vpack.c.b16 %v1472, %v1471
      %v1486 = vpack.c.b16 %v1474, %v1473
      %v1487 = vpack.c.b16 %v1476, %v1475
      %v1488 = vpack.c.b16 %v1478, %v1477
      %v1489 = vpack.c.b16 %v1480, %v1479
      %v1490 = vpack.c.b16 %v1482, %v1481
      %1499 = vmatprep.subr.bf16.mxu0 0
      %1500 = vmatpush1.bf16.msra.mxu0 %v1483
      %1501 = vmatprep.subr.bf16.mxu0 0
      %1502 = vmatpush1.bf16.msra.mxu0 %v1484
      %1503 = vmatprep.subr.bf16.mxu0 0
      %1504 = vmatpush1.bf16.msra.mxu0 %v1485
      %1505 = vmatprep.subr.bf16.mxu0 0
      %1506 = vmatpush1.bf16.msra.mxu0 %v1486
      %1507 = vmatprep.subr.bf16.mxu0 0
      %1508 = vmatpush1.bf16.msra.mxu0 %v1487
      %1509 = vmatprep.subr.bf16.mxu0 0
      %1510 = vmatpush1.bf16.msra.mxu0 %v1488
      %1511 = vmatprep.subr.bf16.mxu0 0
      %1512 = vmatpush1.bf16.msra.mxu0 %v1489
      %1513 = vmatprep.subr.bf16.mxu0 0
      %1514 = vmatpush1.bf16.msra.mxu0 %v1490
      %1515 = vmatprep.subr.bf16.mxu0 0
      %1516 = vmatpush1.bf16.msra.mxu0 0
      %1517 = vmatprep.subr.bf16.mxu0 0
      %1518 = vmatpush1.bf16.msra.mxu0 0
      %1519 = vmatprep.subr.bf16.mxu0 0
      %1520 = vmatpush1.bf16.msra.mxu0 0
      %1521 = vmatprep.subr.bf16.mxu0 0
      %1522 = vmatpush1.bf16.msra.mxu0 0
      %1523 = vmatprep.subr.bf16.mxu0 0
      %1524 = vmatpush1.bf16.msra.mxu0 0
      %1525 = vmatprep.subr.bf16.mxu0 0
      %1526 = vmatpush1.bf16.msra.mxu0 0
      %1527 = vmatprep.subr.bf16.mxu0 0
      %1528 = vmatpush1.bf16.msra.mxu0 0
      %1529 = vmatprep.subr.bf16.mxu0 0
      %1530 = vmatpush1.bf16.msra.mxu0 0
      %1531 = vmatprep.mubr.bf16.mxu0 0
      %1532 = vmatmul.mubr.bf16.gmra.mrb[0].mxu0 %v1443
      %v1533 = vpop.f32.mrb[0].mxu0
      %v1534 = vadd.f32 %v1449, %v1533
      %v1535 = vpop.f32.mrb[0].mxu0
      %v1536 = vpop.f32.mrb[0].mxu0
      %v1537 = vadd.f32 %v1449, %v1536
      %v1538 = vpop.f32.mrb[0].mxu0
      %1539 = vdwg.mxu0
      %v1540 = vadd.f32 %v1534, %v597
      %v1541 = vadd.f32 %v1537, %v598
      %v1542 = vld [vmem:[%s10] sm:$0x1]
      %v1543 = vld [vmem:[%s11] sm:$0x1]
      %1544 = vadd.xlane.f32.xlu0 %v1540
      %v1545 = vpop.xlane.xlu0 %1544
      %1546 = vadd.xlane.f32.xlu0 %v1541
      %v1547 = vpop.xlane.xlu0 %1546
      %v1548 = vrcp.pop 128.0
      %v1549 = vmul.f32 %v1545, %v1548
      %v1550 = vmul.f32 %v1547, %v1548
      %v1551 = vsub.f32 %v1540, %v1549
      %v1552 = vsub.f32 %v1541, %v1550
      %v1553 = vmul.f32 %v1551, %v1551
      %v1554 = vmul.f32 %v1552, %v1552
      %1555 = vadd.xlane.f32.xlu0 %v1553
      %v1556 = vpop.xlane.xlu0 %1555
      %1557 = vadd.xlane.f32.xlu0 %v1554
      %v1558 = vpop.xlane.xlu0 %1557
      %v1559 = vmul.f32 %v1556, %v1548
      %v1560 = vmul.f32 %v1558, %v1548
      %v1561 = vadd.f32 %v1559, 1e-12
      %v1562 = vadd.f32 %v1560, 1e-12
      %v1563 = vrsqrt.pop %v1561
      %v1564 = vrsqrt.pop %v1562
      %v1565 = vmul.f32 %v1551, %v1563
      %v1566 = vmul.f32 %v1552, %v1564
      %v1568 = vlaneseq
      %v1569 = vshrl.u32 %v1568, 7
      %v1570 = vsub.s32 0, %v1569
      %v1571 = vrot.slane %v1542, %v1570
      %v1573 = vmul.f32 %v1565, %v1571
      %v1574 = vmul.f32 %v1566, %v1571
      %v1576 = vlaneseq
      %v1577 = vshrl.u32 %v1576, 7
      %v1578 = vsub.s32 0, %v1577
      %v1579 = vrot.slane %v1543, %v1578
      %v1581 = vadd.f32 %v1573, %v1579
      %v1582 = vadd.f32 %v1574, %v1579
      %v1583 = vld [vmem:[%s12] sm:$0xff]
      %v1584 = vld [vmem:[%s12 + $0x8] sm:$0xff]
      %v1585 = vld [vmem:[%s12 + $0x10] sm:$0xff]
      %v1586 = vld [vmem:[%s12 + $0x18] sm:$0xff]
      %v1587 = vld [vmem:[%s12 + $0x20] sm:$0xff]
      %v1588 = vld [vmem:[%s12 + $0x28] sm:$0xff]
      %v1589 = vld [vmem:[%s12 + $0x30] sm:$0xff]
      %v1590 = vld [vmem:[%s12 + $0x38] sm:$0xff]
      %v1591 = vld [vmem:[%s12 + $0x40] sm:$0xff]
      %v1592 = vld [vmem:[%s12 + $0x48] sm:$0xff]
      %v1593 = vld [vmem:[%s12 + $0x50] sm:$0xff]
      %v1594 = vld [vmem:[%s12 + $0x58] sm:$0xff]
      %v1595 = vld [vmem:[%s12 + $0x60] sm:$0xff]
      %v1596 = vld [vmem:[%s12 + $0x68] sm:$0xff]
      %v1597 = vld [vmem:[%s12 + $0x70] sm:$0xff]
      %v1598 = vld [vmem:[%s12 + $0x78] sm:$0xff]
      %v1599 = vld [vmem:[%s12 + $0x80] sm:$0xff]
      %v1600 = vld [vmem:[%s12 + $0x88] sm:$0xff]
      %v1601 = vld [vmem:[%s12 + $0x90] sm:$0xff]
      %v1602 = vld [vmem:[%s12 + $0x98] sm:$0xff]
      %v1603 = vld [vmem:[%s12 + $0xa0] sm:$0xff]
      %v1604 = vld [vmem:[%s12 + $0xa8] sm:$0xff]
      %v1605 = vld [vmem:[%s12 + $0xb0] sm:$0xff]
      %v1606 = vld [vmem:[%s12 + $0xb8] sm:$0xff]
      %v1607 = vld [vmem:[%s12 + $0xc0] sm:$0xff]
      %v1608 = vld [vmem:[%s12 + $0xc8] sm:$0xff]
      %v1609 = vld [vmem:[%s12 + $0xd0] sm:$0xff]
      %v1610 = vld [vmem:[%s12 + $0xd8] sm:$0xff]
      %v1611 = vld [vmem:[%s12 + $0xe0] sm:$0xff]
      %v1612 = vld [vmem:[%s12 + $0xe8] sm:$0xff]
      %v1613 = vld [vmem:[%s12 + $0xf0] sm:$0xff]
      %v1614 = vld [vmem:[%s12 + $0xf8] sm:$0xff]
      %v1615 = vpack.c.bf16 %v1582, %v1581
      %v1616 = vld [vmem:[%s13] sm:$0xf]
      %v1618 = vlaneseq
      %v1619 = vshrl.u32 %v1618, 7
      %v1620 = vsub.s32 0, %v1619
      %v1621 = vrot.slane %v1616, %v1620
      %v1622 = vlaneseq
      %v1623 = vshrl.u32 %v1622, 7
      %v1624 = vsub.s32 1, %v1623
      %v1625 = vrot.slane %v1616, %v1624
      %v1626 = vlaneseq
      %v1627 = vshrl.u32 %v1626, 7
      %v1628 = vsub.s32 2, %v1627
      %v1629 = vrot.slane %v1616, %v1628
      %v1630 = vlaneseq
      %v1631 = vshrl.u32 %v1630, 7
      %v1632 = vsub.s32 3, %v1631
      %v1633 = vrot.slane %v1616, %v1632
      %v1670 = vunpack.c.l.b16 %v1583
      %v1671 = vunpack.c.h.b16 %v1583
      %v1672 = vunpack.c.l.b16 %v1584
      %v1673 = vunpack.c.h.b16 %v1584
      %v1674 = vunpack.c.l.b16 %v1585
      %v1675 = vunpack.c.h.b16 %v1585
      %v1676 = vunpack.c.l.b16 %v1586
      %v1677 = vunpack.c.h.b16 %v1586
      %v1678 = vunpack.c.l.b16 %v1587
      %v1679 = vunpack.c.h.b16 %v1587
      %v1680 = vunpack.c.l.b16 %v1588
      %v1681 = vunpack.c.h.b16 %v1588
      %v1682 = vunpack.c.l.b16 %v1589
      %v1683 = vunpack.c.h.b16 %v1589
      %v1684 = vunpack.c.l.b16 %v1590
      %v1685 = vunpack.c.h.b16 %v1590
      %v1686 = vunpack.c.l.b16 %v1591
      %v1687 = vunpack.c.h.b16 %v1591
      %v1688 = vunpack.c.l.b16 %v1592
      %v1689 = vunpack.c.h.b16 %v1592
      %v1690 = vunpack.c.l.b16 %v1593
      %v1691 = vunpack.c.h.b16 %v1593
      %v1692 = vunpack.c.l.b16 %v1594
      %v1693 = vunpack.c.h.b16 %v1594
      %v1694 = vunpack.c.l.b16 %v1595
      %v1695 = vunpack.c.h.b16 %v1595
      %v1696 = vunpack.c.l.b16 %v1596
      %v1697 = vunpack.c.h.b16 %v1596
      %v1698 = vunpack.c.l.b16 %v1597
      %v1699 = vunpack.c.h.b16 %v1597
      %v1700 = vunpack.c.l.b16 %v1598
      %v1701 = vunpack.c.h.b16 %v1598
      %v1702 = vunpack.c.l.b16 %v1599
      %v1703 = vunpack.c.h.b16 %v1599
      %v1704 = vunpack.c.l.b16 %v1600
      %v1705 = vunpack.c.h.b16 %v1600
      %v1706 = vunpack.c.l.b16 %v1601
      %v1707 = vunpack.c.h.b16 %v1601
      %v1708 = vunpack.c.l.b16 %v1602
      %v1709 = vunpack.c.h.b16 %v1602
      %v1710 = vunpack.c.l.b16 %v1603
      %v1711 = vunpack.c.h.b16 %v1603
      %v1712 = vunpack.c.l.b16 %v1604
      %v1713 = vunpack.c.h.b16 %v1604
      %v1714 = vunpack.c.l.b16 %v1605
      %v1715 = vunpack.c.h.b16 %v1605
      %v1716 = vunpack.c.l.b16 %v1606
      %v1717 = vunpack.c.h.b16 %v1606
      %v1718 = vunpack.c.l.b16 %v1607
      %v1719 = vunpack.c.h.b16 %v1607
      %v1720 = vunpack.c.l.b16 %v1608
      %v1721 = vunpack.c.h.b16 %v1608
      %v1722 = vunpack.c.l.b16 %v1609
      %v1723 = vunpack.c.h.b16 %v1609
      %v1724 = vunpack.c.l.b16 %v1610
      %v1725 = vunpack.c.h.b16 %v1610
      %v1726 = vunpack.c.l.b16 %v1611
      %v1727 = vunpack.c.h.b16 %v1611
      %v1728 = vunpack.c.l.b16 %v1612
      %v1729 = vunpack.c.h.b16 %v1612
      %v1730 = vunpack.c.l.b16 %v1613
      %v1731 = vunpack.c.h.b16 %v1613
      %v1732 = vunpack.c.l.b16 %v1614
      %v1733 = vunpack.c.h.b16 %v1614
      %v1734 = vpack.c.b16 %v1674, %v1670
      %v1735 = vpack.c.b16 %v1675, %v1671
      %v1736 = vpack.c.b16 %v1676, %v1672
      %v1737 = vpack.c.b16 %v1677, %v1673
      %v1738 = vpack.c.b16 %v1682, %v1678
      %v1739 = vpack.c.b16 %v1683, %v1679
      %v1740 = vpack.c.b16 %v1684, %v1680
      %v1741 = vpack.c.b16 %v1685, %v1681
      %v1742 = vpack.c.b16 %v1690, %v1686
      %v1743 = vpack.c.b16 %v1691, %v1687
      %v1744 = vpack.c.b16 %v1692, %v1688
      %v1745 = vpack.c.b16 %v1693, %v1689
      %v1746 = vpack.c.b16 %v1698, %v1694
      %v1747 = vpack.c.b16 %v1699, %v1695
      %v1748 = vpack.c.b16 %v1700, %v1696
      %v1749 = vpack.c.b16 %v1701, %v1697
      %v1750 = vpack.c.b16 %v1706, %v1702
      %v1751 = vpack.c.b16 %v1707, %v1703
      %v1752 = vpack.c.b16 %v1708, %v1704
      %v1753 = vpack.c.b16 %v1709, %v1705
      %v1754 = vpack.c.b16 %v1714, %v1710
      %v1755 = vpack.c.b16 %v1715, %v1711
      %v1756 = vpack.c.b16 %v1716, %v1712
      %v1757 = vpack.c.b16 %v1717, %v1713
      %v1758 = vpack.c.b16 %v1722, %v1718
      %v1759 = vpack.c.b16 %v1723, %v1719
      %v1760 = vpack.c.b16 %v1724, %v1720
      %v1761 = vpack.c.b16 %v1725, %v1721
      %v1762 = vpack.c.b16 %v1730, %v1726
      %v1763 = vpack.c.b16 %v1731, %v1727
      %v1764 = vpack.c.b16 %v1732, %v1728
      %v1765 = vpack.c.b16 %v1733, %v1729
      %1798 = vmatprep.subr.bf16.mxu0 %v1735
      %1799 = vmatpush1.bf16.msra.mxu0 %v1734
      %1800 = vmatprep.subr.bf16.mxu0 %v1739
      %1801 = vmatpush1.bf16.msra.mxu0 %v1738
      %1802 = vmatprep.subr.bf16.mxu0 %v1743
      %1803 = vmatpush1.bf16.msra.mxu0 %v1742
      %1804 = vmatprep.subr.bf16.mxu0 %v1747
      %1805 = vmatpush1.bf16.msra.mxu0 %v1746
      %1806 = vmatprep.subr.bf16.mxu0 %v1751
      %1807 = vmatpush1.bf16.msra.mxu0 %v1750
      %1808 = vmatprep.subr.bf16.mxu0 %v1755
      %1809 = vmatpush1.bf16.msra.mxu0 %v1754
      %1810 = vmatprep.subr.bf16.mxu0 %v1759
      %1811 = vmatpush1.bf16.msra.mxu0 %v1758
      %1812 = vmatprep.subr.bf16.mxu0 %v1763
      %1813 = vmatpush1.bf16.msra.mxu0 %v1762
      %1814 = vmatprep.subr.bf16.mxu0 0
      %1815 = vmatpush1.bf16.msra.mxu0 0
      %1816 = vmatprep.subr.bf16.mxu0 0
      %1817 = vmatpush1.bf16.msra.mxu0 0
      %1818 = vmatprep.subr.bf16.mxu0 0
      %1819 = vmatpush1.bf16.msra.mxu0 0
      %1820 = vmatprep.subr.bf16.mxu0 0
      %1821 = vmatpush1.bf16.msra.mxu0 0
      %1822 = vmatprep.subr.bf16.mxu0 0
      %1823 = vmatpush1.bf16.msra.mxu0 0
      %1824 = vmatprep.subr.bf16.mxu0 0
      %1825 = vmatpush1.bf16.msra.mxu0 0
      %1826 = vmatprep.subr.bf16.mxu0 0
      %1827 = vmatpush1.bf16.msra.mxu0 0
      %1828 = vmatprep.subr.bf16.mxu0 0
      %1829 = vmatpush1.bf16.msra.mxu0 0
      %1830 = vmatprep.mubr.bf16.mxu0 0
      %1831 = vmatmul.mubr.bf16.gmra.mrb[0].mxu0 %v1615
      %v1832 = vpop.f32.mrb[0].mxu0
      %v1833 = vadd.f32 %v1621, %v1832
      %v1834 = vpop.f32.mrb[0].mxu0
      %v1835 = vadd.f32 %v1625, %v1834
      %v1836 = vpop.f32.mrb[0].mxu0
      %v1837 = vadd.f32 %v1621, %v1836
      %v1838 = vpop.f32.mrb[0].mxu0
      %v1839 = vadd.f32 %v1625, %v1838
      %1840 = vdwg.mxu0
      %1841 = vmatprep.subr.bf16.mxu0 %v1737
      %1842 = vmatpush1.bf16.msra.mxu0 %v1736
      %1843 = vmatprep.subr.bf16.mxu0 %v1741
      %1844 = vmatpush1.bf16.msra.mxu0 %v1740
      %1845 = vmatprep.subr.bf16.mxu0 %v1745
      %1846 = vmatpush1.bf16.msra.mxu0 %v1744
      %1847 = vmatprep.subr.bf16.mxu0 %v1749
      %1848 = vmatpush1.bf16.msra.mxu0 %v1748
      %1849 = vmatprep.subr.bf16.mxu0 %v1753
      %1850 = vmatpush1.bf16.msra.mxu0 %v1752
      %1851 = vmatprep.subr.bf16.mxu0 %v1757
      %1852 = vmatpush1.bf16.msra.mxu0 %v1756
      %1853 = vmatprep.subr.bf16.mxu0 %v1761
      %1854 = vmatpush1.bf16.msra.mxu0 %v1760
      %1855 = vmatprep.subr.bf16.mxu0 %v1765
      %1856 = vmatpush1.bf16.msra.mxu0 %v1764
      %1857 = vmatprep.subr.bf16.mxu0 0
      %1858 = vmatpush1.bf16.msra.mxu0 0
      %1859 = vmatprep.subr.bf16.mxu0 0
      %1860 = vmatpush1.bf16.msra.mxu0 0
      %1861 = vmatprep.subr.bf16.mxu0 0
      %1862 = vmatpush1.bf16.msra.mxu0 0
      %1863 = vmatprep.subr.bf16.mxu0 0
      %1864 = vmatpush1.bf16.msra.mxu0 0
      %1865 = vmatprep.subr.bf16.mxu0 0
      %1866 = vmatpush1.bf16.msra.mxu0 0
      %1867 = vmatprep.subr.bf16.mxu0 0
      %1868 = vmatpush1.bf16.msra.mxu0 0
      %1869 = vmatprep.subr.bf16.mxu0 0
      %1870 = vmatpush1.bf16.msra.mxu0 0
      %1871 = vmatprep.subr.bf16.mxu0 0
      %1872 = vmatpush1.bf16.msra.mxu0 0
      %1873 = vmatprep.mubr.bf16.mxu0 0
      %1874 = vmatmul.mubr.bf16.gmra.mrb[0].mxu0 %v1615
      %v1875 = vpop.f32.mrb[0].mxu0
      %v1876 = vadd.f32 %v1629, %v1875
      %v1877 = vpop.f32.mrb[0].mxu0
      %v1878 = vadd.f32 %v1633, %v1877
      %v1879 = vpop.f32.mrb[0].mxu0
      %v1880 = vadd.f32 %v1629, %v1879
      %v1881 = vpop.f32.mrb[0].mxu0
      %v1882 = vadd.f32 %v1633, %v1881
      %1883 = vdwg.mxu0
      %v1884 = vmul.f32 %v1833, 0.5
      %v1885 = vmul.f32 %v1835, 0.5
      %v1886 = vmul.f32 %v1876, 0.5
      %v1887 = vmul.f32 %v1878, 0.5
      %v1888 = vmul.f32 %v1837, 0.5
      %v1889 = vmul.f32 %v1839, 0.5
      %v1890 = vmul.f32 %v1880, 0.5
      %v1891 = vmul.f32 %v1882, 0.5
      %v1892 = vmul.f32 %v1833, 0.044715
      %v1893 = vmul.f32 %v1835, 0.044715
      %v1894 = vmul.f32 %v1876, 0.044715
      %v1895 = vmul.f32 %v1878, 0.044715
      %v1896 = vmul.f32 %v1837, 0.044715
      %v1897 = vmul.f32 %v1839, 0.044715
      %v1898 = vmul.f32 %v1880, 0.044715
      %v1899 = vmul.f32 %v1882, 0.044715
      %v1900 = vmul.f32 %v1892, %v1833
      %v1901 = vmul.f32 %v1893, %v1835
      %v1902 = vmul.f32 %v1894, %v1876
      %v1903 = vmul.f32 %v1895, %v1878
      %v1904 = vmul.f32 %v1896, %v1837
      %v1905 = vmul.f32 %v1897, %v1839
      %v1906 = vmul.f32 %v1898, %v1880
      %v1907 = vmul.f32 %v1899, %v1882
      %v1908 = vmul.f32 %v1900, %v1833
      %v1909 = vmul.f32 %v1901, %v1835
      %v1910 = vmul.f32 %v1902, %v1876
      %v1911 = vmul.f32 %v1903, %v1878
      %v1912 = vmul.f32 %v1904, %v1837
      %v1913 = vmul.f32 %v1905, %v1839
      %v1914 = vmul.f32 %v1906, %v1880
      %v1915 = vmul.f32 %v1907, %v1882
      %v1916 = vadd.f32 %v1833, %v1908
      %v1917 = vadd.f32 %v1835, %v1909
      %v1918 = vadd.f32 %v1876, %v1910
      %v1919 = vadd.f32 %v1878, %v1911
      %v1920 = vadd.f32 %v1837, %v1912
      %v1921 = vadd.f32 %v1839, %v1913
      %v1922 = vadd.f32 %v1880, %v1914
      %v1923 = vadd.f32 %v1882, %v1915
      %v1924 = vmul.f32 %v1916, 0.7978846
      %v1925 = vmul.f32 %v1917, 0.7978846
      %v1926 = vmul.f32 %v1918, 0.7978846
      %v1927 = vmul.f32 %v1919, 0.7978846
      %v1928 = vmul.f32 %v1920, 0.7978846
      %v1929 = vmul.f32 %v1921, 0.7978846
      %v1930 = vmul.f32 %v1922, 0.7978846
      %v1931 = vmul.f32 %v1923, 0.7978846
      %v1932 = vtanh.pop %v1924
      %v1933 = vtanh.pop %v1925
      %v1934 = vtanh.pop %v1926
      %v1935 = vtanh.pop %v1927
      %v1936 = vtanh.pop %v1928
      %v1937 = vtanh.pop %v1929
      %v1938 = vtanh.pop %v1930
      %v1939 = vtanh.pop %v1931
      %v1940 = vadd.f32 %v1932, 1.0
      %v1941 = vadd.f32 %v1933, 1.0
      %v1942 = vadd.f32 %v1934, 1.0
      %v1943 = vadd.f32 %v1935, 1.0
      %v1944 = vadd.f32 %v1936, 1.0
      %v1945 = vadd.f32 %v1937, 1.0
      %v1946 = vadd.f32 %v1938, 1.0
      %v1947 = vadd.f32 %v1939, 1.0
      %v1948 = vmul.f32 %v1884, %v1940
      %v1949 = vmul.f32 %v1885, %v1941
      %v1950 = vmul.f32 %v1886, %v1942
      %v1951 = vmul.f32 %v1887, %v1943
      %v1952 = vmul.f32 %v1888, %v1944
      %v1953 = vmul.f32 %v1889, %v1945
      %v1954 = vmul.f32 %v1890, %v1946
      %v1955 = vmul.f32 %v1891, %v1947
      %v1956 = vld [vmem:[%s14] sm:$0xf]
      %v1957 = vld [vmem:[%s14 + $0x4] sm:$0xf]
      %v1958 = vld [vmem:[%s14 + $0x8] sm:$0xf]
      %v1959 = vld [vmem:[%s14 + $0xc] sm:$0xf]
      %v1960 = vld [vmem:[%s14 + $0x10] sm:$0xf]
      %v1961 = vld [vmem:[%s14 + $0x14] sm:$0xf]
      %v1962 = vld [vmem:[%s14 + $0x18] sm:$0xf]
      %v1963 = vld [vmem:[%s14 + $0x1c] sm:$0xf]
      %v1964 = vld [vmem:[%s14 + $0x20] sm:$0xf]
      %v1965 = vld [vmem:[%s14 + $0x24] sm:$0xf]
      %v1966 = vld [vmem:[%s14 + $0x28] sm:$0xf]
      %v1967 = vld [vmem:[%s14 + $0x2c] sm:$0xf]
      %v1968 = vld [vmem:[%s14 + $0x30] sm:$0xf]
      %v1969 = vld [vmem:[%s14 + $0x34] sm:$0xf]
      %v1970 = vld [vmem:[%s14 + $0x38] sm:$0xf]
      %v1971 = vld [vmem:[%s14 + $0x3c] sm:$0xf]
      %v1972 = vld [vmem:[%s14 + $0x40] sm:$0xf]
      %v1973 = vld [vmem:[%s14 + $0x44] sm:$0xf]
      %v1974 = vld [vmem:[%s14 + $0x48] sm:$0xf]
      %v1975 = vld [vmem:[%s14 + $0x4c] sm:$0xf]
      %v1976 = vld [vmem:[%s14 + $0x50] sm:$0xf]
      %v1977 = vld [vmem:[%s14 + $0x54] sm:$0xf]
      %v1978 = vld [vmem:[%s14 + $0x58] sm:$0xf]
      %v1979 = vld [vmem:[%s14 + $0x5c] sm:$0xf]
      %v1980 = vld [vmem:[%s14 + $0x60] sm:$0xf]
      %v1981 = vld [vmem:[%s14 + $0x64] sm:$0xf]
      %v1982 = vld [vmem:[%s14 + $0x68] sm:$0xf]
      %v1983 = vld [vmem:[%s14 + $0x6c] sm:$0xf]
      %v1984 = vld [vmem:[%s14 + $0x70] sm:$0xf]
      %v1985 = vld [vmem:[%s14 + $0x74] sm:$0xf]
      %v1986 = vld [vmem:[%s14 + $0x78] sm:$0xf]
      %v1987 = vld [vmem:[%s14 + $0x7c] sm:$0xf]
      %v1988 = vld [vmem:[%s14 + $0x80] sm:$0xf]
      %v1989 = vld [vmem:[%s14 + $0x84] sm:$0xf]
      %v1990 = vld [vmem:[%s14 + $0x88] sm:$0xf]
      %v1991 = vld [vmem:[%s14 + $0x8c] sm:$0xf]
      %v1992 = vld [vmem:[%s14 + $0x90] sm:$0xf]
      %v1993 = vld [vmem:[%s14 + $0x94] sm:$0xf]
      %v1994 = vld [vmem:[%s14 + $0x98] sm:$0xf]
      %v1995 = vld [vmem:[%s14 + $0x9c] sm:$0xf]
      %v1996 = vld [vmem:[%s14 + $0xa0] sm:$0xf]
      %v1997 = vld [vmem:[%s14 + $0xa4] sm:$0xf]
      %v1998 = vld [vmem:[%s14 + $0xa8] sm:$0xf]
      %v1999 = vld [vmem:[%s14 + $0xac] sm:$0xf]
      %v2000 = vld [vmem:[%s14 + $0xb0] sm:$0xf]
      %v2001 = vld [vmem:[%s14 + $0xb4] sm:$0xf]
      %v2002 = vld [vmem:[%s14 + $0xb8] sm:$0xf]
      %v2003 = vld [vmem:[%s14 + $0xbc] sm:$0xf]
      %v2004 = vld [vmem:[%s14 + $0xc0] sm:$0xf]
      %v2005 = vld [vmem:[%s14 + $0xc4] sm:$0xf]
      %v2006 = vld [vmem:[%s14 + $0xc8] sm:$0xf]
      %v2007 = vld [vmem:[%s14 + $0xcc] sm:$0xf]
      %v2008 = vld [vmem:[%s14 + $0xd0] sm:$0xf]
      %v2009 = vld [vmem:[%s14 + $0xd4] sm:$0xf]
      %v2010 = vld [vmem:[%s14 + $0xd8] sm:$0xf]
      %v2011 = vld [vmem:[%s14 + $0xdc] sm:$0xf]
      %v2012 = vld [vmem:[%s14 + $0xe0] sm:$0xf]
      %v2013 = vld [vmem:[%s14 + $0xe4] sm:$0xf]
      %v2014 = vld [vmem:[%s14 + $0xe8] sm:$0xf]
      %v2015 = vld [vmem:[%s14 + $0xec] sm:$0xf]
      %v2016 = vld [vmem:[%s14 + $0xf0] sm:$0xf]
      %v2017 = vld [vmem:[%s14 + $0xf4] sm:$0xf]
      %v2018 = vld [vmem:[%s14 + $0xf8] sm:$0xf]
      %v2019 = vld [vmem:[%s14 + $0xfc] sm:$0xf]
      %v2020 = vpack.c.bf16 %v1952, %v1948
      %v2021 = vpack.c.bf16 %v1953, %v1949
      %v2022 = vpack.c.bf16 %v1954, %v1950
      %v2023 = vpack.c.bf16 %v1955, %v1951
      %v2024 = vld [vmem:[%s15] sm:$0x1]
      %v2026 = vlaneseq
      %v2027 = vshrl.u32 %v2026, 7
      %v2028 = vsub.s32 0, %v2027
      %v2029 = vrot.slane %v2024, %v2028
      %v2095 = vunpack.c.l.b16 %v1956
      %v2096 = vunpack.c.l.b16 %v1957
      %v2097 = vunpack.c.l.b16 %v1958
      %v2098 = vunpack.c.l.b16 %v1959
      %v2099 = vunpack.c.l.b16 %v1960
      %v2100 = vunpack.c.l.b16 %v1961
      %v2101 = vunpack.c.l.b16 %v1962
      %v2102 = vunpack.c.l.b16 %v1963
      %v2103 = vunpack.c.l.b16 %v1964
      %v2104 = vunpack.c.l.b16 %v1965
      %v2105 = vunpack.c.l.b16 %v1966
      %v2106 = vunpack.c.l.b16 %v1967
      %v2107 = vunpack.c.l.b16 %v1968
      %v2108 = vunpack.c.l.b16 %v1969
      %v2109 = vunpack.c.l.b16 %v1970
      %v2110 = vunpack.c.l.b16 %v1971
      %v2111 = vunpack.c.l.b16 %v1972
      %v2112 = vunpack.c.l.b16 %v1973
      %v2113 = vunpack.c.l.b16 %v1974
      %v2114 = vunpack.c.l.b16 %v1975
      %v2115 = vunpack.c.l.b16 %v1976
      %v2116 = vunpack.c.l.b16 %v1977
      %v2117 = vunpack.c.l.b16 %v1978
      %v2118 = vunpack.c.l.b16 %v1979
      %v2119 = vunpack.c.l.b16 %v1980
      %v2120 = vunpack.c.l.b16 %v1981
      %v2121 = vunpack.c.l.b16 %v1982
      %v2122 = vunpack.c.l.b16 %v1983
      %v2123 = vunpack.c.l.b16 %v1984
      %v2124 = vunpack.c.l.b16 %v1985
      %v2125 = vunpack.c.l.b16 %v1986
      %v2126 = vunpack.c.l.b16 %v1987
      %v2127 = vunpack.c.l.b16 %v1988
      %v2128 = vunpack.c.l.b16 %v1989
      %v2129 = vunpack.c.l.b16 %v1990
      %v2130 = vunpack.c.l.b16 %v1991
      %v2131 = vunpack.c.l.b16 %v1992
      %v2132 = vunpack.c.l.b16 %v1993
      %v2133 = vunpack.c.l.b16 %v1994
      %v2134 = vunpack.c.l.b16 %v1995
      %v2135 = vunpack.c.l.b16 %v1996
      %v2136 = vunpack.c.l.b16 %v1997
      %v2137 = vunpack.c.l.b16 %v1998
      %v2138 = vunpack.c.l.b16 %v1999
      %v2139 = vunpack.c.l.b16 %v2000
      %v2140 = vunpack.c.l.b16 %v2001
      %v2141 = vunpack.c.l.b16 %v2002
      %v2142 = vunpack.c.l.b16 %v2003
      %v2143 = vunpack.c.l.b16 %v2004
      %v2144 = vunpack.c.l.b16 %v2005
      %v2145 = vunpack.c.l.b16 %v2006
      %v2146 = vunpack.c.l.b16 %v2007
      %v2147 = vunpack.c.l.b16 %v2008
      %v2148 = vunpack.c.l.b16 %v2009
      %v2149 = vunpack.c.l.b16 %v2010
      %v2150 = vunpack.c.l.b16 %v2011
      %v2151 = vunpack.c.l.b16 %v2012
      %v2152 = vunpack.c.l.b16 %v2013
      %v2153 = vunpack.c.l.b16 %v2014
      %v2154 = vunpack.c.l.b16 %v2015
      %v2155 = vunpack.c.l.b16 %v2016
      %v2156 = vunpack.c.l.b16 %v2017
      %v2157 = vunpack.c.l.b16 %v2018
      %v2158 = vunpack.c.l.b16 %v2019
      %v2159 = vpack.c.b16 %v2096, %v2095
      %v2160 = vpack.c.b16 %v2098, %v2097
      %v2161 = vpack.c.b16 %v2100, %v2099
      %v2162 = vpack.c.b16 %v2102, %v2101
      %v2163 = vpack.c.b16 %v2104, %v2103
      %v2164 = vpack.c.b16 %v2106, %v2105
      %v2165 = vpack.c.b16 %v2108, %v2107
      %v2166 = vpack.c.b16 %v2110, %v2109
      %v2167 = vpack.c.b16 %v2112, %v2111
      %v2168 = vpack.c.b16 %v2114, %v2113
      %v2169 = vpack.c.b16 %v2116, %v2115
      %v2170 = vpack.c.b16 %v2118, %v2117
      %v2171 = vpack.c.b16 %v2120, %v2119
      %v2172 = vpack.c.b16 %v2122, %v2121
      %v2173 = vpack.c.b16 %v2124, %v2123
      %v2174 = vpack.c.b16 %v2126, %v2125
      %v2175 = vpack.c.b16 %v2128, %v2127
      %v2176 = vpack.c.b16 %v2130, %v2129
      %v2177 = vpack.c.b16 %v2132, %v2131
      %v2178 = vpack.c.b16 %v2134, %v2133
      %v2179 = vpack.c.b16 %v2136, %v2135
      %v2180 = vpack.c.b16 %v2138, %v2137
      %v2181 = vpack.c.b16 %v2140, %v2139
      %v2182 = vpack.c.b16 %v2142, %v2141
      %v2183 = vpack.c.b16 %v2144, %v2143
      %v2184 = vpack.c.b16 %v2146, %v2145
      %v2185 = vpack.c.b16 %v2148, %v2147
      %v2186 = vpack.c.b16 %v2150, %v2149
      %v2187 = vpack.c.b16 %v2152, %v2151
      %v2188 = vpack.c.b16 %v2154, %v2153
      %v2189 = vpack.c.b16 %v2156, %v2155
      %v2190 = vpack.c.b16 %v2158, %v2157
      %2223 = vmatprep.subr.bf16.mxu0 0
      %2224 = vmatpush1.bf16.msra.mxu0 %v2159
      %2225 = vmatprep.subr.bf16.mxu0 0
      %2226 = vmatpush1.bf16.msra.mxu0 %v2160
      %2227 = vmatprep.subr.bf16.mxu0 0
      %2228 = vmatpush1.bf16.msra.mxu0 %v2161
      %2229 = vmatprep.subr.bf16.mxu0 0
      %2230 = vmatpush1.bf16.msra.mxu0 %v2162
      %2231 = vmatprep.subr.bf16.mxu0 0
      %2232 = vmatpush1.bf16.msra.mxu0 %v2163
      %2233 = vmatprep.subr.bf16.mxu0 0
      %2234 = vmatpush1.bf16.msra.mxu0 %v2164
      %2235 = vmatprep.subr.bf16.mxu0 0
      %2236 = vmatpush1.bf16.msra.mxu0 %v2165
      %2237 = vmatprep.subr.bf16.mxu0 0
      %2238 = vmatpush1.bf16.msra.mxu0 %v2166
      %2239 = vmatprep.subr.bf16.mxu0 0
      %2240 = vmatpush1.bf16.msra.mxu0 %v2167
      %2241 = vmatprep.subr.bf16.mxu0 0
      %2242 = vmatpush1.bf16.msra.mxu0 %v2168
      %2243 = vmatprep.subr.bf16.mxu0 0
      %2244 = vmatpush1.bf16.msra.mxu0 %v2169
      %2245 = vmatprep.subr.bf16.mxu0 0
      %2246 = vmatpush1.bf16.msra.mxu0 %v2170
      %2247 = vmatprep.subr.bf16.mxu0 0
      %2248 = vmatpush1.bf16.msra.mxu0 %v2171
      %2249 = vmatprep.subr.bf16.mxu0 0
      %2250 = vmatpush1.bf16.msra.mxu0 %v2172
      %2251 = vmatprep.subr.bf16.mxu0 0
      %2252 = vmatpush1.bf16.msra.mxu0 %v2173
      %2253 = vmatprep.subr.bf16.mxu0 0
      %2254 = vmatpush1.bf16.msra.mxu0 %v2174
      %2255 = vmatprep.mubr.bf16.mxu0 %v2021
      %2256 = vmatmul.mubr.bf16.gmra.mrb[0].mxu0 %v2020
      %v2257 = vpop.f32.mrb[0].mxu0
      %v2258 = vadd.f32 %v2029, %v2257
      %v2259 = vpop.f32.mrb[0].mxu0
      %v2260 = vpop.f32.mrb[0].mxu0
      %v2261 = vadd.f32 %v2029, %v2260
      %v2262 = vpop.f32.mrb[0].mxu0
      %2263 = vdwg.mxu0
      %2264 = vmatprep.subr.bf16.mxu0 0
      %2265 = vmatpush1.bf16.msra.mxu0 %v2175
      %2266 = vmatprep.subr.bf16.mxu0 0
      %2267 = vmatpush1.bf16.msra.mxu0 %v2176
      %2268 = vmatprep.subr.bf16.mxu0 0
      %2269 = vmatpush1.bf16.msra.mxu0 %v2177
      %2270 = vmatprep.subr.bf16.mxu0 0
      %2271 = vmatpush1.bf16.msra.mxu0 %v2178
      %2272 = vmatprep.subr.bf16.mxu0 0
      %2273 = vmatpush1.bf16.msra.mxu0 %v2179
      %2274 = vmatprep.subr.bf16.mxu0 0
      %2275 = vmatpush1.bf16.msra.mxu0 %v2180
      %2276 = vmatprep.subr.bf16.mxu0 0
      %2277 = vmatpush1.bf16.msra.mxu0 %v2181
      %2278 = vmatprep.subr.bf16.mxu0 0
      %2279 = vmatpush1.bf16.msra.mxu0 %v2182
      %2280 = vmatprep.subr.bf16.mxu0 0
      %2281 = vmatpush1.bf16.msra.mxu0 %v2183
      %2282 = vmatprep.subr.bf16.mxu0 0
      %2283 = vmatpush1.bf16.msra.mxu0 %v2184
      %2284 = vmatprep.subr.bf16.mxu0 0
      %2285 = vmatpush1.bf16.msra.mxu0 %v2185
      %2286 = vmatprep.subr.bf16.mxu0 0
      %2287 = vmatpush1.bf16.msra.mxu0 %v2186
      %2288 = vmatprep.subr.bf16.mxu0 0
      %2289 = vmatpush1.bf16.msra.mxu0 %v2187
      %2290 = vmatprep.subr.bf16.mxu0 0
      %2291 = vmatpush1.bf16.msra.mxu0 %v2188
      %2292 = vmatprep.subr.bf16.mxu0 0
      %2293 = vmatpush1.bf16.msra.mxu0 %v2189
      %2294 = vmatprep.subr.bf16.mxu0 0
      %2295 = vmatpush1.bf16.msra.mxu0 %v2190
      %2296 = vmatprep.mubr.bf16.mxu0 %v2023
      %2297 = vmatmul.mubr.bf16.gmra.mrb[0].mxu0 %v2022
      %v2298 = vpop.f32.mrb[0].mxu0
      %v2299 = vadd.f32 %v2258, %v2298
      %v2300 = vpop.f32.mrb[0].mxu0
      %v2301 = vpop.f32.mrb[0].mxu0
      %v2302 = vadd.f32 %v2261, %v2301
      %v2303 = vpop.f32.mrb[0].mxu0
      %2304 = vdwg.mxu0
      %v2305 = vadd.f32 %v2299, %v1581
      %v2306 = vadd.f32 %v2302, %v1582
      %v2307 = vld [vmem:[%s16] sm:$0x1]
      %v2308 = vld [vmem:[%s17] sm:$0x1]
      %2309 = vadd.xlane.f32.xlu0 %v2305
      %v2310 = vpop.xlane.xlu0 %2309
      %2311 = vadd.xlane.f32.xlu0 %v2306
      %v2312 = vpop.xlane.xlu0 %2311
      %v2313 = vmul.f32 %v2310, %v1548
      %v2314 = vmul.f32 %v2312, %v1548
      %v2315 = vsub.f32 %v2305, %v2313
      %v2316 = vsub.f32 %v2306, %v2314
      %v2317 = vmul.f32 %v2315, %v2315
      %v2318 = vmul.f32 %v2316, %v2316
      %2319 = vadd.xlane.f32.xlu0 %v2317
      %v2320 = vpop.xlane.xlu0 %2319
      %2321 = vadd.xlane.f32.xlu0 %v2318
      %v2322 = vpop.xlane.xlu0 %2321
      %v2323 = vmul.f32 %v2320, %v1548
      %v2324 = vmul.f32 %v2322, %v1548
      %v2325 = vadd.f32 %v2323, 1e-12
      %v2326 = vadd.f32 %v2324, 1e-12
      %v2327 = vrsqrt.pop %v2325
      %v2328 = vrsqrt.pop %v2326
      %v2329 = vmul.f32 %v2315, %v2327
      %v2330 = vmul.f32 %v2316, %v2328
      %v2332 = vlaneseq
      %v2333 = vshrl.u32 %v2332, 7
      %v2334 = vsub.s32 0, %v2333
      %v2335 = vrot.slane %v2307, %v2334
      %v2337 = vmul.f32 %v2329, %v2335
      %v2338 = vmul.f32 %v2330, %v2335
      %v2340 = vlaneseq
      %v2341 = vshrl.u32 %v2340, 7
      %v2342 = vsub.s32 0, %v2341
      %v2343 = vrot.slane %v2308, %v2342
      %v2345 = vadd.f32 %v2337, %v2343
      %v2346 = vadd.f32 %v2338, %v2343
      %2347 = vst [vmem:[%s595] sm:$0xff] %v2345
      %2348 = vst [vmem:[%s595 + $0x8] sm:$0xff] %v2346
      %p2349 = scmp.lt.s32.totalorder %s29, 1
      %s2350 = scalar_select %p2349, %s29, 1
      %s2351 = smul.addr %s2350, 2
      %s2352 = smul.addr %s2351, 8
      %s2353 = scalar_lea.vmem %s18, %s2352
      // Predicated region
      $region93: #{ramplus_forward.19} parent=91 // pred_check
        %p2354 = pneg %p435
      $region94: #{ramplus_forward.19} parent=91 // pred_check_branch
        %2356 = sbr.rel (%p2354) target = $region96
      $region95: #{ramplus_forward.19} parent=91 // pred_region
        _
      $region96: #{ramplus_forward.19} parent=91 // pred_fallthru
        _
    $region92: #{ramplus_forward.19} parent=5 // pred_fallthru
      _
    %p2357 = scmp.le.s32.totalorder 2, %s24
    // Predicated region
    $region97: #{ramplus_forward.19} parent=5 // pred_check
      %p2358 = pneg %p2357
    $region98: #{ramplus_forward.19} parent=5 // pred_check_branch
      %2360 = sbr.rel (%p2358) target = $region100
    $region99: #{ramplus_forward.19} parent=5 // pred_region
      %s2361 = ssub.s32 %s24, 2
      // Predicated region
      $region101: #{ramplus_forward.19} parent=99 // pred_check
        %p2362 = pneg %p441
      $region102: #{ramplus_forward.19} parent=99 // pred_check_branch
        %2364 = sbr.rel (%p2362) target = $region104
      $region103: #{ramplus_forward.19} parent=99 // pred_region
        %p2365 = scmp.lt.s32.totalorder %s30, 1
        %s2366 = scalar_select %p2365, %s30, 1
        %s2367 = smul.addr %s2366, 2
        %s2368 = smul.addr %s2367, 8
        %s2369 = scalar_lea.vmem %s18, %s2368
      $region104: #{ramplus_forward.19} parent=99 // pred_fallthru
        _
    $region100: #{ramplus_forward.19} parent=5 // pred_fallthru
      _
  $region6: #{ramplus_forward.19} parent=0 // loop_footer
    %s28 = sadd.s32 1, %s24
  $region7: #{ramplus_forward.19} parent=0 // loop_footer_branch
    %23 = sbr.rel target = $region3
  $region8: #{ramplus_forward.19} parent=0 // loop_exit
    _

</llo_original>
